<compile_context>
chip_gen: v7x
topology: tpu7x:2x2x1
jax: 0.10.0
libtpu: 0.0.40
codegen_flags: <defaults>
</compile_context>

<pallas_src>
import functools

import numpy as np
import jax
import jax.numpy as jnp
from jax.experimental import pallas as pl
from jax.experimental.pallas import tpu as pltpu

# ----------------------------- model configuration -----------------------------
IMAGE_SIZE = (16, 16, 3)            # (ih, iw, ic)
PATCH_SIZE = (2, 2)
NUM_CLASSES = 5
LAST_CHANNEL = 16
BLOCK_CONFIG = [
    ("conv", 3, 8, 3, 2, None),     # conv_bn_act: 3->8, k=3, stride=2
    ("mv2", 8, 8, 2, 1, None),      # mobilev2:    8->8, expansion=2, stride=1
    ("vit", 8, 16, 32, 1, 3),       # mobilevit:   ch=8, dim=16, mlp=32, depth=1, k=3
    ("conv", 8, 16, 1, 1, None),    # conv_bn_act: 8->16 (last_channel)
]
HEADS = 4
DIM_HEAD = 8
BN_EPS = 1e-5
LN_EPS = 1e-5
W_OUT = 8                           # spatial size after the stride-2 stem (16/2)


# ------------------------------- in-kernel helpers ------------------------------
def _silu(x):
    return x * jax.nn.sigmoid(x)


def _ln(x, g, b):
    mu = jnp.mean(x, axis=-1, keepdims=True)
    xc = x - mu
    var = jnp.mean(xc * xc, axis=-1, keepdims=True)
    return xc * jax.lax.rsqrt(var + LN_EPS) * g + b


def _conv3x3(x, m_ref, sd, su):
    # x: (8, 8*Cin) row/width*channel layout.  m_ref: (3, 8*Cin, 8*Cout) unpadded
    # width-Toeplitz matrices (one per vertical tap).  sd/su: (8,8) row-shift
    # matrices (shift-down / shift-up with zero fill) -> zero padding in height.
    top = jnp.dot(jnp.dot(sd, x, preferred_element_type=jnp.float32), m_ref[0],
                  preferred_element_type=jnp.float32)
    mid = jnp.dot(x, m_ref[1], preferred_element_type=jnp.float32)
    bot = jnp.dot(jnp.dot(su, x, preferred_element_type=jnp.float32), m_ref[2],
                  preferred_element_type=jnp.float32)
    return top + mid + bot


# ---------------------------------- kernels -------------------------------------
def _front_kernel(x_ref, sd_ref, su_ref,
                  w0_ref, a0_ref, b0_ref, we_ref, ae_ref, be_ref,
                  mdw_ref, adw_ref, bdw_ref, wpr_ref, apr_ref, bpr_ref,
                  m1_ref, a1_ref, b1_ref, w2_ref, a2_ref, b2_ref,
                  y0_ref, c2_ref):
    # Fused: stem conv(3x3,s2) -> mv2 (expand 1x1, dw 3x3, proj 1x1, residual)
    #        -> mobilevit conv1 3x3 -> conv2 1x1.
    x = x_ref[0]                                                  # (8, 216) im2col'd
    sd = sd_ref[...]
    su = su_ref[...]
    # stem conv + BN + SiLU
    ys = _silu(jnp.dot(x, w0_ref[...], preferred_element_type=jnp.float32)
               * a0_ref[...] + b0_ref[...])                       # (8, 64)
    # mv2 expand 1x1 + BN + SiLU
    e = _silu(jnp.dot(ys, we_ref[...], preferred_element_type=jnp.float32)
              * ae_ref[...] + be_ref[...])                        # (8, 128)
    # mv2 depthwise 3x3 + BN + SiLU
    dw = _conv3x3(e, mdw_ref, sd, su)
    ydw = _silu(dw * adw_ref[...] + bdw_ref[...])                 # (8, 128)
    # mv2 projection 1x1 + BN (linear) + residual
    y0 = (jnp.dot(ydw, wpr_ref[...], preferred_element_type=jnp.float32)
          * apr_ref[...] + bpr_ref[...] + ys)                     # (8, 64)
    # mobilevit conv1 3x3 + BN + SiLU
    c1 = _conv3x3(y0, m1_ref, sd, su)
    y1 = _silu(c1 * a1_ref[...] + b1_ref[...])                    # (8, 64)
    # mobilevit conv2 1x1 + BN + SiLU
    c2 = _silu(jnp.dot(y1, w2_ref[...], preferred_element_type=jnp.float32)
               * a2_ref[...] + b2_ref[...])                       # (8, 128)
    y0_ref[0] = y0
    c2_ref[0] = c2


def _transformer_kernel(x_ref, *refs, depth, heads, dim_head, dim):
    # Fused transformer layer(s): LN1 -> per-head QKV -> attention -> out-proj
    # (+residual) -> LN2 -> FFN (SiLU) (+residual), then 1x1 conv3 + BN + SiLU.
    o_ref = refs[-1]
    w3_ref, a3_ref, b3_ref = refs[-4], refs[-3], refs[-2]
    lrefs = refs[:-4]
    p_sz, s_sz = x_ref.shape[1], x_ref.shape[2]
    x = x_ref[0].reshape(p_sz * s_sz, dim)
    scale = dim_head ** -0.5
    for l in range(depth):
        (g1, b1, wq, wk, wv, wo, bo, g2, b2, w1, bf1, w2, bf2) = lrefs[l * 13:(l + 1) * 13]
        # --- attention ---
        xn = _ln(x, g1[...], b1[...])
        acc = x + bo[...]
        for h in range(heads):
            q = jnp.dot(xn, wq[h], preferred_element_type=jnp.float32)
            k = jnp.dot(xn, wk[h], preferred_element_type=jnp.float32)
            v = jnp.dot(xn, wv[h], preferred_element_type=jnp.float32)
            qb = q.reshape(p_sz, s_sz, dim_head)
            kb = k.reshape(p_sz, s_sz, dim_head)
            vb = v.reshape(p_sz, s_sz, dim_head)
            s = jnp.einsum("pqd,pkd->pqk", qb, kb,
                           preferred_element_type=jnp.float32) * scale
            s = s - jnp.max(s, axis=-1, keepdims=True)
            e = jnp.exp(s)
            a = e / jnp.sum(e, axis=-1, keepdims=True)
            ob = jnp.einsum("pqk,pkd->pqd", a, vb,
                            preferred_element_type=jnp.float32)
            acc = acc + jnp.dot(ob.reshape(p_sz * s_sz, dim_head), wo[h],
                                preferred_element_type=jnp.float32)
        x = acc
        # --- feed-forward ---
        xn = _ln(x, g2[...], b2[...])
        hid = jnp.dot(xn, w1[...], preferred_element_type=jnp.float32) + bf1[...]
        hid = _silu(hid)
        x = x + jnp.dot(hid, w2[...], preferred_element_type=jnp.float32) + bf2[...]
    # conv3 (1x1) + folded BN + SiLU, pointwise so applied in patch space.
    y = jnp.dot(x, w3_ref[...], preferred_element_type=jnp.float32)
    y = _silu(y * a3_ref[...] + b3_ref[...])
    o_ref[0] = y.reshape(p_sz, s_sz, w3_ref.shape[1])


def _tail_kernel(x_ref, sd_ref, su_ref, m4_ref, a4_ref, b4_ref,
                 wl_ref, al_ref, bl_ref, wh_ref, bh_ref, o_ref):
    # Fused: conv4 3x3 + last 1x1 conv + global avgpool + linear + softmax.
    x = x_ref[0]                                                  # (8, 128) concat map
    c4 = _conv3x3(x, m4_ref, sd_ref[...], su_ref[...])
    y = _silu(c4 * a4_ref[...] + b4_ref[...])                     # (8, 64)  conv4
    z = _silu(jnp.dot(y, wl_ref[...], preferred_element_type=jnp.float32)
              * al_ref[...] + bl_ref[...])                        # (8, 128) last conv
    pooled = jnp.mean(z, axis=0, keepdims=True)                   # (1, 128) (height avg)
    logits = jnp.dot(pooled, wh_ref[...],
                     preferred_element_type=jnp.float32) + bh_ref[...]
    m = jnp.max(logits, axis=-1, keepdims=True)
    e = jnp.exp(logits - m)
    o_ref[0] = e / jnp.sum(e, axis=-1, keepdims=True)             # (1, 5)


# ------------------------------ spec helpers -------------------------------------
def _batch_spec(shape):
    nd = len(shape)
    return pl.BlockSpec((1,) + tuple(shape[1:]), lambda n: (n,) + (0,) * (nd - 1))


def _full_spec(shape):
    nd = len(shape)
    return pl.BlockSpec(tuple(shape), lambda n: (0,) * nd)


_PAR = pltpu.CompilerParams(dimension_semantics=("parallel",))

_FRONT_KEYS = ("sd", "su", "stem_w", "stem_a", "stem_b", "exp_w", "exp_a", "exp_b",
               "dw_m", "dw_a", "dw_b", "proj_w", "proj_a", "proj_b",
               "c1_m", "c1_a", "c1_b", "c2_w", "c2_a", "c2_b")
_TAIL_KEYS = ("sd", "su", "c4_m", "c4_a", "c4_b", "last_w", "last_a", "last_b",
              "head_w", "head_b")


# ------------------------------ forward (wrapper) ---------------------------------
def customvit_forward(pp, x_nchw):
    n = x_nchw.shape[0]
    x = jnp.transpose(x_nchw, (0, 2, 3, 1))                      # NCHW -> NHWC

    # --- stem im2col (stride-2 3x3, pad 1): one tiny XLA fusion ---
    xp = jnp.pad(x, ((0, 0), (1, 1), (1, 1), (0, 0)))            # (N, 18, 18, 3)
    taps = [xp[:, i:i + 16:2, j:j + 16:2, :] for i in range(3) for j in range(3)]
    patches = jnp.concatenate(taps, axis=-1).reshape(n, W_OUT, W_OUT * 27)

    # --- K1: stem conv + full mv2 block + mobilevit conv1/conv2 (fused) ---
    y0, c2 = pl.pallas_call(
        _front_kernel, grid=(n,),
        in_specs=[_batch_spec(patches.shape)]
                 + [_full_spec(pp[k].shape) for k in _FRONT_KEYS],
        out_specs=(_batch_spec((n, W_OUT, 64)), _batch_spec((n, W_OUT, 128))),
        out_shape=(jax.ShapeDtypeStruct((n, W_OUT, 64), jnp.float32),
                   jax.ShapeDtypeStruct((n, W_OUT, 128), jnp.float32)),
        compiler_params=_PAR,
    )(patches, *[pp[k] for k in _FRONT_KEYS])

    # --- rearrange 'b d (h ph) (w pw) -> b (ph pw) (h w) d' (tiny XLA glue) ---
    dim = 16
    ph, pw = PATCH_SIZE
    hh, ww = W_OUT // ph, W_OUT // pw
    z = c2.reshape(n, W_OUT, W_OUT, dim)
    t = z.reshape(n, hh, ph, ww, pw, dim).transpose(0, 2, 4, 1, 3, 5)
    t = t.reshape(n, ph * pw, hh * ww, dim)

    # --- K2: fused transformer layer(s) + conv3 1x1 ---
    layer_names = ("g1", "b1", "wq", "wk", "wv", "wo", "bo",
                   "g2", "b2", "w1", "bf1", "w2", "bf2")
    tr_args = [t]
    tr_specs = [_batch_spec(t.shape)]
    for lp in pp["layers"]:
        for name in layer_names:
            tr_args.append(lp[name])
            tr_specs.append(_full_spec(lp[name].shape))
    for name in ("c3_w", "c3_a", "c3_b"):
        tr_args.append(pp[name])
        tr_specs.append(_full_spec(pp[name].shape))
    tr_kernel = functools.partial(_transformer_kernel, depth=len(pp["layers"]),
                                  heads=HEADS, dim_head=DIM_HEAD, dim=dim)
    t_out = pl.pallas_call(
        tr_kernel, grid=(n,),
        in_specs=tr_specs,
        out_specs=_batch_spec((n, ph * pw, hh * ww, 8)),
        out_shape=jax.ShapeDtypeStruct((n, ph * pw, hh * ww, 8), jnp.float32),
        compiler_params=_PAR,
    )(*tr_args)

    # --- inverse rearrange + concat (XLA glue), then K3 tail/head ---
    c3s = t_out.reshape(n, ph, pw, hh, ww, 8).transpose(0, 3, 1, 4, 2, 5)
    c3s = c3s.reshape(n, W_OUT, W_OUT, 8)
    y0s = y0.reshape(n, W_OUT, W_OUT, 8)
    cat = jnp.concatenate([c3s, y0s], axis=-1).reshape(n, W_OUT, W_OUT * 16)

    probs = pl.pallas_call(
        _tail_kernel, grid=(n,),
        in_specs=[_batch_spec(cat.shape)]
                 + [_full_spec(pp[k].shape) for k in _TAIL_KEYS],
        out_specs=_batch_spec((n, 1, NUM_CLASSES)),
        out_shape=jax.ShapeDtypeStruct((n, 1, NUM_CLASSES), jnp.float32),
        compiler_params=_PAR,
    )(cat, *[pp[k] for k in _TAIL_KEYS])
    return probs[:, 0, :]


# --------------------------- init-time weight packing -----------------------------
def _fold_bn_np(bn):
    gamma = np.asarray(bn["gamma"], np.float32)
    beta = np.asarray(bn["beta"], np.float32)
    mean = np.asarray(bn["mean"], np.float32)
    var = np.asarray(bn["var"], np.float32)
    scale = gamma / np.sqrt(var + BN_EPS)
    bias = beta - mean * scale
    return scale, bias


def _tile_affine(scale, bias, reps=W_OUT):
    return (np.tile(scale, reps).reshape(1, -1).astype(np.float32),
            np.tile(bias, reps).reshape(1, -1).astype(np.float32))


def _block_diag(w, reps=W_OUT):
    cin, cout = w.shape
    out = np.zeros((reps * cin, reps * cout), np.float32)
    for r in range(reps):
        out[r * cin:(r + 1) * cin, r * cout:(r + 1) * cout] = w
    return out


def _toeplitz3(w_ijio, w_out=W_OUT):
    # Unpadded width-Toeplitz: w_ijio (3, 3, Cin, Cout) -> (3, w_out*Cin, w_out*Cout).
    # Out-of-range width taps are simply absent (== zero padding).
    _, _, cin, cout = w_ijio.shape
    m = np.zeros((3, w_out * cin, w_out * cout), np.float32)
    for i in range(3):
        for j in range(3):
            for wp in range(w_out):
                win = wp + j - 1
                if 0 <= win < w_out:
                    m[i, win * cin:(win + 1) * cin,
                      wp * cout:(wp + 1) * cout] = w_ijio[i, j]
    return m


def _shift_mats(w_out=W_OUT):
    # sd @ x shifts rows down by one (row 0 becomes zero); su @ x shifts rows up.
    sd = np.zeros((w_out, w_out), np.float32)
    su = np.zeros((w_out, w_out), np.float32)
    for r in range(1, w_out):
        sd[r, r - 1] = 1.0
    for r in range(w_out - 1):
        su[r, r + 1] = 1.0
    return sd, su


def prepare_params(params):
    """Fold BN, transpose / Toeplitz / block-diag pack every weight once."""
    blocks = params["blocks"]
    pp = {}
    pp["sd"], pp["su"] = _shift_mats()
    # stem conv 3->8 (k=3, s=2): per-position (27->8), block-diag over width
    b0 = blocks[0]
    wm = np.transpose(np.asarray(b0["w"]), (2, 3, 1, 0)).reshape(9 * 3, 8)
    s, b = _fold_bn_np(b0["bn"])
    pp["stem_w"] = _block_diag(wm)
    pp["stem_a"], pp["stem_b"] = _tile_affine(s, b)
    # mv2
    bm = blocks[1]
    we = np.asarray(bm["expand_w"]).reshape(16, 8).T
    s, b = _fold_bn_np(bm["expand_bn"])
    pp["exp_w"] = _block_diag(we)
    pp["exp_a"], pp["exp_b"] = _tile_affine(s, b)
    wd = np.asarray(bm["dw_w"])[:, 0]                              # (16, 3, 3)
    dense = np.zeros((3, 3, 16, 16), np.float32)
    for i in range(3):
        for j in range(3):
            dense[i, j] = np.diag(wd[:, i, j])
    s, b = _fold_bn_np(bm["dw_bn"])
    pp["dw_m"] = _toeplitz3(dense)
    pp["dw_a"], pp["dw_b"] = _tile_affine(s, b)
    wp = np.asarray(bm["proj_w"]).reshape(8, 16).T
    s, b = _fold_bn_np(bm["proj_bn"])
    pp["proj_w"] = _block_diag(wp)
    pp["proj_a"], pp["proj_b"] = _tile_affine(s, b)
    # mobilevit convs
    bv = blocks[2]
    w = np.transpose(np.asarray(bv["conv1_w"]), (2, 3, 1, 0))      # (3,3,8,8)
    s, b = _fold_bn_np(bv["conv1_bn"])
    pp["c1_m"] = _toeplitz3(w)
    pp["c1_a"], pp["c1_b"] = _tile_affine(s, b)
    w = np.asarray(bv["conv2_w"]).reshape(16, 8).T
    s, b = _fold_bn_np(bv["conv2_bn"])
    pp["c2_w"] = _block_diag(w)
    pp["c2_a"], pp["c2_b"] = _tile_affine(s, b)
    w = np.asarray(bv["conv3_w"]).reshape(8, 16).T                 # (16, 8)
    s, b = _fold_bn_np(bv["conv3_bn"])
    pp["c3_w"] = w.astype(np.float32)
    pp["c3_a"], pp["c3_b"] = s.reshape(1, -1), b.reshape(1, -1)
    w = np.transpose(np.asarray(bv["conv4_w"]), (2, 3, 1, 0))      # (3,3,16,8)
    s, b = _fold_bn_np(bv["conv4_bn"])
    pp["c4_m"] = _toeplitz3(w)
    pp["c4_a"], pp["c4_b"] = _tile_affine(s, b)
    # transformer layers: split QKV / out-proj weights per head at init time
    inner = HEADS * DIM_HEAD
    layers = []
    for lp in bv["layers"]:
        qkv = np.asarray(lp["qkv_w"], np.float32)                  # (16, 96)
        d = dict(
            g1=np.asarray(lp["ln1_g"]).reshape(1, -1),
            b1=np.asarray(lp["ln1_b"]).reshape(1, -1),
            wq=np.stack([qkv[:, h * DIM_HEAD:(h + 1) * DIM_HEAD] for h in range(HEADS)], 0),
            wk=np.stack([qkv[:, inner + h * DIM_HEAD:inner + (h + 1) * DIM_HEAD]
                         for h in range(HEADS)], 0),
            wv=np.stack([qkv[:, 2 * inner + h * DIM_HEAD:2 * inner + (h + 1) * DIM_HEAD]
                         for h in range(HEADS)], 0),
            wo=np.asarray(lp["out_w"]).reshape(HEADS, DIM_HEAD, -1),
            bo=np.asarray(lp["out_b"]).reshape(1, -1),
            g2=np.asarray(lp["ln2_g"]).reshape(1, -1),
            b2=np.asarray(lp["ln2_b"]).reshape(1, -1),
            w1=np.asarray(lp["ff1_w"]),
            bf1=np.asarray(lp["ff1_b"]).reshape(1, -1),
            w2=np.asarray(lp["ff2_w"]),
            bf2=np.asarray(lp["ff2_b"]).reshape(1, -1),
        )
        layers.append({k: jnp.asarray(v, jnp.float32) for k, v in d.items()})
    # last conv 8->16 (1x1)
    bl = blocks[3]
    w = np.asarray(bl["w"]).reshape(16, 8).T
    s, b = _fold_bn_np(bl["bn"])
    pp["last_w"] = _block_diag(w)
    pp["last_a"], pp["last_b"] = _tile_affine(s, b)
    # head: fold width-average (1/8) into the linear weight; row-average in kernel
    wh = np.asarray(params["head_w"], np.float32)                  # (16, 5)
    whp = np.zeros((W_OUT * LAST_CHANNEL, NUM_CLASSES), np.float32)
    for wpos in range(W_OUT):
        whp[wpos * LAST_CHANNEL:(wpos + 1) * LAST_CHANNEL, :] = wh / float(W_OUT)
    pp["head_w"] = whp
    pp["head_b"] = np.asarray(params["head_b"], np.float32).reshape(1, -1)

    out = {k: jnp.asarray(v, jnp.float32) for k, v in pp.items()}
    out["layers"] = layers
    return out


# ------------------------------- parameter init ----------------------------------
def _winit(key, shape, scale=0.1):
    return scale * jax.random.normal(key, shape, dtype=jnp.float32)


def init_bn(key, c):
    k1, k2, k3, k4 = jax.random.split(key, 4)
    return dict(
        gamma=1.0 + 0.1 * jax.random.normal(k1, (c,), jnp.float32),
        beta=0.1 * jax.random.normal(k2, (c,), jnp.float32),
        mean=0.1 * jax.random.normal(k3, (c,), jnp.float32),
        var=1.0 + 0.1 * jnp.abs(jax.random.normal(k4, (c,), jnp.float32)),
    )


def init_params(key):
    blocks = []
    for cfg in BLOCK_CONFIG:
        key, sub = jax.random.split(key)
        name = cfg[0]
        if name == "conv":
            _, inp, oup, k, stride, _ = cfg
            k1, k2 = jax.random.split(sub)
            blocks.append(dict(w=_winit(k1, (oup, inp, k, k)), bn=init_bn(k2, oup)))
        elif name == "mv2":
            _, inp, oup, expansion, stride, _ = cfg
            hidden = inp * expansion
            ks = jax.random.split(sub, 6)
            p = dict(
                dw_w=_winit(ks[2], (hidden, 1, 3, 3)),
                dw_bn=init_bn(ks[3], hidden),
                proj_w=_winit(ks[4], (oup, hidden, 1, 1)),
                proj_bn=init_bn(ks[5], oup),
            )
            if expansion != 1:
                p["expand_w"] = _winit(ks[0], (hidden, inp, 1, 1))
                p["expand_bn"] = init_bn(ks[1], hidden)
            blocks.append(p)
        elif name == "vit":
            _, channel, dim, mlp_dim, depth, ksize = cfg
            inner = HEADS * DIM_HEAD
            ks = jax.random.split(sub, 8 + depth)
            p = dict(
                conv1_w=_winit(ks[0], (channel, channel, ksize, ksize)),
                conv1_bn=init_bn(ks[1], channel),
                conv2_w=_winit(ks[2], (dim, channel, 1, 1)),
                conv2_bn=init_bn(ks[3], dim),
                conv3_w=_winit(ks[4], (channel, dim, 1, 1)),
                conv3_bn=init_bn(ks[5], channel),
                conv4_w=_winit(ks[6], (channel, 2 * channel, ksize, ksize)),
                conv4_bn=init_bn(ks[7], channel),
                layers=[],
            )
            for d in range(depth):
                lk = jax.random.split(ks[8 + d], 11)
                p["layers"].append(dict(
                    ln1_g=1.0 + 0.05 * jax.random.normal(lk[0], (dim,), jnp.float32),
                    ln1_b=0.05 * jax.random.normal(lk[1], (dim,), jnp.float32),
                    qkv_w=_winit(lk[2], (dim, 3 * inner)),
                    out_w=_winit(lk[3], (inner, dim)),
                    out_b=_winit(lk[4], (dim,)),
                    ln2_g=1.0 + 0.05 * jax.random.normal(lk[5], (dim,), jnp.float32),
                    ln2_b=0.05 * jax.random.normal(lk[6], (dim,), jnp.float32),
                    ff1_w=_winit(lk[7], (dim, mlp_dim)),
                    ff1_b=_winit(lk[8], (mlp_dim,)),
                    ff2_w=_winit(lk[9], (mlp_dim, dim)),
                    ff2_b=_winit(lk[10], (dim,)),
                ))
            blocks.append(p)
        else:
            raise ValueError(name)
    key, k1, k2 = jax.random.split(key, 3)
    return dict(
        blocks=blocks,
        head_w=_winit(k1, (LAST_CHANNEL, NUM_CLASSES)),
        head_b=_winit(k2, (NUM_CLASSES,)),
    )


# ------------------------------------ main ---------------------------------------
if __name__ == "__main__":
    key = jax.random.PRNGKey(0)
    pkey, xkey = jax.random.split(key)
    params = init_params(pkey)
    pp = prepare_params(params)          # one-time BN folding / weight packing
    # PyTorch-style NCHW input: (batch=2, channels=3, 16, 16)
    x = jax.random.normal(xkey, (2, IMAGE_SIZE[2], IMAGE_SIZE[0], IMAGE_SIZE[1]),
                          dtype=jnp.float32)
    fwd = jax.jit(customvit_forward)
    out = jax.block_until_ready(fwd(pp, x))
    assert out.shape == (2, NUM_CLASSES), out.shape
    assert bool(jnp.all(jnp.isfinite(out)))
    assert bool(jnp.allclose(jnp.sum(out, axis=-1), 1.0, atol=1e-4))
    print("KERNEL_OK")
</pallas_src>

<mosaic_0001>
module attributes {stable_mosaic.version = 11 : i64} {
  func.func @_front_kernel(%arg0: i32, %arg1: memref<1x8x216xf32, #tpu.memory_space<vmem>>, %arg2: memref<8x8xf32, #tpu.memory_space<vmem>>, %arg3: memref<8x8xf32, #tpu.memory_space<vmem>>, %arg4: memref<216x64xf32, #tpu.memory_space<vmem>>, %arg5: memref<1x64xf32, #tpu.memory_space<vmem>>, %arg6: memref<1x64xf32, #tpu.memory_space<vmem>>, %arg7: memref<64x128xf32, #tpu.memory_space<vmem>>, %arg8: memref<1x128xf32, #tpu.memory_space<vmem>>, %arg9: memref<1x128xf32, #tpu.memory_space<vmem>>, %arg10: memref<3x128x128xf32, #tpu.memory_space<vmem>>, %arg11: memref<1x128xf32, #tpu.memory_space<vmem>>, %arg12: memref<1x128xf32, #tpu.memory_space<vmem>>, %arg13: memref<128x64xf32, #tpu.memory_space<vmem>>, %arg14: memref<1x64xf32, #tpu.memory_space<vmem>>, %arg15: memref<1x64xf32, #tpu.memory_space<vmem>>, %arg16: memref<3x64x64xf32, #tpu.memory_space<vmem>>, %arg17: memref<1x64xf32, #tpu.memory_space<vmem>>, %arg18: memref<1x64xf32, #tpu.memory_space<vmem>>, %arg19: memref<64x128xf32, #tpu.memory_space<vmem>>, %arg20: memref<1x128xf32, #tpu.memory_space<vmem>>, %arg21: memref<1x128xf32, #tpu.memory_space<vmem>>, %arg22: memref<1x8x64xf32, #tpu.memory_space<vmem>>, %arg23: memref<1x8x128xf32, #tpu.memory_space<vmem>>) attributes {dimension_semantics = [#tpu.dimension_semantics<parallel>], iteration_bounds = array<i64: 2>, scalar_prefetch = 0 : i64, scratch_operands = 0 : i64, tpu.core_type = #tpu.core_type<tc>, window_params = [{transform_indices = @transform_0, window_bounds = array<i64: 1, 8, 216>}, {pipeline_mode = #tpu.pipeline_mode<synchronous>, transform_indices = @transform_1, window_bounds = array<i64: 8, 8>}, {pipeline_mode = #tpu.pipeline_mode<synchronous>, transform_indices = @transform_2, window_bounds = array<i64: 8, 8>}, {pipeline_mode = #tpu.pipeline_mode<synchronous>, transform_indices = @transform_3, window_bounds = array<i64: 216, 64>}, {pipeline_mode = #tpu.pipeline_mode<synchronous>, transform_indices = @transform_4, window_bounds = array<i64: 1, 64>}, {pipeline_mode = #tpu.pipeline_mode<synchronous>, transform_indices = @transform_5, window_bounds = array<i64: 1, 64>}, {pipeline_mode = #tpu.pipeline_mode<synchronous>, transform_indices = @transform_6, window_bounds = array<i64: 64, 128>}, {pipeline_mode = #tpu.pipeline_mode<synchronous>, transform_indices = @transform_7, window_bounds = array<i64: 1, 128>}, {pipeline_mode = #tpu.pipeline_mode<synchronous>, transform_indices = @transform_8, window_bounds = array<i64: 1, 128>}, {pipeline_mode = #tpu.pipeline_mode<synchronous>, transform_indices = @transform_9, window_bounds = array<i64: 3, 128, 128>}, {pipeline_mode = #tpu.pipeline_mode<synchronous>, transform_indices = @transform_10, window_bounds = array<i64: 1, 128>}, {pipeline_mode = #tpu.pipeline_mode<synchronous>, transform_indices = @transform_11, window_bounds = array<i64: 1, 128>}, {pipeline_mode = #tpu.pipeline_mode<synchronous>, transform_indices = @transform_12, window_bounds = array<i64: 128, 64>}, {pipeline_mode = #tpu.pipeline_mode<synchronous>, transform_indices = @transform_13, window_bounds = array<i64: 1, 64>}, {pipeline_mode = #tpu.pipeline_mode<synchronous>, transform_indices = @transform_14, window_bounds = array<i64: 1, 64>}, {pipeline_mode = #tpu.pipeline_mode<synchronous>, transform_indices = @transform_15, window_bounds = array<i64: 3, 64, 64>}, {pipeline_mode = #tpu.pipeline_mode<synchronous>, transform_indices = @transform_16, window_bounds = array<i64: 1, 64>}, {pipeline_mode = #tpu.pipeline_mode<synchronous>, transform_indices = @transform_17, window_bounds = array<i64: 1, 64>}, {pipeline_mode = #tpu.pipeline_mode<synchronous>, transform_indices = @transform_18, window_bounds = array<i64: 64, 128>}, {pipeline_mode = #tpu.pipeline_mode<synchronous>, transform_indices = @transform_19, window_bounds = array<i64: 1, 128>}, {pipeline_mode = #tpu.pipeline_mode<synchronous>, transform_indices = @transform_20, window_bounds = array<i64: 1, 128>}, {transform_indices = @transform_21, window_bounds = array<i64: 1, 8, 64>}, {transform_indices = @transform_22, window_bounds = array<i64: 1, 8, 128>}]} {
    %c0 = arith.constant 0 : index
    %c0_0 = arith.constant 0 : index
    %c0_1 = arith.constant 0 : index
    %0 = vector.load %arg1[%c0, %c0_0, %c0_1] : memref<1x8x216xf32, #tpu.memory_space<vmem>>, vector<1x8x216xf32>
    %1 = vector.shape_cast %0 : vector<1x8x216xf32> to vector<8x216xf32>
    %c0_2 = arith.constant 0 : index
    %c0_3 = arith.constant 0 : index
    %2 = vector.load %arg2[%c0_2, %c0_3] : memref<8x8xf32, #tpu.memory_space<vmem>>, vector<8x8xf32>
    %c0_4 = arith.constant 0 : index
    %c0_5 = arith.constant 0 : index
    %3 = vector.load %arg3[%c0_4, %c0_5] : memref<8x8xf32, #tpu.memory_space<vmem>>, vector<8x8xf32>
    %c0_6 = arith.constant 0 : index
    %c0_7 = arith.constant 0 : index
    %4 = vector.load %arg4[%c0_6, %c0_7] : memref<216x64xf32, #tpu.memory_space<vmem>>, vector<216x64xf32>
    %cst = arith.constant dense<0.000000e+00> : vector<8x64xf32>
    %5 = tpu.matmul %1, %4, %cst {dimension_numbers = #tpu.dot_dimension_numbers<[1], [0], [0], [1], [0, 0, 1, 1], [], []>} : vector<8x216xf32>, vector<216x64xf32>, vector<8x64xf32> -> vector<8x64xf32>
    %c0_8 = arith.constant 0 : index
    %c0_9 = arith.constant 0 : index
    %6 = vector.load %arg5[%c0_8, %c0_9] : memref<1x64xf32, #tpu.memory_space<vmem>>, vector<1x64xf32>
    %7 = vector.broadcast %6 : vector<1x64xf32> to vector<8x64xf32>
    %8 = arith.mulf %5, %7 : vector<8x64xf32>
    %c0_10 = arith.constant 0 : index
    %c0_11 = arith.constant 0 : index
    %9 = vector.load %arg6[%c0_10, %c0_11] : memref<1x64xf32, #tpu.memory_space<vmem>>, vector<1x64xf32>
    %10 = vector.broadcast %9 : vector<1x64xf32> to vector<8x64xf32>
    %11 = arith.addf %8, %10 : vector<8x64xf32>
    %12 = arith.negf %11 : vector<8x64xf32>
    %13 = math.exp %12 : vector<8x64xf32>
    %cst_12 = arith.constant 1.000000e+00 : f32
    %14 = vector.broadcast %cst_12 : f32 to vector<8x64xf32>
    %15 = arith.addf %14, %13 : vector<8x64xf32>
    %16 = arith.divf %14, %15 : vector<8x64xf32>
    %17 = arith.mulf %11, %16 : vector<8x64xf32>
    %c0_13 = arith.constant 0 : index
    %c0_14 = arith.constant 0 : index
    %18 = vector.load %arg7[%c0_13, %c0_14] : memref<64x128xf32, #tpu.memory_space<vmem>>, vector<64x128xf32>
    %cst_15 = arith.constant dense<0.000000e+00> : vector<8x128xf32>
    %19 = tpu.matmul %17, %18, %cst_15 {dimension_numbers = #tpu.dot_dimension_numbers<[1], [0], [0], [1], [0, 0, 1, 1], [], []>} : vector<8x64xf32>, vector<64x128xf32>, vector<8x128xf32> -> vector<8x128xf32>
    %c0_16 = arith.constant 0 : index
    %c0_17 = arith.constant 0 : index
    %20 = vector.load %arg8[%c0_16, %c0_17] : memref<1x128xf32, #tpu.memory_space<vmem>>, vector<1x128xf32>
    %21 = vector.broadcast %20 : vector<1x128xf32> to vector<8x128xf32>
    %22 = arith.mulf %19, %21 : vector<8x128xf32>
    %c0_18 = arith.constant 0 : index
    %c0_19 = arith.constant 0 : index
    %23 = vector.load %arg9[%c0_18, %c0_19] : memref<1x128xf32, #tpu.memory_space<vmem>>, vector<1x128xf32>
    %24 = vector.broadcast %23 : vector<1x128xf32> to vector<8x128xf32>
    %25 = arith.addf %22, %24 : vector<8x128xf32>
    %26 = arith.negf %25 : vector<8x128xf32>
    %27 = math.exp %26 : vector<8x128xf32>
    %cst_20 = arith.constant 1.000000e+00 : f32
    %28 = vector.broadcast %cst_20 : f32 to vector<8x128xf32>
    %29 = arith.addf %28, %27 : vector<8x128xf32>
    %30 = arith.divf %28, %29 : vector<8x128xf32>
    %31 = arith.mulf %25, %30 : vector<8x128xf32>
    %cst_21 = arith.constant dense<0.000000e+00> : vector<8x128xf32>
    %32 = tpu.matmul %2, %31, %cst_21 {dimension_numbers = #tpu.dot_dimension_numbers<[1], [0], [0], [1], [0, 0, 1, 1], [], []>} : vector<8x8xf32>, vector<8x128xf32>, vector<8x128xf32> -> vector<8x128xf32>
    %c0_22 = arith.constant 0 : index
    %c0_23 = arith.constant 0 : index
    %c0_24 = arith.constant 0 : index
    %33 = vector.load %arg10[%c0_22, %c0_23, %c0_24] : memref<3x128x128xf32, #tpu.memory_space<vmem>>, vector<1x128x128xf32>
    %34 = vector.shape_cast %33 : vector<1x128x128xf32> to vector<128x128xf32>
    %cst_25 = arith.constant dense<0.000000e+00> : vector<8x128xf32>
    %35 = tpu.matmul %32, %34, %cst_25 {dimension_numbers = #tpu.dot_dimension_numbers<[1], [0], [0], [1], [0, 0, 1, 1], [], []>} : vector<8x128xf32>, vector<128x128xf32>, vector<8x128xf32> -> vector<8x128xf32>
    %c1 = arith.constant 1 : index
    %c0_26 = arith.constant 0 : index
    %c0_27 = arith.constant 0 : index
    %36 = vector.load %arg10[%c1, %c0_26, %c0_27] : memref<3x128x128xf32, #tpu.memory_space<vmem>>, vector<1x128x128xf32>
    %37 = vector.shape_cast %36 : vector<1x128x128xf32> to vector<128x128xf32>
    %cst_28 = arith.constant dense<0.000000e+00> : vector<8x128xf32>
    %38 = tpu.matmul %31, %37, %cst_28 {dimension_numbers = #tpu.dot_dimension_numbers<[1], [0], [0], [1], [0, 0, 1, 1], [], []>} : vector<8x128xf32>, vector<128x128xf32>, vector<8x128xf32> -> vector<8x128xf32>
    %cst_29 = arith.constant dense<0.000000e+00> : vector<8x128xf32>
    %39 = tpu.matmul %3, %31, %cst_29 {dimension_numbers = #tpu.dot_dimension_numbers<[1], [0], [0], [1], [0, 0, 1, 1], [], []>} : vector<8x8xf32>, vector<8x128xf32>, vector<8x128xf32> -> vector<8x128xf32>
    %c2 = arith.constant 2 : index
    %c0_30 = arith.constant 0 : index
    %c0_31 = arith.constant 0 : index
    %40 = vector.load %arg10[%c2, %c0_30, %c0_31] : memref<3x128x128xf32, #tpu.memory_space<vmem>>, vector<1x128x128xf32>
    %41 = vector.shape_cast %40 : vector<1x128x128xf32> to vector<128x128xf32>
    %cst_32 = arith.constant dense<0.000000e+00> : vector<8x128xf32>
    %42 = tpu.matmul %39, %41, %cst_32 {dimension_numbers = #tpu.dot_dimension_numbers<[1], [0], [0], [1], [0, 0, 1, 1], [], []>} : vector<8x128xf32>, vector<128x128xf32>, vector<8x128xf32> -> vector<8x128xf32>
    %43 = arith.addf %35, %38 : vector<8x128xf32>
    %44 = arith.addf %43, %42 : vector<8x128xf32>
    %c0_33 = arith.constant 0 : index
    %c0_34 = arith.constant 0 : index
    %45 = vector.load %arg11[%c0_33, %c0_34] : memref<1x128xf32, #tpu.memory_space<vmem>>, vector<1x128xf32>
    %46 = vector.broadcast %45 : vector<1x128xf32> to vector<8x128xf32>
    %47 = arith.mulf %44, %46 : vector<8x128xf32>
    %c0_35 = arith.constant 0 : index
    %c0_36 = arith.constant 0 : index
    %48 = vector.load %arg12[%c0_35, %c0_36] : memref<1x128xf32, #tpu.memory_space<vmem>>, vector<1x128xf32>
    %49 = vector.broadcast %48 : vector<1x128xf32> to vector<8x128xf32>
    %50 = arith.addf %47, %49 : vector<8x128xf32>
    %51 = arith.negf %50 : vector<8x128xf32>
    %52 = math.exp %51 : vector<8x128xf32>
    %cst_37 = arith.constant 1.000000e+00 : f32
    %53 = vector.broadcast %cst_37 : f32 to vector<8x128xf32>
    %54 = arith.addf %53, %52 : vector<8x128xf32>
    %55 = arith.divf %53, %54 : vector<8x128xf32>
    %56 = arith.mulf %50, %55 : vector<8x128xf32>
    %c0_38 = arith.constant 0 : index
    %c0_39 = arith.constant 0 : index
    %57 = vector.load %arg13[%c0_38, %c0_39] : memref<128x64xf32, #tpu.memory_space<vmem>>, vector<128x64xf32>
    %cst_40 = arith.constant dense<0.000000e+00> : vector<8x64xf32>
    %58 = tpu.matmul %56, %57, %cst_40 {dimension_numbers = #tpu.dot_dimension_numbers<[1], [0], [0], [1], [0, 0, 1, 1], [], []>} : vector<8x128xf32>, vector<128x64xf32>, vector<8x64xf32> -> vector<8x64xf32>
    %c0_41 = arith.constant 0 : index
    %c0_42 = arith.constant 0 : index
    %59 = vector.load %arg14[%c0_41, %c0_42] : memref<1x64xf32, #tpu.memory_space<vmem>>, vector<1x64xf32>
    %60 = vector.broadcast %59 : vector<1x64xf32> to vector<8x64xf32>
    %61 = arith.mulf %58, %60 : vector<8x64xf32>
    %c0_43 = arith.constant 0 : index
    %c0_44 = arith.constant 0 : index
    %62 = vector.load %arg15[%c0_43, %c0_44] : memref<1x64xf32, #tpu.memory_space<vmem>>, vector<1x64xf32>
    %63 = vector.broadcast %62 : vector<1x64xf32> to vector<8x64xf32>
    %64 = arith.addf %61, %63 : vector<8x64xf32>
    %65 = arith.addf %64, %17 : vector<8x64xf32>
    %cst_45 = arith.constant dense<0.000000e+00> : vector<8x64xf32>
    %66 = tpu.matmul %2, %65, %cst_45 {dimension_numbers = #tpu.dot_dimension_numbers<[1], [0], [0], [1], [0, 0, 1, 1], [], []>} : vector<8x8xf32>, vector<8x64xf32>, vector<8x64xf32> -> vector<8x64xf32>
    %c0_46 = arith.constant 0 : index
    %c0_47 = arith.constant 0 : index
    %c0_48 = arith.constant 0 : index
    %67 = vector.load %arg16[%c0_46, %c0_47, %c0_48] : memref<3x64x64xf32, #tpu.memory_space<vmem>>, vector<1x64x64xf32>
    %68 = vector.shape_cast %67 : vector<1x64x64xf32> to vector<64x64xf32>
    %cst_49 = arith.constant dense<0.000000e+00> : vector<8x64xf32>
    %69 = tpu.matmul %66, %68, %cst_49 {dimension_numbers = #tpu.dot_dimension_numbers<[1], [0], [0], [1], [0, 0, 1, 1], [], []>} : vector<8x64xf32>, vector<64x64xf32>, vector<8x64xf32> -> vector<8x64xf32>
    %c1_50 = arith.constant 1 : index
    %c0_51 = arith.constant 0 : index
    %c0_52 = arith.constant 0 : index
    %70 = vector.load %arg16[%c1_50, %c0_51, %c0_52] : memref<3x64x64xf32, #tpu.memory_space<vmem>>, vector<1x64x64xf32>
    %71 = vector.shape_cast %70 : vector<1x64x64xf32> to vector<64x64xf32>
    %cst_53 = arith.constant dense<0.000000e+00> : vector<8x64xf32>
    %72 = tpu.matmul %65, %71, %cst_53 {dimension_numbers = #tpu.dot_dimension_numbers<[1], [0], [0], [1], [0, 0, 1, 1], [], []>} : vector<8x64xf32>, vector<64x64xf32>, vector<8x64xf32> -> vector<8x64xf32>
    %cst_54 = arith.constant dense<0.000000e+00> : vector<8x64xf32>
    %73 = tpu.matmul %3, %65, %cst_54 {dimension_numbers = #tpu.dot_dimension_numbers<[1], [0], [0], [1], [0, 0, 1, 1], [], []>} : vector<8x8xf32>, vector<8x64xf32>, vector<8x64xf32> -> vector<8x64xf32>
    %c2_55 = arith.constant 2 : index
    %c0_56 = arith.constant 0 : index
    %c0_57 = arith.constant 0 : index
    %74 = vector.load %arg16[%c2_55, %c0_56, %c0_57] : memref<3x64x64xf32, #tpu.memory_space<vmem>>, vector<1x64x64xf32>
    %75 = vector.shape_cast %74 : vector<1x64x64xf32> to vector<64x64xf32>
    %cst_58 = arith.constant dense<0.000000e+00> : vector<8x64xf32>
    %76 = tpu.matmul %73, %75, %cst_58 {dimension_numbers = #tpu.dot_dimension_numbers<[1], [0], [0], [1], [0, 0, 1, 1], [], []>} : vector<8x64xf32>, vector<64x64xf32>, vector<8x64xf32> -> vector<8x64xf32>
    %77 = arith.addf %69, %72 : vector<8x64xf32>
    %78 = arith.addf %77, %76 : vector<8x64xf32>
    %c0_59 = arith.constant 0 : index
    %c0_60 = arith.constant 0 : index
    %79 = vector.load %arg17[%c0_59, %c0_60] : memref<1x64xf32, #tpu.memory_space<vmem>>, vector<1x64xf32>
    %80 = vector.broadcast %79 : vector<1x64xf32> to vector<8x64xf32>
    %81 = arith.mulf %78, %80 : vector<8x64xf32>
    %c0_61 = arith.constant 0 : index
    %c0_62 = arith.constant 0 : index
    %82 = vector.load %arg18[%c0_61, %c0_62] : memref<1x64xf32, #tpu.memory_space<vmem>>, vector<1x64xf32>
    %83 = vector.broadcast %82 : vector<1x64xf32> to vector<8x64xf32>
    %84 = arith.addf %81, %83 : vector<8x64xf32>
    %85 = arith.negf %84 : vector<8x64xf32>
    %86 = math.exp %85 : vector<8x64xf32>
    %cst_63 = arith.constant 1.000000e+00 : f32
    %87 = vector.broadcast %cst_63 : f32 to vector<8x64xf32>
    %88 = arith.addf %87, %86 : vector<8x64xf32>
    %89 = arith.divf %87, %88 : vector<8x64xf32>
    %90 = arith.mulf %84, %89 : vector<8x64xf32>
    %c0_64 = arith.constant 0 : index
    %c0_65 = arith.constant 0 : index
    %91 = vector.load %arg19[%c0_64, %c0_65] : memref<64x128xf32, #tpu.memory_space<vmem>>, vector<64x128xf32>
    %cst_66 = arith.constant dense<0.000000e+00> : vector<8x128xf32>
    %92 = tpu.matmul %90, %91, %cst_66 {dimension_numbers = #tpu.dot_dimension_numbers<[1], [0], [0], [1], [0, 0, 1, 1], [], []>} : vector<8x64xf32>, vector<64x128xf32>, vector<8x128xf32> -> vector<8x128xf32>
    %c0_67 = arith.constant 0 : index
    %c0_68 = arith.constant 0 : index
    %93 = vector.load %arg20[%c0_67, %c0_68] : memref<1x128xf32, #tpu.memory_space<vmem>>, vector<1x128xf32>
    %94 = vector.broadcast %93 : vector<1x128xf32> to vector<8x128xf32>
    %95 = arith.mulf %92, %94 : vector<8x128xf32>
    %c0_69 = arith.constant 0 : index
    %c0_70 = arith.constant 0 : index
    %96 = vector.load %arg21[%c0_69, %c0_70] : memref<1x128xf32, #tpu.memory_space<vmem>>, vector<1x128xf32>
    %97 = vector.broadcast %96 : vector<1x128xf32> to vector<8x128xf32>
    %98 = arith.addf %95, %97 : vector<8x128xf32>
    %99 = arith.negf %98 : vector<8x128xf32>
    %100 = math.exp %99 : vector<8x128xf32>
    %cst_71 = arith.constant 1.000000e+00 : f32
    %101 = vector.broadcast %cst_71 : f32 to vector<8x128xf32>
    %102 = arith.addf %101, %100 : vector<8x128xf32>
    %103 = arith.divf %101, %102 : vector<8x128xf32>
    %104 = arith.mulf %98, %103 : vector<8x128xf32>
    %c0_72 = arith.constant 0 : index
    %c0_73 = arith.constant 0 : index
    %c0_74 = arith.constant 0 : index
    %105 = vector.load %arg22[%c0_72, %c0_73, %c0_74] : memref<1x8x64xf32, #tpu.memory_space<vmem>>, vector<1x8x64xf32>
    %106 = vector.shape_cast %105 : vector<1x8x64xf32> to vector<8x64xf32>
    %107 = vector.shape_cast %65 : vector<8x64xf32> to vector<1x8x64xf32>
    tpu.vector_store %arg22[%c0_72, %c0_73, %c0_74], %107 {strides = array<i32>} : memref<1x8x64xf32, #tpu.memory_space<vmem>>, vector<1x8x64xf32>,
    %c0_75 = arith.constant 0 : index
    %c0_76 = arith.constant 0 : index
    %c0_77 = arith.constant 0 : index
    %108 = vector.load %arg23[%c0_75, %c0_76, %c0_77] : memref<1x8x128xf32, #tpu.memory_space<vmem>>, vector<1x8x128xf32>
    %109 = vector.shape_cast %108 : vector<1x8x128xf32> to vector<8x128xf32>
    %110 = vector.shape_cast %104 : vector<8x128xf32> to vector<1x8x128xf32>
    tpu.vector_store %arg23[%c0_75, %c0_76, %c0_77], %110 {strides = array<i32>} : memref<1x8x128xf32, #tpu.memory_space<vmem>>, vector<1x8x128xf32>,
    return
  }
  func.func @transform_0(%arg0: i32) -> (i32, i32, i32) {
    %c0_i32 = arith.constant 0 : i32
    %c0_i32_0 = arith.constant 0 : i32
    %c0_i32_1 = arith.constant 0 : i32
    return %arg0, %c0_i32, %c0_i32_0 : i32, i32, i32
  }
  func.func @transform_1(%arg0: i32) -> (i32, i32) {
    %c0_i32 = arith.constant 0 : i32
    %c0_i32_0 = arith.constant 0 : i32
    %c0_i32_1 = arith.constant 0 : i32
    return %c0_i32, %c0_i32_0 : i32, i32
  }
  func.func @transform_2(%arg0: i32) -> (i32, i32) {
    %c0_i32 = arith.constant 0 : i32
    %c0_i32_0 = arith.constant 0 : i32
    %c0_i32_1 = arith.constant 0 : i32
    return %c0_i32, %c0_i32_0 : i32, i32
  }
  func.func @transform_3(%arg0: i32) -> (i32, i32) {
    %c0_i32 = arith.constant 0 : i32
    %c0_i32_0 = arith.constant 0 : i32
    %c0_i32_1 = arith.constant 0 : i32
    return %c0_i32, %c0_i32_0 : i32, i32
  }
  func.func @transform_4(%arg0: i32) -> (i32, i32) {
    %c0_i32 = arith.constant 0 : i32
    %c0_i32_0 = arith.constant 0 : i32
    %c0_i32_1 = arith.constant 0 : i32
    return %c0_i32, %c0_i32_0 : i32, i32
  }
  func.func @transform_5(%arg0: i32) -> (i32, i32) {
    %c0_i32 = arith.constant 0 : i32
    %c0_i32_0 = arith.constant 0 : i32
    %c0_i32_1 = arith.constant 0 : i32
    return %c0_i32, %c0_i32_0 : i32, i32
  }
  func.func @transform_6(%arg0: i32) -> (i32, i32) {
    %c0_i32 = arith.constant 0 : i32
    %c0_i32_0 = arith.constant 0 : i32
    %c0_i32_1 = arith.constant 0 : i32
    return %c0_i32, %c0_i32_0 : i32, i32
  }
  func.func @transform_7(%arg0: i32) -> (i32, i32) {
    %c0_i32 = arith.constant 0 : i32
    %c0_i32_0 = arith.constant 0 : i32
    %c0_i32_1 = arith.constant 0 : i32
    return %c0_i32, %c0_i32_0 : i32, i32
  }
  func.func @transform_8(%arg0: i32) -> (i32, i32) {
    %c0_i32 = arith.constant 0 : i32
    %c0_i32_0 = arith.constant 0 : i32
    %c0_i32_1 = arith.constant 0 : i32
    return %c0_i32, %c0_i32_0 : i32, i32
  }
  func.func @transform_9(%arg0: i32) -> (i32, i32, i32) {
    %c0_i32 = arith.constant 0 : i32
    %c0_i32_0 = arith.constant 0 : i32
    %c0_i32_1 = arith.constant 0 : i32
    %c0_i32_2 = arith.constant 0 : i32
    return %c0_i32, %c0_i32_0, %c0_i32_1 : i32, i32, i32
  }
  func.func @transform_10(%arg0: i32) -> (i32, i32) {
    %c0_i32 = arith.constant 0 : i32
    %c0_i32_0 = arith.constant 0 : i32
    %c0_i32_1 = arith.constant 0 : i32
    return %c0_i32, %c0_i32_0 : i32, i32
  }
  func.func @transform_11(%arg0: i32) -> (i32, i32) {
    %c0_i32 = arith.constant 0 : i32
    %c0_i32_0 = arith.constant 0 : i32
    %c0_i32_1 = arith.constant 0 : i32
    return %c0_i32, %c0_i32_0 : i32, i32
  }
  func.func @transform_12(%arg0: i32) -> (i32, i32) {
    %c0_i32 = arith.constant 0 : i32
    %c0_i32_0 = arith.constant 0 : i32
    %c0_i32_1 = arith.constant 0 : i32
    return %c0_i32, %c0_i32_0 : i32, i32
  }
  func.func @transform_13(%arg0: i32) -> (i32, i32) {
    %c0_i32 = arith.constant 0 : i32
    %c0_i32_0 = arith.constant 0 : i32
    %c0_i32_1 = arith.constant 0 : i32
    return %c0_i32, %c0_i32_0 : i32, i32
  }
  func.func @transform_14(%arg0: i32) -> (i32, i32) {
    %c0_i32 = arith.constant 0 : i32
    %c0_i32_0 = arith.constant 0 : i32
    %c0_i32_1 = arith.constant 0 : i32
    return %c0_i32, %c0_i32_0 : i32, i32
  }
  func.func @transform_15(%arg0: i32) -> (i32, i32, i32) {
    %c0_i32 = arith.constant 0 : i32
    %c0_i32_0 = arith.constant 0 : i32
    %c0_i32_1 = arith.constant 0 : i32
    %c0_i32_2 = arith.constant 0 : i32
    return %c0_i32, %c0_i32_0, %c0_i32_1 : i32, i32, i32
  }
  func.func @transform_16(%arg0: i32) -> (i32, i32) {
    %c0_i32 = arith.constant 0 : i32
    %c0_i32_0 = arith.constant 0 : i32
    %c0_i32_1 = arith.constant 0 : i32
    return %c0_i32, %c0_i32_0 : i32, i32
  }
  func.func @transform_17(%arg0: i32) -> (i32, i32) {
    %c0_i32 = arith.constant 0 : i32
    %c0_i32_0 = arith.constant 0 : i32
    %c0_i32_1 = arith.constant 0 : i32
    return %c0_i32, %c0_i32_0 : i32, i32
  }
  func.func @transform_18(%arg0: i32) -> (i32, i32) {
    %c0_i32 = arith.constant 0 : i32
    %c0_i32_0 = arith.constant 0 : i32
    %c0_i32_1 = arith.constant 0 : i32
    return %c0_i32, %c0_i32_0 : i32, i32
  }
  func.func @transform_19(%arg0: i32) -> (i32, i32) {
    %c0_i32 = arith.constant 0 : i32
    %c0_i32_0 = arith.constant 0 : i32
    %c0_i32_1 = arith.constant 0 : i32
    return %c0_i32, %c0_i32_0 : i32, i32
  }
  func.func @transform_20(%arg0: i32) -> (i32, i32) {
    %c0_i32 = arith.constant 0 : i32
    %c0_i32_0 = arith.constant 0 : i32
    %c0_i32_1 = arith.constant 0 : i32
    return %c0_i32, %c0_i32_0 : i32, i32
  }
  func.func @transform_21(%arg0: i32) -> (i32, i32, i32) {
    %c0_i32 = arith.constant 0 : i32
    %c0_i32_0 = arith.constant 0 : i32
    %c0_i32_1 = arith.constant 0 : i32
    return %arg0, %c0_i32, %c0_i32_0 : i32, i32, i32
  }
  func.func @transform_22(%arg0: i32) -> (i32, i32, i32) {
    %c0_i32 = arith.constant 0 : i32
    %c0_i32_0 = arith.constant 0 : i32
    %c0_i32_1 = arith.constant 0 : i32
    return %arg0, %c0_i32, %c0_i32_0 : i32, i32, i32
  }
}

module attributes {stable_mosaic.version = 11 : i64} {
  func.func @_transformer_kernel(%arg0: i32, %arg1: memref<1x4x16x16xf32, #tpu.memory_space<vmem>>, %arg2: memref<1x16xf32, #tpu.memory_space<vmem>>, %arg3: memref<1x16xf32, #tpu.memory_space<vmem>>, %arg4: memref<4x16x8xf32, #tpu.memory_space<vmem>>, %arg5: memref<4x16x8xf32, #tpu.memory_space<vmem>>, %arg6: memref<4x16x8xf32, #tpu.memory_space<vmem>>, %arg7: memref<4x8x16xf32, #tpu.memory_space<vmem>>, %arg8: memref<1x16xf32, #tpu.memory_space<vmem>>, %arg9: memref<1x16xf32, #tpu.memory_space<vmem>>, %arg10: memref<1x16xf32, #tpu.memory_space<vmem>>, %arg11: memref<16x32xf32, #tpu.memory_space<vmem>>, %arg12: memref<1x32xf32, #tpu.memory_space<vmem>>, %arg13: memref<32x16xf32, #tpu.memory_space<vmem>>, %arg14: memref<1x16xf32, #tpu.memory_space<vmem>>, %arg15: memref<16x8xf32, #tpu.memory_space<vmem>>, %arg16: memref<1x8xf32, #tpu.memory_space<vmem>>, %arg17: memref<1x8xf32, #tpu.memory_space<vmem>>, %arg18: memref<1x4x16x8xf32, #tpu.memory_space<vmem>>) attributes {dimension_semantics = [#tpu.dimension_semantics<parallel>], iteration_bounds = array<i64: 2>, scalar_prefetch = 0 : i64, scratch_operands = 0 : i64, tpu.core_type = #tpu.core_type<tc>, window_params = [{transform_indices = @transform_0, window_bounds = array<i64: 1, 4, 16, 16>}, {pipeline_mode = #tpu.pipeline_mode<synchronous>, transform_indices = @transform_1, window_bounds = array<i64: 1, 16>}, {pipeline_mode = #tpu.pipeline_mode<synchronous>, transform_indices = @transform_2, window_bounds = array<i64: 1, 16>}, {pipeline_mode = #tpu.pipeline_mode<synchronous>, transform_indices = @transform_3, window_bounds = array<i64: 4, 16, 8>}, {pipeline_mode = #tpu.pipeline_mode<synchronous>, transform_indices = @transform_4, window_bounds = array<i64: 4, 16, 8>}, {pipeline_mode = #tpu.pipeline_mode<synchronous>, transform_indices = @transform_5, window_bounds = array<i64: 4, 16, 8>}, {pipeline_mode = #tpu.pipeline_mode<synchronous>, transform_indices = @transform_6, window_bounds = array<i64: 4, 8, 16>}, {pipeline_mode = #tpu.pipeline_mode<synchronous>, transform_indices = @transform_7, window_bounds = array<i64: 1, 16>}, {pipeline_mode = #tpu.pipeline_mode<synchronous>, transform_indices = @transform_8, window_bounds = array<i64: 1, 16>}, {pipeline_mode = #tpu.pipeline_mode<synchronous>, transform_indices = @transform_9, window_bounds = array<i64: 1, 16>}, {pipeline_mode = #tpu.pipeline_mode<synchronous>, transform_indices = @transform_10, window_bounds = array<i64: 16, 32>}, {pipeline_mode = #tpu.pipeline_mode<synchronous>, transform_indices = @transform_11, window_bounds = array<i64: 1, 32>}, {pipeline_mode = #tpu.pipeline_mode<synchronous>, transform_indices = @transform_12, window_bounds = array<i64: 32, 16>}, {pipeline_mode = #tpu.pipeline_mode<synchronous>, transform_indices = @transform_13, window_bounds = array<i64: 1, 16>}, {pipeline_mode = #tpu.pipeline_mode<synchronous>, transform_indices = @transform_14, window_bounds = array<i64: 16, 8>}, {pipeline_mode = #tpu.pipeline_mode<synchronous>, transform_indices = @transform_15, window_bounds = array<i64: 1, 8>}, {pipeline_mode = #tpu.pipeline_mode<synchronous>, transform_indices = @transform_16, window_bounds = array<i64: 1, 8>}, {transform_indices = @transform_17, window_bounds = array<i64: 1, 4, 16, 8>}]} {
    %c0 = arith.constant 0 : index
    %c0_0 = arith.constant 0 : index
    %c0_1 = arith.constant 0 : index
    %c0_2 = arith.constant 0 : index
    %0 = vector.load %arg1[%c0, %c0_0, %c0_1, %c0_2] : memref<1x4x16x16xf32, #tpu.memory_space<vmem>>, vector<1x4x16x16xf32>
    %1 = vector.shape_cast %0 : vector<1x4x16x16xf32> to vector<4x16x16xf32>
    %2 = vector.shape_cast %1 : vector<4x16x16xf32> to vector<64x16xf32>
    %c0_3 = arith.constant 0 : index
    %c0_4 = arith.constant 0 : index
    %3 = vector.load %arg2[%c0_3, %c0_4] : memref<1x16xf32, #tpu.memory_space<vmem>>, vector<1x16xf32>
    %c0_5 = arith.constant 0 : index
    %c0_6 = arith.constant 0 : index
    %4 = vector.load %arg3[%c0_5, %c0_6] : memref<1x16xf32, #tpu.memory_space<vmem>>, vector<1x16xf32>
    %cst = arith.constant dense<0.000000e+00> : vector<64xf32>
    %5 = vector.multi_reduction <add>, %2, %cst [1] : vector<64x16xf32> to vector<64xf32>
    %6 = vector.shape_cast %5 : vector<64xf32> to vector<64x1xf32>
    %cst_7 = arith.constant 1.600000e+01 : f32
    %7 = vector.broadcast %cst_7 : f32 to vector<64x1xf32>
    %8 = arith.divf %6, %7 : vector<64x1xf32>
    %9 = vector.broadcast %8 : vector<64x1xf32> to vector<64x16xf32>
    %10 = arith.subf %2, %9 : vector<64x16xf32>
    %11 = arith.mulf %10, %10 : vector<64x16xf32>
    %cst_8 = arith.constant dense<0.000000e+00> : vector<64xf32>
    %12 = vector.multi_reduction <add>, %11, %cst_8 [1] : vector<64x16xf32> to vector<64xf32>
    %13 = vector.shape_cast %12 : vector<64xf32> to vector<64x1xf32>
    %cst_9 = arith.constant 1.600000e+01 : f32
    %14 = vector.broadcast %cst_9 : f32 to vector<64x1xf32>
    %15 = arith.divf %13, %14 : vector<64x1xf32>
    %cst_10 = arith.constant 9.99999974E-6 : f32
    %16 = vector.broadcast %cst_10 : f32 to vector<64x1xf32>
    %17 = arith.addf %15, %16 : vector<64x1xf32>
    %18 = math.rsqrt %17 : vector<64x1xf32>
    %19 = vector.broadcast %18 : vector<64x1xf32> to vector<64x16xf32>
    %20 = arith.mulf %10, %19 : vector<64x16xf32>
    %21 = vector.broadcast %3 : vector<1x16xf32> to vector<64x16xf32>
    %22 = arith.mulf %20, %21 : vector<64x16xf32>
    %23 = vector.broadcast %4 : vector<1x16xf32> to vector<64x16xf32>
    %24 = arith.addf %22, %23 : vector<64x16xf32>
    %c0_11 = arith.constant 0 : index
    %c0_12 = arith.constant 0 : index
    %25 = vector.load %arg8[%c0_11, %c0_12] : memref<1x16xf32, #tpu.memory_space<vmem>>, vector<1x16xf32>
    %26 = vector.broadcast %25 : vector<1x16xf32> to vector<64x16xf32>
    %27 = arith.addf %2, %26 : vector<64x16xf32>
    %c0_13 = arith.constant 0 : index
    %c0_14 = arith.constant 0 : index
    %c0_15 = arith.constant 0 : index
    %28 = vector.load %arg4[%c0_13, %c0_14, %c0_15] : memref<4x16x8xf32, #tpu.memory_space<vmem>>, vector<1x16x8xf32>
    %29 = vector.shape_cast %28 : vector<1x16x8xf32> to vector<16x8xf32>
    %cst_16 = arith.constant dense<0.000000e+00> : vector<64x8xf32>
    %30 = tpu.matmul %24, %29, %cst_16 {dimension_numbers = #tpu.dot_dimension_numbers<[1], [0], [0], [1], [0, 0, 1, 1], [], []>} : vector<64x16xf32>, vector<16x8xf32>, vector<64x8xf32> -> vector<64x8xf32>
    %c0_17 = arith.constant 0 : index
    %c0_18 = arith.constant 0 : index
    %c0_19 = arith.constant 0 : index
    %31 = vector.load %arg5[%c0_17, %c0_18, %c0_19] : memref<4x16x8xf32, #tpu.memory_space<vmem>>, vector<1x16x8xf32>
    %32 = vector.shape_cast %31 : vector<1x16x8xf32> to vector<16x8xf32>
    %cst_20 = arith.constant dense<0.000000e+00> : vector<64x8xf32>
    %33 = tpu.matmul %24, %32, %cst_20 {dimension_numbers = #tpu.dot_dimension_numbers<[1], [0], [0], [1], [0, 0, 1, 1], [], []>} : vector<64x16xf32>, vector<16x8xf32>, vector<64x8xf32> -> vector<64x8xf32>
    %c0_21 = arith.constant 0 : index
    %c0_22 = arith.constant 0 : index
    %c0_23 = arith.constant 0 : index
    %34 = vector.load %arg6[%c0_21, %c0_22, %c0_23] : memref<4x16x8xf32, #tpu.memory_space<vmem>>, vector<1x16x8xf32>
    %35 = vector.shape_cast %34 : vector<1x16x8xf32> to vector<16x8xf32>
    %cst_24 = arith.constant dense<0.000000e+00> : vector<64x8xf32>
    %36 = tpu.matmul %24, %35, %cst_24 {dimension_numbers = #tpu.dot_dimension_numbers<[1], [0], [0], [1], [0, 0, 1, 1], [], []>} : vector<64x16xf32>, vector<16x8xf32>, vector<64x8xf32> -> vector<64x8xf32>
    %37 = vector.shape_cast %30 : vector<64x8xf32> to vector<4x16x8xf32>
    %38 = vector.shape_cast %33 : vector<64x8xf32> to vector<4x16x8xf32>
    %39 = vector.shape_cast %36 : vector<64x8xf32> to vector<4x16x8xf32>
    "tpu.trace_start"() <{level = 10 : i32, message = "pqd,pkd->pqk"}> : () -> ()
    %cst_25 = arith.constant dense<0.000000e+00> : vector<4x16x16xf32>
    %40 = tpu.matmul %37, %38, %cst_25 {dimension_numbers = #tpu.dot_dimension_numbers<[2], [2], [1], [1], [0, 0, 0, 1, 1, 1], [0], [0]>} : vector<4x16x8xf32>, vector<4x16x8xf32>, vector<4x16x16xf32> -> vector<4x16x16xf32>
    "tpu.trace_stop"() : () -> ()
    %cst_26 = arith.constant 0.353553385 : f32
    %41 = vector.broadcast %cst_26 : f32 to vector<4x16x16xf32>
    %42 = arith.mulf %40, %41 : vector<4x16x16xf32>
    %cst_27 = arith.constant dense<0xFF800000> : vector<4x16xf32>
    %43 = vector.multi_reduction <maximumf>, %42, %cst_27 [2] : vector<4x16x16xf32> to vector<4x16xf32>
    %44 = vector.shape_cast %43 : vector<4x16xf32> to vector<4x16x1xf32>
    %45 = vector.broadcast %44 : vector<4x16x1xf32> to vector<4x16x16xf32>
    %46 = arith.subf %42, %45 : vector<4x16x16xf32>
    %47 = math.exp %46 : vector<4x16x16xf32>
    %cst_28 = arith.constant dense<0.000000e+00> : vector<4x16xf32>
    %48 = vector.multi_reduction <add>, %47, %cst_28 [2] : vector<4x16x16xf32> to vector<4x16xf32>
    %49 = vector.shape_cast %48 : vector<4x16xf32> to vector<4x16x1xf32>
    %50 = vector.broadcast %49 : vector<4x16x1xf32> to vector<4x16x16xf32>
    %51 = arith.divf %47, %50 : vector<4x16x16xf32>
    "tpu.trace_start"() <{level = 10 : i32, message = "pqk,pkd->pqd"}> : () -> ()
    %cst_29 = arith.constant dense<0.000000e+00> : vector<4x16x8xf32>
    %52 = tpu.matmul %51, %39, %cst_29 {dimension_numbers = #tpu.dot_dimension_numbers<[2], [1], [1], [2], [0, 0, 0, 1, 1, 2], [0], [0]>} : vector<4x16x16xf32>, vector<4x16x8xf32>, vector<4x16x8xf32> -> vector<4x16x8xf32>
    "tpu.trace_stop"() : () -> ()
    %53 = vector.shape_cast %52 : vector<4x16x8xf32> to vector<64x8xf32>
    %c0_30 = arith.constant 0 : index
    %c0_31 = arith.constant 0 : index
    %c0_32 = arith.constant 0 : index
    %54 = vector.load %arg7[%c0_30, %c0_31, %c0_32] : memref<4x8x16xf32, #tpu.memory_space<vmem>>, vector<1x8x16xf32>
    %55 = vector.shape_cast %54 : vector<1x8x16xf32> to vector<8x16xf32>
    %cst_33 = arith.constant dense<0.000000e+00> : vector<64x16xf32>
    %56 = tpu.matmul %53, %55, %cst_33 {dimension_numbers = #tpu.dot_dimension_numbers<[1], [0], [0], [1], [0, 0, 1, 1], [], []>} : vector<64x8xf32>, vector<8x16xf32>, vector<64x16xf32> -> vector<64x16xf32>
    %57 = arith.addf %27, %56 : vector<64x16xf32>
    %c1 = arith.constant 1 : index
    %c0_34 = arith.constant 0 : index
    %c0_35 = arith.constant 0 : index
    %58 = vector.load %arg4[%c1, %c0_34, %c0_35] : memref<4x16x8xf32, #tpu.memory_space<vmem>>, vector<1x16x8xf32>
    %59 = vector.shape_cast %58 : vector<1x16x8xf32> to vector<16x8xf32>
    %cst_36 = arith.constant dense<0.000000e+00> : vector<64x8xf32>
    %60 = tpu.matmul %24, %59, %cst_36 {dimension_numbers = #tpu.dot_dimension_numbers<[1], [0], [0], [1], [0, 0, 1, 1], [], []>} : vector<64x16xf32>, vector<16x8xf32>, vector<64x8xf32> -> vector<64x8xf32>
    %c1_37 = arith.constant 1 : index
    %c0_38 = arith.constant 0 : index
    %c0_39 = arith.constant 0 : index
    %61 = vector.load %arg5[%c1_37, %c0_38, %c0_39] : memref<4x16x8xf32, #tpu.memory_space<vmem>>, vector<1x16x8xf32>
    %62 = vector.shape_cast %61 : vector<1x16x8xf32> to vector<16x8xf32>
    %cst_40 = arith.constant dense<0.000000e+00> : vector<64x8xf32>
    %63 = tpu.matmul %24, %62, %cst_40 {dimension_numbers = #tpu.dot_dimension_numbers<[1], [0], [0], [1], [0, 0, 1, 1], [], []>} : vector<64x16xf32>, vector<16x8xf32>, vector<64x8xf32> -> vector<64x8xf32>
    %c1_41 = arith.constant 1 : index
    %c0_42 = arith.constant 0 : index
    %c0_43 = arith.constant 0 : index
    %64 = vector.load %arg6[%c1_41, %c0_42, %c0_43] : memref<4x16x8xf32, #tpu.memory_space<vmem>>, vector<1x16x8xf32>
    %65 = vector.shape_cast %64 : vector<1x16x8xf32> to vector<16x8xf32>
    %cst_44 = arith.constant dense<0.000000e+00> : vector<64x8xf32>
    %66 = tpu.matmul %24, %65, %cst_44 {dimension_numbers = #tpu.dot_dimension_numbers<[1], [0], [0], [1], [0, 0, 1, 1], [], []>} : vector<64x16xf32>, vector<16x8xf32>, vector<64x8xf32> -> vector<64x8xf32>
    %67 = vector.shape_cast %60 : vector<64x8xf32> to vector<4x16x8xf32>
    %68 = vector.shape_cast %63 : vector<64x8xf32> to vector<4x16x8xf32>
    %69 = vector.shape_cast %66 : vector<64x8xf32> to vector<4x16x8xf32>
    "tpu.trace_start"() <{level = 10 : i32, message = "pqd,pkd->pqk"}> : () -> ()
    %cst_45 = arith.constant dense<0.000000e+00> : vector<4x16x16xf32>
    %70 = tpu.matmul %67, %68, %cst_45 {dimension_numbers = #tpu.dot_dimension_numbers<[2], [2], [1], [1], [0, 0, 0, 1, 1, 1], [0], [0]>} : vector<4x16x8xf32>, vector<4x16x8xf32>, vector<4x16x16xf32> -> vector<4x16x16xf32>
    "tpu.trace_stop"() : () -> ()
    %cst_46 = arith.constant 0.353553385 : f32
    %71 = vector.broadcast %cst_46 : f32 to vector<4x16x16xf32>
    %72 = arith.mulf %70, %71 : vector<4x16x16xf32>
    %cst_47 = arith.constant dense<0xFF800000> : vector<4x16xf32>
    %73 = vector.multi_reduction <maximumf>, %72, %cst_47 [2] : vector<4x16x16xf32> to vector<4x16xf32>
    %74 = vector.shape_cast %73 : vector<4x16xf32> to vector<4x16x1xf32>
    %75 = vector.broadcast %74 : vector<4x16x1xf32> to vector<4x16x16xf32>
    %76 = arith.subf %72, %75 : vector<4x16x16xf32>
    %77 = math.exp %76 : vector<4x16x16xf32>
    %cst_48 = arith.constant dense<0.000000e+00> : vector<4x16xf32>
    %78 = vector.multi_reduction <add>, %77, %cst_48 [2] : vector<4x16x16xf32> to vector<4x16xf32>
    %79 = vector.shape_cast %78 : vector<4x16xf32> to vector<4x16x1xf32>
    %80 = vector.broadcast %79 : vector<4x16x1xf32> to vector<4x16x16xf32>
    %81 = arith.divf %77, %80 : vector<4x16x16xf32>
    "tpu.trace_start"() <{level = 10 : i32, message = "pqk,pkd->pqd"}> : () -> ()
    %cst_49 = arith.constant dense<0.000000e+00> : vector<4x16x8xf32>
    %82 = tpu.matmul %81, %69, %cst_49 {dimension_numbers = #tpu.dot_dimension_numbers<[2], [1], [1], [2], [0, 0, 0, 1, 1, 2], [0], [0]>} : vector<4x16x16xf32>, vector<4x16x8xf32>, vector<4x16x8xf32> -> vector<4x16x8xf32>
    "tpu.trace_stop"() : () -> ()
    %83 = vector.shape_cast %82 : vector<4x16x8xf32> to vector<64x8xf32>
    %c1_50 = arith.constant 1 : index
    %c0_51 = arith.constant 0 : index
    %c0_52 = arith.constant 0 : index
    %84 = vector.load %arg7[%c1_50, %c0_51, %c0_52] : memref<4x8x16xf32, #tpu.memory_space<vmem>>, vector<1x8x16xf32>
    %85 = vector.shape_cast %84 : vector<1x8x16xf32> to vector<8x16xf32>
    %cst_53 = arith.constant dense<0.000000e+00> : vector<64x16xf32>
    %86 = tpu.matmul %83, %85, %cst_53 {dimension_numbers = #tpu.dot_dimension_numbers<[1], [0], [0], [1], [0, 0, 1, 1], [], []>} : vector<64x8xf32>, vector<8x16xf32>, vector<64x16xf32> -> vector<64x16xf32>
    %87 = arith.addf %57, %86 : vector<64x16xf32>
    %c2 = arith.constant 2 : index
    %c0_54 = arith.constant 0 : index
    %c0_55 = arith.constant 0 : index
    %88 = vector.load %arg4[%c2, %c0_54, %c0_55] : memref<4x16x8xf32, #tpu.memory_space<vmem>>, vector<1x16x8xf32>
    %89 = vector.shape_cast %88 : vector<1x16x8xf32> to vector<16x8xf32>
    %cst_56 = arith.constant dense<0.000000e+00> : vector<64x8xf32>
    %90 = tpu.matmul %24, %89, %cst_56 {dimension_numbers = #tpu.dot_dimension_numbers<[1], [0], [0], [1], [0, 0, 1, 1], [], []>} : vector<64x16xf32>, vector<16x8xf32>, vector<64x8xf32> -> vector<64x8xf32>
    %c2_57 = arith.constant 2 : index
    %c0_58 = arith.constant 0 : index
    %c0_59 = arith.constant 0 : index
    %91 = vector.load %arg5[%c2_57, %c0_58, %c0_59] : memref<4x16x8xf32, #tpu.memory_space<vmem>>, vector<1x16x8xf32>
    %92 = vector.shape_cast %91 : vector<1x16x8xf32> to vector<16x8xf32>
    %cst_60 = arith.constant dense<0.000000e+00> : vector<64x8xf32>
    %93 = tpu.matmul %24, %92, %cst_60 {dimension_numbers = #tpu.dot_dimension_numbers<[1], [0], [0], [1], [0, 0, 1, 1], [], []>} : vector<64x16xf32>, vector<16x8xf32>, vector<64x8xf32> -> vector<64x8xf32>
    %c2_61 = arith.constant 2 : index
    %c0_62 = arith.constant 0 : index
    %c0_63 = arith.constant 0 : index
    %94 = vector.load %arg6[%c2_61, %c0_62, %c0_63] : memref<4x16x8xf32, #tpu.memory_space<vmem>>, vector<1x16x8xf32>
    %95 = vector.shape_cast %94 : vector<1x16x8xf32> to vector<16x8xf32>
    %cst_64 = arith.constant dense<0.000000e+00> : vector<64x8xf32>
    %96 = tpu.matmul %24, %95, %cst_64 {dimension_numbers = #tpu.dot_dimension_numbers<[1], [0], [0], [1], [0, 0, 1, 1], [], []>} : vector<64x16xf32>, vector<16x8xf32>, vector<64x8xf32> -> vector<64x8xf32>
    %97 = vector.shape_cast %90 : vector<64x8xf32> to vector<4x16x8xf32>
    %98 = vector.shape_cast %93 : vector<64x8xf32> to vector<4x16x8xf32>
    %99 = vector.shape_cast %96 : vector<64x8xf32> to vector<4x16x8xf32>
    "tpu.trace_start"() <{level = 10 : i32, message = "pqd,pkd->pqk"}> : () -> ()
    %cst_65 = arith.constant dense<0.000000e+00> : vector<4x16x16xf32>
    %100 = tpu.matmul %97, %98, %cst_65 {dimension_numbers = #tpu.dot_dimension_numbers<[2], [2], [1], [1], [0, 0, 0, 1, 1, 1], [0], [0]>} : vector<4x16x8xf32>, vector<4x16x8xf32>, vector<4x16x16xf32> -> vector<4x16x16xf32>
    "tpu.trace_stop"() : () -> ()
    %cst_66 = arith.constant 0.353553385 : f32
    %101 = vector.broadcast %cst_66 : f32 to vector<4x16x16xf32>
    %102 = arith.mulf %100, %101 : vector<4x16x16xf32>
    %cst_67 = arith.constant dense<0xFF800000> : vector<4x16xf32>
    %103 = vector.multi_reduction <maximumf>, %102, %cst_67 [2] : vector<4x16x16xf32> to vector<4x16xf32>
    %104 = vector.shape_cast %103 : vector<4x16xf32> to vector<4x16x1xf32>
    %105 = vector.broadcast %104 : vector<4x16x1xf32> to vector<4x16x16xf32>
    %106 = arith.subf %102, %105 : vector<4x16x16xf32>
    %107 = math.exp %106 : vector<4x16x16xf32>
    %cst_68 = arith.constant dense<0.000000e+00> : vector<4x16xf32>
    %108 = vector.multi_reduction <add>, %107, %cst_68 [2] : vector<4x16x16xf32> to vector<4x16xf32>
    %109 = vector.shape_cast %108 : vector<4x16xf32> to vector<4x16x1xf32>
    %110 = vector.broadcast %109 : vector<4x16x1xf32> to vector<4x16x16xf32>
    %111 = arith.divf %107, %110 : vector<4x16x16xf32>
    "tpu.trace_start"() <{level = 10 : i32, message = "pqk,pkd->pqd"}> : () -> ()
    %cst_69 = arith.constant dense<0.000000e+00> : vector<4x16x8xf32>
    %112 = tpu.matmul %111, %99, %cst_69 {dimension_numbers = #tpu.dot_dimension_numbers<[2], [1], [1], [2], [0, 0, 0, 1, 1, 2], [0], [0]>} : vector<4x16x16xf32>, vector<4x16x8xf32>, vector<4x16x8xf32> -> vector<4x16x8xf32>
    "tpu.trace_stop"() : () -> ()
    %113 = vector.shape_cast %112 : vector<4x16x8xf32> to vector<64x8xf32>
    %c2_70 = arith.constant 2 : index
    %c0_71 = arith.constant 0 : index
    %c0_72 = arith.constant 0 : index
    %114 = vector.load %arg7[%c2_70, %c0_71, %c0_72] : memref<4x8x16xf32, #tpu.memory_space<vmem>>, vector<1x8x16xf32>
    %115 = vector.shape_cast %114 : vector<1x8x16xf32> to vector<8x16xf32>
    %cst_73 = arith.constant dense<0.000000e+00> : vector<64x16xf32>
    %116 = tpu.matmul %113, %115, %cst_73 {dimension_numbers = #tpu.dot_dimension_numbers<[1], [0], [0], [1], [0, 0, 1, 1], [], []>} : vector<64x8xf32>, vector<8x16xf32>, vector<64x16xf32> -> vector<64x16xf32>
    %117 = arith.addf %87, %116 : vector<64x16xf32>
    %c3 = arith.constant 3 : index
    %c0_74 = arith.constant 0 : index
    %c0_75 = arith.constant 0 : index
    %118 = vector.load %arg4[%c3, %c0_74, %c0_75] : memref<4x16x8xf32, #tpu.memory_space<vmem>>, vector<1x16x8xf32>
    %119 = vector.shape_cast %118 : vector<1x16x8xf32> to vector<16x8xf32>
    %cst_76 = arith.constant dense<0.000000e+00> : vector<64x8xf32>
    %120 = tpu.matmul %24, %119, %cst_76 {dimension_numbers = #tpu.dot_dimension_numbers<[1], [0], [0], [1], [0, 0, 1, 1], [], []>} : vector<64x16xf32>, vector<16x8xf32>, vector<64x8xf32> -> vector<64x8xf32>
    %c3_77 = arith.constant 3 : index
    %c0_78 = arith.constant 0 : index
    %c0_79 = arith.constant 0 : index
    %121 = vector.load %arg5[%c3_77, %c0_78, %c0_79] : memref<4x16x8xf32, #tpu.memory_space<vmem>>, vector<1x16x8xf32>
    %122 = vector.shape_cast %121 : vector<1x16x8xf32> to vector<16x8xf32>
    %cst_80 = arith.constant dense<0.000000e+00> : vector<64x8xf32>
    %123 = tpu.matmul %24, %122, %cst_80 {dimension_numbers = #tpu.dot_dimension_numbers<[1], [0], [0], [1], [0, 0, 1, 1], [], []>} : vector<64x16xf32>, vector<16x8xf32>, vector<64x8xf32> -> vector<64x8xf32>
    %c3_81 = arith.constant 3 : index
    %c0_82 = arith.constant 0 : index
    %c0_83 = arith.constant 0 : index
    %124 = vector.load %arg6[%c3_81, %c0_82, %c0_83] : memref<4x16x8xf32, #tpu.memory_space<vmem>>, vector<1x16x8xf32>
    %125 = vector.shape_cast %124 : vector<1x16x8xf32> to vector<16x8xf32>
    %cst_84 = arith.constant dense<0.000000e+00> : vector<64x8xf32>
    %126 = tpu.matmul %24, %125, %cst_84 {dimension_numbers = #tpu.dot_dimension_numbers<[1], [0], [0], [1], [0, 0, 1, 1], [], []>} : vector<64x16xf32>, vector<16x8xf32>, vector<64x8xf32> -> vector<64x8xf32>
    %127 = vector.shape_cast %120 : vector<64x8xf32> to vector<4x16x8xf32>
    %128 = vector.shape_cast %123 : vector<64x8xf32> to vector<4x16x8xf32>
    %129 = vector.shape_cast %126 : vector<64x8xf32> to vector<4x16x8xf32>
    "tpu.trace_start"() <{level = 10 : i32, message = "pqd,pkd->pqk"}> : () -> ()
    %cst_85 = arith.constant dense<0.000000e+00> : vector<4x16x16xf32>
    %130 = tpu.matmul %127, %128, %cst_85 {dimension_numbers = #tpu.dot_dimension_numbers<[2], [2], [1], [1], [0, 0, 0, 1, 1, 1], [0], [0]>} : vector<4x16x8xf32>, vector<4x16x8xf32>, vector<4x16x16xf32> -> vector<4x16x16xf32>
    "tpu.trace_stop"() : () -> ()
    %cst_86 = arith.constant 0.353553385 : f32
    %131 = vector.broadcast %cst_86 : f32 to vector<4x16x16xf32>
    %132 = arith.mulf %130, %131 : vector<4x16x16xf32>
    %cst_87 = arith.constant dense<0xFF800000> : vector<4x16xf32>
    %133 = vector.multi_reduction <maximumf>, %132, %cst_87 [2] : vector<4x16x16xf32> to vector<4x16xf32>
    %134 = vector.shape_cast %133 : vector<4x16xf32> to vector<4x16x1xf32>
    %135 = vector.broadcast %134 : vector<4x16x1xf32> to vector<4x16x16xf32>
    %136 = arith.subf %132, %135 : vector<4x16x16xf32>
    %137 = math.exp %136 : vector<4x16x16xf32>
    %cst_88 = arith.constant dense<0.000000e+00> : vector<4x16xf32>
    %138 = vector.multi_reduction <add>, %137, %cst_88 [2] : vector<4x16x16xf32> to vector<4x16xf32>
    %139 = vector.shape_cast %138 : vector<4x16xf32> to vector<4x16x1xf32>
    %140 = vector.broadcast %139 : vector<4x16x1xf32> to vector<4x16x16xf32>
    %141 = arith.divf %137, %140 : vector<4x16x16xf32>
    "tpu.trace_start"() <{level = 10 : i32, message = "pqk,pkd->pqd"}> : () -> ()
    %cst_89 = arith.constant dense<0.000000e+00> : vector<4x16x8xf32>
    %142 = tpu.matmul %141, %129, %cst_89 {dimension_numbers = #tpu.dot_dimension_numbers<[2], [1], [1], [2], [0, 0, 0, 1, 1, 2], [0], [0]>} : vector<4x16x16xf32>, vector<4x16x8xf32>, vector<4x16x8xf32> -> vector<4x16x8xf32>
    "tpu.trace_stop"() : () -> ()
    %143 = vector.shape_cast %142 : vector<4x16x8xf32> to vector<64x8xf32>
    %c3_90 = arith.constant 3 : index
    %c0_91 = arith.constant 0 : index
    %c0_92 = arith.constant 0 : index
    %144 = vector.load %arg7[%c3_90, %c0_91, %c0_92] : memref<4x8x16xf32, #tpu.memory_space<vmem>>, vector<1x8x16xf32>
    %145 = vector.shape_cast %144 : vector<1x8x16xf32> to vector<8x16xf32>
    %cst_93 = arith.constant dense<0.000000e+00> : vector<64x16xf32>
    %146 = tpu.matmul %143, %145, %cst_93 {dimension_numbers = #tpu.dot_dimension_numbers<[1], [0], [0], [1], [0, 0, 1, 1], [], []>} : vector<64x8xf32>, vector<8x16xf32>, vector<64x16xf32> -> vector<64x16xf32>
    %147 = arith.addf %117, %146 : vector<64x16xf32>
    %c0_94 = arith.constant 0 : index
    %c0_95 = arith.constant 0 : index
    %148 = vector.load %arg9[%c0_94, %c0_95] : memref<1x16xf32, #tpu.memory_space<vmem>>, vector<1x16xf32>
    %c0_96 = arith.constant 0 : index
    %c0_97 = arith.constant 0 : index
    %149 = vector.load %arg10[%c0_96, %c0_97] : memref<1x16xf32, #tpu.memory_space<vmem>>, vector<1x16xf32>
    %cst_98 = arith.constant dense<0.000000e+00> : vector<64xf32>
    %150 = vector.multi_reduction <add>, %147, %cst_98 [1] : vector<64x16xf32> to vector<64xf32>
    %151 = vector.shape_cast %150 : vector<64xf32> to vector<64x1xf32>
    %cst_99 = arith.constant 1.600000e+01 : f32
    %152 = vector.broadcast %cst_99 : f32 to vector<64x1xf32>
    %153 = arith.divf %151, %152 : vector<64x1xf32>
    %154 = vector.broadcast %153 : vector<64x1xf32> to vector<64x16xf32>
    %155 = arith.subf %147, %154 : vector<64x16xf32>
    %156 = arith.mulf %155, %155 : vector<64x16xf32>
    %cst_100 = arith.constant dense<0.000000e+00> : vector<64xf32>
    %157 = vector.multi_reduction <add>, %156, %cst_100 [1] : vector<64x16xf32> to vector<64xf32>
    %158 = vector.shape_cast %157 : vector<64xf32> to vector<64x1xf32>
    %cst_101 = arith.constant 1.600000e+01 : f32
    %159 = vector.broadcast %cst_101 : f32 to vector<64x1xf32>
    %160 = arith.divf %158, %159 : vector<64x1xf32>
    %cst_102 = arith.constant 9.99999974E-6 : f32
    %161 = vector.broadcast %cst_102 : f32 to vector<64x1xf32>
    %162 = arith.addf %160, %161 : vector<64x1xf32>
    %163 = math.rsqrt %162 : vector<64x1xf32>
    %164 = vector.broadcast %163 : vector<64x1xf32> to vector<64x16xf32>
    %165 = arith.mulf %155, %164 : vector<64x16xf32>
    %166 = vector.broadcast %148 : vector<1x16xf32> to vector<64x16xf32>
    %167 = arith.mulf %165, %166 : vector<64x16xf32>
    %168 = vector.broadcast %149 : vector<1x16xf32> to vector<64x16xf32>
    %169 = arith.addf %167, %168 : vector<64x16xf32>
    %c0_103 = arith.constant 0 : index
    %c0_104 = arith.constant 0 : index
    %170 = vector.load %arg11[%c0_103, %c0_104] : memref<16x32xf32, #tpu.memory_space<vmem>>, vector<16x32xf32>
    %cst_105 = arith.constant dense<0.000000e+00> : vector<64x32xf32>
    %171 = tpu.matmul %169, %170, %cst_105 {dimension_numbers = #tpu.dot_dimension_numbers<[1], [0], [0], [1], [0, 0, 1, 1], [], []>} : vector<64x16xf32>, vector<16x32xf32>, vector<64x32xf32> -> vector<64x32xf32>
    %c0_106 = arith.constant 0 : index
    %c0_107 = arith.constant 0 : index
    %172 = vector.load %arg12[%c0_106, %c0_107] : memref<1x32xf32, #tpu.memory_space<vmem>>, vector<1x32xf32>
    %173 = vector.broadcast %172 : vector<1x32xf32> to vector<64x32xf32>
    %174 = arith.addf %171, %173 : vector<64x32xf32>
    %175 = arith.negf %174 : vector<64x32xf32>
    %176 = math.exp %175 : vector<64x32xf32>
    %cst_108 = arith.constant 1.000000e+00 : f32
    %177 = vector.broadcast %cst_108 : f32 to vector<64x32xf32>
    %178 = arith.addf %177, %176 : vector<64x32xf32>
    %179 = arith.divf %177, %178 : vector<64x32xf32>
    %180 = arith.mulf %174, %179 : vector<64x32xf32>
    %c0_109 = arith.constant 0 : index
    %c0_110 = arith.constant 0 : index
    %181 = vector.load %arg13[%c0_109, %c0_110] : memref<32x16xf32, #tpu.memory_space<vmem>>, vector<32x16xf32>
    %cst_111 = arith.constant dense<0.000000e+00> : vector<64x16xf32>
    %182 = tpu.matmul %180, %181, %cst_111 {dimension_numbers = #tpu.dot_dimension_numbers<[1], [0], [0], [1], [0, 0, 1, 1], [], []>} : vector<64x32xf32>, vector<32x16xf32>, vector<64x16xf32> -> vector<64x16xf32>
    %183 = arith.addf %147, %182 : vector<64x16xf32>
    %c0_112 = arith.constant 0 : index
    %c0_113 = arith.constant 0 : index
    %184 = vector.load %arg14[%c0_112, %c0_113] : memref<1x16xf32, #tpu.memory_space<vmem>>, vector<1x16xf32>
    %185 = vector.broadcast %184 : vector<1x16xf32> to vector<64x16xf32>
    %186 = arith.addf %183, %185 : vector<64x16xf32>
    %c0_114 = arith.constant 0 : index
    %c0_115 = arith.constant 0 : index
    %187 = vector.load %arg15[%c0_114, %c0_115] : memref<16x8xf32, #tpu.memory_space<vmem>>, vector<16x8xf32>
    %cst_116 = arith.constant dense<0.000000e+00> : vector<64x8xf32>
    %188 = tpu.matmul %186, %187, %cst_116 {dimension_numbers = #tpu.dot_dimension_numbers<[1], [0], [0], [1], [0, 0, 1, 1], [], []>} : vector<64x16xf32>, vector<16x8xf32>, vector<64x8xf32> -> vector<64x8xf32>
    %c0_117 = arith.constant 0 : index
    %c0_118 = arith.constant 0 : index
    %189 = vector.load %arg16[%c0_117, %c0_118] : memref<1x8xf32, #tpu.memory_space<vmem>>, vector<1x8xf32>
    %190 = vector.broadcast %189 : vector<1x8xf32> to vector<64x8xf32>
    %191 = arith.mulf %188, %190 : vector<64x8xf32>
    %c0_119 = arith.constant 0 : index
    %c0_120 = arith.constant 0 : index
    %192 = vector.load %arg17[%c0_119, %c0_120] : memref<1x8xf32, #tpu.memory_space<vmem>>, vector<1x8xf32>
    %193 = vector.broadcast %192 : vector<1x8xf32> to vector<64x8xf32>
    %194 = arith.addf %191, %193 : vector<64x8xf32>
    %195 = arith.negf %194 : vector<64x8xf32>
    %196 = math.exp %195 : vector<64x8xf32>
    %cst_121 = arith.constant 1.000000e+00 : f32
    %197 = vector.broadcast %cst_121 : f32 to vector<64x8xf32>
    %198 = arith.addf %197, %196 : vector<64x8xf32>
    %199 = arith.divf %197, %198 : vector<64x8xf32>
    %200 = arith.mulf %194, %199 : vector<64x8xf32>
    %201 = vector.shape_cast %200 : vector<64x8xf32> to vector<4x16x8xf32>
    %c0_122 = arith.constant 0 : index
    %c0_123 = arith.constant 0 : index
    %c0_124 = arith.constant 0 : index
    %c0_125 = arith.constant 0 : index
    %202 = vector.load %arg18[%c0_122, %c0_123, %c0_124, %c0_125] : memref<1x4x16x8xf32, #tpu.memory_space<vmem>>, vector<1x4x16x8xf32>
    %203 = vector.shape_cast %202 : vector<1x4x16x8xf32> to vector<4x16x8xf32>
    %204 = vector.shape_cast %201 : vector<4x16x8xf32> to vector<1x4x16x8xf32>
    tpu.vector_store %arg18[%c0_122, %c0_123, %c0_124, %c0_125], %204 {strides = array<i32>} : memref<1x4x16x8xf32, #tpu.memory_space<vmem>>, vector<1x4x16x8xf32>,
    return
  }
  func.func @transform_0(%arg0: i32) -> (i32, i32, i32, i32) {
    %c0_i32 = arith.constant 0 : i32
    %c0_i32_0 = arith.constant 0 : i32
    %c0_i32_1 = arith.constant 0 : i32
    %c0_i32_2 = arith.constant 0 : i32
    return %arg0, %c0_i32, %c0_i32_0, %c0_i32_1 : i32, i32, i32, i32
  }
  func.func @transform_1(%arg0: i32) -> (i32, i32) {
    %c0_i32 = arith.constant 0 : i32
    %c0_i32_0 = arith.constant 0 : i32
    %c0_i32_1 = arith.constant 0 : i32
    return %c0_i32, %c0_i32_0 : i32, i32
  }
  func.func @transform_2(%arg0: i32) -> (i32, i32) {
    %c0_i32 = arith.constant 0 : i32
    %c0_i32_0 = arith.constant 0 : i32
    %c0_i32_1 = arith.constant 0 : i32
    return %c0_i32, %c0_i32_0 : i32, i32
  }
  func.func @transform_3(%arg0: i32) -> (i32, i32, i32) {
    %c0_i32 = arith.constant 0 : i32
    %c0_i32_0 = arith.constant 0 : i32
    %c0_i32_1 = arith.constant 0 : i32
    %c0_i32_2 = arith.constant 0 : i32
    return %c0_i32, %c0_i32_0, %c0_i32_1 : i32, i32, i32
  }
  func.func @transform_4(%arg0: i32) -> (i32, i32, i32) {
    %c0_i32 = arith.constant 0 : i32
    %c0_i32_0 = arith.constant 0 : i32
    %c0_i32_1 = arith.constant 0 : i32
    %c0_i32_2 = arith.constant 0 : i32
    return %c0_i32, %c0_i32_0, %c0_i32_1 : i32, i32, i32
  }
  func.func @transform_5(%arg0: i32) -> (i32, i32, i32) {
    %c0_i32 = arith.constant 0 : i32
    %c0_i32_0 = arith.constant 0 : i32
    %c0_i32_1 = arith.constant 0 : i32
    %c0_i32_2 = arith.constant 0 : i32
    return %c0_i32, %c0_i32_0, %c0_i32_1 : i32, i32, i32
  }
  func.func @transform_6(%arg0: i32) -> (i32, i32, i32) {
    %c0_i32 = arith.constant 0 : i32
    %c0_i32_0 = arith.constant 0 : i32
    %c0_i32_1 = arith.constant 0 : i32
    %c0_i32_2 = arith.constant 0 : i32
    return %c0_i32, %c0_i32_0, %c0_i32_1 : i32, i32, i32
  }
  func.func @transform_7(%arg0: i32) -> (i32, i32) {
    %c0_i32 = arith.constant 0 : i32
    %c0_i32_0 = arith.constant 0 : i32
    %c0_i32_1 = arith.constant 0 : i32
    return %c0_i32, %c0_i32_0 : i32, i32
  }
  func.func @transform_8(%arg0: i32) -> (i32, i32) {
    %c0_i32 = arith.constant 0 : i32
    %c0_i32_0 = arith.constant 0 : i32
    %c0_i32_1 = arith.constant 0 : i32
    return %c0_i32, %c0_i32_0 : i32, i32
  }
  func.func @transform_9(%arg0: i32) -> (i32, i32) {
    %c0_i32 = arith.constant 0 : i32
    %c0_i32_0 = arith.constant 0 : i32
    %c0_i32_1 = arith.constant 0 : i32
    return %c0_i32, %c0_i32_0 : i32, i32
  }
  func.func @transform_10(%arg0: i32) -> (i32, i32) {
    %c0_i32 = arith.constant 0 : i32
    %c0_i32_0 = arith.constant 0 : i32
    %c0_i32_1 = arith.constant 0 : i32
    return %c0_i32, %c0_i32_0 : i32, i32
  }
  func.func @transform_11(%arg0: i32) -> (i32, i32) {
    %c0_i32 = arith.constant 0 : i32
    %c0_i32_0 = arith.constant 0 : i32
    %c0_i32_1 = arith.constant 0 : i32
    return %c0_i32, %c0_i32_0 : i32, i32
  }
  func.func @transform_12(%arg0: i32) -> (i32, i32) {
    %c0_i32 = arith.constant 0 : i32
    %c0_i32_0 = arith.constant 0 : i32
    %c0_i32_1 = arith.constant 0 : i32
    return %c0_i32, %c0_i32_0 : i32, i32
  }
  func.func @transform_13(%arg0: i32) -> (i32, i32) {
    %c0_i32 = arith.constant 0 : i32
    %c0_i32_0 = arith.constant 0 : i32
    %c0_i32_1 = arith.constant 0 : i32
    return %c0_i32, %c0_i32_0 : i32, i32
  }
  func.func @transform_14(%arg0: i32) -> (i32, i32) {
    %c0_i32 = arith.constant 0 : i32
    %c0_i32_0 = arith.constant 0 : i32
    %c0_i32_1 = arith.constant 0 : i32
    return %c0_i32, %c0_i32_0 : i32, i32
  }
  func.func @transform_15(%arg0: i32) -> (i32, i32) {
    %c0_i32 = arith.constant 0 : i32
    %c0_i32_0 = arith.constant 0 : i32
    %c0_i32_1 = arith.constant 0 : i32
    return %c0_i32, %c0_i32_0 : i32, i32
  }
  func.func @transform_16(%arg0: i32) -> (i32, i32) {
    %c0_i32 = arith.constant 0 : i32
    %c0_i32_0 = arith.constant 0 : i32
    %c0_i32_1 = arith.constant 0 : i32
    return %c0_i32, %c0_i32_0 : i32, i32
  }
  func.func @transform_17(%arg0: i32) -> (i32, i32, i32, i32) {
    %c0_i32 = arith.constant 0 : i32
    %c0_i32_0 = arith.constant 0 : i32
    %c0_i32_1 = arith.constant 0 : i32
    %c0_i32_2 = arith.constant 0 : i32
    return %arg0, %c0_i32, %c0_i32_0, %c0_i32_1 : i32, i32, i32, i32
  }
}

module attributes {stable_mosaic.version = 11 : i64} {
  func.func @_tail_kernel(%arg0: i32, %arg1: memref<1x8x128xf32, #tpu.memory_space<vmem>>, %arg2: memref<8x8xf32, #tpu.memory_space<vmem>>, %arg3: memref<8x8xf32, #tpu.memory_space<vmem>>, %arg4: memref<3x128x64xf32, #tpu.memory_space<vmem>>, %arg5: memref<1x64xf32, #tpu.memory_space<vmem>>, %arg6: memref<1x64xf32, #tpu.memory_space<vmem>>, %arg7: memref<64x128xf32, #tpu.memory_space<vmem>>, %arg8: memref<1x128xf32, #tpu.memory_space<vmem>>, %arg9: memref<1x128xf32, #tpu.memory_space<vmem>>, %arg10: memref<128x5xf32, #tpu.memory_space<vmem>>, %arg11: memref<1x5xf32, #tpu.memory_space<vmem>>, %arg12: memref<1x1x5xf32, #tpu.memory_space<vmem>>) attributes {dimension_semantics = [#tpu.dimension_semantics<parallel>], iteration_bounds = array<i64: 2>, scalar_prefetch = 0 : i64, scratch_operands = 0 : i64, tpu.core_type = #tpu.core_type<tc>, window_params = [{transform_indices = @transform_0, window_bounds = array<i64: 1, 8, 128>}, {pipeline_mode = #tpu.pipeline_mode<synchronous>, transform_indices = @transform_1, window_bounds = array<i64: 8, 8>}, {pipeline_mode = #tpu.pipeline_mode<synchronous>, transform_indices = @transform_2, window_bounds = array<i64: 8, 8>}, {pipeline_mode = #tpu.pipeline_mode<synchronous>, transform_indices = @transform_3, window_bounds = array<i64: 3, 128, 64>}, {pipeline_mode = #tpu.pipeline_mode<synchronous>, transform_indices = @transform_4, window_bounds = array<i64: 1, 64>}, {pipeline_mode = #tpu.pipeline_mode<synchronous>, transform_indices = @transform_5, window_bounds = array<i64: 1, 64>}, {pipeline_mode = #tpu.pipeline_mode<synchronous>, transform_indices = @transform_6, window_bounds = array<i64: 64, 128>}, {pipeline_mode = #tpu.pipeline_mode<synchronous>, transform_indices = @transform_7, window_bounds = array<i64: 1, 128>}, {pipeline_mode = #tpu.pipeline_mode<synchronous>, transform_indices = @transform_8, window_bounds = array<i64: 1, 128>}, {pipeline_mode = #tpu.pipeline_mode<synchronous>, transform_indices = @transform_9, window_bounds = array<i64: 128, 5>}, {pipeline_mode = #tpu.pipeline_mode<synchronous>, transform_indices = @transform_10, window_bounds = array<i64: 1, 5>}, {transform_indices = @transform_11, window_bounds = array<i64: 1, 1, 5>}]} {
    %c0 = arith.constant 0 : index
    %c0_0 = arith.constant 0 : index
    %c0_1 = arith.constant 0 : index
    %0 = vector.load %arg1[%c0, %c0_0, %c0_1] : memref<1x8x128xf32, #tpu.memory_space<vmem>>, vector<1x8x128xf32>
    %1 = vector.shape_cast %0 : vector<1x8x128xf32> to vector<8x128xf32>
    %c0_2 = arith.constant 0 : index
    %c0_3 = arith.constant 0 : index
    %2 = vector.load %arg2[%c0_2, %c0_3] : memref<8x8xf32, #tpu.memory_space<vmem>>, vector<8x8xf32>
    %c0_4 = arith.constant 0 : index
    %c0_5 = arith.constant 0 : index
    %3 = vector.load %arg3[%c0_4, %c0_5] : memref<8x8xf32, #tpu.memory_space<vmem>>, vector<8x8xf32>
    %cst = arith.constant dense<0.000000e+00> : vector<8x128xf32>
    %4 = tpu.matmul %2, %1, %cst {dimension_numbers = #tpu.dot_dimension_numbers<[1], [0], [0], [1], [0, 0, 1, 1], [], []>} : vector<8x8xf32>, vector<8x128xf32>, vector<8x128xf32> -> vector<8x128xf32>
    %c0_6 = arith.constant 0 : index
    %c0_7 = arith.constant 0 : index
    %c0_8 = arith.constant 0 : index
    %5 = vector.load %arg4[%c0_6, %c0_7, %c0_8] : memref<3x128x64xf32, #tpu.memory_space<vmem>>, vector<1x128x64xf32>
    %6 = vector.shape_cast %5 : vector<1x128x64xf32> to vector<128x64xf32>
    %cst_9 = arith.constant dense<0.000000e+00> : vector<8x64xf32>
    %7 = tpu.matmul %4, %6, %cst_9 {dimension_numbers = #tpu.dot_dimension_numbers<[1], [0], [0], [1], [0, 0, 1, 1], [], []>} : vector<8x128xf32>, vector<128x64xf32>, vector<8x64xf32> -> vector<8x64xf32>
    %c1 = arith.constant 1 : index
    %c0_10 = arith.constant 0 : index
    %c0_11 = arith.constant 0 : index
    %8 = vector.load %arg4[%c1, %c0_10, %c0_11] : memref<3x128x64xf32, #tpu.memory_space<vmem>>, vector<1x128x64xf32>
    %9 = vector.shape_cast %8 : vector<1x128x64xf32> to vector<128x64xf32>
    %cst_12 = arith.constant dense<0.000000e+00> : vector<8x64xf32>
    %10 = tpu.matmul %1, %9, %cst_12 {dimension_numbers = #tpu.dot_dimension_numbers<[1], [0], [0], [1], [0, 0, 1, 1], [], []>} : vector<8x128xf32>, vector<128x64xf32>, vector<8x64xf32> -> vector<8x64xf32>
    %cst_13 = arith.constant dense<0.000000e+00> : vector<8x128xf32>
    %11 = tpu.matmul %3, %1, %cst_13 {dimension_numbers = #tpu.dot_dimension_numbers<[1], [0], [0], [1], [0, 0, 1, 1], [], []>} : vector<8x8xf32>, vector<8x128xf32>, vector<8x128xf32> -> vector<8x128xf32>
    %c2 = arith.constant 2 : index
    %c0_14 = arith.constant 0 : index
    %c0_15 = arith.constant 0 : index
    %12 = vector.load %arg4[%c2, %c0_14, %c0_15] : memref<3x128x64xf32, #tpu.memory_space<vmem>>, vector<1x128x64xf32>
    %13 = vector.shape_cast %12 : vector<1x128x64xf32> to vector<128x64xf32>
    %cst_16 = arith.constant dense<0.000000e+00> : vector<8x64xf32>
    %14 = tpu.matmul %11, %13, %cst_16 {dimension_numbers = #tpu.dot_dimension_numbers<[1], [0], [0], [1], [0, 0, 1, 1], [], []>} : vector<8x128xf32>, vector<128x64xf32>, vector<8x64xf32> -> vector<8x64xf32>
    %15 = arith.addf %7, %10 : vector<8x64xf32>
    %16 = arith.addf %15, %14 : vector<8x64xf32>
    %c0_17 = arith.constant 0 : index
    %c0_18 = arith.constant 0 : index
    %17 = vector.load %arg5[%c0_17, %c0_18] : memref<1x64xf32, #tpu.memory_space<vmem>>, vector<1x64xf32>
    %18 = vector.broadcast %17 : vector<1x64xf32> to vector<8x64xf32>
    %19 = arith.mulf %16, %18 : vector<8x64xf32>
    %c0_19 = arith.constant 0 : index
    %c0_20 = arith.constant 0 : index
    %20 = vector.load %arg6[%c0_19, %c0_20] : memref<1x64xf32, #tpu.memory_space<vmem>>, vector<1x64xf32>
    %21 = vector.broadcast %20 : vector<1x64xf32> to vector<8x64xf32>
    %22 = arith.addf %19, %21 : vector<8x64xf32>
    %23 = arith.negf %22 : vector<8x64xf32>
    %24 = math.exp %23 : vector<8x64xf32>
    %cst_21 = arith.constant 1.000000e+00 : f32
    %25 = vector.broadcast %cst_21 : f32 to vector<8x64xf32>
    %26 = arith.addf %25, %24 : vector<8x64xf32>
    %27 = arith.divf %25, %26 : vector<8x64xf32>
    %28 = arith.mulf %22, %27 : vector<8x64xf32>
    %c0_22 = arith.constant 0 : index
    %c0_23 = arith.constant 0 : index
    %29 = vector.load %arg7[%c0_22, %c0_23] : memref<64x128xf32, #tpu.memory_space<vmem>>, vector<64x128xf32>
    %cst_24 = arith.constant dense<0.000000e+00> : vector<8x128xf32>
    %30 = tpu.matmul %28, %29, %cst_24 {dimension_numbers = #tpu.dot_dimension_numbers<[1], [0], [0], [1], [0, 0, 1, 1], [], []>} : vector<8x64xf32>, vector<64x128xf32>, vector<8x128xf32> -> vector<8x128xf32>
    %c0_25 = arith.constant 0 : index
    %c0_26 = arith.constant 0 : index
    %31 = vector.load %arg8[%c0_25, %c0_26] : memref<1x128xf32, #tpu.memory_space<vmem>>, vector<1x128xf32>
    %32 = vector.broadcast %31 : vector<1x128xf32> to vector<8x128xf32>
    %33 = arith.mulf %30, %32 : vector<8x128xf32>
    %c0_27 = arith.constant 0 : index
    %c0_28 = arith.constant 0 : index
    %34 = vector.load %arg9[%c0_27, %c0_28] : memref<1x128xf32, #tpu.memory_space<vmem>>, vector<1x128xf32>
    %35 = vector.broadcast %34 : vector<1x128xf32> to vector<8x128xf32>
    %36 = arith.addf %33, %35 : vector<8x128xf32>
    %37 = arith.negf %36 : vector<8x128xf32>
    %38 = math.exp %37 : vector<8x128xf32>
    %cst_29 = arith.constant 1.000000e+00 : f32
    %39 = vector.broadcast %cst_29 : f32 to vector<8x128xf32>
    %40 = arith.addf %39, %38 : vector<8x128xf32>
    %41 = arith.divf %39, %40 : vector<8x128xf32>
    %42 = arith.mulf %36, %41 : vector<8x128xf32>
    %cst_30 = arith.constant dense<0.000000e+00> : vector<128xf32>
    %43 = vector.multi_reduction <add>, %42, %cst_30 [0] : vector<8x128xf32> to vector<128xf32>
    %44 = vector.shape_cast %43 : vector<128xf32> to vector<1x128xf32>
    %cst_31 = arith.constant 8.000000e+00 : f32
    %45 = vector.broadcast %cst_31 : f32 to vector<1x128xf32>
    %46 = arith.divf %44, %45 : vector<1x128xf32>
    %c0_32 = arith.constant 0 : index
    %c0_33 = arith.constant 0 : index
    %47 = vector.load %arg10[%c0_32, %c0_33] : memref<128x5xf32, #tpu.memory_space<vmem>>, vector<128x5xf32>
    %cst_34 = arith.constant dense<0.000000e+00> : vector<1x5xf32>
    %48 = tpu.matmul %46, %47, %cst_34 {dimension_numbers = #tpu.dot_dimension_numbers<[1], [0], [0], [1], [0, 0, 1, 1], [], []>} : vector<1x128xf32>, vector<128x5xf32>, vector<1x5xf32> -> vector<1x5xf32>
    %c0_35 = arith.constant 0 : index
    %c0_36 = arith.constant 0 : index
    %49 = vector.load %arg11[%c0_35, %c0_36] : memref<1x5xf32, #tpu.memory_space<vmem>>, vector<1x5xf32>
    %50 = arith.addf %48, %49 : vector<1x5xf32>
    %cst_37 = arith.constant dense<0xFF800000> : vector<1xf32>
    %51 = vector.multi_reduction <maximumf>, %50, %cst_37 [1] : vector<1x5xf32> to vector<1xf32>
    %52 = vector.shape_cast %51 : vector<1xf32> to vector<1x1xf32>
    %53 = vector.broadcast %52 : vector<1x1xf32> to vector<1x5xf32>
    %54 = arith.subf %50, %53 : vector<1x5xf32>
    %55 = math.exp %54 : vector<1x5xf32>
    %cst_38 = arith.constant dense<0.000000e+00> : vector<1xf32>
    %56 = vector.multi_reduction <add>, %55, %cst_38 [1] : vector<1x5xf32> to vector<1xf32>
    %57 = vector.shape_cast %56 : vector<1xf32> to vector<1x1xf32>
    %58 = vector.broadcast %57 : vector<1x1xf32> to vector<1x5xf32>
    %59 = arith.divf %55, %58 : vector<1x5xf32>
    %c0_39 = arith.constant 0 : index
    %c0_40 = arith.constant 0 : index
    %c0_41 = arith.constant 0 : index
    %60 = vector.load %arg12[%c0_39, %c0_40, %c0_41] : memref<1x1x5xf32, #tpu.memory_space<vmem>>, vector<1x1x5xf32>
    %61 = vector.shape_cast %60 : vector<1x1x5xf32> to vector<1x5xf32>
    %62 = vector.shape_cast %59 : vector<1x5xf32> to vector<1x1x5xf32>
    tpu.vector_store %arg12[%c0_39, %c0_40, %c0_41], %62 {strides = array<i32>} : memref<1x1x5xf32, #tpu.memory_space<vmem>>, vector<1x1x5xf32>,
    return
  }
  func.func @transform_0(%arg0: i32) -> (i32, i32, i32) {
    %c0_i32 = arith.constant 0 : i32
    %c0_i32_0 = arith.constant 0 : i32
    %c0_i32_1 = arith.constant 0 : i32
    return %arg0, %c0_i32, %c0_i32_0 : i32, i32, i32
  }
  func.func @transform_1(%arg0: i32) -> (i32, i32) {
    %c0_i32 = arith.constant 0 : i32
    %c0_i32_0 = arith.constant 0 : i32
    %c0_i32_1 = arith.constant 0 : i32
    return %c0_i32, %c0_i32_0 : i32, i32
  }
  func.func @transform_2(%arg0: i32) -> (i32, i32) {
    %c0_i32 = arith.constant 0 : i32
    %c0_i32_0 = arith.constant 0 : i32
    %c0_i32_1 = arith.constant 0 : i32
    return %c0_i32, %c0_i32_0 : i32, i32
  }
  func.func @transform_3(%arg0: i32) -> (i32, i32, i32) {
    %c0_i32 = arith.constant 0 : i32
    %c0_i32_0 = arith.constant 0 : i32
    %c0_i32_1 = arith.constant 0 : i32
    %c0_i32_2 = arith.constant 0 : i32
    return %c0_i32, %c0_i32_0, %c0_i32_1 : i32, i32, i32
  }
  func.func @transform_4(%arg0: i32) -> (i32, i32) {
    %c0_i32 = arith.constant 0 : i32
    %c0_i32_0 = arith.constant 0 : i32
    %c0_i32_1 = arith.constant 0 : i32
    return %c0_i32, %c0_i32_0 : i32, i32
  }
  func.func @transform_5(%arg0: i32) -> (i32, i32) {
    %c0_i32 = arith.constant 0 : i32
    %c0_i32_0 = arith.constant 0 : i32
    %c0_i32_1 = arith.constant 0 : i32
    return %c0_i32, %c0_i32_0 : i32, i32
  }
  func.func @transform_6(%arg0: i32) -> (i32, i32) {
    %c0_i32 = arith.constant 0 : i32
    %c0_i32_0 = arith.constant 0 : i32
    %c0_i32_1 = arith.constant 0 : i32
    return %c0_i32, %c0_i32_0 : i32, i32
  }
  func.func @transform_7(%arg0: i32) -> (i32, i32) {
    %c0_i32 = arith.constant 0 : i32
    %c0_i32_0 = arith.constant 0 : i32
    %c0_i32_1 = arith.constant 0 : i32
    return %c0_i32, %c0_i32_0 : i32, i32
  }
  func.func @transform_8(%arg0: i32) -> (i32, i32) {
    %c0_i32 = arith.constant 0 : i32
    %c0_i32_0 = arith.constant 0 : i32
    %c0_i32_1 = arith.constant 0 : i32
    return %c0_i32, %c0_i32_0 : i32, i32
  }
  func.func @transform_9(%arg0: i32) -> (i32, i32) {
    %c0_i32 = arith.constant 0 : i32
    %c0_i32_0 = arith.constant 0 : i32
    %c0_i32_1 = arith.constant 0 : i32
    return %c0_i32, %c0_i32_0 : i32, i32
  }
  func.func @transform_10(%arg0: i32) -> (i32, i32) {
    %c0_i32 = arith.constant 0 : i32
    %c0_i32_0 = arith.constant 0 : i32
    %c0_i32_1 = arith.constant 0 : i32
    return %c0_i32, %c0_i32_0 : i32, i32
  }
  func.func @transform_11(%arg0: i32) -> (i32, i32, i32) {
    %c0_i32 = arith.constant 0 : i32
    %c0_i32_0 = arith.constant 0 : i32
    %c0_i32_1 = arith.constant 0 : i32
    return %arg0, %c0_i32, %c0_i32_0 : i32, i32, i32
  }
}

</mosaic_0001>

<llo_original>
// kernel: customvit_forward.3
$region0: #{customvit_forward.3}
  #allocation0 [shape = 'u32[]', space=smem, size = 0x4, offset = 0x4, fixed_abs, tag = 'smem constant byte address 0x4 - core index']
  #allocation1 [shape = 'u32[144,128]{1,0:T(1,128)}', space=vmem, size = 0x12000, scoped, tag = 'internal scratch']
  %s0 = inlined_call_operand.vmem [shape: f32[2,8,216], index: 0, kind: input, shape index: {}]
  %s1 = inlined_call_operand.vmem [shape: f32[8,8], index: 1, kind: input, shape index: {}]
  %s2 = inlined_call_operand.vmem [shape: f32[8,8], index: 2, kind: input, shape index: {}]
  %s3 = inlined_call_operand.vmem [shape: f32[216,64], index: 3, kind: input, shape index: {}]
  %s4 = inlined_call_operand.vmem [shape: f32[1,64], index: 4, kind: input, shape index: {}]
  %s5 = inlined_call_operand.vmem [shape: f32[1,64], index: 5, kind: input, shape index: {}]
  %s6 = inlined_call_operand.vmem [shape: f32[64,128], index: 6, kind: input, shape index: {}]
  %s7 = inlined_call_operand.vmem [shape: f32[1,128], index: 7, kind: input, shape index: {}]
  %s8 = inlined_call_operand.vmem [shape: f32[1,128], index: 8, kind: input, shape index: {}]
  %s9 = inlined_call_operand.vmem [shape: f32[3,128,128], index: 9, kind: input, shape index: {}]
  %s10 = inlined_call_operand.vmem [shape: f32[1,128], index: 10, kind: input, shape index: {}]
  %s11 = inlined_call_operand.vmem [shape: f32[1,128], index: 11, kind: input, shape index: {}]
  %s12 = inlined_call_operand.vmem [shape: f32[128,64], index: 12, kind: input, shape index: {}]
  %s13 = inlined_call_operand.vmem [shape: f32[1,64], index: 13, kind: input, shape index: {}]
  %s14 = inlined_call_operand.vmem [shape: f32[1,64], index: 14, kind: input, shape index: {}]
  %s15 = inlined_call_operand.vmem [shape: f32[3,64,64], index: 15, kind: input, shape index: {}]
  %s16 = inlined_call_operand.vmem [shape: f32[1,64], index: 16, kind: input, shape index: {}]
  %s17 = inlined_call_operand.vmem [shape: f32[1,64], index: 17, kind: input, shape index: {}]
  %s18 = inlined_call_operand.vmem [shape: f32[64,128], index: 18, kind: input, shape index: {}]
  %s19 = inlined_call_operand.vmem [shape: f32[1,128], index: 19, kind: input, shape index: {}]
  %s20 = inlined_call_operand.vmem [shape: f32[1,128], index: 20, kind: input, shape index: {}]
  %s21 = inlined_call_operand.vmem [shape: f32[2,8,64], index: 21, kind: output, shape index: {0}]
  %s22 = inlined_call_operand.vmem [shape: f32[2,8,128], index: 22, kind: output, shape index: {1}]
  %23 = xla_tuple %s21, %s22
  %s24 = sld [smem:[#allocation0]]
  $region125: #{customvit_forward.3} parent=0
    _
  %s26 = ssub.s32 1, %s24
  %s27 = scalar_select 0, %s26, %s24
  loop: start=0, step=1, limit=4
  $region2: #{customvit_forward.3} parent=0 // loop_pre_header
    _
  $region3: #{customvit_forward.3} parent=0 // loop_header
    %s29 = sphi 0, %s33
    %p30 = scmp.ge.s32.totalorder %s29, 4
    %s39 = sphi 0, %s41
    %s42 = sphi 0, %s39
    %s43 = sphi 0, %s42
    %s59 = sphi 0, %s43
    %s63 = sphi 0, %s63
    %s65 = sphi 0, %s63
    %s66 = sphi 0, %s65
    %s80 = sphi 0, %s66
    %s84 = sphi 0, %s84
    %s86 = sphi 0, %s84
    %s87 = sphi 0, %s86
    %s101 = sphi 0, %s87
    %s105 = sphi 0, %s105
    %s107 = sphi 0, %s105
    %s108 = sphi 0, %s107
    %s122 = sphi 0, %s108
    %s126 = sphi 0, %s126
    %s128 = sphi 0, %s126
    %s129 = sphi 0, %s128
    %s143 = sphi 0, %s129
    %s147 = sphi 0, %s147
    %s149 = sphi 0, %s147
    %s150 = sphi 0, %s149
    %s164 = sphi 0, %s150
    %s168 = sphi 0, %s168
    %s170 = sphi 0, %s168
    %s171 = sphi 0, %s170
    %s185 = sphi 0, %s171
    %s189 = sphi 0, %s189
    %s191 = sphi 0, %s189
    %s192 = sphi 0, %s191
    %s206 = sphi 0, %s192
    %s210 = sphi 0, %s210
    %s212 = sphi 0, %s210
    %s213 = sphi 0, %s212
    %s227 = sphi 0, %s213
    %s231 = sphi 0, %s231
    %s233 = sphi 0, %s231
    %s234 = sphi 0, %s233
    %s248 = sphi 0, %s234
    %s252 = sphi 0, %s252
    %s254 = sphi 0, %s252
    %s255 = sphi 0, %s254
    %s269 = sphi 0, %s255
    %s273 = sphi 0, %s273
    %s275 = sphi 0, %s273
    %s276 = sphi 0, %s275
    %s290 = sphi 0, %s276
    %s294 = sphi 0, %s294
    %s296 = sphi 0, %s294
    %s297 = sphi 0, %s296
    %s311 = sphi 0, %s297
    %s315 = sphi 0, %s315
    %s317 = sphi 0, %s315
    %s318 = sphi 0, %s317
    %s332 = sphi 0, %s318
    %s336 = sphi 0, %s336
    %s338 = sphi 0, %s336
    %s339 = sphi 0, %s338
    %s353 = sphi 0, %s339
    %s357 = sphi 0, %s357
    %s359 = sphi 0, %s357
    %s360 = sphi 0, %s359
    %s374 = sphi 0, %s360
    %s378 = sphi 0, %s378
    %s380 = sphi 0, %s378
    %s381 = sphi 0, %s380
    %s395 = sphi 0, %s381
    %s399 = sphi 0, %s399
    %s401 = sphi 0, %s399
    %s402 = sphi 0, %s401
    %s416 = sphi 0, %s402
    %s420 = sphi 0, %s420
    %s422 = sphi 0, %s420
    %s423 = sphi 0, %s422
    %s437 = sphi 0, %s423
    %s441 = sphi 0, %s441
    %s443 = sphi 0, %s441
    %s444 = sphi 0, %s443
    %s458 = sphi 0, %s444
    %s462 = sphi 0, %s462
    %s464 = sphi 0, %s462
    %s465 = sphi 0, %s464
    %s479 = sphi 0, %s465
    %s485 = sphi 0, %s487
    %s488 = sphi 0, %s485
    %s489 = sphi 0, %s488
    %s505 = sphi 0, %s489
    %s511 = sphi 0, %s513
    %s514 = sphi 0, %s511
    %s515 = sphi 0, %s514
    %s531 = sphi 0, %s515
  $region4: #{customvit_forward.3} parent=0 // loop_header_branch
    %32 = sbr.rel (%p30) target = $region8
  $region5: #{customvit_forward.3} parent=0 // loop_body
    %s34 = ssub.s32 %s29, 1
    %s35 = ssub.s32 %s29, 2
    %s36 = sadd.s32 %s29, 1
    %s37 = ssub.s32 %s29, %s36
    %p38 = scmp.eq.s32.totalorder %s37, 0
    %s40 = sadd.s32 %s39, 1
    %s41 = scalar_select %p38, %s39, %s40
    %p44 = pneg %p38
    %p45 = scmp.eq.s32.totalorder %s29, 1
    %p46 = por %p44, %p45
    %p47 = scmp.ne.s32.totalorder %s39, %s42
    %p48 = scmp.eq.s32.totalorder %s29, 0
    %p49 = por %p47, %p48
    %p50 = scmp.ne.s32.totalorder %s39, %s42
    %p51 = scmp.eq.s32.totalorder %s34, 1
    %p52 = por %p50, %p51
    %p53 = scmp.ne.s32.totalorder %s42, %s43
    %p54 = scmp.eq.s32.totalorder %s34, 0
    %p55 = por %p53, %p54
    %p56 = scmp.ne.s32.totalorder %s42, %s43
    %p57 = scmp.eq.s32.totalorder %s35, 1
    %p58 = por %p56, %p57
    %p60 = scmp.ne.s32.totalorder %s43, %s59
    %p61 = scmp.eq.s32.totalorder %s35, 0
    %p62 = por %p60, %p61
    %s64 = sadd.s32 %s63, 1
    %p67 = scmp.eq.s32.totalorder %s29, 1
    %p68 = scmp.ne.s32.totalorder %s63, %s65
    %p69 = scmp.eq.s32.totalorder %s29, 0
    %p70 = por %p68, %p69
    %p71 = scmp.ne.s32.totalorder %s63, %s65
    %p72 = scmp.eq.s32.totalorder %s34, 1
    %p73 = por %p71, %p72
    %p74 = scmp.ne.s32.totalorder %s65, %s66
    %p75 = scmp.eq.s32.totalorder %s34, 0
    %p76 = por %p74, %p75
    %p77 = scmp.ne.s32.totalorder %s65, %s66
    %p78 = scmp.eq.s32.totalorder %s35, 1
    %p79 = por %p77, %p78
    %p81 = scmp.ne.s32.totalorder %s66, %s80
    %p82 = scmp.eq.s32.totalorder %s35, 0
    %p83 = por %p81, %p82
    %s85 = sadd.s32 %s84, 1
    %p88 = scmp.eq.s32.totalorder %s29, 1
    %p89 = scmp.ne.s32.totalorder %s84, %s86
    %p90 = scmp.eq.s32.totalorder %s29, 0
    %p91 = por %p89, %p90
    %p92 = scmp.ne.s32.totalorder %s84, %s86
    %p93 = scmp.eq.s32.totalorder %s34, 1
    %p94 = por %p92, %p93
    %p95 = scmp.ne.s32.totalorder %s86, %s87
    %p96 = scmp.eq.s32.totalorder %s34, 0
    %p97 = por %p95, %p96
    %p98 = scmp.ne.s32.totalorder %s86, %s87
    %p99 = scmp.eq.s32.totalorder %s35, 1
    %p100 = por %p98, %p99
    %p102 = scmp.ne.s32.totalorder %s87, %s101
    %p103 = scmp.eq.s32.totalorder %s35, 0
    %p104 = por %p102, %p103
    %s106 = sadd.s32 %s105, 1
    %p109 = scmp.eq.s32.totalorder %s29, 1
    %p110 = scmp.ne.s32.totalorder %s105, %s107
    %p111 = scmp.eq.s32.totalorder %s29, 0
    %p112 = por %p110, %p111
    %p113 = scmp.ne.s32.totalorder %s105, %s107
    %p114 = scmp.eq.s32.totalorder %s34, 1
    %p115 = por %p113, %p114
    %p116 = scmp.ne.s32.totalorder %s107, %s108
    %p117 = scmp.eq.s32.totalorder %s34, 0
    %p118 = por %p116, %p117
    %p119 = scmp.ne.s32.totalorder %s107, %s108
    %p120 = scmp.eq.s32.totalorder %s35, 1
    %p121 = por %p119, %p120
    %p123 = scmp.ne.s32.totalorder %s108, %s122
    %p124 = scmp.eq.s32.totalorder %s35, 0
    %p125 = por %p123, %p124
    %s127 = sadd.s32 %s126, 1
    %p130 = scmp.eq.s32.totalorder %s29, 1
    %p131 = scmp.ne.s32.totalorder %s126, %s128
    %p132 = scmp.eq.s32.totalorder %s29, 0
    %p133 = por %p131, %p132
    %p134 = scmp.ne.s32.totalorder %s126, %s128
    %p135 = scmp.eq.s32.totalorder %s34, 1
    %p136 = por %p134, %p135
    %p137 = scmp.ne.s32.totalorder %s128, %s129
    %p138 = scmp.eq.s32.totalorder %s34, 0
    %p139 = por %p137, %p138
    %p140 = scmp.ne.s32.totalorder %s128, %s129
    %p141 = scmp.eq.s32.totalorder %s35, 1
    %p142 = por %p140, %p141
    %p144 = scmp.ne.s32.totalorder %s129, %s143
    %p145 = scmp.eq.s32.totalorder %s35, 0
    %p146 = por %p144, %p145
    %s148 = sadd.s32 %s147, 1
    %p151 = scmp.eq.s32.totalorder %s29, 1
    %p152 = scmp.ne.s32.totalorder %s147, %s149
    %p153 = scmp.eq.s32.totalorder %s29, 0
    %p154 = por %p152, %p153
    %p155 = scmp.ne.s32.totalorder %s147, %s149
    %p156 = scmp.eq.s32.totalorder %s34, 1
    %p157 = por %p155, %p156
    %p158 = scmp.ne.s32.totalorder %s149, %s150
    %p159 = scmp.eq.s32.totalorder %s34, 0
    %p160 = por %p158, %p159
    %p161 = scmp.ne.s32.totalorder %s149, %s150
    %p162 = scmp.eq.s32.totalorder %s35, 1
    %p163 = por %p161, %p162
    %p165 = scmp.ne.s32.totalorder %s150, %s164
    %p166 = scmp.eq.s32.totalorder %s35, 0
    %p167 = por %p165, %p166
    %s169 = sadd.s32 %s168, 1
    %p172 = scmp.eq.s32.totalorder %s29, 1
    %p173 = scmp.ne.s32.totalorder %s168, %s170
    %p174 = scmp.eq.s32.totalorder %s29, 0
    %p175 = por %p173, %p174
    %p176 = scmp.ne.s32.totalorder %s168, %s170
    %p177 = scmp.eq.s32.totalorder %s34, 1
    %p178 = por %p176, %p177
    %p179 = scmp.ne.s32.totalorder %s170, %s171
    %p180 = scmp.eq.s32.totalorder %s34, 0
    %p181 = por %p179, %p180
    %p182 = scmp.ne.s32.totalorder %s170, %s171
    %p183 = scmp.eq.s32.totalorder %s35, 1
    %p184 = por %p182, %p183
    %p186 = scmp.ne.s32.totalorder %s171, %s185
    %p187 = scmp.eq.s32.totalorder %s35, 0
    %p188 = por %p186, %p187
    %s190 = sadd.s32 %s189, 1
    %p193 = scmp.eq.s32.totalorder %s29, 1
    %p194 = scmp.ne.s32.totalorder %s189, %s191
    %p195 = scmp.eq.s32.totalorder %s29, 0
    %p196 = por %p194, %p195
    %p197 = scmp.ne.s32.totalorder %s189, %s191
    %p198 = scmp.eq.s32.totalorder %s34, 1
    %p199 = por %p197, %p198
    %p200 = scmp.ne.s32.totalorder %s191, %s192
    %p201 = scmp.eq.s32.totalorder %s34, 0
    %p202 = por %p200, %p201
    %p203 = scmp.ne.s32.totalorder %s191, %s192
    %p204 = scmp.eq.s32.totalorder %s35, 1
    %p205 = por %p203, %p204
    %p207 = scmp.ne.s32.totalorder %s192, %s206
    %p208 = scmp.eq.s32.totalorder %s35, 0
    %p209 = por %p207, %p208
    %s211 = sadd.s32 %s210, 1
    %p214 = scmp.eq.s32.totalorder %s29, 1
    %p215 = scmp.ne.s32.totalorder %s210, %s212
    %p216 = scmp.eq.s32.totalorder %s29, 0
    %p217 = por %p215, %p216
    %p218 = scmp.ne.s32.totalorder %s210, %s212
    %p219 = scmp.eq.s32.totalorder %s34, 1
    %p220 = por %p218, %p219
    %p221 = scmp.ne.s32.totalorder %s212, %s213
    %p222 = scmp.eq.s32.totalorder %s34, 0
    %p223 = por %p221, %p222
    %p224 = scmp.ne.s32.totalorder %s212, %s213
    %p225 = scmp.eq.s32.totalorder %s35, 1
    %p226 = por %p224, %p225
    %p228 = scmp.ne.s32.totalorder %s213, %s227
    %p229 = scmp.eq.s32.totalorder %s35, 0
    %p230 = por %p228, %p229
    %s232 = sadd.s32 %s231, 1
    %p235 = scmp.eq.s32.totalorder %s29, 1
    %p236 = scmp.ne.s32.totalorder %s231, %s233
    %p237 = scmp.eq.s32.totalorder %s29, 0
    %p238 = por %p236, %p237
    %p239 = scmp.ne.s32.totalorder %s231, %s233
    %p240 = scmp.eq.s32.totalorder %s34, 1
    %p241 = por %p239, %p240
    %p242 = scmp.ne.s32.totalorder %s233, %s234
    %p243 = scmp.eq.s32.totalorder %s34, 0
    %p244 = por %p242, %p243
    %p245 = scmp.ne.s32.totalorder %s233, %s234
    %p246 = scmp.eq.s32.totalorder %s35, 1
    %p247 = por %p245, %p246
    %p249 = scmp.ne.s32.totalorder %s234, %s248
    %p250 = scmp.eq.s32.totalorder %s35, 0
    %p251 = por %p249, %p250
    %s253 = sadd.s32 %s252, 1
    %p256 = scmp.eq.s32.totalorder %s29, 1
    %p257 = scmp.ne.s32.totalorder %s252, %s254
    %p258 = scmp.eq.s32.totalorder %s29, 0
    %p259 = por %p257, %p258
    %p260 = scmp.ne.s32.totalorder %s252, %s254
    %p261 = scmp.eq.s32.totalorder %s34, 1
    %p262 = por %p260, %p261
    %p263 = scmp.ne.s32.totalorder %s254, %s255
    %p264 = scmp.eq.s32.totalorder %s34, 0
    %p265 = por %p263, %p264
    %p266 = scmp.ne.s32.totalorder %s254, %s255
    %p267 = scmp.eq.s32.totalorder %s35, 1
    %p268 = por %p266, %p267
    %p270 = scmp.ne.s32.totalorder %s255, %s269
    %p271 = scmp.eq.s32.totalorder %s35, 0
    %p272 = por %p270, %p271
    %s274 = sadd.s32 %s273, 1
    %p277 = scmp.eq.s32.totalorder %s29, 1
    %p278 = scmp.ne.s32.totalorder %s273, %s275
    %p279 = scmp.eq.s32.totalorder %s29, 0
    %p280 = por %p278, %p279
    %p281 = scmp.ne.s32.totalorder %s273, %s275
    %p282 = scmp.eq.s32.totalorder %s34, 1
    %p283 = por %p281, %p282
    %p284 = scmp.ne.s32.totalorder %s275, %s276
    %p285 = scmp.eq.s32.totalorder %s34, 0
    %p286 = por %p284, %p285
    %p287 = scmp.ne.s32.totalorder %s275, %s276
    %p288 = scmp.eq.s32.totalorder %s35, 1
    %p289 = por %p287, %p288
    %p291 = scmp.ne.s32.totalorder %s276, %s290
    %p292 = scmp.eq.s32.totalorder %s35, 0
    %p293 = por %p291, %p292
    %s295 = sadd.s32 %s294, 1
    %p298 = scmp.eq.s32.totalorder %s29, 1
    %p299 = scmp.ne.s32.totalorder %s294, %s296
    %p300 = scmp.eq.s32.totalorder %s29, 0
    %p301 = por %p299, %p300
    %p302 = scmp.ne.s32.totalorder %s294, %s296
    %p303 = scmp.eq.s32.totalorder %s34, 1
    %p304 = por %p302, %p303
    %p305 = scmp.ne.s32.totalorder %s296, %s297
    %p306 = scmp.eq.s32.totalorder %s34, 0
    %p307 = por %p305, %p306
    %p308 = scmp.ne.s32.totalorder %s296, %s297
    %p309 = scmp.eq.s32.totalorder %s35, 1
    %p310 = por %p308, %p309
    %p312 = scmp.ne.s32.totalorder %s297, %s311
    %p313 = scmp.eq.s32.totalorder %s35, 0
    %p314 = por %p312, %p313
    %s316 = sadd.s32 %s315, 1
    %p319 = scmp.eq.s32.totalorder %s29, 1
    %p320 = scmp.ne.s32.totalorder %s315, %s317
    %p321 = scmp.eq.s32.totalorder %s29, 0
    %p322 = por %p320, %p321
    %p323 = scmp.ne.s32.totalorder %s315, %s317
    %p324 = scmp.eq.s32.totalorder %s34, 1
    %p325 = por %p323, %p324
    %p326 = scmp.ne.s32.totalorder %s317, %s318
    %p327 = scmp.eq.s32.totalorder %s34, 0
    %p328 = por %p326, %p327
    %p329 = scmp.ne.s32.totalorder %s317, %s318
    %p330 = scmp.eq.s32.totalorder %s35, 1
    %p331 = por %p329, %p330
    %p333 = scmp.ne.s32.totalorder %s318, %s332
    %p334 = scmp.eq.s32.totalorder %s35, 0
    %p335 = por %p333, %p334
    %s337 = sadd.s32 %s336, 1
    %p340 = scmp.eq.s32.totalorder %s29, 1
    %p341 = scmp.ne.s32.totalorder %s336, %s338
    %p342 = scmp.eq.s32.totalorder %s29, 0
    %p343 = por %p341, %p342
    %p344 = scmp.ne.s32.totalorder %s336, %s338
    %p345 = scmp.eq.s32.totalorder %s34, 1
    %p346 = por %p344, %p345
    %p347 = scmp.ne.s32.totalorder %s338, %s339
    %p348 = scmp.eq.s32.totalorder %s34, 0
    %p349 = por %p347, %p348
    %p350 = scmp.ne.s32.totalorder %s338, %s339
    %p351 = scmp.eq.s32.totalorder %s35, 1
    %p352 = por %p350, %p351
    %p354 = scmp.ne.s32.totalorder %s339, %s353
    %p355 = scmp.eq.s32.totalorder %s35, 0
    %p356 = por %p354, %p355
    %s358 = sadd.s32 %s357, 1
    %p361 = scmp.eq.s32.totalorder %s29, 1
    %p362 = scmp.ne.s32.totalorder %s357, %s359
    %p363 = scmp.eq.s32.totalorder %s29, 0
    %p364 = por %p362, %p363
    %p365 = scmp.ne.s32.totalorder %s357, %s359
    %p366 = scmp.eq.s32.totalorder %s34, 1
    %p367 = por %p365, %p366
    %p368 = scmp.ne.s32.totalorder %s359, %s360
    %p369 = scmp.eq.s32.totalorder %s34, 0
    %p370 = por %p368, %p369
    %p371 = scmp.ne.s32.totalorder %s359, %s360
    %p372 = scmp.eq.s32.totalorder %s35, 1
    %p373 = por %p371, %p372
    %p375 = scmp.ne.s32.totalorder %s360, %s374
    %p376 = scmp.eq.s32.totalorder %s35, 0
    %p377 = por %p375, %p376
    %s379 = sadd.s32 %s378, 1
    %p382 = scmp.eq.s32.totalorder %s29, 1
    %p383 = scmp.ne.s32.totalorder %s378, %s380
    %p384 = scmp.eq.s32.totalorder %s29, 0
    %p385 = por %p383, %p384
    %p386 = scmp.ne.s32.totalorder %s378, %s380
    %p387 = scmp.eq.s32.totalorder %s34, 1
    %p388 = por %p386, %p387
    %p389 = scmp.ne.s32.totalorder %s380, %s381
    %p390 = scmp.eq.s32.totalorder %s34, 0
    %p391 = por %p389, %p390
    %p392 = scmp.ne.s32.totalorder %s380, %s381
    %p393 = scmp.eq.s32.totalorder %s35, 1
    %p394 = por %p392, %p393
    %p396 = scmp.ne.s32.totalorder %s381, %s395
    %p397 = scmp.eq.s32.totalorder %s35, 0
    %p398 = por %p396, %p397
    %s400 = sadd.s32 %s399, 1
    %p403 = scmp.eq.s32.totalorder %s29, 1
    %p404 = scmp.ne.s32.totalorder %s399, %s401
    %p405 = scmp.eq.s32.totalorder %s29, 0
    %p406 = por %p404, %p405
    %p407 = scmp.ne.s32.totalorder %s399, %s401
    %p408 = scmp.eq.s32.totalorder %s34, 1
    %p409 = por %p407, %p408
    %p410 = scmp.ne.s32.totalorder %s401, %s402
    %p411 = scmp.eq.s32.totalorder %s34, 0
    %p412 = por %p410, %p411
    %p413 = scmp.ne.s32.totalorder %s401, %s402
    %p414 = scmp.eq.s32.totalorder %s35, 1
    %p415 = por %p413, %p414
    %p417 = scmp.ne.s32.totalorder %s402, %s416
    %p418 = scmp.eq.s32.totalorder %s35, 0
    %p419 = por %p417, %p418
    %s421 = sadd.s32 %s420, 1
    %p424 = scmp.eq.s32.totalorder %s29, 1
    %p425 = scmp.ne.s32.totalorder %s420, %s422
    %p426 = scmp.eq.s32.totalorder %s29, 0
    %p427 = por %p425, %p426
    %p428 = scmp.ne.s32.totalorder %s420, %s422
    %p429 = scmp.eq.s32.totalorder %s34, 1
    %p430 = por %p428, %p429
    %p431 = scmp.ne.s32.totalorder %s422, %s423
    %p432 = scmp.eq.s32.totalorder %s34, 0
    %p433 = por %p431, %p432
    %p434 = scmp.ne.s32.totalorder %s422, %s423
    %p435 = scmp.eq.s32.totalorder %s35, 1
    %p436 = por %p434, %p435
    %p438 = scmp.ne.s32.totalorder %s423, %s437
    %p439 = scmp.eq.s32.totalorder %s35, 0
    %p440 = por %p438, %p439
    %s442 = sadd.s32 %s441, 1
    %p445 = scmp.eq.s32.totalorder %s29, 1
    %p446 = scmp.ne.s32.totalorder %s441, %s443
    %p447 = scmp.eq.s32.totalorder %s29, 0
    %p448 = por %p446, %p447
    %p449 = scmp.ne.s32.totalorder %s441, %s443
    %p450 = scmp.eq.s32.totalorder %s34, 1
    %p451 = por %p449, %p450
    %p452 = scmp.ne.s32.totalorder %s443, %s444
    %p453 = scmp.eq.s32.totalorder %s34, 0
    %p454 = por %p452, %p453
    %p455 = scmp.ne.s32.totalorder %s443, %s444
    %p456 = scmp.eq.s32.totalorder %s35, 1
    %p457 = por %p455, %p456
    %p459 = scmp.ne.s32.totalorder %s444, %s458
    %p460 = scmp.eq.s32.totalorder %s35, 0
    %p461 = por %p459, %p460
    %s463 = sadd.s32 %s462, 1
    %p466 = scmp.eq.s32.totalorder %s29, 1
    %p467 = scmp.ne.s32.totalorder %s462, %s464
    %p468 = scmp.eq.s32.totalorder %s29, 0
    %p469 = por %p467, %p468
    %p470 = scmp.ne.s32.totalorder %s462, %s464
    %p471 = scmp.eq.s32.totalorder %s34, 1
    %p472 = por %p470, %p471
    %p473 = scmp.ne.s32.totalorder %s464, %s465
    %p474 = scmp.eq.s32.totalorder %s34, 0
    %p475 = por %p473, %p474
    %p476 = scmp.ne.s32.totalorder %s464, %s465
    %p477 = scmp.eq.s32.totalorder %s35, 1
    %p478 = por %p476, %p477
    %p480 = scmp.ne.s32.totalorder %s465, %s479
    %p481 = scmp.eq.s32.totalorder %s35, 0
    %p482 = por %p480, %p481
    %s483 = ssub.s32 %s29, %s36
    %p484 = scmp.eq.s32.totalorder %s483, 0
    %s486 = sadd.s32 %s485, 1
    %s487 = scalar_select %p484, %s485, %s486
    %p490 = pneg %p484
    %p491 = scmp.eq.s32.totalorder %s29, 1
    %p492 = por %p490, %p491
    %p493 = scmp.ne.s32.totalorder %s485, %s488
    %p494 = scmp.eq.s32.totalorder %s29, 0
    %p495 = por %p493, %p494
    %p496 = scmp.ne.s32.totalorder %s485, %s488
    %p497 = scmp.eq.s32.totalorder %s34, 1
    %p498 = por %p496, %p497
    %p499 = scmp.ne.s32.totalorder %s488, %s489
    %p500 = scmp.eq.s32.totalorder %s34, 0
    %p501 = por %p499, %p500
    %p502 = scmp.ne.s32.totalorder %s488, %s489
    %p503 = scmp.eq.s32.totalorder %s35, 1
    %p504 = por %p502, %p503
    %p506 = scmp.ne.s32.totalorder %s489, %s505
    %p507 = scmp.eq.s32.totalorder %s35, 0
    %p508 = por %p506, %p507
    %s509 = ssub.s32 %s29, %s36
    %p510 = scmp.eq.s32.totalorder %s509, 0
    %s512 = sadd.s32 %s511, 1
    %s513 = scalar_select %p510, %s511, %s512
    %p516 = pneg %p510
    %p517 = scmp.eq.s32.totalorder %s29, 1
    %p518 = por %p516, %p517
    %p519 = scmp.ne.s32.totalorder %s511, %s514
    %p520 = scmp.eq.s32.totalorder %s29, 0
    %p521 = por %p519, %p520
    %p522 = scmp.ne.s32.totalorder %s511, %s514
    %p523 = scmp.eq.s32.totalorder %s34, 1
    %p524 = por %p522, %p523
    %p525 = scmp.ne.s32.totalorder %s514, %s515
    %p526 = scmp.eq.s32.totalorder %s34, 0
    %p527 = por %p525, %p526
    %p528 = scmp.ne.s32.totalorder %s514, %s515
    %p529 = scmp.eq.s32.totalorder %s35, 1
    %p530 = por %p528, %p529
    %p532 = scmp.ne.s32.totalorder %s515, %s531
    %p533 = scmp.eq.s32.totalorder %s35, 0
    %p534 = por %p532, %p533
    %p535 = scmp.le.s32.totalorder 1, %s29
    %p536 = scmp.lt.s32.totalorder %s29, 3
    %p537 = pnand %p535, %p536
    %p538 = pneg %p537
    // Predicated region
    $region9: #{customvit_forward.3} parent=5 // pred_check
      _
    $region10: #{customvit_forward.3} parent=5 // pred_check_branch
      %540 = sbr.rel (%p537) target = $region12
    $region11: #{customvit_forward.3} parent=5 // pred_region
      %s541 = ssub.s32 %s29, 1
      // Predicated region
      $region13: #{customvit_forward.3} parent=11 // pred_check
        %p542 = pneg %p76
      $region14: #{customvit_forward.3} parent=11 // pred_check_branch
        %544 = sbr.rel (%p542) target = $region16
      $region15: #{customvit_forward.3} parent=11 // pred_region
        _
      $region16: #{customvit_forward.3} parent=11 // pred_fallthru
        _
      // Predicated region
      $region17: #{customvit_forward.3} parent=11 // pred_check
        %p545 = pneg %p97
      $region18: #{customvit_forward.3} parent=11 // pred_check_branch
        %547 = sbr.rel (%p545) target = $region20
      $region19: #{customvit_forward.3} parent=11 // pred_region
        _
      $region20: #{customvit_forward.3} parent=11 // pred_fallthru
        _
      // Predicated region
      $region21: #{customvit_forward.3} parent=11 // pred_check
        %p548 = pneg %p118
      $region22: #{customvit_forward.3} parent=11 // pred_check_branch
        %550 = sbr.rel (%p548) target = $region24
      $region23: #{customvit_forward.3} parent=11 // pred_region
        _
      $region24: #{customvit_forward.3} parent=11 // pred_fallthru
        _
      // Predicated region
      $region25: #{customvit_forward.3} parent=11 // pred_check
        %p551 = pneg %p139
      $region26: #{customvit_forward.3} parent=11 // pred_check_branch
        %553 = sbr.rel (%p551) target = $region28
      $region27: #{customvit_forward.3} parent=11 // pred_region
        _
      $region28: #{customvit_forward.3} parent=11 // pred_fallthru
        _
      // Predicated region
      $region29: #{customvit_forward.3} parent=11 // pred_check
        %p554 = pneg %p160
      $region30: #{customvit_forward.3} parent=11 // pred_check_branch
        %556 = sbr.rel (%p554) target = $region32
      $region31: #{customvit_forward.3} parent=11 // pred_region
        _
      $region32: #{customvit_forward.3} parent=11 // pred_fallthru
        _
      // Predicated region
      $region33: #{customvit_forward.3} parent=11 // pred_check
        %p557 = pneg %p181
      $region34: #{customvit_forward.3} parent=11 // pred_check_branch
        %559 = sbr.rel (%p557) target = $region36
      $region35: #{customvit_forward.3} parent=11 // pred_region
        _
      $region36: #{customvit_forward.3} parent=11 // pred_fallthru
        _
      // Predicated region
      $region37: #{customvit_forward.3} parent=11 // pred_check
        %p560 = pneg %p202
      $region38: #{customvit_forward.3} parent=11 // pred_check_branch
        %562 = sbr.rel (%p560) target = $region40
      $region39: #{customvit_forward.3} parent=11 // pred_region
        _
      $region40: #{customvit_forward.3} parent=11 // pred_fallthru
        _
      // Predicated region
      $region41: #{customvit_forward.3} parent=11 // pred_check
        %p563 = pneg %p223
      $region42: #{customvit_forward.3} parent=11 // pred_check_branch
        %565 = sbr.rel (%p563) target = $region44
      $region43: #{customvit_forward.3} parent=11 // pred_region
        _
      $region44: #{customvit_forward.3} parent=11 // pred_fallthru
        _
      // Predicated region
      $region45: #{customvit_forward.3} parent=11 // pred_check
        %p566 = pneg %p244
      $region46: #{customvit_forward.3} parent=11 // pred_check_branch
        %568 = sbr.rel (%p566) target = $region48
      $region47: #{customvit_forward.3} parent=11 // pred_region
        _
      $region48: #{customvit_forward.3} parent=11 // pred_fallthru
        _
      // Predicated region
      $region49: #{customvit_forward.3} parent=11 // pred_check
        %p569 = pneg %p265
      $region50: #{customvit_forward.3} parent=11 // pred_check_branch
        %571 = sbr.rel (%p569) target = $region52
      $region51: #{customvit_forward.3} parent=11 // pred_region
        _
      $region52: #{customvit_forward.3} parent=11 // pred_fallthru
        _
      // Predicated region
      $region53: #{customvit_forward.3} parent=11 // pred_check
        %p572 = pneg %p286
      $region54: #{customvit_forward.3} parent=11 // pred_check_branch
        %574 = sbr.rel (%p572) target = $region56
      $region55: #{customvit_forward.3} parent=11 // pred_region
        _
      $region56: #{customvit_forward.3} parent=11 // pred_fallthru
        _
      // Predicated region
      $region57: #{customvit_forward.3} parent=11 // pred_check
        %p575 = pneg %p307
      $region58: #{customvit_forward.3} parent=11 // pred_check_branch
        %577 = sbr.rel (%p575) target = $region60
      $region59: #{customvit_forward.3} parent=11 // pred_region
        _
      $region60: #{customvit_forward.3} parent=11 // pred_fallthru
        _
      // Predicated region
      $region61: #{customvit_forward.3} parent=11 // pred_check
        %p578 = pneg %p328
      $region62: #{customvit_forward.3} parent=11 // pred_check_branch
        %580 = sbr.rel (%p578) target = $region64
      $region63: #{customvit_forward.3} parent=11 // pred_region
        _
      $region64: #{customvit_forward.3} parent=11 // pred_fallthru
        _
      // Predicated region
      $region65: #{customvit_forward.3} parent=11 // pred_check
        %p581 = pneg %p349
      $region66: #{customvit_forward.3} parent=11 // pred_check_branch
        %583 = sbr.rel (%p581) target = $region68
      $region67: #{customvit_forward.3} parent=11 // pred_region
        _
      $region68: #{customvit_forward.3} parent=11 // pred_fallthru
        _
      // Predicated region
      $region69: #{customvit_forward.3} parent=11 // pred_check
        %p584 = pneg %p370
      $region70: #{customvit_forward.3} parent=11 // pred_check_branch
        %586 = sbr.rel (%p584) target = $region72
      $region71: #{customvit_forward.3} parent=11 // pred_region
        _
      $region72: #{customvit_forward.3} parent=11 // pred_fallthru
        _
      // Predicated region
      $region73: #{customvit_forward.3} parent=11 // pred_check
        %p587 = pneg %p391
      $region74: #{customvit_forward.3} parent=11 // pred_check_branch
        %589 = sbr.rel (%p587) target = $region76
      $region75: #{customvit_forward.3} parent=11 // pred_region
        _
      $region76: #{customvit_forward.3} parent=11 // pred_fallthru
        _
      // Predicated region
      $region77: #{customvit_forward.3} parent=11 // pred_check
        %p590 = pneg %p412
      $region78: #{customvit_forward.3} parent=11 // pred_check_branch
        %592 = sbr.rel (%p590) target = $region80
      $region79: #{customvit_forward.3} parent=11 // pred_region
        _
      $region80: #{customvit_forward.3} parent=11 // pred_fallthru
        _
      // Predicated region
      $region81: #{customvit_forward.3} parent=11 // pred_check
        %p593 = pneg %p433
      $region82: #{customvit_forward.3} parent=11 // pred_check_branch
        %595 = sbr.rel (%p593) target = $region84
      $region83: #{customvit_forward.3} parent=11 // pred_region
        _
      $region84: #{customvit_forward.3} parent=11 // pred_fallthru
        _
      // Predicated region
      $region85: #{customvit_forward.3} parent=11 // pred_check
        %p596 = pneg %p454
      $region86: #{customvit_forward.3} parent=11 // pred_check_branch
        %598 = sbr.rel (%p596) target = $region88
      $region87: #{customvit_forward.3} parent=11 // pred_region
        _
      $region88: #{customvit_forward.3} parent=11 // pred_fallthru
        _
      // Predicated region
      $region89: #{customvit_forward.3} parent=11 // pred_check
        %p599 = pneg %p475
      $region90: #{customvit_forward.3} parent=11 // pred_check_branch
        %601 = sbr.rel (%p599) target = $region92
      $region91: #{customvit_forward.3} parent=11 // pred_region
        _
      $region92: #{customvit_forward.3} parent=11 // pred_fallthru
        _
    $region12: #{customvit_forward.3} parent=5 // pred_fallthru
      _
    %p602 = scmp.lt.s32.totalorder %s29, 2
    // Predicated region
    $region93: #{customvit_forward.3} parent=5 // pred_check
      %p603 = pneg %p602
    $region94: #{customvit_forward.3} parent=5 // pred_check_branch
      %605 = sbr.rel (%p603) target = $region96
    $region95: #{customvit_forward.3} parent=5 // pred_region
      // Predicated region
      $region97: #{customvit_forward.3} parent=95 // pred_check
        %p606 = pneg %p49
      $region98: #{customvit_forward.3} parent=95 // pred_check_branch
        %608 = sbr.rel (%p606) target = $region100
      $region99: #{customvit_forward.3} parent=95 // pred_region
        %p609 = scmp.lt.s32.totalorder %s29, 1
        %s610 = scalar_select %p609, %s29, 1
        %s611 = smul.addr %s610, 2
        %s612 = smul.addr %s611, 8
        %s613 = scalar_lea.vmem %s0, %s612
      $region100: #{customvit_forward.3} parent=95 // pred_fallthru
        _
    $region96: #{customvit_forward.3} parent=5 // pred_fallthru
      _
    %p614 = scmp.le.s32.totalorder 1, %s29
    %p615 = scmp.lt.s32.totalorder %s29, 3
    %p616 = pnand %p614, %p615
    %p617 = pneg %p616
    // Predicated region
    $region101: #{customvit_forward.3} parent=5 // pred_check
      _
    $region102: #{customvit_forward.3} parent=5 // pred_check_branch
      %619 = sbr.rel (%p616) target = $region104
    $region103: #{customvit_forward.3} parent=5 // pred_region
      %s620 = ssub.s32 %s29, 1
      %p621 = scmp.lt.s32.totalorder %s34, 1
      %s622 = scalar_select %p621, %s34, 1
      %s623 = smul.addr %s622, 2
      %s624 = smul.addr %s623, 8
      %s625 = scalar_lea.vmem %s0, %s624
      %p626 = pneg %p55
      %p627 = pneg %p52
      %p628 = pneg %p76
      %p629 = pneg %p73
      %p630 = pneg %p97
      %p631 = pneg %p94
      %p632 = pneg %p118
      %p633 = pneg %p115
      %p634 = pneg %p139
      %p635 = pneg %p136
      %p636 = pneg %p160
      %p637 = pneg %p157
      %p638 = pneg %p181
      %p639 = pneg %p178
      %p640 = pneg %p202
      %p641 = pneg %p199
      %p642 = pneg %p223
      %p643 = pneg %p220
      %p644 = pneg %p244
      %p645 = pneg %p241
      %p646 = pneg %p265
      %p647 = pneg %p262
      %p648 = pneg %p286
      %p649 = pneg %p283
      %p650 = pneg %p307
      %p651 = pneg %p304
      %p652 = pneg %p328
      %p653 = pneg %p325
      %p654 = pneg %p349
      %p655 = pneg %p346
      %p656 = pneg %p370
      %p657 = pneg %p367
      %p658 = pneg %p391
      %p659 = pneg %p388
      %p660 = pneg %p412
      %p661 = pneg %p409
      %p662 = pneg %p433
      %p663 = pneg %p430
      %p664 = pneg %p454
      %p665 = pneg %p451
      %p666 = pneg %p475
      %p667 = pneg %p472
      %p668 = pneg %p501
      %p669 = pneg %p498
      %p670 = scmp.lt.s32.totalorder %s34, 1
      %s671 = scalar_select %p670, %s34, 1
      %s672 = smul.addr %s671, 8
      %s673 = scalar_lea.vmem %s21, %s672
      %p674 = pneg %p527
      %p675 = pneg %p524
      %p676 = scmp.lt.s32.totalorder %s34, 1
      %s677 = scalar_select %p676, %s34, 1
      %s678 = smul.addr %s677, 8
      %s679 = scalar_lea.vmem %s22, %s678
      %p680 = scmp.lt.s32.totalorder %s34, 1
      %s681 = scalar_select %p680, %s34, 1
      %s682 = smul.addr %s681, 2
      %s683 = smul.addr %s682, 8
      %s684 = scalar_lea.vmem %s0, %s683
      %p685 = scmp.lt.s32.totalorder %s34, 1
      %s686 = scalar_select %p685, %s34, 1
      %s687 = smul.addr %s686, 8
      %s688 = scalar_lea.vmem %s21, %s687
      %p689 = scmp.lt.s32.totalorder %s34, 1
      %s690 = scalar_select %p689, %s34, 1
      %s691 = smul.addr %s690, 8
      %s692 = scalar_lea.vmem %s22, %s691
      %v693 = vld [vmem:[%s684] sm:$0xff]
      %v694 = vld [vmem:[%s684 + $0x8] sm:$0xff]
      %v695 = vld [vmem:[%s1] sm:$0xff]
      %v696 = vld [vmem:[%s2] sm:$0xff]
      %v697 = vld [vmem:[%s3] sm:$0xff]
      %v698 = vld [vmem:[%s3 + $0x8] sm:$0xff]
      %v699 = vld [vmem:[%s3 + $0x10] sm:$0xff]
      %v700 = vld [vmem:[%s3 + $0x18] sm:$0xff]
      %v701 = vld [vmem:[%s3 + $0x20] sm:$0xff]
      %v702 = vld [vmem:[%s3 + $0x28] sm:$0xff]
      %v703 = vld [vmem:[%s3 + $0x30] sm:$0xff]
      %v704 = vld [vmem:[%s3 + $0x38] sm:$0xff]
      %v705 = vld [vmem:[%s3 + $0x40] sm:$0xff]
      %v706 = vld [vmem:[%s3 + $0x48] sm:$0xff]
      %v707 = vld [vmem:[%s3 + $0x50] sm:$0xff]
      %v708 = vld [vmem:[%s3 + $0x58] sm:$0xff]
      %v709 = vld [vmem:[%s3 + $0x60] sm:$0xff]
      %v710 = vld [vmem:[%s3 + $0x68] sm:$0xff]
      %v711 = vld [vmem:[%s3 + $0x70] sm:$0xff]
      %v712 = vld [vmem:[%s3 + $0x78] sm:$0xff]
      %v713 = vld [vmem:[%s3 + $0x80] sm:$0xff]
      %v714 = vld [vmem:[%s3 + $0x88] sm:$0xff]
      %v715 = vld [vmem:[%s3 + $0x90] sm:$0xff]
      %v716 = vld [vmem:[%s3 + $0x98] sm:$0xff]
      %v717 = vld [vmem:[%s3 + $0xa0] sm:$0xff]
      %v718 = vld [vmem:[%s3 + $0xa8] sm:$0xff]
      %v719 = vld [vmem:[%s3 + $0xb0] sm:$0xff]
      %v720 = vld [vmem:[%s3 + $0xb8] sm:$0xff]
      %v721 = vld [vmem:[%s3 + $0xc0] sm:$0xff]
      %v722 = vld [vmem:[%s3 + $0xc8] sm:$0xff]
      %v723 = vld [vmem:[%s3 + $0xd0] sm:$0xff]
      %vm724 = vcmask 719872
      %v726 = vsel %vm724, %v694, 0
      %728 = vmatprep.subr.mxu0 0.0
      %729 = vmatpush1.msra.mxu0 %v697
      %730 = vmatprep.subr.mxu0 0.0
      %731 = vmatpush1.msra.mxu0 %v698
      %732 = vmatprep.subr.mxu0 0.0
      %733 = vmatpush1.msra.mxu0 %v699
      %734 = vmatprep.subr.mxu0 0.0
      %735 = vmatpush1.msra.mxu0 %v700
      %736 = vmatprep.subr.mxu0 0.0
      %737 = vmatpush1.msra.mxu0 %v701
      %738 = vmatprep.subr.mxu0 0.0
      %739 = vmatpush1.msra.mxu0 %v702
      %740 = vmatprep.subr.mxu0 0.0
      %741 = vmatpush1.msra.mxu0 %v703
      %742 = vmatprep.subr.mxu0 0.0
      %743 = vmatpush1.msra.mxu0 %v704
      %744 = vmatprep.subr.mxu0 0.0
      %745 = vmatpush1.msra.mxu0 %v705
      %746 = vmatprep.subr.mxu0 0.0
      %747 = vmatpush1.msra.mxu0 %v706
      %748 = vmatprep.subr.mxu0 0.0
      %749 = vmatpush1.msra.mxu0 %v707
      %750 = vmatprep.subr.mxu0 0.0
      %751 = vmatpush1.msra.mxu0 %v708
      %752 = vmatprep.subr.mxu0 0.0
      %753 = vmatpush1.msra.mxu0 %v709
      %754 = vmatprep.subr.mxu0 0.0
      %755 = vmatpush1.msra.mxu0 %v710
      %756 = vmatprep.subr.mxu0 0.0
      %757 = vmatpush1.msra.mxu0 %v711
      %758 = vmatprep.subr.mxu0 0.0
      %759 = vmatpush1.msra.mxu0 %v712
      %760 = vmatprep.subr.mxu0 0.0
      %761 = vmatpush1.msra.mxu0 %v713
      %762 = vmatprep.subr.mxu0 0.0
      %763 = vmatpush1.msra.mxu0 %v714
      %764 = vmatprep.subr.mxu0 0.0
      %765 = vmatpush1.msra.mxu0 %v715
      %766 = vmatprep.subr.mxu0 0.0
      %767 = vmatpush1.msra.mxu0 %v716
      %768 = vmatprep.subr.mxu0 0.0
      %769 = vmatpush1.msra.mxu0 %v717
      %770 = vmatprep.subr.mxu0 0.0
      %771 = vmatpush1.msra.mxu0 %v718
      %772 = vmatprep.subr.mxu0 0.0
      %773 = vmatpush1.msra.mxu0 %v719
      %774 = vmatprep.subr.mxu0 0.0
      %775 = vmatpush1.msra.mxu0 %v720
      %776 = vmatprep.subr.mxu0 0.0
      %777 = vmatpush1.msra.mxu0 %v721
      %778 = vmatprep.subr.mxu0 0.0
      %779 = vmatpush1.msra.mxu0 %v722
      %780 = vmatprep.subr.mxu0 0.0
      %781 = vmatpush1.msra.mxu0 %v723
      %782 = vmatprep.subr.mxu0 0.0
      %783 = vmatpush1.msra.mxu0 0.0
      %784 = vmatprep.subr.mxu0 0.0
      %785 = vmatpush1.msra.mxu0 0.0
      %786 = vmatprep.subr.mxu0 0.0
      %787 = vmatpush1.msra.mxu0 0.0
      %788 = vmatprep.subr.mxu0 0.0
      %789 = vmatpush1.msra.mxu0 0.0
      %790 = vmatprep.subr.mxu0 0.0
      %791 = vmatpush1.msra.mxu0 0.0
      %792 = vmatprep.mubr.f32.mxu0 %v726
      %793 = vmatmul.mubr.f32.gmra.mrb[0].mxu0 %v693
      %v794 = vpop.f32.mrb[0].mxu0
      %v795 = vadd.f32 0.0, %v794
      %v796 = vpop.f32.mrb[0].mxu0
      %797 = vdwg.mxu0
      %v798 = vld [vmem:[%s4] sm:$0x1]
      %v800 = vlaneseq
      %v801 = vshrl.u32 %v800, 7
      %v802 = vsub.s32 0, %v801
      %v803 = vrot.slane %v798, %v802
      %v805 = vmul.f32 %v795, %v803
      %v806 = vld [vmem:[%s5] sm:$0x1]
      %v808 = vlaneseq
      %v809 = vshrl.u32 %v808, 7
      %v810 = vsub.s32 0, %v809
      %v811 = vrot.slane %v806, %v810
      %v813 = vadd.f32 %v805, %v811
      %v814 = vxor.u32 %v813, 2147483648
      %v815 = vmul.f32 %v814, 1.442695
      %v816 = vpow.pop %v815
      %v817 = vadd.f32 %v816, 1.0
      %v818 = vrcp.pop %v817
      %v819 = vmul.f32 1.0, %v818
      %v820 = vmul.f32 %v813, %v819
      %v821 = vld [vmem:[%s6] sm:$0xff]
      %v822 = vld [vmem:[%s6 + $0x8] sm:$0xff]
      %v823 = vld [vmem:[%s6 + $0x10] sm:$0xff]
      %v824 = vld [vmem:[%s6 + $0x18] sm:$0xff]
      %v825 = vld [vmem:[%s6 + $0x20] sm:$0xff]
      %v826 = vld [vmem:[%s6 + $0x28] sm:$0xff]
      %v827 = vld [vmem:[%s6 + $0x30] sm:$0xff]
      %v828 = vld [vmem:[%s6 + $0x38] sm:$0xff]
      %vm829 = vcmask 523264
      %v831 = vsel %vm829, %v820, 0
      %833 = vmatprep.subr.mxu0 0.0
      %834 = vmatpush1.msra.mxu0 %v821
      %835 = vmatprep.subr.mxu0 0.0
      %836 = vmatpush1.msra.mxu0 %v822
      %837 = vmatprep.subr.mxu0 0.0
      %838 = vmatpush1.msra.mxu0 %v823
      %839 = vmatprep.subr.mxu0 0.0
      %840 = vmatpush1.msra.mxu0 %v824
      %841 = vmatprep.subr.mxu0 0.0
      %842 = vmatpush1.msra.mxu0 %v825
      %843 = vmatprep.subr.mxu0 0.0
      %844 = vmatpush1.msra.mxu0 %v826
      %845 = vmatprep.subr.mxu0 0.0
      %846 = vmatpush1.msra.mxu0 %v827
      %847 = vmatprep.subr.mxu0 0.0
      %848 = vmatpush1.msra.mxu0 %v828
      %849 = vmatprep.subr.mxu0 0.0
      %850 = vmatpush1.msra.mxu0 0.0
      %851 = vmatprep.subr.mxu0 0.0
      %852 = vmatpush1.msra.mxu0 0.0
      %853 = vmatprep.subr.mxu0 0.0
      %854 = vmatpush1.msra.mxu0 0.0
      %855 = vmatprep.subr.mxu0 0.0
      %856 = vmatpush1.msra.mxu0 0.0
      %857 = vmatprep.subr.mxu0 0.0
      %858 = vmatpush1.msra.mxu0 0.0
      %859 = vmatprep.subr.mxu0 0.0
      %860 = vmatpush1.msra.mxu0 0.0
      %861 = vmatprep.subr.mxu0 0.0
      %862 = vmatpush1.msra.mxu0 0.0
      %863 = vmatprep.subr.mxu0 0.0
      %864 = vmatpush1.msra.mxu0 0.0
      %865 = vmatprep.subr.mxu0 0.0
      %866 = vmatpush1.msra.mxu0 0.0
      %867 = vmatprep.subr.mxu0 0.0
      %868 = vmatpush1.msra.mxu0 0.0
      %869 = vmatprep.subr.mxu0 0.0
      %870 = vmatpush1.msra.mxu0 0.0
      %871 = vmatprep.subr.mxu0 0.0
      %872 = vmatpush1.msra.mxu0 0.0
      %873 = vmatprep.subr.mxu0 0.0
      %874 = vmatpush1.msra.mxu0 0.0
      %875 = vmatprep.subr.mxu0 0.0
      %876 = vmatpush1.msra.mxu0 0.0
      %877 = vmatprep.subr.mxu0 0.0
      %878 = vmatpush1.msra.mxu0 0.0
      %879 = vmatprep.subr.mxu0 0.0
      %880 = vmatpush1.msra.mxu0 0.0
      %881 = vmatprep.subr.mxu0 0.0
      %882 = vmatpush1.msra.mxu0 0.0
      %883 = vmatprep.subr.mxu0 0.0
      %884 = vmatpush1.msra.mxu0 0.0
      %885 = vmatprep.subr.mxu0 0.0
      %886 = vmatpush1.msra.mxu0 0.0
      %887 = vmatprep.subr.mxu0 0.0
      %888 = vmatpush1.msra.mxu0 0.0
      %889 = vmatprep.subr.mxu0 0.0
      %890 = vmatpush1.msra.mxu0 0.0
      %891 = vmatprep.subr.mxu0 0.0
      %892 = vmatpush1.msra.mxu0 0.0
      %893 = vmatprep.subr.mxu0 0.0
      %894 = vmatpush1.msra.mxu0 0.0
      %895 = vmatprep.subr.mxu0 0.0
      %896 = vmatpush1.msra.mxu0 0.0
      %897 = vmatprep.mubr.f32.mxu0 0.0
      %898 = vmatmul.mubr.f32.gmra.mrb[0].mxu0 %v831
      %v899 = vpop.f32.mrb[0].mxu0
      %v900 = vadd.f32 0.0, %v899
      %v901 = vpop.f32.mrb[0].mxu0
      %902 = vdwg.mxu0
      %v903 = vld [vmem:[%s7] sm:$0x1]
      %v905 = vlaneseq
      %v906 = vshrl.u32 %v905, 7
      %v907 = vsub.s32 0, %v906
      %v908 = vrot.slane %v903, %v907
      %v910 = vmul.f32 %v900, %v908
      %v911 = vld [vmem:[%s8] sm:$0x1]
      %v913 = vlaneseq
      %v914 = vshrl.u32 %v913, 7
      %v915 = vsub.s32 0, %v914
      %v916 = vrot.slane %v911, %v915
      %v918 = vadd.f32 %v910, %v916
      %v919 = vxor.u32 %v918, 2147483648
      %v920 = vmul.f32 %v919, 1.442695
      %v921 = vpow.pop %v920
      %v922 = vadd.f32 %v921, 1.0
      %v923 = vrcp.pop %v922
      %v924 = vmul.f32 1.0, %v923
      %v925 = vmul.f32 %v918, %v924
      %vm926 = vcmask 64512
      %v928 = vsel %vm926, %v695, 0
      %930 = vmatprep.subr.mxu0 0.0
      %931 = vmatpush1.msra.mxu0 %v925
      %932 = vmatprep.subr.mxu0 0.0
      %933 = vmatpush1.msra.mxu0 0.0
      %934 = vmatprep.subr.mxu0 0.0
      %935 = vmatpush1.msra.mxu0 0.0
      %936 = vmatprep.subr.mxu0 0.0
      %937 = vmatpush1.msra.mxu0 0.0
      %938 = vmatprep.subr.mxu0 0.0
      %939 = vmatpush1.msra.mxu0 0.0
      %940 = vmatprep.subr.mxu0 0.0
      %941 = vmatpush1.msra.mxu0 0.0
      %942 = vmatprep.subr.mxu0 0.0
      %943 = vmatpush1.msra.mxu0 0.0
      %944 = vmatprep.subr.mxu0 0.0
      %945 = vmatpush1.msra.mxu0 0.0
      %946 = vmatprep.subr.mxu0 0.0
      %947 = vmatpush1.msra.mxu0 0.0
      %948 = vmatprep.subr.mxu0 0.0
      %949 = vmatpush1.msra.mxu0 0.0
      %950 = vmatprep.subr.mxu0 0.0
      %951 = vmatpush1.msra.mxu0 0.0
      %952 = vmatprep.subr.mxu0 0.0
      %953 = vmatpush1.msra.mxu0 0.0
      %954 = vmatprep.subr.mxu0 0.0
      %955 = vmatpush1.msra.mxu0 0.0
      %956 = vmatprep.subr.mxu0 0.0
      %957 = vmatpush1.msra.mxu0 0.0
      %958 = vmatprep.subr.mxu0 0.0
      %959 = vmatpush1.msra.mxu0 0.0
      %960 = vmatprep.subr.mxu0 0.0
      %961 = vmatpush1.msra.mxu0 0.0
      %962 = vmatprep.subr.mxu0 0.0
      %963 = vmatpush1.msra.mxu0 0.0
      %964 = vmatprep.subr.mxu0 0.0
      %965 = vmatpush1.msra.mxu0 0.0
      %966 = vmatprep.subr.mxu0 0.0
      %967 = vmatpush1.msra.mxu0 0.0
      %968 = vmatprep.subr.mxu0 0.0
      %969 = vmatpush1.msra.mxu0 0.0
      %970 = vmatprep.subr.mxu0 0.0
      %971 = vmatpush1.msra.mxu0 0.0
      %972 = vmatprep.subr.mxu0 0.0
      %973 = vmatpush1.msra.mxu0 0.0
      %974 = vmatprep.subr.mxu0 0.0
      %975 = vmatpush1.msra.mxu0 0.0
      %976 = vmatprep.subr.mxu0 0.0
      %977 = vmatpush1.msra.mxu0 0.0
      %978 = vmatprep.subr.mxu0 0.0
      %979 = vmatpush1.msra.mxu0 0.0
      %980 = vmatprep.subr.mxu0 0.0
      %981 = vmatpush1.msra.mxu0 0.0
      %982 = vmatprep.subr.mxu0 0.0
      %983 = vmatpush1.msra.mxu0 0.0
      %984 = vmatprep.subr.mxu0 0.0
      %985 = vmatpush1.msra.mxu0 0.0
      %986 = vmatprep.subr.mxu0 0.0
      %987 = vmatpush1.msra.mxu0 0.0
      %988 = vmatprep.subr.mxu0 0.0
      %989 = vmatpush1.msra.mxu0 0.0
      %990 = vmatprep.subr.mxu0 0.0
      %991 = vmatpush1.msra.mxu0 0.0
      %992 = vmatprep.subr.mxu0 0.0
      %993 = vmatpush1.msra.mxu0 0.0
      %994 = vmatprep.mubr.f32.mxu0 0.0
      %995 = vmatmul.mubr.f32.gmra.mrb[0].mxu0 %v928
      %v996 = vpop.f32.mrb[0].mxu0
      %v997 = vadd.f32 0.0, %v996
      %v998 = vpop.f32.mrb[0].mxu0
      %999 = vdwg.mxu0
      %v1000 = vld [vmem:[%s9] sm:$0xff]
      %v1001 = vld [vmem:[%s9 + $0x8] sm:$0xff]
      %v1002 = vld [vmem:[%s9 + $0x10] sm:$0xff]
      %v1003 = vld [vmem:[%s9 + $0x18] sm:$0xff]
      %v1004 = vld [vmem:[%s9 + $0x20] sm:$0xff]
      %v1005 = vld [vmem:[%s9 + $0x28] sm:$0xff]
      %v1006 = vld [vmem:[%s9 + $0x30] sm:$0xff]
      %v1007 = vld [vmem:[%s9 + $0x38] sm:$0xff]
      %v1008 = vld [vmem:[%s9 + $0x40] sm:$0xff]
      %v1009 = vld [vmem:[%s9 + $0x48] sm:$0xff]
      %v1010 = vld [vmem:[%s9 + $0x50] sm:$0xff]
      %v1011 = vld [vmem:[%s9 + $0x58] sm:$0xff]
      %v1012 = vld [vmem:[%s9 + $0x60] sm:$0xff]
      %v1013 = vld [vmem:[%s9 + $0x68] sm:$0xff]
      %v1014 = vld [vmem:[%s9 + $0x70] sm:$0xff]
      %v1015 = vld [vmem:[%s9 + $0x78] sm:$0xff]
      %s1016 = scalar_lea.vmem %s9, 128
      %v1017 = vld [vmem:[%s1016] sm:$0xff]
      %v1018 = vld [vmem:[%s1016 + $0x8] sm:$0xff]
      %v1019 = vld [vmem:[%s1016 + $0x10] sm:$0xff]
      %v1020 = vld [vmem:[%s1016 + $0x18] sm:$0xff]
      %v1021 = vld [vmem:[%s1016 + $0x20] sm:$0xff]
      %v1022 = vld [vmem:[%s1016 + $0x28] sm:$0xff]
      %v1023 = vld [vmem:[%s1016 + $0x30] sm:$0xff]
      %v1024 = vld [vmem:[%s1016 + $0x38] sm:$0xff]
      %v1025 = vld [vmem:[%s1016 + $0x40] sm:$0xff]
      %v1026 = vld [vmem:[%s1016 + $0x48] sm:$0xff]
      %v1027 = vld [vmem:[%s1016 + $0x50] sm:$0xff]
      %v1028 = vld [vmem:[%s1016 + $0x58] sm:$0xff]
      %v1029 = vld [vmem:[%s1016 + $0x60] sm:$0xff]
      %v1030 = vld [vmem:[%s1016 + $0x68] sm:$0xff]
      %v1031 = vld [vmem:[%s1016 + $0x70] sm:$0xff]
      %v1032 = vld [vmem:[%s1016 + $0x78] sm:$0xff]
      %1033 = vmatprep.subr.mxu0 0.0
      %1034 = vmatpush1.msra.mxu0 %v1017
      %1035 = vmatprep.subr.mxu0 0.0
      %1036 = vmatpush1.msra.mxu0 %v1018
      %1037 = vmatprep.subr.mxu0 0.0
      %1038 = vmatpush1.msra.mxu0 %v1019
      %1039 = vmatprep.subr.mxu0 0.0
      %1040 = vmatpush1.msra.mxu0 %v1020
      %1041 = vmatprep.subr.mxu0 0.0
      %1042 = vmatpush1.msra.mxu0 %v1021
      %1043 = vmatprep.subr.mxu0 0.0
      %1044 = vmatpush1.msra.mxu0 %v1022
      %1045 = vmatprep.subr.mxu0 0.0
      %1046 = vmatpush1.msra.mxu0 %v1023
      %1047 = vmatprep.subr.mxu0 0.0
      %1048 = vmatpush1.msra.mxu0 %v1024
      %1049 = vmatprep.subr.mxu0 0.0
      %1050 = vmatpush1.msra.mxu0 %v1025
      %1051 = vmatprep.subr.mxu0 0.0
      %1052 = vmatpush1.msra.mxu0 %v1026
      %1053 = vmatprep.subr.mxu0 0.0
      %1054 = vmatpush1.msra.mxu0 %v1027
      %1055 = vmatprep.subr.mxu0 0.0
      %1056 = vmatpush1.msra.mxu0 %v1028
      %1057 = vmatprep.subr.mxu0 0.0
      %1058 = vmatpush1.msra.mxu0 %v1029
      %1059 = vmatprep.subr.mxu0 0.0
      %1060 = vmatpush1.msra.mxu0 %v1030
      %1061 = vmatprep.subr.mxu0 0.0
      %1062 = vmatpush1.msra.mxu0 %v1031
      %1063 = vmatprep.subr.mxu0 0.0
      %1064 = vmatpush1.msra.mxu0 %v1032
      %1065 = vmatprep.subr.mxu0 0.0
      %1066 = vmatpush1.msra.mxu0 0.0
      %1067 = vmatprep.subr.mxu0 0.0
      %1068 = vmatpush1.msra.mxu0 0.0
      %1069 = vmatprep.subr.mxu0 0.0
      %1070 = vmatpush1.msra.mxu0 0.0
      %1071 = vmatprep.subr.mxu0 0.0
      %1072 = vmatpush1.msra.mxu0 0.0
      %1073 = vmatprep.subr.mxu0 0.0
      %1074 = vmatpush1.msra.mxu0 0.0
      %1075 = vmatprep.subr.mxu0 0.0
      %1076 = vmatpush1.msra.mxu0 0.0
      %1077 = vmatprep.subr.mxu0 0.0
      %1078 = vmatpush1.msra.mxu0 0.0
      %1079 = vmatprep.subr.mxu0 0.0
      %1080 = vmatpush1.msra.mxu0 0.0
      %1081 = vmatprep.subr.mxu0 0.0
      %1082 = vmatpush1.msra.mxu0 0.0
      %1083 = vmatprep.subr.mxu0 0.0
      %1084 = vmatpush1.msra.mxu0 0.0
      %1085 = vmatprep.subr.mxu0 0.0
      %1086 = vmatpush1.msra.mxu0 0.0
      %1087 = vmatprep.subr.mxu0 0.0
      %1088 = vmatpush1.msra.mxu0 0.0
      %1089 = vmatprep.subr.mxu0 0.0
      %1090 = vmatpush1.msra.mxu0 0.0
      %1091 = vmatprep.subr.mxu0 0.0
      %1092 = vmatpush1.msra.mxu0 0.0
      %1093 = vmatprep.subr.mxu0 0.0
      %1094 = vmatpush1.msra.mxu0 0.0
      %1095 = vmatprep.subr.mxu0 0.0
      %1096 = vmatpush1.msra.mxu0 0.0
      %1097 = vmatprep.mubr.f32.mxu0 0.0
      %1098 = vmatmul.mubr.f32.gmra.mrb[0].mxu0 %v925
      %v1099 = vpop.f32.mrb[0].mxu0
      %v1100 = vadd.f32 0.0, %v1099
      %v1101 = vpop.f32.mrb[0].mxu0
      %1102 = vdwg.mxu0
      %v1104 = vsel %vm926, %v696, 0
      %1106 = vmatprep.subr.mxu0 0.0
      %1107 = vmatpush1.msra.mxu0 %v925
      %1108 = vmatprep.subr.mxu0 0.0
      %1109 = vmatpush1.msra.mxu0 0.0
      %1110 = vmatprep.subr.mxu0 0.0
      %1111 = vmatpush1.msra.mxu0 0.0
      %1112 = vmatprep.subr.mxu0 0.0
      %1113 = vmatpush1.msra.mxu0 0.0
      %1114 = vmatprep.subr.mxu0 0.0
      %1115 = vmatpush1.msra.mxu0 0.0
      %1116 = vmatprep.subr.mxu0 0.0
      %1117 = vmatpush1.msra.mxu0 0.0
      %1118 = vmatprep.subr.mxu0 0.0
      %1119 = vmatpush1.msra.mxu0 0.0
      %1120 = vmatprep.subr.mxu0 0.0
      %1121 = vmatpush1.msra.mxu0 0.0
      %1122 = vmatprep.subr.mxu0 0.0
      %1123 = vmatpush1.msra.mxu0 0.0
      %1124 = vmatprep.subr.mxu0 0.0
      %1125 = vmatpush1.msra.mxu0 0.0
      %1126 = vmatprep.subr.mxu0 0.0
      %1127 = vmatpush1.msra.mxu0 0.0
      %1128 = vmatprep.subr.mxu0 0.0
      %1129 = vmatpush1.msra.mxu0 0.0
      %1130 = vmatprep.subr.mxu0 0.0
      %1131 = vmatpush1.msra.mxu0 0.0
      %1132 = vmatprep.subr.mxu0 0.0
      %1133 = vmatpush1.msra.mxu0 0.0
      %1134 = vmatprep.subr.mxu0 0.0
      %1135 = vmatpush1.msra.mxu0 0.0
      %1136 = vmatprep.subr.mxu0 0.0
      %1137 = vmatpush1.msra.mxu0 0.0
      %1138 = vmatprep.subr.mxu0 0.0
      %1139 = vmatpush1.msra.mxu0 0.0
      %1140 = vmatprep.subr.mxu0 0.0
      %1141 = vmatpush1.msra.mxu0 0.0
      %1142 = vmatprep.subr.mxu0 0.0
      %1143 = vmatpush1.msra.mxu0 0.0
      %1144 = vmatprep.subr.mxu0 0.0
      %1145 = vmatpush1.msra.mxu0 0.0
      %1146 = vmatprep.subr.mxu0 0.0
      %1147 = vmatpush1.msra.mxu0 0.0
      %1148 = vmatprep.subr.mxu0 0.0
      %1149 = vmatpush1.msra.mxu0 0.0
      %1150 = vmatprep.subr.mxu0 0.0
      %1151 = vmatpush1.msra.mxu0 0.0
      %1152 = vmatprep.subr.mxu0 0.0
      %1153 = vmatpush1.msra.mxu0 0.0
      %1154 = vmatprep.subr.mxu0 0.0
      %1155 = vmatpush1.msra.mxu0 0.0
      %1156 = vmatprep.subr.mxu0 0.0
      %1157 = vmatpush1.msra.mxu0 0.0
      %1158 = vmatprep.subr.mxu0 0.0
      %1159 = vmatpush1.msra.mxu0 0.0
      %1160 = vmatprep.subr.mxu0 0.0
      %1161 = vmatpush1.msra.mxu0 0.0
      %1162 = vmatprep.subr.mxu0 0.0
      %1163 = vmatpush1.msra.mxu0 0.0
      %1164 = vmatprep.subr.mxu0 0.0
      %1165 = vmatpush1.msra.mxu0 0.0
      %1166 = vmatprep.subr.mxu0 0.0
      %1167 = vmatpush1.msra.mxu0 0.0
      %1168 = vmatprep.subr.mxu0 0.0
      %1169 = vmatpush1.msra.mxu0 0.0
      %1170 = vmatprep.mubr.f32.mxu0 0.0
      %1171 = vmatmul.mubr.f32.gmra.mrb[0].mxu0 %v1104
      %v1172 = vpop.f32.mrb[0].mxu0
      %v1173 = vadd.f32 0.0, %v1172
      %v1174 = vpop.f32.mrb[0].mxu0
      %1175 = vdwg.mxu0
      %s1176 = scalar_lea.vmem %s9, 256
      %v1177 = vld [vmem:[%s1176] sm:$0xff]
      %v1178 = vld [vmem:[%s1176 + $0x8] sm:$0xff]
      %v1179 = vld [vmem:[%s1176 + $0x10] sm:$0xff]
      %v1180 = vld [vmem:[%s1176 + $0x18] sm:$0xff]
      %v1181 = vld [vmem:[%s1176 + $0x20] sm:$0xff]
      %v1182 = vld [vmem:[%s1176 + $0x28] sm:$0xff]
      %v1183 = vld [vmem:[%s1176 + $0x30] sm:$0xff]
      %v1184 = vld [vmem:[%s1176 + $0x38] sm:$0xff]
      %v1185 = vld [vmem:[%s1176 + $0x40] sm:$0xff]
      %v1186 = vld [vmem:[%s1176 + $0x48] sm:$0xff]
      %v1187 = vld [vmem:[%s1176 + $0x50] sm:$0xff]
      %v1188 = vld [vmem:[%s1176 + $0x58] sm:$0xff]
      %v1189 = vld [vmem:[%s1176 + $0x60] sm:$0xff]
      %v1190 = vld [vmem:[%s1176 + $0x68] sm:$0xff]
      %v1191 = vld [vmem:[%s1176 + $0x70] sm:$0xff]
      %v1192 = vld [vmem:[%s1176 + $0x78] sm:$0xff]
      %1193 = vmatprep.subr.mxu0 0.0
      %1194 = vmatpush1.msra.mxu0 %v1177
      %1195 = vmatprep.subr.mxu0 0.0
      %1196 = vmatpush1.msra.mxu0 %v1178
      %1197 = vmatprep.subr.mxu0 0.0
      %1198 = vmatpush1.msra.mxu0 %v1179
      %1199 = vmatprep.subr.mxu0 0.0
      %1200 = vmatpush1.msra.mxu0 %v1180
      %1201 = vmatprep.subr.mxu0 0.0
      %1202 = vmatpush1.msra.mxu0 %v1181
      %1203 = vmatprep.subr.mxu0 0.0
      %1204 = vmatpush1.msra.mxu0 %v1182
      %1205 = vmatprep.subr.mxu0 0.0
      %1206 = vmatpush1.msra.mxu0 %v1183
      %1207 = vmatprep.subr.mxu0 0.0
      %1208 = vmatpush1.msra.mxu0 %v1184
      %1209 = vmatprep.subr.mxu0 0.0
      %1210 = vmatpush1.msra.mxu0 %v1185
      %1211 = vmatprep.subr.mxu0 0.0
      %1212 = vmatpush1.msra.mxu0 %v1186
      %1213 = vmatprep.subr.mxu0 0.0
      %1214 = vmatpush1.msra.mxu0 %v1187
      %1215 = vmatprep.subr.mxu0 0.0
      %1216 = vmatpush1.msra.mxu0 %v1188
      %1217 = vmatprep.subr.mxu0 0.0
      %1218 = vmatpush1.msra.mxu0 %v1189
      %1219 = vmatprep.subr.mxu0 0.0
      %1220 = vmatpush1.msra.mxu0 %v1190
      %1221 = vmatprep.subr.mxu0 0.0
      %1222 = vmatpush1.msra.mxu0 %v1191
      %1223 = vmatprep.subr.mxu0 0.0
      %1224 = vmatpush1.msra.mxu0 %v1192
      %1225 = vmatprep.subr.mxu0 0.0
      %1226 = vmatpush1.msra.mxu0 0.0
      %1227 = vmatprep.subr.mxu0 0.0
      %1228 = vmatpush1.msra.mxu0 0.0
      %1229 = vmatprep.subr.mxu0 0.0
      %1230 = vmatpush1.msra.mxu0 0.0
      %1231 = vmatprep.subr.mxu0 0.0
      %1232 = vmatpush1.msra.mxu0 0.0
      %1233 = vmatprep.subr.mxu0 0.0
      %1234 = vmatpush1.msra.mxu0 0.0
      %1235 = vmatprep.subr.mxu0 0.0
      %1236 = vmatpush1.msra.mxu0 0.0
      %1237 = vmatprep.subr.mxu0 0.0
      %1238 = vmatpush1.msra.mxu0 0.0
      %1239 = vmatprep.subr.mxu0 0.0
      %1240 = vmatpush1.msra.mxu0 0.0
      %1241 = vmatprep.subr.mxu0 0.0
      %1242 = vmatpush1.msra.mxu0 0.0
      %1243 = vmatprep.subr.mxu0 0.0
      %1244 = vmatpush1.msra.mxu0 0.0
      %1245 = vmatprep.subr.mxu0 0.0
      %1246 = vmatpush1.msra.mxu0 0.0
      %1247 = vmatprep.subr.mxu0 0.0
      %1248 = vmatpush1.msra.mxu0 0.0
      %1249 = vmatprep.subr.mxu0 0.0
      %1250 = vmatpush1.msra.mxu0 0.0
      %1251 = vmatprep.subr.mxu0 0.0
      %1252 = vmatpush1.msra.mxu0 0.0
      %1253 = vmatprep.subr.mxu0 0.0
      %1254 = vmatpush1.msra.mxu0 0.0
      %1255 = vmatprep.subr.mxu0 0.0
      %1256 = vmatpush1.msra.mxu0 0.0
      %1257 = vmatprep.mubr.f32.mxu0 0.0
      %1258 = vmatmul.mubr.f32.gmra.mrb[0].mxu0 %v1173
      %v1259 = vpop.f32.mrb[0].mxu0
      %v1260 = vadd.f32 0.0, %v1259
      %v1261 = vpop.f32.mrb[0].mxu0
      %1262 = vdwg.mxu0
      %1263 = vmatprep.subr.mxu0 0.0
      %1264 = vmatpush1.msra.mxu0 %v1000
      %1265 = vmatprep.subr.mxu0 0.0
      %1266 = vmatpush1.msra.mxu0 %v1001
      %1267 = vmatprep.subr.mxu0 0.0
      %1268 = vmatpush1.msra.mxu0 %v1002
      %1269 = vmatprep.subr.mxu0 0.0
      %1270 = vmatpush1.msra.mxu0 %v1003
      %1271 = vmatprep.subr.mxu0 0.0
      %1272 = vmatpush1.msra.mxu0 %v1004
      %1273 = vmatprep.subr.mxu0 0.0
      %1274 = vmatpush1.msra.mxu0 %v1005
      %1275 = vmatprep.subr.mxu0 0.0
      %1276 = vmatpush1.msra.mxu0 %v1006
      %1277 = vmatprep.subr.mxu0 0.0
      %1278 = vmatpush1.msra.mxu0 %v1007
      %1279 = vmatprep.subr.mxu0 0.0
      %1280 = vmatpush1.msra.mxu0 %v1008
      %1281 = vmatprep.subr.mxu0 0.0
      %1282 = vmatpush1.msra.mxu0 %v1009
      %1283 = vmatprep.subr.mxu0 0.0
      %1284 = vmatpush1.msra.mxu0 %v1010
      %1285 = vmatprep.subr.mxu0 0.0
      %1286 = vmatpush1.msra.mxu0 %v1011
      %1287 = vmatprep.subr.mxu0 0.0
      %1288 = vmatpush1.msra.mxu0 %v1012
      %1289 = vmatprep.subr.mxu0 0.0
      %1290 = vmatpush1.msra.mxu0 %v1013
      %1291 = vmatprep.subr.mxu0 0.0
      %1292 = vmatpush1.msra.mxu0 %v1014
      %1293 = vmatprep.subr.mxu0 0.0
      %1294 = vmatpush1.msra.mxu0 %v1015
      %1295 = vmatprep.subr.mxu0 0.0
      %1296 = vmatpush1.msra.mxu0 0.0
      %1297 = vmatprep.subr.mxu0 0.0
      %1298 = vmatpush1.msra.mxu0 0.0
      %1299 = vmatprep.subr.mxu0 0.0
      %1300 = vmatpush1.msra.mxu0 0.0
      %1301 = vmatprep.subr.mxu0 0.0
      %1302 = vmatpush1.msra.mxu0 0.0
      %1303 = vmatprep.subr.mxu0 0.0
      %1304 = vmatpush1.msra.mxu0 0.0
      %1305 = vmatprep.subr.mxu0 0.0
      %1306 = vmatpush1.msra.mxu0 0.0
      %1307 = vmatprep.subr.mxu0 0.0
      %1308 = vmatpush1.msra.mxu0 0.0
      %1309 = vmatprep.subr.mxu0 0.0
      %1310 = vmatpush1.msra.mxu0 0.0
      %1311 = vmatprep.subr.mxu0 0.0
      %1312 = vmatpush1.msra.mxu0 0.0
      %1313 = vmatprep.subr.mxu0 0.0
      %1314 = vmatpush1.msra.mxu0 0.0
      %1315 = vmatprep.subr.mxu0 0.0
      %1316 = vmatpush1.msra.mxu0 0.0
      %1317 = vmatprep.subr.mxu0 0.0
      %1318 = vmatpush1.msra.mxu0 0.0
      %1319 = vmatprep.subr.mxu0 0.0
      %1320 = vmatpush1.msra.mxu0 0.0
      %1321 = vmatprep.subr.mxu0 0.0
      %1322 = vmatpush1.msra.mxu0 0.0
      %1323 = vmatprep.subr.mxu0 0.0
      %1324 = vmatpush1.msra.mxu0 0.0
      %1325 = vmatprep.subr.mxu0 0.0
      %1326 = vmatpush1.msra.mxu0 0.0
      %1327 = vmatprep.mubr.f32.mxu0 0.0
      %1328 = vmatmul.mubr.f32.gmra.mrb[0].mxu0 %v997
      %v1329 = vpop.f32.mrb[0].mxu0
      %v1330 = vadd.f32 %v1100, %v1329
      %v1331 = vpop.f32.mrb[0].mxu0
      %1332 = vdwg.mxu0
      %v1333 = vadd.f32 %v1330, %v1260
      %v1334 = vld [vmem:[%s10] sm:$0x1]
      %v1336 = vlaneseq
      %v1337 = vshrl.u32 %v1336, 7
      %v1338 = vsub.s32 0, %v1337
      %v1339 = vrot.slane %v1334, %v1338
      %v1341 = vmul.f32 %v1333, %v1339
      %v1342 = vld [vmem:[%s11] sm:$0x1]
      %v1344 = vlaneseq
      %v1345 = vshrl.u32 %v1344, 7
      %v1346 = vsub.s32 0, %v1345
      %v1347 = vrot.slane %v1342, %v1346
      %v1349 = vadd.f32 %v1341, %v1347
      %v1350 = vxor.u32 %v1349, 2147483648
      %v1351 = vmul.f32 %v1350, 1.442695
      %v1352 = vpow.pop %v1351
      %v1353 = vadd.f32 %v1352, 1.0
      %v1354 = vrcp.pop %v1353
      %v1355 = vmul.f32 1.0, %v1354
      %v1356 = vmul.f32 %v1349, %v1355
      %v1357 = vld [vmem:[%s12] sm:$0xff]
      %v1358 = vld [vmem:[%s12 + $0x8] sm:$0xff]
      %v1359 = vld [vmem:[%s12 + $0x10] sm:$0xff]
      %v1360 = vld [vmem:[%s12 + $0x18] sm:$0xff]
      %v1361 = vld [vmem:[%s12 + $0x20] sm:$0xff]
      %v1362 = vld [vmem:[%s12 + $0x28] sm:$0xff]
      %v1363 = vld [vmem:[%s12 + $0x30] sm:$0xff]
      %v1364 = vld [vmem:[%s12 + $0x38] sm:$0xff]
      %v1365 = vld [vmem:[%s12 + $0x40] sm:$0xff]
      %v1366 = vld [vmem:[%s12 + $0x48] sm:$0xff]
      %v1367 = vld [vmem:[%s12 + $0x50] sm:$0xff]
      %v1368 = vld [vmem:[%s12 + $0x58] sm:$0xff]
      %v1369 = vld [vmem:[%s12 + $0x60] sm:$0xff]
      %v1370 = vld [vmem:[%s12 + $0x68] sm:$0xff]
      %v1371 = vld [vmem:[%s12 + $0x70] sm:$0xff]
      %v1372 = vld [vmem:[%s12 + $0x78] sm:$0xff]
      %1373 = vmatprep.subr.mxu0 0.0
      %1374 = vmatpush1.msra.mxu0 %v1357
      %1375 = vmatprep.subr.mxu0 0.0
      %1376 = vmatpush1.msra.mxu0 %v1358
      %1377 = vmatprep.subr.mxu0 0.0
      %1378 = vmatpush1.msra.mxu0 %v1359
      %1379 = vmatprep.subr.mxu0 0.0
      %1380 = vmatpush1.msra.mxu0 %v1360
      %1381 = vmatprep.subr.mxu0 0.0
      %1382 = vmatpush1.msra.mxu0 %v1361
      %1383 = vmatprep.subr.mxu0 0.0
      %1384 = vmatpush1.msra.mxu0 %v1362
      %1385 = vmatprep.subr.mxu0 0.0
      %1386 = vmatpush1.msra.mxu0 %v1363
      %1387 = vmatprep.subr.mxu0 0.0
      %1388 = vmatpush1.msra.mxu0 %v1364
      %1389 = vmatprep.subr.mxu0 0.0
      %1390 = vmatpush1.msra.mxu0 %v1365
      %1391 = vmatprep.subr.mxu0 0.0
      %1392 = vmatpush1.msra.mxu0 %v1366
      %1393 = vmatprep.subr.mxu0 0.0
      %1394 = vmatpush1.msra.mxu0 %v1367
      %1395 = vmatprep.subr.mxu0 0.0
      %1396 = vmatpush1.msra.mxu0 %v1368
      %1397 = vmatprep.subr.mxu0 0.0
      %1398 = vmatpush1.msra.mxu0 %v1369
      %1399 = vmatprep.subr.mxu0 0.0
      %1400 = vmatpush1.msra.mxu0 %v1370
      %1401 = vmatprep.subr.mxu0 0.0
      %1402 = vmatpush1.msra.mxu0 %v1371
      %1403 = vmatprep.subr.mxu0 0.0
      %1404 = vmatpush1.msra.mxu0 %v1372
      %1405 = vmatprep.subr.mxu0 0.0
      %1406 = vmatpush1.msra.mxu0 0.0
      %1407 = vmatprep.subr.mxu0 0.0
      %1408 = vmatpush1.msra.mxu0 0.0
      %1409 = vmatprep.subr.mxu0 0.0
      %1410 = vmatpush1.msra.mxu0 0.0
      %1411 = vmatprep.subr.mxu0 0.0
      %1412 = vmatpush1.msra.mxu0 0.0
      %1413 = vmatprep.subr.mxu0 0.0
      %1414 = vmatpush1.msra.mxu0 0.0
      %1415 = vmatprep.subr.mxu0 0.0
      %1416 = vmatpush1.msra.mxu0 0.0
      %1417 = vmatprep.subr.mxu0 0.0
      %1418 = vmatpush1.msra.mxu0 0.0
      %1419 = vmatprep.subr.mxu0 0.0
      %1420 = vmatpush1.msra.mxu0 0.0
      %1421 = vmatprep.subr.mxu0 0.0
      %1422 = vmatpush1.msra.mxu0 0.0
      %1423 = vmatprep.subr.mxu0 0.0
      %1424 = vmatpush1.msra.mxu0 0.0
      %1425 = vmatprep.subr.mxu0 0.0
      %1426 = vmatpush1.msra.mxu0 0.0
      %1427 = vmatprep.subr.mxu0 0.0
      %1428 = vmatpush1.msra.mxu0 0.0
      %1429 = vmatprep.subr.mxu0 0.0
      %1430 = vmatpush1.msra.mxu0 0.0
      %1431 = vmatprep.subr.mxu0 0.0
      %1432 = vmatpush1.msra.mxu0 0.0
      %1433 = vmatprep.subr.mxu0 0.0
      %1434 = vmatpush1.msra.mxu0 0.0
      %1435 = vmatprep.subr.mxu0 0.0
      %1436 = vmatpush1.msra.mxu0 0.0
      %1437 = vmatprep.mubr.f32.mxu0 0.0
      %1438 = vmatmul.mubr.f32.gmra.mrb[0].mxu0 %v1356
      %v1439 = vpop.f32.mrb[0].mxu0
      %v1440 = vadd.f32 0.0, %v1439
      %v1441 = vpop.f32.mrb[0].mxu0
      %1442 = vdwg.mxu0
      %v1443 = vld [vmem:[%s13] sm:$0x1]
      %v1445 = vlaneseq
      %v1446 = vshrl.u32 %v1445, 7
      %v1447 = vsub.s32 0, %v1446
      %v1448 = vrot.slane %v1443, %v1447
      %v1450 = vmul.f32 %v1440, %v1448
      %v1451 = vld [vmem:[%s14] sm:$0x1]
      %v1453 = vlaneseq
      %v1454 = vshrl.u32 %v1453, 7
      %v1455 = vsub.s32 0, %v1454
      %v1456 = vrot.slane %v1451, %v1455
      %v1458 = vadd.f32 %v1450, %v1456
      %v1459 = vadd.f32 %v1458, %v820
      %1460 = vmatprep.subr.mxu0 0.0
      %1461 = vmatpush1.msra.mxu0 %v1459
      %1462 = vmatprep.subr.mxu0 0.0
      %1463 = vmatpush1.msra.mxu0 0.0
      %1464 = vmatprep.subr.mxu0 0.0
      %1465 = vmatpush1.msra.mxu0 0.0
      %1466 = vmatprep.subr.mxu0 0.0
      %1467 = vmatpush1.msra.mxu0 0.0
      %1468 = vmatprep.subr.mxu0 0.0
      %1469 = vmatpush1.msra.mxu0 0.0
      %1470 = vmatprep.subr.mxu0 0.0
      %1471 = vmatpush1.msra.mxu0 0.0
      %1472 = vmatprep.subr.mxu0 0.0
      %1473 = vmatpush1.msra.mxu0 0.0
      %1474 = vmatprep.subr.mxu0 0.0
      %1475 = vmatpush1.msra.mxu0 0.0
      %1476 = vmatprep.subr.mxu0 0.0
      %1477 = vmatpush1.msra.mxu0 0.0
      %1478 = vmatprep.subr.mxu0 0.0
      %1479 = vmatpush1.msra.mxu0 0.0
      %1480 = vmatprep.subr.mxu0 0.0
      %1481 = vmatpush1.msra.mxu0 0.0
      %1482 = vmatprep.subr.mxu0 0.0
      %1483 = vmatpush1.msra.mxu0 0.0
      %1484 = vmatprep.subr.mxu0 0.0
      %1485 = vmatpush1.msra.mxu0 0.0
      %1486 = vmatprep.subr.mxu0 0.0
      %1487 = vmatpush1.msra.mxu0 0.0
      %1488 = vmatprep.subr.mxu0 0.0
      %1489 = vmatpush1.msra.mxu0 0.0
      %1490 = vmatprep.subr.mxu0 0.0
      %1491 = vmatpush1.msra.mxu0 0.0
      %1492 = vmatprep.subr.mxu0 0.0
      %1493 = vmatpush1.msra.mxu0 0.0
      %1494 = vmatprep.subr.mxu0 0.0
      %1495 = vmatpush1.msra.mxu0 0.0
      %1496 = vmatprep.subr.mxu0 0.0
      %1497 = vmatpush1.msra.mxu0 0.0
      %1498 = vmatprep.subr.mxu0 0.0
      %1499 = vmatpush1.msra.mxu0 0.0
      %1500 = vmatprep.subr.mxu0 0.0
      %1501 = vmatpush1.msra.mxu0 0.0
      %1502 = vmatprep.subr.mxu0 0.0
      %1503 = vmatpush1.msra.mxu0 0.0
      %1504 = vmatprep.subr.mxu0 0.0
      %1505 = vmatpush1.msra.mxu0 0.0
      %1506 = vmatprep.subr.mxu0 0.0
      %1507 = vmatpush1.msra.mxu0 0.0
      %1508 = vmatprep.subr.mxu0 0.0
      %1509 = vmatpush1.msra.mxu0 0.0
      %1510 = vmatprep.subr.mxu0 0.0
      %1511 = vmatpush1.msra.mxu0 0.0
      %1512 = vmatprep.subr.mxu0 0.0
      %1513 = vmatpush1.msra.mxu0 0.0
      %1514 = vmatprep.subr.mxu0 0.0
      %1515 = vmatpush1.msra.mxu0 0.0
      %1516 = vmatprep.subr.mxu0 0.0
      %1517 = vmatpush1.msra.mxu0 0.0
      %1518 = vmatprep.subr.mxu0 0.0
      %1519 = vmatpush1.msra.mxu0 0.0
      %1520 = vmatprep.subr.mxu0 0.0
      %1521 = vmatpush1.msra.mxu0 0.0
      %1522 = vmatprep.subr.mxu0 0.0
      %1523 = vmatpush1.msra.mxu0 0.0
      %1524 = vmatprep.mubr.f32.mxu0 0.0
      %1525 = vmatmul.mubr.f32.gmra.mrb[0].mxu0 %v928
      %v1526 = vpop.f32.mrb[0].mxu0
      %v1527 = vadd.f32 0.0, %v1526
      %v1528 = vpop.f32.mrb[0].mxu0
      %1529 = vdwg.mxu0
      %v1530 = vld [vmem:[%s15] sm:$0xff]
      %v1531 = vld [vmem:[%s15 + $0x8] sm:$0xff]
      %v1532 = vld [vmem:[%s15 + $0x10] sm:$0xff]
      %v1533 = vld [vmem:[%s15 + $0x18] sm:$0xff]
      %v1534 = vld [vmem:[%s15 + $0x20] sm:$0xff]
      %v1535 = vld [vmem:[%s15 + $0x28] sm:$0xff]
      %v1536 = vld [vmem:[%s15 + $0x30] sm:$0xff]
      %v1537 = vld [vmem:[%s15 + $0x38] sm:$0xff]
      %s1538 = scalar_lea.vmem %s15, 64
      %v1539 = vld [vmem:[%s1538] sm:$0xff]
      %v1540 = vld [vmem:[%s1538 + $0x8] sm:$0xff]
      %v1541 = vld [vmem:[%s1538 + $0x10] sm:$0xff]
      %v1542 = vld [vmem:[%s1538 + $0x18] sm:$0xff]
      %v1543 = vld [vmem:[%s1538 + $0x20] sm:$0xff]
      %v1544 = vld [vmem:[%s1538 + $0x28] sm:$0xff]
      %v1545 = vld [vmem:[%s1538 + $0x30] sm:$0xff]
      %v1546 = vld [vmem:[%s1538 + $0x38] sm:$0xff]
      %v1548 = vsel %vm829, %v1459, 0
      %1550 = vmatprep.subr.mxu0 0.0
      %1551 = vmatpush1.msra.mxu0 %v1539
      %1552 = vmatprep.subr.mxu0 0.0
      %1553 = vmatpush1.msra.mxu0 %v1540
      %1554 = vmatprep.subr.mxu0 0.0
      %1555 = vmatpush1.msra.mxu0 %v1541
      %1556 = vmatprep.subr.mxu0 0.0
      %1557 = vmatpush1.msra.mxu0 %v1542
      %1558 = vmatprep.subr.mxu0 0.0
      %1559 = vmatpush1.msra.mxu0 %v1543
      %1560 = vmatprep.subr.mxu0 0.0
      %1561 = vmatpush1.msra.mxu0 %v1544
      %1562 = vmatprep.subr.mxu0 0.0
      %1563 = vmatpush1.msra.mxu0 %v1545
      %1564 = vmatprep.subr.mxu0 0.0
      %1565 = vmatpush1.msra.mxu0 %v1546
      %1566 = vmatprep.subr.mxu0 0.0
      %1567 = vmatpush1.msra.mxu0 0.0
      %1568 = vmatprep.subr.mxu0 0.0
      %1569 = vmatpush1.msra.mxu0 0.0
      %1570 = vmatprep.subr.mxu0 0.0
      %1571 = vmatpush1.msra.mxu0 0.0
      %1572 = vmatprep.subr.mxu0 0.0
      %1573 = vmatpush1.msra.mxu0 0.0
      %1574 = vmatprep.subr.mxu0 0.0
      %1575 = vmatpush1.msra.mxu0 0.0
      %1576 = vmatprep.subr.mxu0 0.0
      %1577 = vmatpush1.msra.mxu0 0.0
      %1578 = vmatprep.subr.mxu0 0.0
      %1579 = vmatpush1.msra.mxu0 0.0
      %1580 = vmatprep.subr.mxu0 0.0
      %1581 = vmatpush1.msra.mxu0 0.0
      %1582 = vmatprep.subr.mxu0 0.0
      %1583 = vmatpush1.msra.mxu0 0.0
      %1584 = vmatprep.subr.mxu0 0.0
      %1585 = vmatpush1.msra.mxu0 0.0
      %1586 = vmatprep.subr.mxu0 0.0
      %1587 = vmatpush1.msra.mxu0 0.0
      %1588 = vmatprep.subr.mxu0 0.0
      %1589 = vmatpush1.msra.mxu0 0.0
      %1590 = vmatprep.subr.mxu0 0.0
      %1591 = vmatpush1.msra.mxu0 0.0
      %1592 = vmatprep.subr.mxu0 0.0
      %1593 = vmatpush1.msra.mxu0 0.0
      %1594 = vmatprep.subr.mxu0 0.0
      %1595 = vmatpush1.msra.mxu0 0.0
      %1596 = vmatprep.subr.mxu0 0.0
      %1597 = vmatpush1.msra.mxu0 0.0
      %1598 = vmatprep.subr.mxu0 0.0
      %1599 = vmatpush1.msra.mxu0 0.0
      %1600 = vmatprep.subr.mxu0 0.0
      %1601 = vmatpush1.msra.mxu0 0.0
      %1602 = vmatprep.subr.mxu0 0.0
      %1603 = vmatpush1.msra.mxu0 0.0
      %1604 = vmatprep.subr.mxu0 0.0
      %1605 = vmatpush1.msra.mxu0 0.0
      %1606 = vmatprep.subr.mxu0 0.0
      %1607 = vmatpush1.msra.mxu0 0.0
      %1608 = vmatprep.subr.mxu0 0.0
      %1609 = vmatpush1.msra.mxu0 0.0
      %1610 = vmatprep.subr.mxu0 0.0
      %1611 = vmatpush1.msra.mxu0 0.0
      %1612 = vmatprep.subr.mxu0 0.0
      %1613 = vmatpush1.msra.mxu0 0.0
      %1614 = vmatprep.mubr.f32.mxu0 0.0
      %1615 = vmatmul.mubr.f32.gmra.mrb[0].mxu0 %v1548
      %v1616 = vpop.f32.mrb[0].mxu0
      %v1617 = vadd.f32 0.0, %v1616
      %v1618 = vpop.f32.mrb[0].mxu0
      %1619 = vdwg.mxu0
      %1620 = vmatprep.subr.mxu0 0.0
      %1621 = vmatpush1.msra.mxu0 %v1459
      %1622 = vmatprep.subr.mxu0 0.0
      %1623 = vmatpush1.msra.mxu0 0.0
      %1624 = vmatprep.subr.mxu0 0.0
      %1625 = vmatpush1.msra.mxu0 0.0
      %1626 = vmatprep.subr.mxu0 0.0
      %1627 = vmatpush1.msra.mxu0 0.0
      %1628 = vmatprep.subr.mxu0 0.0
      %1629 = vmatpush1.msra.mxu0 0.0
      %1630 = vmatprep.subr.mxu0 0.0
      %1631 = vmatpush1.msra.mxu0 0.0
      %1632 = vmatprep.subr.mxu0 0.0
      %1633 = vmatpush1.msra.mxu0 0.0
      %1634 = vmatprep.subr.mxu0 0.0
      %1635 = vmatpush1.msra.mxu0 0.0
      %1636 = vmatprep.subr.mxu0 0.0
      %1637 = vmatpush1.msra.mxu0 0.0
      %1638 = vmatprep.subr.mxu0 0.0
      %1639 = vmatpush1.msra.mxu0 0.0
      %1640 = vmatprep.subr.mxu0 0.0
      %1641 = vmatpush1.msra.mxu0 0.0
      %1642 = vmatprep.subr.mxu0 0.0
      %1643 = vmatpush1.msra.mxu0 0.0
      %1644 = vmatprep.subr.mxu0 0.0
      %1645 = vmatpush1.msra.mxu0 0.0
      %1646 = vmatprep.subr.mxu0 0.0
      %1647 = vmatpush1.msra.mxu0 0.0
      %1648 = vmatprep.subr.mxu0 0.0
      %1649 = vmatpush1.msra.mxu0 0.0
      %1650 = vmatprep.subr.mxu0 0.0
      %1651 = vmatpush1.msra.mxu0 0.0
      %1652 = vmatprep.subr.mxu0 0.0
      %1653 = vmatpush1.msra.mxu0 0.0
      %1654 = vmatprep.subr.mxu0 0.0
      %1655 = vmatpush1.msra.mxu0 0.0
      %1656 = vmatprep.subr.mxu0 0.0
      %1657 = vmatpush1.msra.mxu0 0.0
      %1658 = vmatprep.subr.mxu0 0.0
      %1659 = vmatpush1.msra.mxu0 0.0
      %1660 = vmatprep.subr.mxu0 0.0
      %1661 = vmatpush1.msra.mxu0 0.0
      %1662 = vmatprep.subr.mxu0 0.0
      %1663 = vmatpush1.msra.mxu0 0.0
      %1664 = vmatprep.subr.mxu0 0.0
      %1665 = vmatpush1.msra.mxu0 0.0
      %1666 = vmatprep.subr.mxu0 0.0
      %1667 = vmatpush1.msra.mxu0 0.0
      %1668 = vmatprep.subr.mxu0 0.0
      %1669 = vmatpush1.msra.mxu0 0.0
      %1670 = vmatprep.subr.mxu0 0.0
      %1671 = vmatpush1.msra.mxu0 0.0
      %1672 = vmatprep.subr.mxu0 0.0
      %1673 = vmatpush1.msra.mxu0 0.0
      %1674 = vmatprep.subr.mxu0 0.0
      %1675 = vmatpush1.msra.mxu0 0.0
      %1676 = vmatprep.subr.mxu0 0.0
      %1677 = vmatpush1.msra.mxu0 0.0
      %1678 = vmatprep.subr.mxu0 0.0
      %1679 = vmatpush1.msra.mxu0 0.0
      %1680 = vmatprep.subr.mxu0 0.0
      %1681 = vmatpush1.msra.mxu0 0.0
      %1682 = vmatprep.subr.mxu0 0.0
      %1683 = vmatpush1.msra.mxu0 0.0
      %1684 = vmatprep.mubr.f32.mxu0 0.0
      %1685 = vmatmul.mubr.f32.gmra.mrb[0].mxu0 %v1104
      %v1686 = vpop.f32.mrb[0].mxu0
      %v1687 = vadd.f32 0.0, %v1686
      %v1688 = vpop.f32.mrb[0].mxu0
      %1689 = vdwg.mxu0
      %s1690 = scalar_lea.vmem %s15, 128
      %v1691 = vld [vmem:[%s1690] sm:$0xff]
      %v1692 = vld [vmem:[%s1690 + $0x8] sm:$0xff]
      %v1693 = vld [vmem:[%s1690 + $0x10] sm:$0xff]
      %v1694 = vld [vmem:[%s1690 + $0x18] sm:$0xff]
      %v1695 = vld [vmem:[%s1690 + $0x20] sm:$0xff]
      %v1696 = vld [vmem:[%s1690 + $0x28] sm:$0xff]
      %v1697 = vld [vmem:[%s1690 + $0x30] sm:$0xff]
      %v1698 = vld [vmem:[%s1690 + $0x38] sm:$0xff]
      %v1700 = vsel %vm829, %v1687, 0
      %1702 = vmatprep.subr.mxu0 0.0
      %1703 = vmatpush1.msra.mxu0 %v1691
      %1704 = vmatprep.subr.mxu0 0.0
      %1705 = vmatpush1.msra.mxu0 %v1692
      %1706 = vmatprep.subr.mxu0 0.0
      %1707 = vmatpush1.msra.mxu0 %v1693
      %1708 = vmatprep.subr.mxu0 0.0
      %1709 = vmatpush1.msra.mxu0 %v1694
      %1710 = vmatprep.subr.mxu0 0.0
      %1711 = vmatpush1.msra.mxu0 %v1695
      %1712 = vmatprep.subr.mxu0 0.0
      %1713 = vmatpush1.msra.mxu0 %v1696
      %1714 = vmatprep.subr.mxu0 0.0
      %1715 = vmatpush1.msra.mxu0 %v1697
      %1716 = vmatprep.subr.mxu0 0.0
      %1717 = vmatpush1.msra.mxu0 %v1698
      %1718 = vmatprep.subr.mxu0 0.0
      %1719 = vmatpush1.msra.mxu0 0.0
      %1720 = vmatprep.subr.mxu0 0.0
      %1721 = vmatpush1.msra.mxu0 0.0
      %1722 = vmatprep.subr.mxu0 0.0
      %1723 = vmatpush1.msra.mxu0 0.0
      %1724 = vmatprep.subr.mxu0 0.0
      %1725 = vmatpush1.msra.mxu0 0.0
      %1726 = vmatprep.subr.mxu0 0.0
      %1727 = vmatpush1.msra.mxu0 0.0
      %1728 = vmatprep.subr.mxu0 0.0
      %1729 = vmatpush1.msra.mxu0 0.0
      %1730 = vmatprep.subr.mxu0 0.0
      %1731 = vmatpush1.msra.mxu0 0.0
      %1732 = vmatprep.subr.mxu0 0.0
      %1733 = vmatpush1.msra.mxu0 0.0
      %1734 = vmatprep.subr.mxu0 0.0
      %1735 = vmatpush1.msra.mxu0 0.0
      %1736 = vmatprep.subr.mxu0 0.0
      %1737 = vmatpush1.msra.mxu0 0.0
      %1738 = vmatprep.subr.mxu0 0.0
      %1739 = vmatpush1.msra.mxu0 0.0
      %1740 = vmatprep.subr.mxu0 0.0
      %1741 = vmatpush1.msra.mxu0 0.0
      %1742 = vmatprep.subr.mxu0 0.0
      %1743 = vmatpush1.msra.mxu0 0.0
      %1744 = vmatprep.subr.mxu0 0.0
      %1745 = vmatpush1.msra.mxu0 0.0
      %1746 = vmatprep.subr.mxu0 0.0
      %1747 = vmatpush1.msra.mxu0 0.0
      %1748 = vmatprep.subr.mxu0 0.0
      %1749 = vmatpush1.msra.mxu0 0.0
      %1750 = vmatprep.subr.mxu0 0.0
      %1751 = vmatpush1.msra.mxu0 0.0
      %1752 = vmatprep.subr.mxu0 0.0
      %1753 = vmatpush1.msra.mxu0 0.0
      %1754 = vmatprep.subr.mxu0 0.0
      %1755 = vmatpush1.msra.mxu0 0.0
      %1756 = vmatprep.subr.mxu0 0.0
      %1757 = vmatpush1.msra.mxu0 0.0
      %1758 = vmatprep.subr.mxu0 0.0
      %1759 = vmatpush1.msra.mxu0 0.0
      %1760 = vmatprep.subr.mxu0 0.0
      %1761 = vmatpush1.msra.mxu0 0.0
      %1762 = vmatprep.subr.mxu0 0.0
      %1763 = vmatpush1.msra.mxu0 0.0
      %1764 = vmatprep.subr.mxu0 0.0
      %1765 = vmatpush1.msra.mxu0 0.0
      %1766 = vmatprep.mubr.f32.mxu0 0.0
      %1767 = vmatmul.mubr.f32.gmra.mrb[0].mxu0 %v1700
      %v1768 = vpop.f32.mrb[0].mxu0
      %v1769 = vadd.f32 0.0, %v1768
      %v1770 = vpop.f32.mrb[0].mxu0
      %1771 = vdwg.mxu0
      %v1773 = vsel %vm829, %v1527, 0
      %1775 = vmatprep.subr.mxu0 0.0
      %1776 = vmatpush1.msra.mxu0 %v1530
      %1777 = vmatprep.subr.mxu0 0.0
      %1778 = vmatpush1.msra.mxu0 %v1531
      %1779 = vmatprep.subr.mxu0 0.0
      %1780 = vmatpush1.msra.mxu0 %v1532
      %1781 = vmatprep.subr.mxu0 0.0
      %1782 = vmatpush1.msra.mxu0 %v1533
      %1783 = vmatprep.subr.mxu0 0.0
      %1784 = vmatpush1.msra.mxu0 %v1534
      %1785 = vmatprep.subr.mxu0 0.0
      %1786 = vmatpush1.msra.mxu0 %v1535
      %1787 = vmatprep.subr.mxu0 0.0
      %1788 = vmatpush1.msra.mxu0 %v1536
      %1789 = vmatprep.subr.mxu0 0.0
      %1790 = vmatpush1.msra.mxu0 %v1537
      %1791 = vmatprep.subr.mxu0 0.0
      %1792 = vmatpush1.msra.mxu0 0.0
      %1793 = vmatprep.subr.mxu0 0.0
      %1794 = vmatpush1.msra.mxu0 0.0
      %1795 = vmatprep.subr.mxu0 0.0
      %1796 = vmatpush1.msra.mxu0 0.0
      %1797 = vmatprep.subr.mxu0 0.0
      %1798 = vmatpush1.msra.mxu0 0.0
      %1799 = vmatprep.subr.mxu0 0.0
      %1800 = vmatpush1.msra.mxu0 0.0
      %1801 = vmatprep.subr.mxu0 0.0
      %1802 = vmatpush1.msra.mxu0 0.0
      %1803 = vmatprep.subr.mxu0 0.0
      %1804 = vmatpush1.msra.mxu0 0.0
      %1805 = vmatprep.subr.mxu0 0.0
      %1806 = vmatpush1.msra.mxu0 0.0
      %1807 = vmatprep.subr.mxu0 0.0
      %1808 = vmatpush1.msra.mxu0 0.0
      %1809 = vmatprep.subr.mxu0 0.0
      %1810 = vmatpush1.msra.mxu0 0.0
      %1811 = vmatprep.subr.mxu0 0.0
      %1812 = vmatpush1.msra.mxu0 0.0
      %1813 = vmatprep.subr.mxu0 0.0
      %1814 = vmatpush1.msra.mxu0 0.0
      %1815 = vmatprep.subr.mxu0 0.0
      %1816 = vmatpush1.msra.mxu0 0.0
      %1817 = vmatprep.subr.mxu0 0.0
      %1818 = vmatpush1.msra.mxu0 0.0
      %1819 = vmatprep.subr.mxu0 0.0
      %1820 = vmatpush1.msra.mxu0 0.0
      %1821 = vmatprep.subr.mxu0 0.0
      %1822 = vmatpush1.msra.mxu0 0.0
      %1823 = vmatprep.subr.mxu0 0.0
      %1824 = vmatpush1.msra.mxu0 0.0
      %1825 = vmatprep.subr.mxu0 0.0
      %1826 = vmatpush1.msra.mxu0 0.0
      %1827 = vmatprep.subr.mxu0 0.0
      %1828 = vmatpush1.msra.mxu0 0.0
      %1829 = vmatprep.subr.mxu0 0.0
      %1830 = vmatpush1.msra.mxu0 0.0
      %1831 = vmatprep.subr.mxu0 0.0
      %1832 = vmatpush1.msra.mxu0 0.0
      %1833 = vmatprep.subr.mxu0 0.0
      %1834 = vmatpush1.msra.mxu0 0.0
      %1835 = vmatprep.subr.mxu0 0.0
      %1836 = vmatpush1.msra.mxu0 0.0
      %1837 = vmatprep.subr.mxu0 0.0
      %1838 = vmatpush1.msra.mxu0 0.0
      %1839 = vmatprep.mubr.f32.mxu0 0.0
      %1840 = vmatmul.mubr.f32.gmra.mrb[0].mxu0 %v1773
      %v1841 = vpop.f32.mrb[0].mxu0
      %v1842 = vadd.f32 %v1617, %v1841
      %v1843 = vpop.f32.mrb[0].mxu0
      %1844 = vdwg.mxu0
      %v1845 = vadd.f32 %v1842, %v1769
      %v1846 = vld [vmem:[%s16] sm:$0x1]
      %v1848 = vlaneseq
      %v1849 = vshrl.u32 %v1848, 7
      %v1850 = vsub.s32 0, %v1849
      %v1851 = vrot.slane %v1846, %v1850
      %v1853 = vmul.f32 %v1845, %v1851
      %v1854 = vld [vmem:[%s17] sm:$0x1]
      %v1856 = vlaneseq
      %v1857 = vshrl.u32 %v1856, 7
      %v1858 = vsub.s32 0, %v1857
      %v1859 = vrot.slane %v1854, %v1858
      %v1861 = vadd.f32 %v1853, %v1859
      %v1862 = vxor.u32 %v1861, 2147483648
      %v1863 = vmul.f32 %v1862, 1.442695
      %v1864 = vpow.pop %v1863
      %v1865 = vadd.f32 %v1864, 1.0
      %v1866 = vrcp.pop %v1865
      %v1867 = vmul.f32 1.0, %v1866
      %v1868 = vmul.f32 %v1861, %v1867
      %v1869 = vld [vmem:[%s18] sm:$0xff]
      %v1870 = vld [vmem:[%s18 + $0x8] sm:$0xff]
      %v1871 = vld [vmem:[%s18 + $0x10] sm:$0xff]
      %v1872 = vld [vmem:[%s18 + $0x18] sm:$0xff]
      %v1873 = vld [vmem:[%s18 + $0x20] sm:$0xff]
      %v1874 = vld [vmem:[%s18 + $0x28] sm:$0xff]
      %v1875 = vld [vmem:[%s18 + $0x30] sm:$0xff]
      %v1876 = vld [vmem:[%s18 + $0x38] sm:$0xff]
      %v1878 = vsel %vm829, %v1868, 0
      %1880 = vmatprep.subr.mxu0 0.0
      %1881 = vmatpush1.msra.mxu0 %v1869
      %1882 = vmatprep.subr.mxu0 0.0
      %1883 = vmatpush1.msra.mxu0 %v1870
      %1884 = vmatprep.subr.mxu0 0.0
      %1885 = vmatpush1.msra.mxu0 %v1871
      %1886 = vmatprep.subr.mxu0 0.0
      %1887 = vmatpush1.msra.mxu0 %v1872
      %1888 = vmatprep.subr.mxu0 0.0
      %1889 = vmatpush1.msra.mxu0 %v1873
      %1890 = vmatprep.subr.mxu0 0.0
      %1891 = vmatpush1.msra.mxu0 %v1874
      %1892 = vmatprep.subr.mxu0 0.0
      %1893 = vmatpush1.msra.mxu0 %v1875
      %1894 = vmatprep.subr.mxu0 0.0
      %1895 = vmatpush1.msra.mxu0 %v1876
      %1896 = vmatprep.subr.mxu0 0.0
      %1897 = vmatpush1.msra.mxu0 0.0
      %1898 = vmatprep.subr.mxu0 0.0
      %1899 = vmatpush1.msra.mxu0 0.0
      %1900 = vmatprep.subr.mxu0 0.0
      %1901 = vmatpush1.msra.mxu0 0.0
      %1902 = vmatprep.subr.mxu0 0.0
      %1903 = vmatpush1.msra.mxu0 0.0
      %1904 = vmatprep.subr.mxu0 0.0
      %1905 = vmatpush1.msra.mxu0 0.0
      %1906 = vmatprep.subr.mxu0 0.0
      %1907 = vmatpush1.msra.mxu0 0.0
      %1908 = vmatprep.subr.mxu0 0.0
      %1909 = vmatpush1.msra.mxu0 0.0
      %1910 = vmatprep.subr.mxu0 0.0
      %1911 = vmatpush1.msra.mxu0 0.0
      %1912 = vmatprep.subr.mxu0 0.0
      %1913 = vmatpush1.msra.mxu0 0.0
      %1914 = vmatprep.subr.mxu0 0.0
      %1915 = vmatpush1.msra.mxu0 0.0
      %1916 = vmatprep.subr.mxu0 0.0
      %1917 = vmatpush1.msra.mxu0 0.0
      %1918 = vmatprep.subr.mxu0 0.0
      %1919 = vmatpush1.msra.mxu0 0.0
      %1920 = vmatprep.subr.mxu0 0.0
      %1921 = vmatpush1.msra.mxu0 0.0
      %1922 = vmatprep.subr.mxu0 0.0
      %1923 = vmatpush1.msra.mxu0 0.0
      %1924 = vmatprep.subr.mxu0 0.0
      %1925 = vmatpush1.msra.mxu0 0.0
      %1926 = vmatprep.subr.mxu0 0.0
      %1927 = vmatpush1.msra.mxu0 0.0
      %1928 = vmatprep.subr.mxu0 0.0
      %1929 = vmatpush1.msra.mxu0 0.0
      %1930 = vmatprep.subr.mxu0 0.0
      %1931 = vmatpush1.msra.mxu0 0.0
      %1932 = vmatprep.subr.mxu0 0.0
      %1933 = vmatpush1.msra.mxu0 0.0
      %1934 = vmatprep.subr.mxu0 0.0
      %1935 = vmatpush1.msra.mxu0 0.0
      %1936 = vmatprep.subr.mxu0 0.0
      %1937 = vmatpush1.msra.mxu0 0.0
      %1938 = vmatprep.subr.mxu0 0.0
      %1939 = vmatpush1.msra.mxu0 0.0
      %1940 = vmatprep.subr.mxu0 0.0
      %1941 = vmatpush1.msra.mxu0 0.0
      %1942 = vmatprep.subr.mxu0 0.0
      %1943 = vmatpush1.msra.mxu0 0.0
      %1944 = vmatprep.mubr.f32.mxu0 0.0
      %1945 = vmatmul.mubr.f32.gmra.mrb[0].mxu0 %v1878
      %v1946 = vpop.f32.mrb[0].mxu0
      %v1947 = vadd.f32 0.0, %v1946
      %v1948 = vpop.f32.mrb[0].mxu0
      %1949 = vdwg.mxu0
      %v1950 = vld [vmem:[%s19] sm:$0x1]
      %v1952 = vlaneseq
      %v1953 = vshrl.u32 %v1952, 7
      %v1954 = vsub.s32 0, %v1953
      %v1955 = vrot.slane %v1950, %v1954
      %v1957 = vmul.f32 %v1947, %v1955
      %v1958 = vld [vmem:[%s20] sm:$0x1]
      %v1960 = vlaneseq
      %v1961 = vshrl.u32 %v1960, 7
      %v1962 = vsub.s32 0, %v1961
      %v1963 = vrot.slane %v1958, %v1962
      %v1965 = vadd.f32 %v1957, %v1963
      %v1966 = vxor.u32 %v1965, 2147483648
      %v1967 = vmul.f32 %v1966, 1.442695
      %v1968 = vpow.pop %v1967
      %v1969 = vadd.f32 %v1968, 1.0
      %v1970 = vrcp.pop %v1969
      %v1971 = vmul.f32 1.0, %v1970
      %v1972 = vmul.f32 %v1965, %v1971
      %1973 = vst.msk [vmem:[%s688] sm:$0xff] %vm829, %v1459
      %1974 = vst [vmem:[%s692] sm:$0xff] %v1972
      %p1975 = scmp.lt.s32.totalorder %s34, 1
      %s1976 = scalar_select %p1975, %s34, 1
      %s1977 = smul.addr %s1976, 8
      %s1978 = scalar_lea.vmem %s21, %s1977
      %p1979 = scmp.lt.s32.totalorder %s34, 1
      %s1980 = scalar_select %p1979, %s34, 1
      %s1981 = smul.addr %s1980, 8
      %s1982 = scalar_lea.vmem %s22, %s1981
      // Predicated region
      $region105: #{customvit_forward.3} parent=103 // pred_check
        %p1983 = pneg %p498
      $region106: #{customvit_forward.3} parent=103 // pred_check_branch
        %1985 = sbr.rel (%p1983) target = $region108
      $region107: #{customvit_forward.3} parent=103 // pred_region
        _
      $region108: #{customvit_forward.3} parent=103 // pred_fallthru
        _
      // Predicated region
      $region109: #{customvit_forward.3} parent=103 // pred_check
        %p1986 = pneg %p524
      $region110: #{customvit_forward.3} parent=103 // pred_check_branch
        %1988 = sbr.rel (%p1986) target = $region112
      $region111: #{customvit_forward.3} parent=103 // pred_region
        _
      $region112: #{customvit_forward.3} parent=103 // pred_fallthru
        _
    $region104: #{customvit_forward.3} parent=5 // pred_fallthru
      _
    %p1989 = scmp.le.s32.totalorder 2, %s29
    // Predicated region
    $region113: #{customvit_forward.3} parent=5 // pred_check
      %p1990 = pneg %p1989
    $region114: #{customvit_forward.3} parent=5 // pred_check_branch
      %1992 = sbr.rel (%p1990) target = $region116
    $region115: #{customvit_forward.3} parent=5 // pred_region
      %s1993 = ssub.s32 %s29, 2
      // Predicated region
      $region117: #{customvit_forward.3} parent=115 // pred_check
        %p1994 = pneg %p504
      $region118: #{customvit_forward.3} parent=115 // pred_check_branch
        %1996 = sbr.rel (%p1994) target = $region120
      $region119: #{customvit_forward.3} parent=115 // pred_region
        %p1997 = scmp.lt.s32.totalorder %s35, 1
        %s1998 = scalar_select %p1997, %s35, 1
        %s1999 = smul.addr %s1998, 8
        %s2000 = scalar_lea.vmem %s21, %s1999
      $region120: #{customvit_forward.3} parent=115 // pred_fallthru
        _
      // Predicated region
      $region121: #{customvit_forward.3} parent=115 // pred_check
        %p2001 = pneg %p530
      $region122: #{customvit_forward.3} parent=115 // pred_check_branch
        %2003 = sbr.rel (%p2001) target = $region124
      $region123: #{customvit_forward.3} parent=115 // pred_region
        %p2004 = scmp.lt.s32.totalorder %s35, 1
        %s2005 = scalar_select %p2004, %s35, 1
        %s2006 = smul.addr %s2005, 8
        %s2007 = scalar_lea.vmem %s22, %s2006
      $region124: #{customvit_forward.3} parent=115 // pred_fallthru
        _
    $region116: #{customvit_forward.3} parent=5 // pred_fallthru
      _
  $region6: #{customvit_forward.3} parent=0 // loop_footer
    %s33 = sadd.s32 1, %s29
  $region7: #{customvit_forward.3} parent=0 // loop_footer_branch
    %28 = sbr.rel target = $region3
  $region8: #{customvit_forward.3} parent=0 // loop_exit
    _

// kernel: customvit_forward.5
$region0: #{customvit_forward.5}
  #allocation0 [shape = 'u32[]', space=smem, size = 0x4, offset = 0x4, fixed_abs, tag = 'smem constant byte address 0x4 - core index']
  #allocation1 [shape = 'u32[144,128]{1,0:T(1,128)}', space=vmem, size = 0x12000, scoped, tag = 'internal scratch']
  %s0 = inlined_call_operand.vmem [shape: f32[2,8,128], index: 0, kind: input, shape index: {}]
  %s1 = inlined_call_operand.vmem [shape: f32[8,8], index: 1, kind: input, shape index: {}]
  %s2 = inlined_call_operand.vmem [shape: f32[8,8], index: 2, kind: input, shape index: {}]
  %s3 = inlined_call_operand.vmem [shape: f32[3,128,64], index: 3, kind: input, shape index: {}]
  %s4 = inlined_call_operand.vmem [shape: f32[1,64], index: 4, kind: input, shape index: {}]
  %s5 = inlined_call_operand.vmem [shape: f32[1,64], index: 5, kind: input, shape index: {}]
  %s6 = inlined_call_operand.vmem [shape: f32[64,128], index: 6, kind: input, shape index: {}]
  %s7 = inlined_call_operand.vmem [shape: f32[1,128], index: 7, kind: input, shape index: {}]
  %s8 = inlined_call_operand.vmem [shape: f32[1,128], index: 8, kind: input, shape index: {}]
  %s9 = inlined_call_operand.vmem [shape: f32[128,5], index: 9, kind: input, shape index: {}]
  %s10 = inlined_call_operand.vmem [shape: f32[1,5], index: 10, kind: input, shape index: {}]
  %s11 = inlined_call_operand.hbm [shape: f32[2,1,5], index: 11, kind: output, shape index: {}]
  %s12 = sld [smem:[#allocation0]]
  $region77: #{customvit_forward.5} parent=0
    _
  %s14 = ssub.s32 1, %s12
  %s15 = scalar_select 0, %s14, %s12
  $region1: #{customvit_forward.5} parent=0
    #allocation2 [shape = 'u8[1024]{0}', space=vmem, size = 0x400, scoped, tag = 'output window, operand 0']
    #allocation3 [shape = 's32[2]{0}', space=sflag, size = 0x8, scoped, tag = 'scoped memory for customvit_forward.5']
    %16 = vsyncpa [#allocation3], 0
    %s17 = scalar_lea.sflag [#allocation3], 1
    %18 = vsyncpa %s17, 0
    loop: start=0, step=1, limit=4
    $region2: #{customvit_forward.5} parent=1 // loop_pre_header
      _
    $region3: #{customvit_forward.5} parent=1 // loop_header
      %s20 = sphi 0, %s24
      %p21 = scmp.ge.s32.totalorder %s20, 4
      %s30 = sphi 0, %s32
      %s33 = sphi 0, %s30
      %s34 = sphi 0, %s33
      %s50 = sphi 0, %s34
      %s54 = sphi 0, %s54
      %s56 = sphi 0, %s54
      %s57 = sphi 0, %s56
      %s71 = sphi 0, %s57
      %s75 = sphi 0, %s75
      %s77 = sphi 0, %s75
      %s78 = sphi 0, %s77
      %s92 = sphi 0, %s78
      %s96 = sphi 0, %s96
      %s98 = sphi 0, %s96
      %s99 = sphi 0, %s98
      %s113 = sphi 0, %s99
      %s117 = sphi 0, %s117
      %s119 = sphi 0, %s117
      %s120 = sphi 0, %s119
      %s134 = sphi 0, %s120
      %s138 = sphi 0, %s138
      %s140 = sphi 0, %s138
      %s141 = sphi 0, %s140
      %s155 = sphi 0, %s141
      %s159 = sphi 0, %s159
      %s161 = sphi 0, %s159
      %s162 = sphi 0, %s161
      %s176 = sphi 0, %s162
      %s180 = sphi 0, %s180
      %s182 = sphi 0, %s180
      %s183 = sphi 0, %s182
      %s197 = sphi 0, %s183
      %s201 = sphi 0, %s201
      %s203 = sphi 0, %s201
      %s204 = sphi 0, %s203
      %s218 = sphi 0, %s204
      %s222 = sphi 0, %s222
      %s224 = sphi 0, %s222
      %s225 = sphi 0, %s224
      %s239 = sphi 0, %s225
      %s243 = sphi 0, %s243
      %s245 = sphi 0, %s243
      %s246 = sphi 0, %s245
      %s260 = sphi 0, %s246
      %s266 = sphi 0, %s268
      %s269 = sphi 0, %s266
      %s270 = sphi 0, %s269
      %s286 = sphi 0, %s270
    $region4: #{customvit_forward.5} parent=1 // loop_header_branch
      %23 = sbr.rel (%p21) target = $region8
    $region5: #{customvit_forward.5} parent=1 // loop_body
      %s25 = ssub.s32 %s20, 1
      %s26 = ssub.s32 %s20, 2
      %s27 = sadd.s32 %s20, 1
      %s28 = ssub.s32 %s20, %s27
      %p29 = scmp.eq.s32.totalorder %s28, 0
      %s31 = sadd.s32 %s30, 1
      %s32 = scalar_select %p29, %s30, %s31
      %p35 = pneg %p29
      %p36 = scmp.eq.s32.totalorder %s20, 1
      %p37 = por %p35, %p36
      %p38 = scmp.ne.s32.totalorder %s30, %s33
      %p39 = scmp.eq.s32.totalorder %s20, 0
      %p40 = por %p38, %p39
      %p41 = scmp.ne.s32.totalorder %s30, %s33
      %p42 = scmp.eq.s32.totalorder %s25, 1
      %p43 = por %p41, %p42
      %p44 = scmp.ne.s32.totalorder %s33, %s34
      %p45 = scmp.eq.s32.totalorder %s25, 0
      %p46 = por %p44, %p45
      %p47 = scmp.ne.s32.totalorder %s33, %s34
      %p48 = scmp.eq.s32.totalorder %s26, 1
      %p49 = por %p47, %p48
      %p51 = scmp.ne.s32.totalorder %s34, %s50
      %p52 = scmp.eq.s32.totalorder %s26, 0
      %p53 = por %p51, %p52
      %s55 = sadd.s32 %s54, 1
      %p58 = scmp.eq.s32.totalorder %s20, 1
      %p59 = scmp.ne.s32.totalorder %s54, %s56
      %p60 = scmp.eq.s32.totalorder %s20, 0
      %p61 = por %p59, %p60
      %p62 = scmp.ne.s32.totalorder %s54, %s56
      %p63 = scmp.eq.s32.totalorder %s25, 1
      %p64 = por %p62, %p63
      %p65 = scmp.ne.s32.totalorder %s56, %s57
      %p66 = scmp.eq.s32.totalorder %s25, 0
      %p67 = por %p65, %p66
      %p68 = scmp.ne.s32.totalorder %s56, %s57
      %p69 = scmp.eq.s32.totalorder %s26, 1
      %p70 = por %p68, %p69
      %p72 = scmp.ne.s32.totalorder %s57, %s71
      %p73 = scmp.eq.s32.totalorder %s26, 0
      %p74 = por %p72, %p73
      %s76 = sadd.s32 %s75, 1
      %p79 = scmp.eq.s32.totalorder %s20, 1
      %p80 = scmp.ne.s32.totalorder %s75, %s77
      %p81 = scmp.eq.s32.totalorder %s20, 0
      %p82 = por %p80, %p81
      %p83 = scmp.ne.s32.totalorder %s75, %s77
      %p84 = scmp.eq.s32.totalorder %s25, 1
      %p85 = por %p83, %p84
      %p86 = scmp.ne.s32.totalorder %s77, %s78
      %p87 = scmp.eq.s32.totalorder %s25, 0
      %p88 = por %p86, %p87
      %p89 = scmp.ne.s32.totalorder %s77, %s78
      %p90 = scmp.eq.s32.totalorder %s26, 1
      %p91 = por %p89, %p90
      %p93 = scmp.ne.s32.totalorder %s78, %s92
      %p94 = scmp.eq.s32.totalorder %s26, 0
      %p95 = por %p93, %p94
      %s97 = sadd.s32 %s96, 1
      %p100 = scmp.eq.s32.totalorder %s20, 1
      %p101 = scmp.ne.s32.totalorder %s96, %s98
      %p102 = scmp.eq.s32.totalorder %s20, 0
      %p103 = por %p101, %p102
      %p104 = scmp.ne.s32.totalorder %s96, %s98
      %p105 = scmp.eq.s32.totalorder %s25, 1
      %p106 = por %p104, %p105
      %p107 = scmp.ne.s32.totalorder %s98, %s99
      %p108 = scmp.eq.s32.totalorder %s25, 0
      %p109 = por %p107, %p108
      %p110 = scmp.ne.s32.totalorder %s98, %s99
      %p111 = scmp.eq.s32.totalorder %s26, 1
      %p112 = por %p110, %p111
      %p114 = scmp.ne.s32.totalorder %s99, %s113
      %p115 = scmp.eq.s32.totalorder %s26, 0
      %p116 = por %p114, %p115
      %s118 = sadd.s32 %s117, 1
      %p121 = scmp.eq.s32.totalorder %s20, 1
      %p122 = scmp.ne.s32.totalorder %s117, %s119
      %p123 = scmp.eq.s32.totalorder %s20, 0
      %p124 = por %p122, %p123
      %p125 = scmp.ne.s32.totalorder %s117, %s119
      %p126 = scmp.eq.s32.totalorder %s25, 1
      %p127 = por %p125, %p126
      %p128 = scmp.ne.s32.totalorder %s119, %s120
      %p129 = scmp.eq.s32.totalorder %s25, 0
      %p130 = por %p128, %p129
      %p131 = scmp.ne.s32.totalorder %s119, %s120
      %p132 = scmp.eq.s32.totalorder %s26, 1
      %p133 = por %p131, %p132
      %p135 = scmp.ne.s32.totalorder %s120, %s134
      %p136 = scmp.eq.s32.totalorder %s26, 0
      %p137 = por %p135, %p136
      %s139 = sadd.s32 %s138, 1
      %p142 = scmp.eq.s32.totalorder %s20, 1
      %p143 = scmp.ne.s32.totalorder %s138, %s140
      %p144 = scmp.eq.s32.totalorder %s20, 0
      %p145 = por %p143, %p144
      %p146 = scmp.ne.s32.totalorder %s138, %s140
      %p147 = scmp.eq.s32.totalorder %s25, 1
      %p148 = por %p146, %p147
      %p149 = scmp.ne.s32.totalorder %s140, %s141
      %p150 = scmp.eq.s32.totalorder %s25, 0
      %p151 = por %p149, %p150
      %p152 = scmp.ne.s32.totalorder %s140, %s141
      %p153 = scmp.eq.s32.totalorder %s26, 1
      %p154 = por %p152, %p153
      %p156 = scmp.ne.s32.totalorder %s141, %s155
      %p157 = scmp.eq.s32.totalorder %s26, 0
      %p158 = por %p156, %p157
      %s160 = sadd.s32 %s159, 1
      %p163 = scmp.eq.s32.totalorder %s20, 1
      %p164 = scmp.ne.s32.totalorder %s159, %s161
      %p165 = scmp.eq.s32.totalorder %s20, 0
      %p166 = por %p164, %p165
      %p167 = scmp.ne.s32.totalorder %s159, %s161
      %p168 = scmp.eq.s32.totalorder %s25, 1
      %p169 = por %p167, %p168
      %p170 = scmp.ne.s32.totalorder %s161, %s162
      %p171 = scmp.eq.s32.totalorder %s25, 0
      %p172 = por %p170, %p171
      %p173 = scmp.ne.s32.totalorder %s161, %s162
      %p174 = scmp.eq.s32.totalorder %s26, 1
      %p175 = por %p173, %p174
      %p177 = scmp.ne.s32.totalorder %s162, %s176
      %p178 = scmp.eq.s32.totalorder %s26, 0
      %p179 = por %p177, %p178
      %s181 = sadd.s32 %s180, 1
      %p184 = scmp.eq.s32.totalorder %s20, 1
      %p185 = scmp.ne.s32.totalorder %s180, %s182
      %p186 = scmp.eq.s32.totalorder %s20, 0
      %p187 = por %p185, %p186
      %p188 = scmp.ne.s32.totalorder %s180, %s182
      %p189 = scmp.eq.s32.totalorder %s25, 1
      %p190 = por %p188, %p189
      %p191 = scmp.ne.s32.totalorder %s182, %s183
      %p192 = scmp.eq.s32.totalorder %s25, 0
      %p193 = por %p191, %p192
      %p194 = scmp.ne.s32.totalorder %s182, %s183
      %p195 = scmp.eq.s32.totalorder %s26, 1
      %p196 = por %p194, %p195
      %p198 = scmp.ne.s32.totalorder %s183, %s197
      %p199 = scmp.eq.s32.totalorder %s26, 0
      %p200 = por %p198, %p199
      %s202 = sadd.s32 %s201, 1
      %p205 = scmp.eq.s32.totalorder %s20, 1
      %p206 = scmp.ne.s32.totalorder %s201, %s203
      %p207 = scmp.eq.s32.totalorder %s20, 0
      %p208 = por %p206, %p207
      %p209 = scmp.ne.s32.totalorder %s201, %s203
      %p210 = scmp.eq.s32.totalorder %s25, 1
      %p211 = por %p209, %p210
      %p212 = scmp.ne.s32.totalorder %s203, %s204
      %p213 = scmp.eq.s32.totalorder %s25, 0
      %p214 = por %p212, %p213
      %p215 = scmp.ne.s32.totalorder %s203, %s204
      %p216 = scmp.eq.s32.totalorder %s26, 1
      %p217 = por %p215, %p216
      %p219 = scmp.ne.s32.totalorder %s204, %s218
      %p220 = scmp.eq.s32.totalorder %s26, 0
      %p221 = por %p219, %p220
      %s223 = sadd.s32 %s222, 1
      %p226 = scmp.eq.s32.totalorder %s20, 1
      %p227 = scmp.ne.s32.totalorder %s222, %s224
      %p228 = scmp.eq.s32.totalorder %s20, 0
      %p229 = por %p227, %p228
      %p230 = scmp.ne.s32.totalorder %s222, %s224
      %p231 = scmp.eq.s32.totalorder %s25, 1
      %p232 = por %p230, %p231
      %p233 = scmp.ne.s32.totalorder %s224, %s225
      %p234 = scmp.eq.s32.totalorder %s25, 0
      %p235 = por %p233, %p234
      %p236 = scmp.ne.s32.totalorder %s224, %s225
      %p237 = scmp.eq.s32.totalorder %s26, 1
      %p238 = por %p236, %p237
      %p240 = scmp.ne.s32.totalorder %s225, %s239
      %p241 = scmp.eq.s32.totalorder %s26, 0
      %p242 = por %p240, %p241
      %s244 = sadd.s32 %s243, 1
      %p247 = scmp.eq.s32.totalorder %s20, 1
      %p248 = scmp.ne.s32.totalorder %s243, %s245
      %p249 = scmp.eq.s32.totalorder %s20, 0
      %p250 = por %p248, %p249
      %p251 = scmp.ne.s32.totalorder %s243, %s245
      %p252 = scmp.eq.s32.totalorder %s25, 1
      %p253 = por %p251, %p252
      %p254 = scmp.ne.s32.totalorder %s245, %s246
      %p255 = scmp.eq.s32.totalorder %s25, 0
      %p256 = por %p254, %p255
      %p257 = scmp.ne.s32.totalorder %s245, %s246
      %p258 = scmp.eq.s32.totalorder %s26, 1
      %p259 = por %p257, %p258
      %p261 = scmp.ne.s32.totalorder %s246, %s260
      %p262 = scmp.eq.s32.totalorder %s26, 0
      %p263 = por %p261, %p262
      %s264 = ssub.s32 %s20, %s27
      %p265 = scmp.eq.s32.totalorder %s264, 0
      %s267 = sadd.s32 %s266, 1
      %s268 = scalar_select %p265, %s266, %s267
      %p271 = pneg %p265
      %p272 = scmp.eq.s32.totalorder %s20, 1
      %p273 = por %p271, %p272
      %p274 = scmp.ne.s32.totalorder %s266, %s269
      %p275 = scmp.eq.s32.totalorder %s20, 0
      %p276 = por %p274, %p275
      %p277 = scmp.ne.s32.totalorder %s266, %s269
      %p278 = scmp.eq.s32.totalorder %s25, 1
      %p279 = por %p277, %p278
      %p280 = scmp.ne.s32.totalorder %s269, %s270
      %p281 = scmp.eq.s32.totalorder %s25, 0
      %p282 = por %p280, %p281
      %p283 = scmp.ne.s32.totalorder %s269, %s270
      %p284 = scmp.eq.s32.totalorder %s26, 1
      %p285 = por %p283, %p284
      %p287 = scmp.ne.s32.totalorder %s270, %s286
      %p288 = scmp.eq.s32.totalorder %s26, 0
      %p289 = por %p287, %p288
      %p290 = scmp.le.s32.totalorder 1, %s20
      %p291 = scmp.lt.s32.totalorder %s20, 3
      %p292 = pnand %p290, %p291
      %p293 = pneg %p292
      // Predicated region
      $region9: #{customvit_forward.5} parent=5 // pred_check
        _
      $region10: #{customvit_forward.5} parent=5 // pred_check_branch
        %295 = sbr.rel (%p292) target = $region12
      $region11: #{customvit_forward.5} parent=5 // pred_region
        %s296 = ssub.s32 %s20, 1
        // Predicated region
        $region13: #{customvit_forward.5} parent=11 // pred_check
          %p297 = pneg %p67
        $region14: #{customvit_forward.5} parent=11 // pred_check_branch
          %299 = sbr.rel (%p297) target = $region16
        $region15: #{customvit_forward.5} parent=11 // pred_region
          _
        $region16: #{customvit_forward.5} parent=11 // pred_fallthru
          _
        // Predicated region
        $region17: #{customvit_forward.5} parent=11 // pred_check
          %p300 = pneg %p88
        $region18: #{customvit_forward.5} parent=11 // pred_check_branch
          %302 = sbr.rel (%p300) target = $region20
        $region19: #{customvit_forward.5} parent=11 // pred_region
          _
        $region20: #{customvit_forward.5} parent=11 // pred_fallthru
          _
        // Predicated region
        $region21: #{customvit_forward.5} parent=11 // pred_check
          %p303 = pneg %p109
        $region22: #{customvit_forward.5} parent=11 // pred_check_branch
          %305 = sbr.rel (%p303) target = $region24
        $region23: #{customvit_forward.5} parent=11 // pred_region
          _
        $region24: #{customvit_forward.5} parent=11 // pred_fallthru
          _
        // Predicated region
        $region25: #{customvit_forward.5} parent=11 // pred_check
          %p306 = pneg %p130
        $region26: #{customvit_forward.5} parent=11 // pred_check_branch
          %308 = sbr.rel (%p306) target = $region28
        $region27: #{customvit_forward.5} parent=11 // pred_region
          _
        $region28: #{customvit_forward.5} parent=11 // pred_fallthru
          _
        // Predicated region
        $region29: #{customvit_forward.5} parent=11 // pred_check
          %p309 = pneg %p151
        $region30: #{customvit_forward.5} parent=11 // pred_check_branch
          %311 = sbr.rel (%p309) target = $region32
        $region31: #{customvit_forward.5} parent=11 // pred_region
          _
        $region32: #{customvit_forward.5} parent=11 // pred_fallthru
          _
        // Predicated region
        $region33: #{customvit_forward.5} parent=11 // pred_check
          %p312 = pneg %p172
        $region34: #{customvit_forward.5} parent=11 // pred_check_branch
          %314 = sbr.rel (%p312) target = $region36
        $region35: #{customvit_forward.5} parent=11 // pred_region
          _
        $region36: #{customvit_forward.5} parent=11 // pred_fallthru
          _
        // Predicated region
        $region37: #{customvit_forward.5} parent=11 // pred_check
          %p315 = pneg %p193
        $region38: #{customvit_forward.5} parent=11 // pred_check_branch
          %317 = sbr.rel (%p315) target = $region40
        $region39: #{customvit_forward.5} parent=11 // pred_region
          _
        $region40: #{customvit_forward.5} parent=11 // pred_fallthru
          _
        // Predicated region
        $region41: #{customvit_forward.5} parent=11 // pred_check
          %p318 = pneg %p214
        $region42: #{customvit_forward.5} parent=11 // pred_check_branch
          %320 = sbr.rel (%p318) target = $region44
        $region43: #{customvit_forward.5} parent=11 // pred_region
          _
        $region44: #{customvit_forward.5} parent=11 // pred_fallthru
          _
        // Predicated region
        $region45: #{customvit_forward.5} parent=11 // pred_check
          %p321 = pneg %p235
        $region46: #{customvit_forward.5} parent=11 // pred_check_branch
          %323 = sbr.rel (%p321) target = $region48
        $region47: #{customvit_forward.5} parent=11 // pred_region
          _
        $region48: #{customvit_forward.5} parent=11 // pred_fallthru
          _
        // Predicated region
        $region49: #{customvit_forward.5} parent=11 // pred_check
          %p324 = pneg %p256
        $region50: #{customvit_forward.5} parent=11 // pred_check_branch
          %326 = sbr.rel (%p324) target = $region52
        $region51: #{customvit_forward.5} parent=11 // pred_region
          _
        $region52: #{customvit_forward.5} parent=11 // pred_fallthru
          _
      $region12: #{customvit_forward.5} parent=5 // pred_fallthru
        _
      %p327 = scmp.lt.s32.totalorder %s20, 2
      // Predicated region
      $region53: #{customvit_forward.5} parent=5 // pred_check
        %p328 = pneg %p327
      $region54: #{customvit_forward.5} parent=5 // pred_check_branch
        %330 = sbr.rel (%p328) target = $region56
      $region55: #{customvit_forward.5} parent=5 // pred_region
        // Predicated region
        $region57: #{customvit_forward.5} parent=55 // pred_check
          %p331 = pneg %p40
        $region58: #{customvit_forward.5} parent=55 // pred_check_branch
          %333 = sbr.rel (%p331) target = $region60
        $region59: #{customvit_forward.5} parent=55 // pred_region
          %p334 = scmp.lt.s32.totalorder %s20, 1
          %s335 = scalar_select %p334, %s20, 1
          %s336 = smul.addr %s335, 8
          %s337 = scalar_lea.vmem %s0, %s336
        $region60: #{customvit_forward.5} parent=55 // pred_fallthru
          _
      $region56: #{customvit_forward.5} parent=5 // pred_fallthru
        _
      %p338 = scmp.le.s32.totalorder 1, %s20
      %p339 = scmp.lt.s32.totalorder %s20, 3
      %p340 = pnand %p338, %p339
      %p341 = pneg %p340
      // Predicated region
      $region61: #{customvit_forward.5} parent=5 // pred_check
        _
      $region62: #{customvit_forward.5} parent=5 // pred_check_branch
        %343 = sbr.rel (%p340) target = $region64
      $region63: #{customvit_forward.5} parent=5 // pred_region
        %s344 = ssub.s32 %s20, 1
        %p345 = scmp.lt.s32.totalorder %s25, 1
        %s346 = scalar_select %p345, %s25, 1
        %s347 = smul.addr %s346, 8
        %s348 = scalar_lea.vmem %s0, %s347
        %p349 = pneg %p46
        %p350 = pneg %p43
        %p351 = pneg %p67
        %p352 = pneg %p64
        %p353 = pneg %p88
        %p354 = pneg %p85
        %p355 = pneg %p109
        %p356 = pneg %p106
        %p357 = pneg %p130
        %p358 = pneg %p127
        %p359 = pneg %p151
        %p360 = pneg %p148
        %p361 = pneg %p172
        %p362 = pneg %p169
        %p363 = pneg %p193
        %p364 = pneg %p190
        %p365 = pneg %p214
        %p366 = pneg %p211
        %p367 = pneg %p235
        %p368 = pneg %p232
        %p369 = pneg %p256
        %p370 = pneg %p253
        %p371 = pneg %p282
        %p372 = pneg %p279
        %s373 = sand.u32 %s269, 1
        %s374 = scalar_lea.sflag [#allocation3], %s373
        %s375 = sand.u32 %s269, 1
        %s376 = scalar_lea.vmem [#allocation2], %s375
        %p377 = scmp.lt.s32.totalorder %s25, 1
        %s378 = scalar_select %p377, %s25, 1
        %s379 = smul.addr %s378, 8
        %s380 = scalar_lea.vmem %s0, %s379
        %v381 = vld [vmem:[%s380] sm:$0xff]
        %v382 = vld [vmem:[%s1] sm:$0xff]
        %v383 = vld [vmem:[%s2] sm:$0xff]
        %vm384 = vcmask 64512
        %v386 = vsel %vm384, %v382, 0
        %388 = vmatprep.subr.mxu0 0.0
        %389 = vmatpush1.msra.mxu0 %v381
        %390 = vmatprep.subr.mxu0 0.0
        %391 = vmatpush1.msra.mxu0 0.0
        %392 = vmatprep.subr.mxu0 0.0
        %393 = vmatpush1.msra.mxu0 0.0
        %394 = vmatprep.subr.mxu0 0.0
        %395 = vmatpush1.msra.mxu0 0.0
        %396 = vmatprep.subr.mxu0 0.0
        %397 = vmatpush1.msra.mxu0 0.0
        %398 = vmatprep.subr.mxu0 0.0
        %399 = vmatpush1.msra.mxu0 0.0
        %400 = vmatprep.subr.mxu0 0.0
        %401 = vmatpush1.msra.mxu0 0.0
        %402 = vmatprep.subr.mxu0 0.0
        %403 = vmatpush1.msra.mxu0 0.0
        %404 = vmatprep.subr.mxu0 0.0
        %405 = vmatpush1.msra.mxu0 0.0
        %406 = vmatprep.subr.mxu0 0.0
        %407 = vmatpush1.msra.mxu0 0.0
        %408 = vmatprep.subr.mxu0 0.0
        %409 = vmatpush1.msra.mxu0 0.0
        %410 = vmatprep.subr.mxu0 0.0
        %411 = vmatpush1.msra.mxu0 0.0
        %412 = vmatprep.subr.mxu0 0.0
        %413 = vmatpush1.msra.mxu0 0.0
        %414 = vmatprep.subr.mxu0 0.0
        %415 = vmatpush1.msra.mxu0 0.0
        %416 = vmatprep.subr.mxu0 0.0
        %417 = vmatpush1.msra.mxu0 0.0
        %418 = vmatprep.subr.mxu0 0.0
        %419 = vmatpush1.msra.mxu0 0.0
        %420 = vmatprep.subr.mxu0 0.0
        %421 = vmatpush1.msra.mxu0 0.0
        %422 = vmatprep.subr.mxu0 0.0
        %423 = vmatpush1.msra.mxu0 0.0
        %424 = vmatprep.subr.mxu0 0.0
        %425 = vmatpush1.msra.mxu0 0.0
        %426 = vmatprep.subr.mxu0 0.0
        %427 = vmatpush1.msra.mxu0 0.0
        %428 = vmatprep.subr.mxu0 0.0
        %429 = vmatpush1.msra.mxu0 0.0
        %430 = vmatprep.subr.mxu0 0.0
        %431 = vmatpush1.msra.mxu0 0.0
        %432 = vmatprep.subr.mxu0 0.0
        %433 = vmatpush1.msra.mxu0 0.0
        %434 = vmatprep.subr.mxu0 0.0
        %435 = vmatpush1.msra.mxu0 0.0
        %436 = vmatprep.subr.mxu0 0.0
        %437 = vmatpush1.msra.mxu0 0.0
        %438 = vmatprep.subr.mxu0 0.0
        %439 = vmatpush1.msra.mxu0 0.0
        %440 = vmatprep.subr.mxu0 0.0
        %441 = vmatpush1.msra.mxu0 0.0
        %442 = vmatprep.subr.mxu0 0.0
        %443 = vmatpush1.msra.mxu0 0.0
        %444 = vmatprep.subr.mxu0 0.0
        %445 = vmatpush1.msra.mxu0 0.0
        %446 = vmatprep.subr.mxu0 0.0
        %447 = vmatpush1.msra.mxu0 0.0
        %448 = vmatprep.subr.mxu0 0.0
        %449 = vmatpush1.msra.mxu0 0.0
        %450 = vmatprep.subr.mxu0 0.0
        %451 = vmatpush1.msra.mxu0 0.0
        %452 = vmatprep.mubr.f32.mxu0 0.0
        %453 = vmatmul.mubr.f32.gmra.mrb[0].mxu0 %v386
        %v454 = vpop.f32.mrb[0].mxu0
        %v455 = vadd.f32 0.0, %v454
        %v456 = vpop.f32.mrb[0].mxu0
        %457 = vdwg.mxu0
        %v458 = vld [vmem:[%s3] sm:$0xff]
        %v459 = vld [vmem:[%s3 + $0x8] sm:$0xff]
        %v460 = vld [vmem:[%s3 + $0x10] sm:$0xff]
        %v461 = vld [vmem:[%s3 + $0x18] sm:$0xff]
        %v462 = vld [vmem:[%s3 + $0x20] sm:$0xff]
        %v463 = vld [vmem:[%s3 + $0x28] sm:$0xff]
        %v464 = vld [vmem:[%s3 + $0x30] sm:$0xff]
        %v465 = vld [vmem:[%s3 + $0x38] sm:$0xff]
        %v466 = vld [vmem:[%s3 + $0x40] sm:$0xff]
        %v467 = vld [vmem:[%s3 + $0x48] sm:$0xff]
        %v468 = vld [vmem:[%s3 + $0x50] sm:$0xff]
        %v469 = vld [vmem:[%s3 + $0x58] sm:$0xff]
        %v470 = vld [vmem:[%s3 + $0x60] sm:$0xff]
        %v471 = vld [vmem:[%s3 + $0x68] sm:$0xff]
        %v472 = vld [vmem:[%s3 + $0x70] sm:$0xff]
        %v473 = vld [vmem:[%s3 + $0x78] sm:$0xff]
        %s474 = scalar_lea.vmem %s3, 128
        %v475 = vld [vmem:[%s474] sm:$0xff]
        %v476 = vld [vmem:[%s474 + $0x8] sm:$0xff]
        %v477 = vld [vmem:[%s474 + $0x10] sm:$0xff]
        %v478 = vld [vmem:[%s474 + $0x18] sm:$0xff]
        %v479 = vld [vmem:[%s474 + $0x20] sm:$0xff]
        %v480 = vld [vmem:[%s474 + $0x28] sm:$0xff]
        %v481 = vld [vmem:[%s474 + $0x30] sm:$0xff]
        %v482 = vld [vmem:[%s474 + $0x38] sm:$0xff]
        %v483 = vld [vmem:[%s474 + $0x40] sm:$0xff]
        %v484 = vld [vmem:[%s474 + $0x48] sm:$0xff]
        %v485 = vld [vmem:[%s474 + $0x50] sm:$0xff]
        %v486 = vld [vmem:[%s474 + $0x58] sm:$0xff]
        %v487 = vld [vmem:[%s474 + $0x60] sm:$0xff]
        %v488 = vld [vmem:[%s474 + $0x68] sm:$0xff]
        %v489 = vld [vmem:[%s474 + $0x70] sm:$0xff]
        %v490 = vld [vmem:[%s474 + $0x78] sm:$0xff]
        %491 = vmatprep.subr.mxu0 0.0
        %492 = vmatpush1.msra.mxu0 %v475
        %493 = vmatprep.subr.mxu0 0.0
        %494 = vmatpush1.msra.mxu0 %v476
        %495 = vmatprep.subr.mxu0 0.0
        %496 = vmatpush1.msra.mxu0 %v477
        %497 = vmatprep.subr.mxu0 0.0
        %498 = vmatpush1.msra.mxu0 %v478
        %499 = vmatprep.subr.mxu0 0.0
        %500 = vmatpush1.msra.mxu0 %v479
        %501 = vmatprep.subr.mxu0 0.0
        %502 = vmatpush1.msra.mxu0 %v480
        %503 = vmatprep.subr.mxu0 0.0
        %504 = vmatpush1.msra.mxu0 %v481
        %505 = vmatprep.subr.mxu0 0.0
        %506 = vmatpush1.msra.mxu0 %v482
        %507 = vmatprep.subr.mxu0 0.0
        %508 = vmatpush1.msra.mxu0 %v483
        %509 = vmatprep.subr.mxu0 0.0
        %510 = vmatpush1.msra.mxu0 %v484
        %511 = vmatprep.subr.mxu0 0.0
        %512 = vmatpush1.msra.mxu0 %v485
        %513 = vmatprep.subr.mxu0 0.0
        %514 = vmatpush1.msra.mxu0 %v486
        %515 = vmatprep.subr.mxu0 0.0
        %516 = vmatpush1.msra.mxu0 %v487
        %517 = vmatprep.subr.mxu0 0.0
        %518 = vmatpush1.msra.mxu0 %v488
        %519 = vmatprep.subr.mxu0 0.0
        %520 = vmatpush1.msra.mxu0 %v489
        %521 = vmatprep.subr.mxu0 0.0
        %522 = vmatpush1.msra.mxu0 %v490
        %523 = vmatprep.subr.mxu0 0.0
        %524 = vmatpush1.msra.mxu0 0.0
        %525 = vmatprep.subr.mxu0 0.0
        %526 = vmatpush1.msra.mxu0 0.0
        %527 = vmatprep.subr.mxu0 0.0
        %528 = vmatpush1.msra.mxu0 0.0
        %529 = vmatprep.subr.mxu0 0.0
        %530 = vmatpush1.msra.mxu0 0.0
        %531 = vmatprep.subr.mxu0 0.0
        %532 = vmatpush1.msra.mxu0 0.0
        %533 = vmatprep.subr.mxu0 0.0
        %534 = vmatpush1.msra.mxu0 0.0
        %535 = vmatprep.subr.mxu0 0.0
        %536 = vmatpush1.msra.mxu0 0.0
        %537 = vmatprep.subr.mxu0 0.0
        %538 = vmatpush1.msra.mxu0 0.0
        %539 = vmatprep.subr.mxu0 0.0
        %540 = vmatpush1.msra.mxu0 0.0
        %541 = vmatprep.subr.mxu0 0.0
        %542 = vmatpush1.msra.mxu0 0.0
        %543 = vmatprep.subr.mxu0 0.0
        %544 = vmatpush1.msra.mxu0 0.0
        %545 = vmatprep.subr.mxu0 0.0
        %546 = vmatpush1.msra.mxu0 0.0
        %547 = vmatprep.subr.mxu0 0.0
        %548 = vmatpush1.msra.mxu0 0.0
        %549 = vmatprep.subr.mxu0 0.0
        %550 = vmatpush1.msra.mxu0 0.0
        %551 = vmatprep.subr.mxu0 0.0
        %552 = vmatpush1.msra.mxu0 0.0
        %553 = vmatprep.subr.mxu0 0.0
        %554 = vmatpush1.msra.mxu0 0.0
        %555 = vmatprep.mubr.f32.mxu0 0.0
        %556 = vmatmul.mubr.f32.gmra.mrb[0].mxu0 %v381
        %v557 = vpop.f32.mrb[0].mxu0
        %v558 = vadd.f32 0.0, %v557
        %v559 = vpop.f32.mrb[0].mxu0
        %560 = vdwg.mxu0
        %v562 = vsel %vm384, %v383, 0
        %564 = vmatprep.subr.mxu0 0.0
        %565 = vmatpush1.msra.mxu0 %v381
        %566 = vmatprep.subr.mxu0 0.0
        %567 = vmatpush1.msra.mxu0 0.0
        %568 = vmatprep.subr.mxu0 0.0
        %569 = vmatpush1.msra.mxu0 0.0
        %570 = vmatprep.subr.mxu0 0.0
        %571 = vmatpush1.msra.mxu0 0.0
        %572 = vmatprep.subr.mxu0 0.0
        %573 = vmatpush1.msra.mxu0 0.0
        %574 = vmatprep.subr.mxu0 0.0
        %575 = vmatpush1.msra.mxu0 0.0
        %576 = vmatprep.subr.mxu0 0.0
        %577 = vmatpush1.msra.mxu0 0.0
        %578 = vmatprep.subr.mxu0 0.0
        %579 = vmatpush1.msra.mxu0 0.0
        %580 = vmatprep.subr.mxu0 0.0
        %581 = vmatpush1.msra.mxu0 0.0
        %582 = vmatprep.subr.mxu0 0.0
        %583 = vmatpush1.msra.mxu0 0.0
        %584 = vmatprep.subr.mxu0 0.0
        %585 = vmatpush1.msra.mxu0 0.0
        %586 = vmatprep.subr.mxu0 0.0
        %587 = vmatpush1.msra.mxu0 0.0
        %588 = vmatprep.subr.mxu0 0.0
        %589 = vmatpush1.msra.mxu0 0.0
        %590 = vmatprep.subr.mxu0 0.0
        %591 = vmatpush1.msra.mxu0 0.0
        %592 = vmatprep.subr.mxu0 0.0
        %593 = vmatpush1.msra.mxu0 0.0
        %594 = vmatprep.subr.mxu0 0.0
        %595 = vmatpush1.msra.mxu0 0.0
        %596 = vmatprep.subr.mxu0 0.0
        %597 = vmatpush1.msra.mxu0 0.0
        %598 = vmatprep.subr.mxu0 0.0
        %599 = vmatpush1.msra.mxu0 0.0
        %600 = vmatprep.subr.mxu0 0.0
        %601 = vmatpush1.msra.mxu0 0.0
        %602 = vmatprep.subr.mxu0 0.0
        %603 = vmatpush1.msra.mxu0 0.0
        %604 = vmatprep.subr.mxu0 0.0
        %605 = vmatpush1.msra.mxu0 0.0
        %606 = vmatprep.subr.mxu0 0.0
        %607 = vmatpush1.msra.mxu0 0.0
        %608 = vmatprep.subr.mxu0 0.0
        %609 = vmatpush1.msra.mxu0 0.0
        %610 = vmatprep.subr.mxu0 0.0
        %611 = vmatpush1.msra.mxu0 0.0
        %612 = vmatprep.subr.mxu0 0.0
        %613 = vmatpush1.msra.mxu0 0.0
        %614 = vmatprep.subr.mxu0 0.0
        %615 = vmatpush1.msra.mxu0 0.0
        %616 = vmatprep.subr.mxu0 0.0
        %617 = vmatpush1.msra.mxu0 0.0
        %618 = vmatprep.subr.mxu0 0.0
        %619 = vmatpush1.msra.mxu0 0.0
        %620 = vmatprep.subr.mxu0 0.0
        %621 = vmatpush1.msra.mxu0 0.0
        %622 = vmatprep.subr.mxu0 0.0
        %623 = vmatpush1.msra.mxu0 0.0
        %624 = vmatprep.subr.mxu0 0.0
        %625 = vmatpush1.msra.mxu0 0.0
        %626 = vmatprep.subr.mxu0 0.0
        %627 = vmatpush1.msra.mxu0 0.0
        %628 = vmatprep.mubr.f32.mxu0 0.0
        %629 = vmatmul.mubr.f32.gmra.mrb[0].mxu0 %v562
        %v630 = vpop.f32.mrb[0].mxu0
        %v631 = vadd.f32 0.0, %v630
        %v632 = vpop.f32.mrb[0].mxu0
        %633 = vdwg.mxu0
        %s634 = scalar_lea.vmem %s3, 256
        %v635 = vld [vmem:[%s634] sm:$0xff]
        %v636 = vld [vmem:[%s634 + $0x8] sm:$0xff]
        %v637 = vld [vmem:[%s634 + $0x10] sm:$0xff]
        %v638 = vld [vmem:[%s634 + $0x18] sm:$0xff]
        %v639 = vld [vmem:[%s634 + $0x20] sm:$0xff]
        %v640 = vld [vmem:[%s634 + $0x28] sm:$0xff]
        %v641 = vld [vmem:[%s634 + $0x30] sm:$0xff]
        %v642 = vld [vmem:[%s634 + $0x38] sm:$0xff]
        %v643 = vld [vmem:[%s634 + $0x40] sm:$0xff]
        %v644 = vld [vmem:[%s634 + $0x48] sm:$0xff]
        %v645 = vld [vmem:[%s634 + $0x50] sm:$0xff]
        %v646 = vld [vmem:[%s634 + $0x58] sm:$0xff]
        %v647 = vld [vmem:[%s634 + $0x60] sm:$0xff]
        %v648 = vld [vmem:[%s634 + $0x68] sm:$0xff]
        %v649 = vld [vmem:[%s634 + $0x70] sm:$0xff]
        %v650 = vld [vmem:[%s634 + $0x78] sm:$0xff]
        %651 = vmatprep.subr.mxu0 0.0
        %652 = vmatpush1.msra.mxu0 %v635
        %653 = vmatprep.subr.mxu0 0.0
        %654 = vmatpush1.msra.mxu0 %v636
        %655 = vmatprep.subr.mxu0 0.0
        %656 = vmatpush1.msra.mxu0 %v637
        %657 = vmatprep.subr.mxu0 0.0
        %658 = vmatpush1.msra.mxu0 %v638
        %659 = vmatprep.subr.mxu0 0.0
        %660 = vmatpush1.msra.mxu0 %v639
        %661 = vmatprep.subr.mxu0 0.0
        %662 = vmatpush1.msra.mxu0 %v640
        %663 = vmatprep.subr.mxu0 0.0
        %664 = vmatpush1.msra.mxu0 %v641
        %665 = vmatprep.subr.mxu0 0.0
        %666 = vmatpush1.msra.mxu0 %v642
        %667 = vmatprep.subr.mxu0 0.0
        %668 = vmatpush1.msra.mxu0 %v643
        %669 = vmatprep.subr.mxu0 0.0
        %670 = vmatpush1.msra.mxu0 %v644
        %671 = vmatprep.subr.mxu0 0.0
        %672 = vmatpush1.msra.mxu0 %v645
        %673 = vmatprep.subr.mxu0 0.0
        %674 = vmatpush1.msra.mxu0 %v646
        %675 = vmatprep.subr.mxu0 0.0
        %676 = vmatpush1.msra.mxu0 %v647
        %677 = vmatprep.subr.mxu0 0.0
        %678 = vmatpush1.msra.mxu0 %v648
        %679 = vmatprep.subr.mxu0 0.0
        %680 = vmatpush1.msra.mxu0 %v649
        %681 = vmatprep.subr.mxu0 0.0
        %682 = vmatpush1.msra.mxu0 %v650
        %683 = vmatprep.subr.mxu0 0.0
        %684 = vmatpush1.msra.mxu0 0.0
        %685 = vmatprep.subr.mxu0 0.0
        %686 = vmatpush1.msra.mxu0 0.0
        %687 = vmatprep.subr.mxu0 0.0
        %688 = vmatpush1.msra.mxu0 0.0
        %689 = vmatprep.subr.mxu0 0.0
        %690 = vmatpush1.msra.mxu0 0.0
        %691 = vmatprep.subr.mxu0 0.0
        %692 = vmatpush1.msra.mxu0 0.0
        %693 = vmatprep.subr.mxu0 0.0
        %694 = vmatpush1.msra.mxu0 0.0
        %695 = vmatprep.subr.mxu0 0.0
        %696 = vmatpush1.msra.mxu0 0.0
        %697 = vmatprep.subr.mxu0 0.0
        %698 = vmatpush1.msra.mxu0 0.0
        %699 = vmatprep.subr.mxu0 0.0
        %700 = vmatpush1.msra.mxu0 0.0
        %701 = vmatprep.subr.mxu0 0.0
        %702 = vmatpush1.msra.mxu0 0.0
        %703 = vmatprep.subr.mxu0 0.0
        %704 = vmatpush1.msra.mxu0 0.0
        %705 = vmatprep.subr.mxu0 0.0
        %706 = vmatpush1.msra.mxu0 0.0
        %707 = vmatprep.subr.mxu0 0.0
        %708 = vmatpush1.msra.mxu0 0.0
        %709 = vmatprep.subr.mxu0 0.0
        %710 = vmatpush1.msra.mxu0 0.0
        %711 = vmatprep.subr.mxu0 0.0
        %712 = vmatpush1.msra.mxu0 0.0
        %713 = vmatprep.subr.mxu0 0.0
        %714 = vmatpush1.msra.mxu0 0.0
        %715 = vmatprep.mubr.f32.mxu0 0.0
        %716 = vmatmul.mubr.f32.gmra.mrb[0].mxu0 %v631
        %v717 = vpop.f32.mrb[0].mxu0
        %v718 = vadd.f32 0.0, %v717
        %v719 = vpop.f32.mrb[0].mxu0
        %720 = vdwg.mxu0
        %721 = vmatprep.subr.mxu0 0.0
        %722 = vmatpush1.msra.mxu0 %v458
        %723 = vmatprep.subr.mxu0 0.0
        %724 = vmatpush1.msra.mxu0 %v459
        %725 = vmatprep.subr.mxu0 0.0
        %726 = vmatpush1.msra.mxu0 %v460
        %727 = vmatprep.subr.mxu0 0.0
        %728 = vmatpush1.msra.mxu0 %v461
        %729 = vmatprep.subr.mxu0 0.0
        %730 = vmatpush1.msra.mxu0 %v462
        %731 = vmatprep.subr.mxu0 0.0
        %732 = vmatpush1.msra.mxu0 %v463
        %733 = vmatprep.subr.mxu0 0.0
        %734 = vmatpush1.msra.mxu0 %v464
        %735 = vmatprep.subr.mxu0 0.0
        %736 = vmatpush1.msra.mxu0 %v465
        %737 = vmatprep.subr.mxu0 0.0
        %738 = vmatpush1.msra.mxu0 %v466
        %739 = vmatprep.subr.mxu0 0.0
        %740 = vmatpush1.msra.mxu0 %v467
        %741 = vmatprep.subr.mxu0 0.0
        %742 = vmatpush1.msra.mxu0 %v468
        %743 = vmatprep.subr.mxu0 0.0
        %744 = vmatpush1.msra.mxu0 %v469
        %745 = vmatprep.subr.mxu0 0.0
        %746 = vmatpush1.msra.mxu0 %v470
        %747 = vmatprep.subr.mxu0 0.0
        %748 = vmatpush1.msra.mxu0 %v471
        %749 = vmatprep.subr.mxu0 0.0
        %750 = vmatpush1.msra.mxu0 %v472
        %751 = vmatprep.subr.mxu0 0.0
        %752 = vmatpush1.msra.mxu0 %v473
        %753 = vmatprep.subr.mxu0 0.0
        %754 = vmatpush1.msra.mxu0 0.0
        %755 = vmatprep.subr.mxu0 0.0
        %756 = vmatpush1.msra.mxu0 0.0
        %757 = vmatprep.subr.mxu0 0.0
        %758 = vmatpush1.msra.mxu0 0.0
        %759 = vmatprep.subr.mxu0 0.0
        %760 = vmatpush1.msra.mxu0 0.0
        %761 = vmatprep.subr.mxu0 0.0
        %762 = vmatpush1.msra.mxu0 0.0
        %763 = vmatprep.subr.mxu0 0.0
        %764 = vmatpush1.msra.mxu0 0.0
        %765 = vmatprep.subr.mxu0 0.0
        %766 = vmatpush1.msra.mxu0 0.0
        %767 = vmatprep.subr.mxu0 0.0
        %768 = vmatpush1.msra.mxu0 0.0
        %769 = vmatprep.subr.mxu0 0.0
        %770 = vmatpush1.msra.mxu0 0.0
        %771 = vmatprep.subr.mxu0 0.0
        %772 = vmatpush1.msra.mxu0 0.0
        %773 = vmatprep.subr.mxu0 0.0
        %774 = vmatpush1.msra.mxu0 0.0
        %775 = vmatprep.subr.mxu0 0.0
        %776 = vmatpush1.msra.mxu0 0.0
        %777 = vmatprep.subr.mxu0 0.0
        %778 = vmatpush1.msra.mxu0 0.0
        %779 = vmatprep.subr.mxu0 0.0
        %780 = vmatpush1.msra.mxu0 0.0
        %781 = vmatprep.subr.mxu0 0.0
        %782 = vmatpush1.msra.mxu0 0.0
        %783 = vmatprep.subr.mxu0 0.0
        %784 = vmatpush1.msra.mxu0 0.0
        %785 = vmatprep.mubr.f32.mxu0 0.0
        %786 = vmatmul.mubr.f32.gmra.mrb[0].mxu0 %v455
        %v787 = vpop.f32.mrb[0].mxu0
        %v788 = vadd.f32 %v558, %v787
        %v789 = vpop.f32.mrb[0].mxu0
        %790 = vdwg.mxu0
        %v791 = vadd.f32 %v788, %v718
        %v792 = vld [vmem:[%s4] sm:$0x1]
        %v794 = vlaneseq
        %v795 = vshrl.u32 %v794, 7
        %v796 = vsub.s32 0, %v795
        %v797 = vrot.slane %v792, %v796
        %v799 = vmul.f32 %v791, %v797
        %v800 = vld [vmem:[%s5] sm:$0x1]
        %v802 = vlaneseq
        %v803 = vshrl.u32 %v802, 7
        %v804 = vsub.s32 0, %v803
        %v805 = vrot.slane %v800, %v804
        %v807 = vadd.f32 %v799, %v805
        %v808 = vxor.u32 %v807, 2147483648
        %v809 = vmul.f32 %v808, 1.442695
        %v810 = vpow.pop %v809
        %v811 = vadd.f32 %v810, 1.0
        %v812 = vrcp.pop %v811
        %v813 = vmul.f32 1.0, %v812
        %v814 = vmul.f32 %v807, %v813
        %v815 = vld [vmem:[%s6] sm:$0xff]
        %v816 = vld [vmem:[%s6 + $0x8] sm:$0xff]
        %v817 = vld [vmem:[%s6 + $0x10] sm:$0xff]
        %v818 = vld [vmem:[%s6 + $0x18] sm:$0xff]
        %v819 = vld [vmem:[%s6 + $0x20] sm:$0xff]
        %v820 = vld [vmem:[%s6 + $0x28] sm:$0xff]
        %v821 = vld [vmem:[%s6 + $0x30] sm:$0xff]
        %v822 = vld [vmem:[%s6 + $0x38] sm:$0xff]
        %vm823 = vcmask 523264
        %v825 = vsel %vm823, %v814, 0
        %827 = vmatprep.subr.mxu0 0.0
        %828 = vmatpush1.msra.mxu0 %v815
        %829 = vmatprep.subr.mxu0 0.0
        %830 = vmatpush1.msra.mxu0 %v816
        %831 = vmatprep.subr.mxu0 0.0
        %832 = vmatpush1.msra.mxu0 %v817
        %833 = vmatprep.subr.mxu0 0.0
        %834 = vmatpush1.msra.mxu0 %v818
        %835 = vmatprep.subr.mxu0 0.0
        %836 = vmatpush1.msra.mxu0 %v819
        %837 = vmatprep.subr.mxu0 0.0
        %838 = vmatpush1.msra.mxu0 %v820
        %839 = vmatprep.subr.mxu0 0.0
        %840 = vmatpush1.msra.mxu0 %v821
        %841 = vmatprep.subr.mxu0 0.0
        %842 = vmatpush1.msra.mxu0 %v822
        %843 = vmatprep.subr.mxu0 0.0
        %844 = vmatpush1.msra.mxu0 0.0
        %845 = vmatprep.subr.mxu0 0.0
        %846 = vmatpush1.msra.mxu0 0.0
        %847 = vmatprep.subr.mxu0 0.0
        %848 = vmatpush1.msra.mxu0 0.0
        %849 = vmatprep.subr.mxu0 0.0
        %850 = vmatpush1.msra.mxu0 0.0
        %851 = vmatprep.subr.mxu0 0.0
        %852 = vmatpush1.msra.mxu0 0.0
        %853 = vmatprep.subr.mxu0 0.0
        %854 = vmatpush1.msra.mxu0 0.0
        %855 = vmatprep.subr.mxu0 0.0
        %856 = vmatpush1.msra.mxu0 0.0
        %857 = vmatprep.subr.mxu0 0.0
        %858 = vmatpush1.msra.mxu0 0.0
        %859 = vmatprep.subr.mxu0 0.0
        %860 = vmatpush1.msra.mxu0 0.0
        %861 = vmatprep.subr.mxu0 0.0
        %862 = vmatpush1.msra.mxu0 0.0
        %863 = vmatprep.subr.mxu0 0.0
        %864 = vmatpush1.msra.mxu0 0.0
        %865 = vmatprep.subr.mxu0 0.0
        %866 = vmatpush1.msra.mxu0 0.0
        %867 = vmatprep.subr.mxu0 0.0
        %868 = vmatpush1.msra.mxu0 0.0
        %869 = vmatprep.subr.mxu0 0.0
        %870 = vmatpush1.msra.mxu0 0.0
        %871 = vmatprep.subr.mxu0 0.0
        %872 = vmatpush1.msra.mxu0 0.0
        %873 = vmatprep.subr.mxu0 0.0
        %874 = vmatpush1.msra.mxu0 0.0
        %875 = vmatprep.subr.mxu0 0.0
        %876 = vmatpush1.msra.mxu0 0.0
        %877 = vmatprep.subr.mxu0 0.0
        %878 = vmatpush1.msra.mxu0 0.0
        %879 = vmatprep.subr.mxu0 0.0
        %880 = vmatpush1.msra.mxu0 0.0
        %881 = vmatprep.subr.mxu0 0.0
        %882 = vmatpush1.msra.mxu0 0.0
        %883 = vmatprep.subr.mxu0 0.0
        %884 = vmatpush1.msra.mxu0 0.0
        %885 = vmatprep.subr.mxu0 0.0
        %886 = vmatpush1.msra.mxu0 0.0
        %887 = vmatprep.subr.mxu0 0.0
        %888 = vmatpush1.msra.mxu0 0.0
        %889 = vmatprep.subr.mxu0 0.0
        %890 = vmatpush1.msra.mxu0 0.0
        %891 = vmatprep.mubr.f32.mxu0 0.0
        %892 = vmatmul.mubr.f32.gmra.mrb[0].mxu0 %v825
        %v893 = vpop.f32.mrb[0].mxu0
        %v894 = vadd.f32 0.0, %v893
        %v895 = vpop.f32.mrb[0].mxu0
        %896 = vdwg.mxu0
        %v897 = vld [vmem:[%s7] sm:$0x1]
        %v899 = vlaneseq
        %v900 = vshrl.u32 %v899, 7
        %v901 = vsub.s32 0, %v900
        %v902 = vrot.slane %v897, %v901
        %v904 = vmul.f32 %v894, %v902
        %v905 = vld [vmem:[%s8] sm:$0x1]
        %v907 = vlaneseq
        %v908 = vshrl.u32 %v907, 7
        %v909 = vsub.s32 0, %v908
        %v910 = vrot.slane %v905, %v909
        %v912 = vadd.f32 %v904, %v910
        %v913 = vxor.u32 %v912, 2147483648
        %v914 = vmul.f32 %v913, 1.442695
        %v915 = vpow.pop %v914
        %v916 = vadd.f32 %v915, 1.0
        %v917 = vrcp.pop %v916
        %v918 = vmul.f32 1.0, %v917
        %v919 = vmul.f32 %v912, %v918
        %v920 = vrot.slane %v919, 4
        %v921 = vadd.f32 %v919, %v920
        %v922 = vrot.slane %v921, 2
        %v923 = vadd.f32 %v921, %v922
        %v924 = vrot.slane %v923, 1
        %v925 = vadd.f32 %v923, %v924
        %v926 = vrcp.pop 8.0
        %v927 = vmul.f32 %v925, %v926
        %v928 = vld [vmem:[%s9] sm:$0xff]
        %v929 = vld [vmem:[%s9 + $0x8] sm:$0xff]
        %v930 = vld [vmem:[%s9 + $0x10] sm:$0xff]
        %v931 = vld [vmem:[%s9 + $0x18] sm:$0xff]
        %v932 = vld [vmem:[%s9 + $0x20] sm:$0xff]
        %v933 = vld [vmem:[%s9 + $0x28] sm:$0xff]
        %v934 = vld [vmem:[%s9 + $0x30] sm:$0xff]
        %v935 = vld [vmem:[%s9 + $0x38] sm:$0xff]
        %v936 = vld [vmem:[%s9 + $0x40] sm:$0xff]
        %v937 = vld [vmem:[%s9 + $0x48] sm:$0xff]
        %v938 = vld [vmem:[%s9 + $0x50] sm:$0xff]
        %v939 = vld [vmem:[%s9 + $0x58] sm:$0xff]
        %v940 = vld [vmem:[%s9 + $0x60] sm:$0xff]
        %v941 = vld [vmem:[%s9 + $0x68] sm:$0xff]
        %v942 = vld [vmem:[%s9 + $0x70] sm:$0xff]
        %v943 = vld [vmem:[%s9 + $0x78] sm:$0xff]
        %v944 = vld [vmem:[%s10] sm:$0x1]
        %945 = vmatprep.subr.mxu0 0.0
        %946 = vmatpush1.msra.mxu0 %v928
        %947 = vmatprep.subr.mxu0 0.0
        %948 = vmatpush1.msra.mxu0 %v929
        %949 = vmatprep.subr.mxu0 0.0
        %950 = vmatpush1.msra.mxu0 %v930
        %951 = vmatprep.subr.mxu0 0.0
        %952 = vmatpush1.msra.mxu0 %v931
        %953 = vmatprep.subr.mxu0 0.0
        %954 = vmatpush1.msra.mxu0 %v932
        %955 = vmatprep.subr.mxu0 0.0
        %956 = vmatpush1.msra.mxu0 %v933
        %957 = vmatprep.subr.mxu0 0.0
        %958 = vmatpush1.msra.mxu0 %v934
        %959 = vmatprep.subr.mxu0 0.0
        %960 = vmatpush1.msra.mxu0 %v935
        %961 = vmatprep.subr.mxu0 0.0
        %962 = vmatpush1.msra.mxu0 %v936
        %963 = vmatprep.subr.mxu0 0.0
        %964 = vmatpush1.msra.mxu0 %v937
        %965 = vmatprep.subr.mxu0 0.0
        %966 = vmatpush1.msra.mxu0 %v938
        %967 = vmatprep.subr.mxu0 0.0
        %968 = vmatpush1.msra.mxu0 %v939
        %969 = vmatprep.subr.mxu0 0.0
        %970 = vmatpush1.msra.mxu0 %v940
        %971 = vmatprep.subr.mxu0 0.0
        %972 = vmatpush1.msra.mxu0 %v941
        %973 = vmatprep.subr.mxu0 0.0
        %974 = vmatpush1.msra.mxu0 %v942
        %975 = vmatprep.subr.mxu0 0.0
        %976 = vmatpush1.msra.mxu0 %v943
        %977 = vmatprep.subr.mxu0 0.0
        %978 = vmatpush1.msra.mxu0 0.0
        %979 = vmatprep.subr.mxu0 0.0
        %980 = vmatpush1.msra.mxu0 0.0
        %981 = vmatprep.subr.mxu0 0.0
        %982 = vmatpush1.msra.mxu0 0.0
        %983 = vmatprep.subr.mxu0 0.0
        %984 = vmatpush1.msra.mxu0 0.0
        %985 = vmatprep.subr.mxu0 0.0
        %986 = vmatpush1.msra.mxu0 0.0
        %987 = vmatprep.subr.mxu0 0.0
        %988 = vmatpush1.msra.mxu0 0.0
        %989 = vmatprep.subr.mxu0 0.0
        %990 = vmatpush1.msra.mxu0 0.0
        %991 = vmatprep.subr.mxu0 0.0
        %992 = vmatpush1.msra.mxu0 0.0
        %993 = vmatprep.subr.mxu0 0.0
        %994 = vmatpush1.msra.mxu0 0.0
        %995 = vmatprep.subr.mxu0 0.0
        %996 = vmatpush1.msra.mxu0 0.0
        %997 = vmatprep.subr.mxu0 0.0
        %998 = vmatpush1.msra.mxu0 0.0
        %999 = vmatprep.subr.mxu0 0.0
        %1000 = vmatpush1.msra.mxu0 0.0
        %1001 = vmatprep.subr.mxu0 0.0
        %1002 = vmatpush1.msra.mxu0 0.0
        %1003 = vmatprep.subr.mxu0 0.0
        %1004 = vmatpush1.msra.mxu0 0.0
        %1005 = vmatprep.subr.mxu0 0.0
        %1006 = vmatpush1.msra.mxu0 0.0
        %1007 = vmatprep.subr.mxu0 0.0
        %1008 = vmatpush1.msra.mxu0 0.0
        %1009 = vmatprep.mubr.f32.mxu0 0.0
        %1010 = vmatmul.mubr.f32.gmra.mrb[0].mxu0 %v927
        %v1011 = vpop.f32.mrb[0].mxu0
        %v1012 = vadd.f32 %v944, %v1011
        %v1013 = vpop.f32.mrb[0].mxu0
        %1014 = vdwg.mxu0
        %vm1015 = vcmask 32768
        %v1016 = vsel %vm1015, %v1012, -inf
        %1017 = vmax.xlane.f32.xlu0 %v1016
        %v1018 = vpop.xlane.xlu0 %1017
        %v1019 = vsub.f32 %v1012, %v1018
        %v1020 = vmul.f32 %v1019, 1.442695
        %v1021 = vpow.pop %v1020
        %v1022 = vsel %vm1015, %v1021, 0.0
        %1023 = vadd.xlane.f32.xlu0 %v1022
        %v1024 = vpop.xlane.xlu0 %1023
        %v1025 = vrcp.pop %v1024
        %v1026 = vmul.f32 %v1021, %v1025
        %1027 = vst.msk [vmem:[%s376] sm:$0x1] %vm1015, %v1026
        %s1028 = sand.u32 %s269, 1
        %s1029 = scalar_lea.sflag [#allocation3], %s1028
        %s1030 = sand.u32 %s269, 1
        %s1031 = scalar_lea.vmem [#allocation2], %s1030
        // Predicated region
        $region65: #{customvit_forward.5} parent=63 // pred_check
          %p1032 = pneg %p279
        $region66: #{customvit_forward.5} parent=63 // pred_check_branch
          %1034 = sbr.rel (%p1032) target = $region68
        $region67: #{customvit_forward.5} parent=63 // pred_region
          %s1036 = ssub.s32 16, 16
          %1037 = vsyncadd %s1029, %s1036
          %s1038 = smul.addr %s25, 16
          %s1039 = scalar_lea.hbm %s11, %s1038
          %s1041 = sshll.u32 %s1031, 4
          %s1042 = int_to_ptr.vmem [resolvable:$true] %s1041
          %1044 = dma.vmem_to_hbm [thread:$0]  %s1042, 16, %s1039, %s1029
        $region68: #{customvit_forward.5} parent=63 // pred_fallthru
          _
      $region64: #{customvit_forward.5} parent=5 // pred_fallthru
        _
      %p1045 = scmp.le.s32.totalorder 2, %s20
      // Predicated region
      $region69: #{customvit_forward.5} parent=5 // pred_check
        %p1046 = pneg %p1045
      $region70: #{customvit_forward.5} parent=5 // pred_check_branch
        %1048 = sbr.rel (%p1046) target = $region72
      $region71: #{customvit_forward.5} parent=5 // pred_region
        %s1049 = ssub.s32 %s20, 2
        // Predicated region
        $region73: #{customvit_forward.5} parent=71 // pred_check
          %p1050 = pneg %p285
        $region74: #{customvit_forward.5} parent=71 // pred_check_branch
          %1052 = sbr.rel (%p1050) target = $region76
        $region75: #{customvit_forward.5} parent=71 // pred_region
          %s1053 = sand.u32 %s270, 1
          %s1054 = scalar_lea.sflag [#allocation3], %s1053
          %s1055 = sand.u32 %s270, 1
          %s1056 = scalar_lea.vmem [#allocation2], %s1055
          %1057 = dma.done %s1054, 16
        $region76: #{customvit_forward.5} parent=71 // pred_fallthru
          _
      $region72: #{customvit_forward.5} parent=5 // pred_fallthru
        _
    $region6: #{customvit_forward.5} parent=1 // loop_footer
      %s24 = sadd.s32 1, %s20
    $region7: #{customvit_forward.5} parent=1 // loop_footer_branch
      %19 = sbr.rel target = $region3
    $region8: #{customvit_forward.5} parent=1 // loop_exit
      _
    %1058 = vsyncpa [#allocation3], 1
    %s1059 = scalar_lea.sflag [#allocation3], 1
    %1060 = vsyncpa %s1059, 1

// kernel: customvit_forward.4
$region0: #{customvit_forward.4}
  #allocation0 [shape = 'u32[]', space=smem, size = 0x4, offset = 0x4, fixed_abs, tag = 'smem constant byte address 0x4 - core index']
  #allocation1 [shape = 'u32[144,128]{1,0:T(1,128)}', space=vmem, size = 0x12000, scoped, tag = 'internal scratch']
  %s0 = inlined_call_operand.vmem [shape: f32[2,4,16,16], index: 0, kind: input, shape index: {}]
  %s1 = inlined_call_operand.vmem [shape: f32[1,16], index: 1, kind: input, shape index: {}]
  %s2 = inlined_call_operand.vmem [shape: f32[1,16], index: 2, kind: input, shape index: {}]
  %s3 = inlined_call_operand.vmem [shape: f32[4,16,8], index: 3, kind: input, shape index: {}]
  %s4 = inlined_call_operand.vmem [shape: f32[4,16,8], index: 4, kind: input, shape index: {}]
  %s5 = inlined_call_operand.vmem [shape: f32[4,16,8], index: 5, kind: input, shape index: {}]
  %s6 = inlined_call_operand.vmem [shape: f32[4,8,16], index: 6, kind: input, shape index: {}]
  %s7 = inlined_call_operand.vmem [shape: f32[1,16], index: 7, kind: input, shape index: {}]
  %s8 = inlined_call_operand.vmem [shape: f32[1,16], index: 8, kind: input, shape index: {}]
  %s9 = inlined_call_operand.vmem [shape: f32[1,16], index: 9, kind: input, shape index: {}]
  %s10 = inlined_call_operand.vmem [shape: f32[16,32], index: 10, kind: input, shape index: {}]
  %s11 = inlined_call_operand.vmem [shape: f32[1,32], index: 11, kind: input, shape index: {}]
  %s12 = inlined_call_operand.vmem [shape: f32[32,16], index: 12, kind: input, shape index: {}]
  %s13 = inlined_call_operand.vmem [shape: f32[1,16], index: 13, kind: input, shape index: {}]
  %s14 = inlined_call_operand.vmem [shape: f32[16,8], index: 14, kind: input, shape index: {}]
  %s15 = inlined_call_operand.vmem [shape: f32[1,8], index: 15, kind: input, shape index: {}]
  %s16 = inlined_call_operand.vmem [shape: f32[1,8], index: 16, kind: input, shape index: {}]
  %s17 = inlined_call_operand.vmem [shape: f32[2,4,16,8], index: 17, kind: output, shape index: {}]
  %s18 = sld [smem:[#allocation0]]
  $region101: #{customvit_forward.4} parent=0
    _
  %s20 = ssub.s32 1, %s18
  %s21 = scalar_select 0, %s20, %s18
  loop: start=0, step=1, limit=4
  $region2: #{customvit_forward.4} parent=0 // loop_pre_header
    _
  $region3: #{customvit_forward.4} parent=0 // loop_header
    %s23 = sphi 0, %s27
    %p24 = scmp.ge.s32.totalorder %s23, 4
    %s33 = sphi 0, %s35
    %s36 = sphi 0, %s33
    %s37 = sphi 0, %s36
    %s53 = sphi 0, %s37
    %s57 = sphi 0, %s57
    %s59 = sphi 0, %s57
    %s60 = sphi 0, %s59
    %s74 = sphi 0, %s60
    %s78 = sphi 0, %s78
    %s80 = sphi 0, %s78
    %s81 = sphi 0, %s80
    %s95 = sphi 0, %s81
    %s99 = sphi 0, %s99
    %s101 = sphi 0, %s99
    %s102 = sphi 0, %s101
    %s116 = sphi 0, %s102
    %s120 = sphi 0, %s120
    %s122 = sphi 0, %s120
    %s123 = sphi 0, %s122
    %s137 = sphi 0, %s123
    %s141 = sphi 0, %s141
    %s143 = sphi 0, %s141
    %s144 = sphi 0, %s143
    %s158 = sphi 0, %s144
    %s162 = sphi 0, %s162
    %s164 = sphi 0, %s162
    %s165 = sphi 0, %s164
    %s179 = sphi 0, %s165
    %s183 = sphi 0, %s183
    %s185 = sphi 0, %s183
    %s186 = sphi 0, %s185
    %s200 = sphi 0, %s186
    %s204 = sphi 0, %s204
    %s206 = sphi 0, %s204
    %s207 = sphi 0, %s206
    %s221 = sphi 0, %s207
    %s225 = sphi 0, %s225
    %s227 = sphi 0, %s225
    %s228 = sphi 0, %s227
    %s242 = sphi 0, %s228
    %s246 = sphi 0, %s246
    %s248 = sphi 0, %s246
    %s249 = sphi 0, %s248
    %s263 = sphi 0, %s249
    %s267 = sphi 0, %s267
    %s269 = sphi 0, %s267
    %s270 = sphi 0, %s269
    %s284 = sphi 0, %s270
    %s288 = sphi 0, %s288
    %s290 = sphi 0, %s288
    %s291 = sphi 0, %s290
    %s305 = sphi 0, %s291
    %s309 = sphi 0, %s309
    %s311 = sphi 0, %s309
    %s312 = sphi 0, %s311
    %s326 = sphi 0, %s312
    %s330 = sphi 0, %s330
    %s332 = sphi 0, %s330
    %s333 = sphi 0, %s332
    %s347 = sphi 0, %s333
    %s351 = sphi 0, %s351
    %s353 = sphi 0, %s351
    %s354 = sphi 0, %s353
    %s368 = sphi 0, %s354
    %s372 = sphi 0, %s372
    %s374 = sphi 0, %s372
    %s375 = sphi 0, %s374
    %s389 = sphi 0, %s375
    %s395 = sphi 0, %s397
    %s398 = sphi 0, %s395
    %s399 = sphi 0, %s398
    %s415 = sphi 0, %s399
  $region4: #{customvit_forward.4} parent=0 // loop_header_branch
    %26 = sbr.rel (%p24) target = $region8
  $region5: #{customvit_forward.4} parent=0 // loop_body
    %s28 = ssub.s32 %s23, 1
    %s29 = ssub.s32 %s23, 2
    %s30 = sadd.s32 %s23, 1
    %s31 = ssub.s32 %s23, %s30
    %p32 = scmp.eq.s32.totalorder %s31, 0
    %s34 = sadd.s32 %s33, 1
    %s35 = scalar_select %p32, %s33, %s34
    %p38 = pneg %p32
    %p39 = scmp.eq.s32.totalorder %s23, 1
    %p40 = por %p38, %p39
    %p41 = scmp.ne.s32.totalorder %s33, %s36
    %p42 = scmp.eq.s32.totalorder %s23, 0
    %p43 = por %p41, %p42
    %p44 = scmp.ne.s32.totalorder %s33, %s36
    %p45 = scmp.eq.s32.totalorder %s28, 1
    %p46 = por %p44, %p45
    %p47 = scmp.ne.s32.totalorder %s36, %s37
    %p48 = scmp.eq.s32.totalorder %s28, 0
    %p49 = por %p47, %p48
    %p50 = scmp.ne.s32.totalorder %s36, %s37
    %p51 = scmp.eq.s32.totalorder %s29, 1
    %p52 = por %p50, %p51
    %p54 = scmp.ne.s32.totalorder %s37, %s53
    %p55 = scmp.eq.s32.totalorder %s29, 0
    %p56 = por %p54, %p55
    %s58 = sadd.s32 %s57, 1
    %p61 = scmp.eq.s32.totalorder %s23, 1
    %p62 = scmp.ne.s32.totalorder %s57, %s59
    %p63 = scmp.eq.s32.totalorder %s23, 0
    %p64 = por %p62, %p63
    %p65 = scmp.ne.s32.totalorder %s57, %s59
    %p66 = scmp.eq.s32.totalorder %s28, 1
    %p67 = por %p65, %p66
    %p68 = scmp.ne.s32.totalorder %s59, %s60
    %p69 = scmp.eq.s32.totalorder %s28, 0
    %p70 = por %p68, %p69
    %p71 = scmp.ne.s32.totalorder %s59, %s60
    %p72 = scmp.eq.s32.totalorder %s29, 1
    %p73 = por %p71, %p72
    %p75 = scmp.ne.s32.totalorder %s60, %s74
    %p76 = scmp.eq.s32.totalorder %s29, 0
    %p77 = por %p75, %p76
    %s79 = sadd.s32 %s78, 1
    %p82 = scmp.eq.s32.totalorder %s23, 1
    %p83 = scmp.ne.s32.totalorder %s78, %s80
    %p84 = scmp.eq.s32.totalorder %s23, 0
    %p85 = por %p83, %p84
    %p86 = scmp.ne.s32.totalorder %s78, %s80
    %p87 = scmp.eq.s32.totalorder %s28, 1
    %p88 = por %p86, %p87
    %p89 = scmp.ne.s32.totalorder %s80, %s81
    %p90 = scmp.eq.s32.totalorder %s28, 0
    %p91 = por %p89, %p90
    %p92 = scmp.ne.s32.totalorder %s80, %s81
    %p93 = scmp.eq.s32.totalorder %s29, 1
    %p94 = por %p92, %p93
    %p96 = scmp.ne.s32.totalorder %s81, %s95
    %p97 = scmp.eq.s32.totalorder %s29, 0
    %p98 = por %p96, %p97
    %s100 = sadd.s32 %s99, 1
    %p103 = scmp.eq.s32.totalorder %s23, 1
    %p104 = scmp.ne.s32.totalorder %s99, %s101
    %p105 = scmp.eq.s32.totalorder %s23, 0
    %p106 = por %p104, %p105
    %p107 = scmp.ne.s32.totalorder %s99, %s101
    %p108 = scmp.eq.s32.totalorder %s28, 1
    %p109 = por %p107, %p108
    %p110 = scmp.ne.s32.totalorder %s101, %s102
    %p111 = scmp.eq.s32.totalorder %s28, 0
    %p112 = por %p110, %p111
    %p113 = scmp.ne.s32.totalorder %s101, %s102
    %p114 = scmp.eq.s32.totalorder %s29, 1
    %p115 = por %p113, %p114
    %p117 = scmp.ne.s32.totalorder %s102, %s116
    %p118 = scmp.eq.s32.totalorder %s29, 0
    %p119 = por %p117, %p118
    %s121 = sadd.s32 %s120, 1
    %p124 = scmp.eq.s32.totalorder %s23, 1
    %p125 = scmp.ne.s32.totalorder %s120, %s122
    %p126 = scmp.eq.s32.totalorder %s23, 0
    %p127 = por %p125, %p126
    %p128 = scmp.ne.s32.totalorder %s120, %s122
    %p129 = scmp.eq.s32.totalorder %s28, 1
    %p130 = por %p128, %p129
    %p131 = scmp.ne.s32.totalorder %s122, %s123
    %p132 = scmp.eq.s32.totalorder %s28, 0
    %p133 = por %p131, %p132
    %p134 = scmp.ne.s32.totalorder %s122, %s123
    %p135 = scmp.eq.s32.totalorder %s29, 1
    %p136 = por %p134, %p135
    %p138 = scmp.ne.s32.totalorder %s123, %s137
    %p139 = scmp.eq.s32.totalorder %s29, 0
    %p140 = por %p138, %p139
    %s142 = sadd.s32 %s141, 1
    %p145 = scmp.eq.s32.totalorder %s23, 1
    %p146 = scmp.ne.s32.totalorder %s141, %s143
    %p147 = scmp.eq.s32.totalorder %s23, 0
    %p148 = por %p146, %p147
    %p149 = scmp.ne.s32.totalorder %s141, %s143
    %p150 = scmp.eq.s32.totalorder %s28, 1
    %p151 = por %p149, %p150
    %p152 = scmp.ne.s32.totalorder %s143, %s144
    %p153 = scmp.eq.s32.totalorder %s28, 0
    %p154 = por %p152, %p153
    %p155 = scmp.ne.s32.totalorder %s143, %s144
    %p156 = scmp.eq.s32.totalorder %s29, 1
    %p157 = por %p155, %p156
    %p159 = scmp.ne.s32.totalorder %s144, %s158
    %p160 = scmp.eq.s32.totalorder %s29, 0
    %p161 = por %p159, %p160
    %s163 = sadd.s32 %s162, 1
    %p166 = scmp.eq.s32.totalorder %s23, 1
    %p167 = scmp.ne.s32.totalorder %s162, %s164
    %p168 = scmp.eq.s32.totalorder %s23, 0
    %p169 = por %p167, %p168
    %p170 = scmp.ne.s32.totalorder %s162, %s164
    %p171 = scmp.eq.s32.totalorder %s28, 1
    %p172 = por %p170, %p171
    %p173 = scmp.ne.s32.totalorder %s164, %s165
    %p174 = scmp.eq.s32.totalorder %s28, 0
    %p175 = por %p173, %p174
    %p176 = scmp.ne.s32.totalorder %s164, %s165
    %p177 = scmp.eq.s32.totalorder %s29, 1
    %p178 = por %p176, %p177
    %p180 = scmp.ne.s32.totalorder %s165, %s179
    %p181 = scmp.eq.s32.totalorder %s29, 0
    %p182 = por %p180, %p181
    %s184 = sadd.s32 %s183, 1
    %p187 = scmp.eq.s32.totalorder %s23, 1
    %p188 = scmp.ne.s32.totalorder %s183, %s185
    %p189 = scmp.eq.s32.totalorder %s23, 0
    %p190 = por %p188, %p189
    %p191 = scmp.ne.s32.totalorder %s183, %s185
    %p192 = scmp.eq.s32.totalorder %s28, 1
    %p193 = por %p191, %p192
    %p194 = scmp.ne.s32.totalorder %s185, %s186
    %p195 = scmp.eq.s32.totalorder %s28, 0
    %p196 = por %p194, %p195
    %p197 = scmp.ne.s32.totalorder %s185, %s186
    %p198 = scmp.eq.s32.totalorder %s29, 1
    %p199 = por %p197, %p198
    %p201 = scmp.ne.s32.totalorder %s186, %s200
    %p202 = scmp.eq.s32.totalorder %s29, 0
    %p203 = por %p201, %p202
    %s205 = sadd.s32 %s204, 1
    %p208 = scmp.eq.s32.totalorder %s23, 1
    %p209 = scmp.ne.s32.totalorder %s204, %s206
    %p210 = scmp.eq.s32.totalorder %s23, 0
    %p211 = por %p209, %p210
    %p212 = scmp.ne.s32.totalorder %s204, %s206
    %p213 = scmp.eq.s32.totalorder %s28, 1
    %p214 = por %p212, %p213
    %p215 = scmp.ne.s32.totalorder %s206, %s207
    %p216 = scmp.eq.s32.totalorder %s28, 0
    %p217 = por %p215, %p216
    %p218 = scmp.ne.s32.totalorder %s206, %s207
    %p219 = scmp.eq.s32.totalorder %s29, 1
    %p220 = por %p218, %p219
    %p222 = scmp.ne.s32.totalorder %s207, %s221
    %p223 = scmp.eq.s32.totalorder %s29, 0
    %p224 = por %p222, %p223
    %s226 = sadd.s32 %s225, 1
    %p229 = scmp.eq.s32.totalorder %s23, 1
    %p230 = scmp.ne.s32.totalorder %s225, %s227
    %p231 = scmp.eq.s32.totalorder %s23, 0
    %p232 = por %p230, %p231
    %p233 = scmp.ne.s32.totalorder %s225, %s227
    %p234 = scmp.eq.s32.totalorder %s28, 1
    %p235 = por %p233, %p234
    %p236 = scmp.ne.s32.totalorder %s227, %s228
    %p237 = scmp.eq.s32.totalorder %s28, 0
    %p238 = por %p236, %p237
    %p239 = scmp.ne.s32.totalorder %s227, %s228
    %p240 = scmp.eq.s32.totalorder %s29, 1
    %p241 = por %p239, %p240
    %p243 = scmp.ne.s32.totalorder %s228, %s242
    %p244 = scmp.eq.s32.totalorder %s29, 0
    %p245 = por %p243, %p244
    %s247 = sadd.s32 %s246, 1
    %p250 = scmp.eq.s32.totalorder %s23, 1
    %p251 = scmp.ne.s32.totalorder %s246, %s248
    %p252 = scmp.eq.s32.totalorder %s23, 0
    %p253 = por %p251, %p252
    %p254 = scmp.ne.s32.totalorder %s246, %s248
    %p255 = scmp.eq.s32.totalorder %s28, 1
    %p256 = por %p254, %p255
    %p257 = scmp.ne.s32.totalorder %s248, %s249
    %p258 = scmp.eq.s32.totalorder %s28, 0
    %p259 = por %p257, %p258
    %p260 = scmp.ne.s32.totalorder %s248, %s249
    %p261 = scmp.eq.s32.totalorder %s29, 1
    %p262 = por %p260, %p261
    %p264 = scmp.ne.s32.totalorder %s249, %s263
    %p265 = scmp.eq.s32.totalorder %s29, 0
    %p266 = por %p264, %p265
    %s268 = sadd.s32 %s267, 1
    %p271 = scmp.eq.s32.totalorder %s23, 1
    %p272 = scmp.ne.s32.totalorder %s267, %s269
    %p273 = scmp.eq.s32.totalorder %s23, 0
    %p274 = por %p272, %p273
    %p275 = scmp.ne.s32.totalorder %s267, %s269
    %p276 = scmp.eq.s32.totalorder %s28, 1
    %p277 = por %p275, %p276
    %p278 = scmp.ne.s32.totalorder %s269, %s270
    %p279 = scmp.eq.s32.totalorder %s28, 0
    %p280 = por %p278, %p279
    %p281 = scmp.ne.s32.totalorder %s269, %s270
    %p282 = scmp.eq.s32.totalorder %s29, 1
    %p283 = por %p281, %p282
    %p285 = scmp.ne.s32.totalorder %s270, %s284
    %p286 = scmp.eq.s32.totalorder %s29, 0
    %p287 = por %p285, %p286
    %s289 = sadd.s32 %s288, 1
    %p292 = scmp.eq.s32.totalorder %s23, 1
    %p293 = scmp.ne.s32.totalorder %s288, %s290
    %p294 = scmp.eq.s32.totalorder %s23, 0
    %p295 = por %p293, %p294
    %p296 = scmp.ne.s32.totalorder %s288, %s290
    %p297 = scmp.eq.s32.totalorder %s28, 1
    %p298 = por %p296, %p297
    %p299 = scmp.ne.s32.totalorder %s290, %s291
    %p300 = scmp.eq.s32.totalorder %s28, 0
    %p301 = por %p299, %p300
    %p302 = scmp.ne.s32.totalorder %s290, %s291
    %p303 = scmp.eq.s32.totalorder %s29, 1
    %p304 = por %p302, %p303
    %p306 = scmp.ne.s32.totalorder %s291, %s305
    %p307 = scmp.eq.s32.totalorder %s29, 0
    %p308 = por %p306, %p307
    %s310 = sadd.s32 %s309, 1
    %p313 = scmp.eq.s32.totalorder %s23, 1
    %p314 = scmp.ne.s32.totalorder %s309, %s311
    %p315 = scmp.eq.s32.totalorder %s23, 0
    %p316 = por %p314, %p315
    %p317 = scmp.ne.s32.totalorder %s309, %s311
    %p318 = scmp.eq.s32.totalorder %s28, 1
    %p319 = por %p317, %p318
    %p320 = scmp.ne.s32.totalorder %s311, %s312
    %p321 = scmp.eq.s32.totalorder %s28, 0
    %p322 = por %p320, %p321
    %p323 = scmp.ne.s32.totalorder %s311, %s312
    %p324 = scmp.eq.s32.totalorder %s29, 1
    %p325 = por %p323, %p324
    %p327 = scmp.ne.s32.totalorder %s312, %s326
    %p328 = scmp.eq.s32.totalorder %s29, 0
    %p329 = por %p327, %p328
    %s331 = sadd.s32 %s330, 1
    %p334 = scmp.eq.s32.totalorder %s23, 1
    %p335 = scmp.ne.s32.totalorder %s330, %s332
    %p336 = scmp.eq.s32.totalorder %s23, 0
    %p337 = por %p335, %p336
    %p338 = scmp.ne.s32.totalorder %s330, %s332
    %p339 = scmp.eq.s32.totalorder %s28, 1
    %p340 = por %p338, %p339
    %p341 = scmp.ne.s32.totalorder %s332, %s333
    %p342 = scmp.eq.s32.totalorder %s28, 0
    %p343 = por %p341, %p342
    %p344 = scmp.ne.s32.totalorder %s332, %s333
    %p345 = scmp.eq.s32.totalorder %s29, 1
    %p346 = por %p344, %p345
    %p348 = scmp.ne.s32.totalorder %s333, %s347
    %p349 = scmp.eq.s32.totalorder %s29, 0
    %p350 = por %p348, %p349
    %s352 = sadd.s32 %s351, 1
    %p355 = scmp.eq.s32.totalorder %s23, 1
    %p356 = scmp.ne.s32.totalorder %s351, %s353
    %p357 = scmp.eq.s32.totalorder %s23, 0
    %p358 = por %p356, %p357
    %p359 = scmp.ne.s32.totalorder %s351, %s353
    %p360 = scmp.eq.s32.totalorder %s28, 1
    %p361 = por %p359, %p360
    %p362 = scmp.ne.s32.totalorder %s353, %s354
    %p363 = scmp.eq.s32.totalorder %s28, 0
    %p364 = por %p362, %p363
    %p365 = scmp.ne.s32.totalorder %s353, %s354
    %p366 = scmp.eq.s32.totalorder %s29, 1
    %p367 = por %p365, %p366
    %p369 = scmp.ne.s32.totalorder %s354, %s368
    %p370 = scmp.eq.s32.totalorder %s29, 0
    %p371 = por %p369, %p370
    %s373 = sadd.s32 %s372, 1
    %p376 = scmp.eq.s32.totalorder %s23, 1
    %p377 = scmp.ne.s32.totalorder %s372, %s374
    %p378 = scmp.eq.s32.totalorder %s23, 0
    %p379 = por %p377, %p378
    %p380 = scmp.ne.s32.totalorder %s372, %s374
    %p381 = scmp.eq.s32.totalorder %s28, 1
    %p382 = por %p380, %p381
    %p383 = scmp.ne.s32.totalorder %s374, %s375
    %p384 = scmp.eq.s32.totalorder %s28, 0
    %p385 = por %p383, %p384
    %p386 = scmp.ne.s32.totalorder %s374, %s375
    %p387 = scmp.eq.s32.totalorder %s29, 1
    %p388 = por %p386, %p387
    %p390 = scmp.ne.s32.totalorder %s375, %s389
    %p391 = scmp.eq.s32.totalorder %s29, 0
    %p392 = por %p390, %p391
    %s393 = ssub.s32 %s23, %s30
    %p394 = scmp.eq.s32.totalorder %s393, 0
    %s396 = sadd.s32 %s395, 1
    %s397 = scalar_select %p394, %s395, %s396
    %p400 = pneg %p394
    %p401 = scmp.eq.s32.totalorder %s23, 1
    %p402 = por %p400, %p401
    %p403 = scmp.ne.s32.totalorder %s395, %s398
    %p404 = scmp.eq.s32.totalorder %s23, 0
    %p405 = por %p403, %p404
    %p406 = scmp.ne.s32.totalorder %s395, %s398
    %p407 = scmp.eq.s32.totalorder %s28, 1
    %p408 = por %p406, %p407
    %p409 = scmp.ne.s32.totalorder %s398, %s399
    %p410 = scmp.eq.s32.totalorder %s28, 0
    %p411 = por %p409, %p410
    %p412 = scmp.ne.s32.totalorder %s398, %s399
    %p413 = scmp.eq.s32.totalorder %s29, 1
    %p414 = por %p412, %p413
    %p416 = scmp.ne.s32.totalorder %s399, %s415
    %p417 = scmp.eq.s32.totalorder %s29, 0
    %p418 = por %p416, %p417
    %p419 = scmp.le.s32.totalorder 1, %s23
    %p420 = scmp.lt.s32.totalorder %s23, 3
    %p421 = pnand %p419, %p420
    %p422 = pneg %p421
    // Predicated region
    $region9: #{customvit_forward.4} parent=5 // pred_check
      _
    $region10: #{customvit_forward.4} parent=5 // pred_check_branch
      %424 = sbr.rel (%p421) target = $region12
    $region11: #{customvit_forward.4} parent=5 // pred_region
      %s425 = ssub.s32 %s23, 1
      // Predicated region
      $region13: #{customvit_forward.4} parent=11 // pred_check
        %p426 = pneg %p70
      $region14: #{customvit_forward.4} parent=11 // pred_check_branch
        %428 = sbr.rel (%p426) target = $region16
      $region15: #{customvit_forward.4} parent=11 // pred_region
        _
      $region16: #{customvit_forward.4} parent=11 // pred_fallthru
        _
      // Predicated region
      $region17: #{customvit_forward.4} parent=11 // pred_check
        %p429 = pneg %p91
      $region18: #{customvit_forward.4} parent=11 // pred_check_branch
        %431 = sbr.rel (%p429) target = $region20
      $region19: #{customvit_forward.4} parent=11 // pred_region
        _
      $region20: #{customvit_forward.4} parent=11 // pred_fallthru
        _
      // Predicated region
      $region21: #{customvit_forward.4} parent=11 // pred_check
        %p432 = pneg %p112
      $region22: #{customvit_forward.4} parent=11 // pred_check_branch
        %434 = sbr.rel (%p432) target = $region24
      $region23: #{customvit_forward.4} parent=11 // pred_region
        _
      $region24: #{customvit_forward.4} parent=11 // pred_fallthru
        _
      // Predicated region
      $region25: #{customvit_forward.4} parent=11 // pred_check
        %p435 = pneg %p133
      $region26: #{customvit_forward.4} parent=11 // pred_check_branch
        %437 = sbr.rel (%p435) target = $region28
      $region27: #{customvit_forward.4} parent=11 // pred_region
        _
      $region28: #{customvit_forward.4} parent=11 // pred_fallthru
        _
      // Predicated region
      $region29: #{customvit_forward.4} parent=11 // pred_check
        %p438 = pneg %p154
      $region30: #{customvit_forward.4} parent=11 // pred_check_branch
        %440 = sbr.rel (%p438) target = $region32
      $region31: #{customvit_forward.4} parent=11 // pred_region
        _
      $region32: #{customvit_forward.4} parent=11 // pred_fallthru
        _
      // Predicated region
      $region33: #{customvit_forward.4} parent=11 // pred_check
        %p441 = pneg %p175
      $region34: #{customvit_forward.4} parent=11 // pred_check_branch
        %443 = sbr.rel (%p441) target = $region36
      $region35: #{customvit_forward.4} parent=11 // pred_region
        _
      $region36: #{customvit_forward.4} parent=11 // pred_fallthru
        _
      // Predicated region
      $region37: #{customvit_forward.4} parent=11 // pred_check
        %p444 = pneg %p196
      $region38: #{customvit_forward.4} parent=11 // pred_check_branch
        %446 = sbr.rel (%p444) target = $region40
      $region39: #{customvit_forward.4} parent=11 // pred_region
        _
      $region40: #{customvit_forward.4} parent=11 // pred_fallthru
        _
      // Predicated region
      $region41: #{customvit_forward.4} parent=11 // pred_check
        %p447 = pneg %p217
      $region42: #{customvit_forward.4} parent=11 // pred_check_branch
        %449 = sbr.rel (%p447) target = $region44
      $region43: #{customvit_forward.4} parent=11 // pred_region
        _
      $region44: #{customvit_forward.4} parent=11 // pred_fallthru
        _
      // Predicated region
      $region45: #{customvit_forward.4} parent=11 // pred_check
        %p450 = pneg %p238
      $region46: #{customvit_forward.4} parent=11 // pred_check_branch
        %452 = sbr.rel (%p450) target = $region48
      $region47: #{customvit_forward.4} parent=11 // pred_region
        _
      $region48: #{customvit_forward.4} parent=11 // pred_fallthru
        _
      // Predicated region
      $region49: #{customvit_forward.4} parent=11 // pred_check
        %p453 = pneg %p259
      $region50: #{customvit_forward.4} parent=11 // pred_check_branch
        %455 = sbr.rel (%p453) target = $region52
      $region51: #{customvit_forward.4} parent=11 // pred_region
        _
      $region52: #{customvit_forward.4} parent=11 // pred_fallthru
        _
      // Predicated region
      $region53: #{customvit_forward.4} parent=11 // pred_check
        %p456 = pneg %p280
      $region54: #{customvit_forward.4} parent=11 // pred_check_branch
        %458 = sbr.rel (%p456) target = $region56
      $region55: #{customvit_forward.4} parent=11 // pred_region
        _
      $region56: #{customvit_forward.4} parent=11 // pred_fallthru
        _
      // Predicated region
      $region57: #{customvit_forward.4} parent=11 // pred_check
        %p459 = pneg %p301
      $region58: #{customvit_forward.4} parent=11 // pred_check_branch
        %461 = sbr.rel (%p459) target = $region60
      $region59: #{customvit_forward.4} parent=11 // pred_region
        _
      $region60: #{customvit_forward.4} parent=11 // pred_fallthru
        _
      // Predicated region
      $region61: #{customvit_forward.4} parent=11 // pred_check
        %p462 = pneg %p322
      $region62: #{customvit_forward.4} parent=11 // pred_check_branch
        %464 = sbr.rel (%p462) target = $region64
      $region63: #{customvit_forward.4} parent=11 // pred_region
        _
      $region64: #{customvit_forward.4} parent=11 // pred_fallthru
        _
      // Predicated region
      $region65: #{customvit_forward.4} parent=11 // pred_check
        %p465 = pneg %p343
      $region66: #{customvit_forward.4} parent=11 // pred_check_branch
        %467 = sbr.rel (%p465) target = $region68
      $region67: #{customvit_forward.4} parent=11 // pred_region
        _
      $region68: #{customvit_forward.4} parent=11 // pred_fallthru
        _
      // Predicated region
      $region69: #{customvit_forward.4} parent=11 // pred_check
        %p468 = pneg %p364
      $region70: #{customvit_forward.4} parent=11 // pred_check_branch
        %470 = sbr.rel (%p468) target = $region72
      $region71: #{customvit_forward.4} parent=11 // pred_region
        _
      $region72: #{customvit_forward.4} parent=11 // pred_fallthru
        _
      // Predicated region
      $region73: #{customvit_forward.4} parent=11 // pred_check
        %p471 = pneg %p385
      $region74: #{customvit_forward.4} parent=11 // pred_check_branch
        %473 = sbr.rel (%p471) target = $region76
      $region75: #{customvit_forward.4} parent=11 // pred_region
        _
      $region76: #{customvit_forward.4} parent=11 // pred_fallthru
        _
    $region12: #{customvit_forward.4} parent=5 // pred_fallthru
      _
    %p474 = scmp.lt.s32.totalorder %s23, 2
    // Predicated region
    $region77: #{customvit_forward.4} parent=5 // pred_check
      %p475 = pneg %p474
    $region78: #{customvit_forward.4} parent=5 // pred_check_branch
      %477 = sbr.rel (%p475) target = $region80
    $region79: #{customvit_forward.4} parent=5 // pred_region
      // Predicated region
      $region81: #{customvit_forward.4} parent=79 // pred_check
        %p478 = pneg %p43
      $region82: #{customvit_forward.4} parent=79 // pred_check_branch
        %480 = sbr.rel (%p478) target = $region84
      $region83: #{customvit_forward.4} parent=79 // pred_region
        %p481 = scmp.lt.s32.totalorder %s23, 1
        %s482 = scalar_select %p481, %s23, 1
        %s483 = smul.addr %s482, 8
        %s484 = smul.addr %s483, 8
        %s485 = scalar_lea.vmem %s0, %s484
      $region84: #{customvit_forward.4} parent=79 // pred_fallthru
        _
    $region80: #{customvit_forward.4} parent=5 // pred_fallthru
      _
    %p486 = scmp.le.s32.totalorder 1, %s23
    %p487 = scmp.lt.s32.totalorder %s23, 3
    %p488 = pnand %p486, %p487
    %p489 = pneg %p488
    // Predicated region
    $region85: #{customvit_forward.4} parent=5 // pred_check
      _
    $region86: #{customvit_forward.4} parent=5 // pred_check_branch
      %491 = sbr.rel (%p488) target = $region88
    $region87: #{customvit_forward.4} parent=5 // pred_region
      %s492 = ssub.s32 %s23, 1
      %p493 = scmp.lt.s32.totalorder %s28, 1
      %s494 = scalar_select %p493, %s28, 1
      %s495 = smul.addr %s494, 8
      %s496 = smul.addr %s495, 8
      %s497 = scalar_lea.vmem %s0, %s496
      %p498 = pneg %p49
      %p499 = pneg %p46
      %p500 = pneg %p70
      %p501 = pneg %p67
      %p502 = pneg %p91
      %p503 = pneg %p88
      %p504 = pneg %p112
      %p505 = pneg %p109
      %p506 = pneg %p133
      %p507 = pneg %p130
      %p508 = pneg %p154
      %p509 = pneg %p151
      %p510 = pneg %p175
      %p511 = pneg %p172
      %p512 = pneg %p196
      %p513 = pneg %p193
      %p514 = pneg %p217
      %p515 = pneg %p214
      %p516 = pneg %p238
      %p517 = pneg %p235
      %p518 = pneg %p259
      %p519 = pneg %p256
      %p520 = pneg %p280
      %p521 = pneg %p277
      %p522 = pneg %p301
      %p523 = pneg %p298
      %p524 = pneg %p322
      %p525 = pneg %p319
      %p526 = pneg %p343
      %p527 = pneg %p340
      %p528 = pneg %p364
      %p529 = pneg %p361
      %p530 = pneg %p385
      %p531 = pneg %p382
      %p532 = pneg %p411
      %p533 = pneg %p408
      %p534 = scmp.lt.s32.totalorder %s28, 1
      %s535 = scalar_select %p534, %s28, 1
      %s536 = smul.addr %s535, 8
      %s537 = smul.addr %s536, 8
      %s538 = scalar_lea.vmem %s17, %s537
      %p539 = scmp.lt.s32.totalorder %s28, 1
      %s540 = scalar_select %p539, %s28, 1
      %s541 = smul.addr %s540, 8
      %s542 = smul.addr %s541, 8
      %s543 = scalar_lea.vmem %s0, %s542
      %p544 = scmp.lt.s32.totalorder %s28, 1
      %s545 = scalar_select %p544, %s28, 1
      %s546 = smul.addr %s545, 8
      %s547 = smul.addr %s546, 8
      %s548 = scalar_lea.vmem %s17, %s547
      %v549 = vld [vmem:[%s543] sm:$0xff]
      %v550 = vld [vmem:[%s543 + $0x8] sm:$0xff]
      %v551 = vld [vmem:[%s543 + $0x10] sm:$0xff]
      %v552 = vld [vmem:[%s543 + $0x18] sm:$0xff]
      %v553 = vld [vmem:[%s543 + $0x20] sm:$0xff]
      %v554 = vld [vmem:[%s543 + $0x28] sm:$0xff]
      %v555 = vld [vmem:[%s543 + $0x30] sm:$0xff]
      %v556 = vld [vmem:[%s543 + $0x38] sm:$0xff]
      %v557 = vld [vmem:[%s1] sm:$0x1]
      %v558 = vld [vmem:[%s2] sm:$0x1]
      %vm559 = vcmask 130048
      %v560 = vsel %vm559, %v549, 0.0
      %561 = vadd.xlane.f32.xlu0 %v560
      %v562 = vpop.xlane.xlu0 %561
      %v563 = vsel %vm559, %v550, 0.0
      %564 = vadd.xlane.f32.xlu0 %v563
      %v565 = vpop.xlane.xlu0 %564
      %v566 = vsel %vm559, %v551, 0.0
      %567 = vadd.xlane.f32.xlu0 %v566
      %v568 = vpop.xlane.xlu0 %567
      %v569 = vsel %vm559, %v552, 0.0
      %570 = vadd.xlane.f32.xlu0 %v569
      %v571 = vpop.xlane.xlu0 %570
      %v572 = vsel %vm559, %v553, 0.0
      %573 = vadd.xlane.f32.xlu0 %v572
      %v574 = vpop.xlane.xlu0 %573
      %v575 = vsel %vm559, %v554, 0.0
      %576 = vadd.xlane.f32.xlu0 %v575
      %v577 = vpop.xlane.xlu0 %576
      %v578 = vsel %vm559, %v555, 0.0
      %579 = vadd.xlane.f32.xlu0 %v578
      %v580 = vpop.xlane.xlu0 %579
      %v581 = vsel %vm559, %v556, 0.0
      %582 = vadd.xlane.f32.xlu0 %v581
      %v583 = vpop.xlane.xlu0 %582
      %v584 = vrcp.pop 16.0
      %v585 = vmul.f32 %v562, %v584
      %v586 = vmul.f32 %v565, %v584
      %v587 = vmul.f32 %v568, %v584
      %v588 = vmul.f32 %v571, %v584
      %v589 = vmul.f32 %v574, %v584
      %v590 = vmul.f32 %v577, %v584
      %v591 = vmul.f32 %v580, %v584
      %v592 = vmul.f32 %v583, %v584
      %v593 = vsub.f32 %v549, %v585
      %v594 = vsub.f32 %v550, %v586
      %v595 = vsub.f32 %v551, %v587
      %v596 = vsub.f32 %v552, %v588
      %v597 = vsub.f32 %v553, %v589
      %v598 = vsub.f32 %v554, %v590
      %v599 = vsub.f32 %v555, %v591
      %v600 = vsub.f32 %v556, %v592
      %v601 = vmul.f32 %v593, %v593
      %v602 = vmul.f32 %v594, %v594
      %v603 = vmul.f32 %v595, %v595
      %v604 = vmul.f32 %v596, %v596
      %v605 = vmul.f32 %v597, %v597
      %v606 = vmul.f32 %v598, %v598
      %v607 = vmul.f32 %v599, %v599
      %v608 = vmul.f32 %v600, %v600
      %v609 = vsel %vm559, %v601, 0.0
      %610 = vadd.xlane.f32.xlu0 %v609
      %v611 = vpop.xlane.xlu0 %610
      %v612 = vsel %vm559, %v602, 0.0
      %613 = vadd.xlane.f32.xlu0 %v612
      %v614 = vpop.xlane.xlu0 %613
      %v615 = vsel %vm559, %v603, 0.0
      %616 = vadd.xlane.f32.xlu0 %v615
      %v617 = vpop.xlane.xlu0 %616
      %v618 = vsel %vm559, %v604, 0.0
      %619 = vadd.xlane.f32.xlu0 %v618
      %v620 = vpop.xlane.xlu0 %619
      %v621 = vsel %vm559, %v605, 0.0
      %622 = vadd.xlane.f32.xlu0 %v621
      %v623 = vpop.xlane.xlu0 %622
      %v624 = vsel %vm559, %v606, 0.0
      %625 = vadd.xlane.f32.xlu0 %v624
      %v626 = vpop.xlane.xlu0 %625
      %v627 = vsel %vm559, %v607, 0.0
      %628 = vadd.xlane.f32.xlu0 %v627
      %v629 = vpop.xlane.xlu0 %628
      %v630 = vsel %vm559, %v608, 0.0
      %631 = vadd.xlane.f32.xlu0 %v630
      %v632 = vpop.xlane.xlu0 %631
      %v633 = vmul.f32 %v611, %v584
      %v634 = vmul.f32 %v614, %v584
      %v635 = vmul.f32 %v617, %v584
      %v636 = vmul.f32 %v620, %v584
      %v637 = vmul.f32 %v623, %v584
      %v638 = vmul.f32 %v626, %v584
      %v639 = vmul.f32 %v629, %v584
      %v640 = vmul.f32 %v632, %v584
      %v641 = vadd.f32 %v633, 1e-05
      %v642 = vadd.f32 %v634, 1e-05
      %v643 = vadd.f32 %v635, 1e-05
      %v644 = vadd.f32 %v636, 1e-05
      %v645 = vadd.f32 %v637, 1e-05
      %v646 = vadd.f32 %v638, 1e-05
      %v647 = vadd.f32 %v639, 1e-05
      %v648 = vadd.f32 %v640, 1e-05
      %v649 = vrsqrt.pop %v641
      %v650 = vrsqrt.pop %v642
      %v651 = vrsqrt.pop %v643
      %v652 = vrsqrt.pop %v644
      %v653 = vrsqrt.pop %v645
      %v654 = vrsqrt.pop %v646
      %v655 = vrsqrt.pop %v647
      %v656 = vrsqrt.pop %v648
      %v657 = vmul.f32 %v593, %v649
      %v658 = vmul.f32 %v594, %v650
      %v659 = vmul.f32 %v595, %v651
      %v660 = vmul.f32 %v596, %v652
      %v661 = vmul.f32 %v597, %v653
      %v662 = vmul.f32 %v598, %v654
      %v663 = vmul.f32 %v599, %v655
      %v664 = vmul.f32 %v600, %v656
      %v666 = vlaneseq
      %v667 = vshrl.u32 %v666, 7
      %v668 = vsub.s32 0, %v667
      %v669 = vrot.slane %v557, %v668
      %v671 = vmul.f32 %v657, %v669
      %v672 = vmul.f32 %v658, %v669
      %v673 = vmul.f32 %v659, %v669
      %v674 = vmul.f32 %v660, %v669
      %v675 = vmul.f32 %v661, %v669
      %v676 = vmul.f32 %v662, %v669
      %v677 = vmul.f32 %v663, %v669
      %v678 = vmul.f32 %v664, %v669
      %v680 = vlaneseq
      %v681 = vshrl.u32 %v680, 7
      %v682 = vsub.s32 0, %v681
      %v683 = vrot.slane %v558, %v682
      %v685 = vadd.f32 %v671, %v683
      %v686 = vadd.f32 %v672, %v683
      %v687 = vadd.f32 %v673, %v683
      %v688 = vadd.f32 %v674, %v683
      %v689 = vadd.f32 %v675, %v683
      %v690 = vadd.f32 %v676, %v683
      %v691 = vadd.f32 %v677, %v683
      %v692 = vadd.f32 %v678, %v683
      %v693 = vld [vmem:[%s7] sm:$0x1]
      %v695 = vlaneseq
      %v696 = vshrl.u32 %v695, 7
      %v697 = vsub.s32 0, %v696
      %v698 = vrot.slane %v693, %v697
      %v700 = vadd.f32 %v549, %v698
      %v701 = vadd.f32 %v550, %v698
      %v702 = vadd.f32 %v551, %v698
      %v703 = vadd.f32 %v552, %v698
      %v704 = vadd.f32 %v553, %v698
      %v705 = vadd.f32 %v554, %v698
      %v706 = vadd.f32 %v555, %v698
      %v707 = vadd.f32 %v556, %v698
      %v708 = vld [vmem:[%s3] sm:$0xff]
      %v709 = vld [vmem:[%s3 + $0x8] sm:$0xff]
      %v711 = vsel %vm559, %v685, 0
      %v714 = vsel %vm559, %v686, 0
      %v717 = vsel %vm559, %v687, 0
      %v720 = vsel %vm559, %v688, 0
      %v723 = vsel %vm559, %v689, 0
      %v726 = vsel %vm559, %v690, 0
      %v729 = vsel %vm559, %v691, 0
      %v732 = vsel %vm559, %v692, 0
      %734 = vmatprep.subr.mxu0 0.0
      %735 = vmatpush1.msra.mxu0 %v708
      %736 = vmatprep.subr.mxu0 0.0
      %737 = vmatpush1.msra.mxu0 %v709
      %738 = vmatprep.subr.mxu0 0.0
      %739 = vmatpush1.msra.mxu0 0.0
      %740 = vmatprep.subr.mxu0 0.0
      %741 = vmatpush1.msra.mxu0 0.0
      %742 = vmatprep.subr.mxu0 0.0
      %743 = vmatpush1.msra.mxu0 0.0
      %744 = vmatprep.subr.mxu0 0.0
      %745 = vmatpush1.msra.mxu0 0.0
      %746 = vmatprep.subr.mxu0 0.0
      %747 = vmatpush1.msra.mxu0 0.0
      %748 = vmatprep.subr.mxu0 0.0
      %749 = vmatpush1.msra.mxu0 0.0
      %750 = vmatprep.subr.mxu0 0.0
      %751 = vmatpush1.msra.mxu0 0.0
      %752 = vmatprep.subr.mxu0 0.0
      %753 = vmatpush1.msra.mxu0 0.0
      %754 = vmatprep.subr.mxu0 0.0
      %755 = vmatpush1.msra.mxu0 0.0
      %756 = vmatprep.subr.mxu0 0.0
      %757 = vmatpush1.msra.mxu0 0.0
      %758 = vmatprep.subr.mxu0 0.0
      %759 = vmatpush1.msra.mxu0 0.0
      %760 = vmatprep.subr.mxu0 0.0
      %761 = vmatpush1.msra.mxu0 0.0
      %762 = vmatprep.subr.mxu0 0.0
      %763 = vmatpush1.msra.mxu0 0.0
      %764 = vmatprep.subr.mxu0 0.0
      %765 = vmatpush1.msra.mxu0 0.0
      %766 = vmatprep.subr.mxu0 0.0
      %767 = vmatpush1.msra.mxu0 0.0
      %768 = vmatprep.subr.mxu0 0.0
      %769 = vmatpush1.msra.mxu0 0.0
      %770 = vmatprep.subr.mxu0 0.0
      %771 = vmatpush1.msra.mxu0 0.0
      %772 = vmatprep.subr.mxu0 0.0
      %773 = vmatpush1.msra.mxu0 0.0
      %774 = vmatprep.subr.mxu0 0.0
      %775 = vmatpush1.msra.mxu0 0.0
      %776 = vmatprep.subr.mxu0 0.0
      %777 = vmatpush1.msra.mxu0 0.0
      %778 = vmatprep.subr.mxu0 0.0
      %779 = vmatpush1.msra.mxu0 0.0
      %780 = vmatprep.subr.mxu0 0.0
      %781 = vmatpush1.msra.mxu0 0.0
      %782 = vmatprep.subr.mxu0 0.0
      %783 = vmatpush1.msra.mxu0 0.0
      %784 = vmatprep.subr.mxu0 0.0
      %785 = vmatpush1.msra.mxu0 0.0
      %786 = vmatprep.subr.mxu0 0.0
      %787 = vmatpush1.msra.mxu0 0.0
      %788 = vmatprep.subr.mxu0 0.0
      %789 = vmatpush1.msra.mxu0 0.0
      %790 = vmatprep.subr.mxu0 0.0
      %791 = vmatpush1.msra.mxu0 0.0
      %792 = vmatprep.subr.mxu0 0.0
      %793 = vmatpush1.msra.mxu0 0.0
      %794 = vmatprep.subr.mxu0 0.0
      %795 = vmatpush1.msra.mxu0 0.0
      %796 = vmatprep.subr.mxu0 0.0
      %797 = vmatpush1.msra.mxu0 0.0
      %798 = vmatprep.mubr.f32.mxu0 0.0
      %799 = vmatmul.mubr.f32.gmra.mrb[0].mxu0 %v711
      %v800 = vpop.f32.mrb[0].mxu0
      %v801 = vadd.f32 0.0, %v800
      %v802 = vpop.f32.mrb[0].mxu0
      %803 = vmatprep.mubr.f32.mxu0 0.0
      %804 = vmatmul.mubr.f32.gmra.mrb[0].mxu0 %v714
      %v805 = vpop.f32.mrb[0].mxu0
      %v806 = vadd.f32 0.0, %v805
      %v807 = vpop.f32.mrb[0].mxu0
      %808 = vmatprep.mubr.f32.mxu0 0.0
      %809 = vmatmul.mubr.f32.gmra.mrb[0].mxu0 %v717
      %v810 = vpop.f32.mrb[0].mxu0
      %v811 = vadd.f32 0.0, %v810
      %v812 = vpop.f32.mrb[0].mxu0
      %813 = vmatprep.mubr.f32.mxu0 0.0
      %814 = vmatmul.mubr.f32.gmra.mrb[0].mxu0 %v720
      %v815 = vpop.f32.mrb[0].mxu0
      %v816 = vadd.f32 0.0, %v815
      %v817 = vpop.f32.mrb[0].mxu0
      %818 = vmatprep.mubr.f32.mxu0 0.0
      %819 = vmatmul.mubr.f32.gmra.mrb[0].mxu0 %v723
      %v820 = vpop.f32.mrb[0].mxu0
      %v821 = vadd.f32 0.0, %v820
      %v822 = vpop.f32.mrb[0].mxu0
      %823 = vmatprep.mubr.f32.mxu0 0.0
      %824 = vmatmul.mubr.f32.gmra.mrb[0].mxu0 %v726
      %v825 = vpop.f32.mrb[0].mxu0
      %v826 = vadd.f32 0.0, %v825
      %v827 = vpop.f32.mrb[0].mxu0
      %828 = vmatprep.mubr.f32.mxu0 0.0
      %829 = vmatmul.mubr.f32.gmra.mrb[0].mxu0 %v729
      %v830 = vpop.f32.mrb[0].mxu0
      %v831 = vadd.f32 0.0, %v830
      %v832 = vpop.f32.mrb[0].mxu0
      %833 = vmatprep.mubr.f32.mxu0 0.0
      %834 = vmatmul.mubr.f32.gmra.mrb[0].mxu0 %v732
      %v835 = vpop.f32.mrb[0].mxu0
      %v836 = vadd.f32 0.0, %v835
      %v837 = vpop.f32.mrb[0].mxu0
      %838 = vdwg.mxu0
      %v839 = vld [vmem:[%s4] sm:$0xff]
      %v840 = vld [vmem:[%s4 + $0x8] sm:$0xff]
      %841 = vmatprep.subr.mxu0 0.0
      %842 = vmatpush1.msra.mxu0 %v839
      %843 = vmatprep.subr.mxu0 0.0
      %844 = vmatpush1.msra.mxu0 %v840
      %845 = vmatprep.subr.mxu0 0.0
      %846 = vmatpush1.msra.mxu0 0.0
      %847 = vmatprep.subr.mxu0 0.0
      %848 = vmatpush1.msra.mxu0 0.0
      %849 = vmatprep.subr.mxu0 0.0
      %850 = vmatpush1.msra.mxu0 0.0
      %851 = vmatprep.subr.mxu0 0.0
      %852 = vmatpush1.msra.mxu0 0.0
      %853 = vmatprep.subr.mxu0 0.0
      %854 = vmatpush1.msra.mxu0 0.0
      %855 = vmatprep.subr.mxu0 0.0
      %856 = vmatpush1.msra.mxu0 0.0
      %857 = vmatprep.subr.mxu0 0.0
      %858 = vmatpush1.msra.mxu0 0.0
      %859 = vmatprep.subr.mxu0 0.0
      %860 = vmatpush1.msra.mxu0 0.0
      %861 = vmatprep.subr.mxu0 0.0
      %862 = vmatpush1.msra.mxu0 0.0
      %863 = vmatprep.subr.mxu0 0.0
      %864 = vmatpush1.msra.mxu0 0.0
      %865 = vmatprep.subr.mxu0 0.0
      %866 = vmatpush1.msra.mxu0 0.0
      %867 = vmatprep.subr.mxu0 0.0
      %868 = vmatpush1.msra.mxu0 0.0
      %869 = vmatprep.subr.mxu0 0.0
      %870 = vmatpush1.msra.mxu0 0.0
      %871 = vmatprep.subr.mxu0 0.0
      %872 = vmatpush1.msra.mxu0 0.0
      %873 = vmatprep.subr.mxu0 0.0
      %874 = vmatpush1.msra.mxu0 0.0
      %875 = vmatprep.subr.mxu0 0.0
      %876 = vmatpush1.msra.mxu0 0.0
      %877 = vmatprep.subr.mxu0 0.0
      %878 = vmatpush1.msra.mxu0 0.0
      %879 = vmatprep.subr.mxu0 0.0
      %880 = vmatpush1.msra.mxu0 0.0
      %881 = vmatprep.subr.mxu0 0.0
      %882 = vmatpush1.msra.mxu0 0.0
      %883 = vmatprep.subr.mxu0 0.0
      %884 = vmatpush1.msra.mxu0 0.0
      %885 = vmatprep.subr.mxu0 0.0
      %886 = vmatpush1.msra.mxu0 0.0
      %887 = vmatprep.subr.mxu0 0.0
      %888 = vmatpush1.msra.mxu0 0.0
      %889 = vmatprep.subr.mxu0 0.0
      %890 = vmatpush1.msra.mxu0 0.0
      %891 = vmatprep.subr.mxu0 0.0
      %892 = vmatpush1.msra.mxu0 0.0
      %893 = vmatprep.subr.mxu0 0.0
      %894 = vmatpush1.msra.mxu0 0.0
      %895 = vmatprep.subr.mxu0 0.0
      %896 = vmatpush1.msra.mxu0 0.0
      %897 = vmatprep.subr.mxu0 0.0
      %898 = vmatpush1.msra.mxu0 0.0
      %899 = vmatprep.subr.mxu0 0.0
      %900 = vmatpush1.msra.mxu0 0.0
      %901 = vmatprep.subr.mxu0 0.0
      %902 = vmatpush1.msra.mxu0 0.0
      %903 = vmatprep.subr.mxu0 0.0
      %904 = vmatpush1.msra.mxu0 0.0
      %905 = vmatprep.mubr.f32.mxu0 0.0
      %906 = vmatmul.mubr.f32.gmra.mrb[0].mxu0 %v711
      %v907 = vpop.f32.mrb[0].mxu0
      %v908 = vadd.f32 0.0, %v907
      %v909 = vpop.f32.mrb[0].mxu0
      %910 = vmatprep.mubr.f32.mxu0 0.0
      %911 = vmatmul.mubr.f32.gmra.mrb[0].mxu0 %v714
      %v912 = vpop.f32.mrb[0].mxu0
      %v913 = vadd.f32 0.0, %v912
      %v914 = vpop.f32.mrb[0].mxu0
      %915 = vmatprep.mubr.f32.mxu0 0.0
      %916 = vmatmul.mubr.f32.gmra.mrb[0].mxu0 %v717
      %v917 = vpop.f32.mrb[0].mxu0
      %v918 = vadd.f32 0.0, %v917
      %v919 = vpop.f32.mrb[0].mxu0
      %920 = vmatprep.mubr.f32.mxu0 0.0
      %921 = vmatmul.mubr.f32.gmra.mrb[0].mxu0 %v720
      %v922 = vpop.f32.mrb[0].mxu0
      %v923 = vadd.f32 0.0, %v922
      %v924 = vpop.f32.mrb[0].mxu0
      %925 = vmatprep.mubr.f32.mxu0 0.0
      %926 = vmatmul.mubr.f32.gmra.mrb[0].mxu0 %v723
      %v927 = vpop.f32.mrb[0].mxu0
      %v928 = vadd.f32 0.0, %v927
      %v929 = vpop.f32.mrb[0].mxu0
      %930 = vmatprep.mubr.f32.mxu0 0.0
      %931 = vmatmul.mubr.f32.gmra.mrb[0].mxu0 %v726
      %v932 = vpop.f32.mrb[0].mxu0
      %v933 = vadd.f32 0.0, %v932
      %v934 = vpop.f32.mrb[0].mxu0
      %935 = vmatprep.mubr.f32.mxu0 0.0
      %936 = vmatmul.mubr.f32.gmra.mrb[0].mxu0 %v729
      %v937 = vpop.f32.mrb[0].mxu0
      %v938 = vadd.f32 0.0, %v937
      %v939 = vpop.f32.mrb[0].mxu0
      %940 = vmatprep.mubr.f32.mxu0 0.0
      %941 = vmatmul.mubr.f32.gmra.mrb[0].mxu0 %v732
      %v942 = vpop.f32.mrb[0].mxu0
      %v943 = vadd.f32 0.0, %v942
      %v944 = vpop.f32.mrb[0].mxu0
      %945 = vdwg.mxu0
      %v946 = vld [vmem:[%s5] sm:$0xff]
      %v947 = vld [vmem:[%s5 + $0x8] sm:$0xff]
      %948 = vmatprep.subr.mxu0 0.0
      %949 = vmatpush1.msra.mxu0 %v946
      %950 = vmatprep.subr.mxu0 0.0
      %951 = vmatpush1.msra.mxu0 %v947
      %952 = vmatprep.subr.mxu0 0.0
      %953 = vmatpush1.msra.mxu0 0.0
      %954 = vmatprep.subr.mxu0 0.0
      %955 = vmatpush1.msra.mxu0 0.0
      %956 = vmatprep.subr.mxu0 0.0
      %957 = vmatpush1.msra.mxu0 0.0
      %958 = vmatprep.subr.mxu0 0.0
      %959 = vmatpush1.msra.mxu0 0.0
      %960 = vmatprep.subr.mxu0 0.0
      %961 = vmatpush1.msra.mxu0 0.0
      %962 = vmatprep.subr.mxu0 0.0
      %963 = vmatpush1.msra.mxu0 0.0
      %964 = vmatprep.subr.mxu0 0.0
      %965 = vmatpush1.msra.mxu0 0.0
      %966 = vmatprep.subr.mxu0 0.0
      %967 = vmatpush1.msra.mxu0 0.0
      %968 = vmatprep.subr.mxu0 0.0
      %969 = vmatpush1.msra.mxu0 0.0
      %970 = vmatprep.subr.mxu0 0.0
      %971 = vmatpush1.msra.mxu0 0.0
      %972 = vmatprep.subr.mxu0 0.0
      %973 = vmatpush1.msra.mxu0 0.0
      %974 = vmatprep.subr.mxu0 0.0
      %975 = vmatpush1.msra.mxu0 0.0
      %976 = vmatprep.subr.mxu0 0.0
      %977 = vmatpush1.msra.mxu0 0.0
      %978 = vmatprep.subr.mxu0 0.0
      %979 = vmatpush1.msra.mxu0 0.0
      %980 = vmatprep.subr.mxu0 0.0
      %981 = vmatpush1.msra.mxu0 0.0
      %982 = vmatprep.subr.mxu0 0.0
      %983 = vmatpush1.msra.mxu0 0.0
      %984 = vmatprep.subr.mxu0 0.0
      %985 = vmatpush1.msra.mxu0 0.0
      %986 = vmatprep.subr.mxu0 0.0
      %987 = vmatpush1.msra.mxu0 0.0
      %988 = vmatprep.subr.mxu0 0.0
      %989 = vmatpush1.msra.mxu0 0.0
      %990 = vmatprep.subr.mxu0 0.0
      %991 = vmatpush1.msra.mxu0 0.0
      %992 = vmatprep.subr.mxu0 0.0
      %993 = vmatpush1.msra.mxu0 0.0
      %994 = vmatprep.subr.mxu0 0.0
      %995 = vmatpush1.msra.mxu0 0.0
      %996 = vmatprep.subr.mxu0 0.0
      %997 = vmatpush1.msra.mxu0 0.0
      %998 = vmatprep.subr.mxu0 0.0
      %999 = vmatpush1.msra.mxu0 0.0
      %1000 = vmatprep.subr.mxu0 0.0
      %1001 = vmatpush1.msra.mxu0 0.0
      %1002 = vmatprep.subr.mxu0 0.0
      %1003 = vmatpush1.msra.mxu0 0.0
      %1004 = vmatprep.subr.mxu0 0.0
      %1005 = vmatpush1.msra.mxu0 0.0
      %1006 = vmatprep.subr.mxu0 0.0
      %1007 = vmatpush1.msra.mxu0 0.0
      %1008 = vmatprep.subr.mxu0 0.0
      %1009 = vmatpush1.msra.mxu0 0.0
      %1010 = vmatprep.subr.mxu0 0.0
      %1011 = vmatpush1.msra.mxu0 0.0
      %1012 = vmatprep.mubr.f32.mxu0 0.0
      %1013 = vmatmul.mubr.f32.gmra.mrb[0].mxu0 %v711
      %v1014 = vpop.f32.mrb[0].mxu0
      %v1015 = vadd.f32 0.0, %v1014
      %v1016 = vpop.f32.mrb[0].mxu0
      %1017 = vmatprep.mubr.f32.mxu0 0.0
      %1018 = vmatmul.mubr.f32.gmra.mrb[0].mxu0 %v714
      %v1019 = vpop.f32.mrb[0].mxu0
      %v1020 = vadd.f32 0.0, %v1019
      %v1021 = vpop.f32.mrb[0].mxu0
      %1022 = vmatprep.mubr.f32.mxu0 0.0
      %1023 = vmatmul.mubr.f32.gmra.mrb[0].mxu0 %v717
      %v1024 = vpop.f32.mrb[0].mxu0
      %v1025 = vadd.f32 0.0, %v1024
      %v1026 = vpop.f32.mrb[0].mxu0
      %1027 = vmatprep.mubr.f32.mxu0 0.0
      %1028 = vmatmul.mubr.f32.gmra.mrb[0].mxu0 %v720
      %v1029 = vpop.f32.mrb[0].mxu0
      %v1030 = vadd.f32 0.0, %v1029
      %v1031 = vpop.f32.mrb[0].mxu0
      %1032 = vmatprep.mubr.f32.mxu0 0.0
      %1033 = vmatmul.mubr.f32.gmra.mrb[0].mxu0 %v723
      %v1034 = vpop.f32.mrb[0].mxu0
      %v1035 = vadd.f32 0.0, %v1034
      %v1036 = vpop.f32.mrb[0].mxu0
      %1037 = vmatprep.mubr.f32.mxu0 0.0
      %1038 = vmatmul.mubr.f32.gmra.mrb[0].mxu0 %v726
      %v1039 = vpop.f32.mrb[0].mxu0
      %v1040 = vadd.f32 0.0, %v1039
      %v1041 = vpop.f32.mrb[0].mxu0
      %1042 = vmatprep.mubr.f32.mxu0 0.0
      %1043 = vmatmul.mubr.f32.gmra.mrb[0].mxu0 %v729
      %v1044 = vpop.f32.mrb[0].mxu0
      %v1045 = vadd.f32 0.0, %v1044
      %v1046 = vpop.f32.mrb[0].mxu0
      %1047 = vmatprep.mubr.f32.mxu0 0.0
      %1048 = vmatmul.mubr.f32.gmra.mrb[0].mxu0 %v732
      %v1049 = vpop.f32.mrb[0].mxu0
      %v1050 = vadd.f32 0.0, %v1049
      %v1051 = vpop.f32.mrb[0].mxu0
      %1052 = vdwg.mxu0
      %vm1053 = vcmask 64512
      %v1055 = vsel %vm1053, %v801, 0
      %v1058 = vsel %vm1053, %v806, 0
      %v1061 = vsel %vm1053, %v908, 0
      %v1064 = vsel %vm1053, %v913, 0
      %1066 = vmatprep.subr.mxu0 0.0
      %1067 = vmatpush1.xpose.msra.mxu0 %v1061
      %1068 = vmatprep.subr.mxu0 0.0
      %1069 = vmatpush1.xpose.msra.mxu0 %v1064
      %1070 = vmatprep.subr.mxu0 0.0
      %1071 = vmatpush1.xpose.msra.mxu0 0.0
      %1072 = vmatprep.subr.mxu0 0.0
      %1073 = vmatpush1.xpose.msra.mxu0 0.0
      %1074 = vmatprep.subr.mxu0 0.0
      %1075 = vmatpush1.xpose.msra.mxu0 0.0
      %1076 = vmatprep.subr.mxu0 0.0
      %1077 = vmatpush1.xpose.msra.mxu0 0.0
      %1078 = vmatprep.subr.mxu0 0.0
      %1079 = vmatpush1.xpose.msra.mxu0 0.0
      %1080 = vmatprep.subr.mxu0 0.0
      %1081 = vmatpush1.xpose.msra.mxu0 0.0
      %1082 = vmatprep.subr.mxu0 0.0
      %1083 = vmatpush1.xpose.msra.mxu0 0.0
      %1084 = vmatprep.subr.mxu0 0.0
      %1085 = vmatpush1.xpose.msra.mxu0 0.0
      %1086 = vmatprep.subr.mxu0 0.0
      %1087 = vmatpush1.xpose.msra.mxu0 0.0
      %1088 = vmatprep.subr.mxu0 0.0
      %1089 = vmatpush1.xpose.msra.mxu0 0.0
      %1090 = vmatprep.subr.mxu0 0.0
      %1091 = vmatpush1.xpose.msra.mxu0 0.0
      %1092 = vmatprep.subr.mxu0 0.0
      %1093 = vmatpush1.xpose.msra.mxu0 0.0
      %1094 = vmatprep.subr.mxu0 0.0
      %1095 = vmatpush1.xpose.msra.mxu0 0.0
      %1096 = vmatprep.subr.mxu0 0.0
      %1097 = vmatpush1.xpose.msra.mxu0 0.0
      %1098 = vmatprep.subr.mxu0 0.0
      %1099 = vmatpush1.xpose.msra.mxu0 0.0
      %1100 = vmatprep.subr.mxu0 0.0
      %1101 = vmatpush1.xpose.msra.mxu0 0.0
      %1102 = vmatprep.subr.mxu0 0.0
      %1103 = vmatpush1.xpose.msra.mxu0 0.0
      %1104 = vmatprep.subr.mxu0 0.0
      %1105 = vmatpush1.xpose.msra.mxu0 0.0
      %1106 = vmatprep.subr.mxu0 0.0
      %1107 = vmatpush1.xpose.msra.mxu0 0.0
      %1108 = vmatprep.subr.mxu0 0.0
      %1109 = vmatpush1.xpose.msra.mxu0 0.0
      %1110 = vmatprep.subr.mxu0 0.0
      %1111 = vmatpush1.xpose.msra.mxu0 0.0
      %1112 = vmatprep.subr.mxu0 0.0
      %1113 = vmatpush1.xpose.msra.mxu0 0.0
      %1114 = vmatprep.subr.mxu0 0.0
      %1115 = vmatpush1.xpose.msra.mxu0 0.0
      %1116 = vmatprep.subr.mxu0 0.0
      %1117 = vmatpush1.xpose.msra.mxu0 0.0
      %1118 = vmatprep.subr.mxu0 0.0
      %1119 = vmatpush1.xpose.msra.mxu0 0.0
      %1120 = vmatprep.subr.mxu0 0.0
      %1121 = vmatpush1.xpose.msra.mxu0 0.0
      %1122 = vmatprep.subr.mxu0 0.0
      %1123 = vmatpush1.xpose.msra.mxu0 0.0
      %1124 = vmatprep.subr.mxu0 0.0
      %1125 = vmatpush1.xpose.msra.mxu0 0.0
      %1126 = vmatprep.subr.mxu0 0.0
      %1127 = vmatpush1.xpose.msra.mxu0 0.0
      %1128 = vmatprep.subr.mxu0 0.0
      %1129 = vmatpush1.xpose.msra.mxu0 0.0
      %1130 = vmatprep.mubr.f32.mxu0 0.0
      %1131 = vmatmul.mubr.f32.gmra.mrb[0].mxu0 %v1055
      %v1132 = vpop.f32.mrb[0].mxu0
      %v1133 = vadd.f32 0.0, %v1132
      %v1134 = vpop.f32.mrb[0].mxu0
      %1135 = vmatprep.mubr.f32.mxu0 0.0
      %1136 = vmatmul.mubr.f32.gmra.mrb[0].mxu0 %v1058
      %v1137 = vpop.f32.mrb[0].mxu0
      %v1138 = vadd.f32 0.0, %v1137
      %v1139 = vpop.f32.mrb[0].mxu0
      %1140 = vdwg.mxu0
      %v1142 = vsel %vm1053, %v811, 0
      %v1145 = vsel %vm1053, %v816, 0
      %v1148 = vsel %vm1053, %v918, 0
      %v1151 = vsel %vm1053, %v923, 0
      %1153 = vmatprep.subr.mxu0 0.0
      %1154 = vmatpush1.xpose.msra.mxu0 %v1148
      %1155 = vmatprep.subr.mxu0 0.0
      %1156 = vmatpush1.xpose.msra.mxu0 %v1151
      %1157 = vmatprep.subr.mxu0 0.0
      %1158 = vmatpush1.xpose.msra.mxu0 0.0
      %1159 = vmatprep.subr.mxu0 0.0
      %1160 = vmatpush1.xpose.msra.mxu0 0.0
      %1161 = vmatprep.subr.mxu0 0.0
      %1162 = vmatpush1.xpose.msra.mxu0 0.0
      %1163 = vmatprep.subr.mxu0 0.0
      %1164 = vmatpush1.xpose.msra.mxu0 0.0
      %1165 = vmatprep.subr.mxu0 0.0
      %1166 = vmatpush1.xpose.msra.mxu0 0.0
      %1167 = vmatprep.subr.mxu0 0.0
      %1168 = vmatpush1.xpose.msra.mxu0 0.0
      %1169 = vmatprep.subr.mxu0 0.0
      %1170 = vmatpush1.xpose.msra.mxu0 0.0
      %1171 = vmatprep.subr.mxu0 0.0
      %1172 = vmatpush1.xpose.msra.mxu0 0.0
      %1173 = vmatprep.subr.mxu0 0.0
      %1174 = vmatpush1.xpose.msra.mxu0 0.0
      %1175 = vmatprep.subr.mxu0 0.0
      %1176 = vmatpush1.xpose.msra.mxu0 0.0
      %1177 = vmatprep.subr.mxu0 0.0
      %1178 = vmatpush1.xpose.msra.mxu0 0.0
      %1179 = vmatprep.subr.mxu0 0.0
      %1180 = vmatpush1.xpose.msra.mxu0 0.0
      %1181 = vmatprep.subr.mxu0 0.0
      %1182 = vmatpush1.xpose.msra.mxu0 0.0
      %1183 = vmatprep.subr.mxu0 0.0
      %1184 = vmatpush1.xpose.msra.mxu0 0.0
      %1185 = vmatprep.subr.mxu0 0.0
      %1186 = vmatpush1.xpose.msra.mxu0 0.0
      %1187 = vmatprep.subr.mxu0 0.0
      %1188 = vmatpush1.xpose.msra.mxu0 0.0
      %1189 = vmatprep.subr.mxu0 0.0
      %1190 = vmatpush1.xpose.msra.mxu0 0.0
      %1191 = vmatprep.subr.mxu0 0.0
      %1192 = vmatpush1.xpose.msra.mxu0 0.0
      %1193 = vmatprep.subr.mxu0 0.0
      %1194 = vmatpush1.xpose.msra.mxu0 0.0
      %1195 = vmatprep.subr.mxu0 0.0
      %1196 = vmatpush1.xpose.msra.mxu0 0.0
      %1197 = vmatprep.subr.mxu0 0.0
      %1198 = vmatpush1.xpose.msra.mxu0 0.0
      %1199 = vmatprep.subr.mxu0 0.0
      %1200 = vmatpush1.xpose.msra.mxu0 0.0
      %1201 = vmatprep.subr.mxu0 0.0
      %1202 = vmatpush1.xpose.msra.mxu0 0.0
      %1203 = vmatprep.subr.mxu0 0.0
      %1204 = vmatpush1.xpose.msra.mxu0 0.0
      %1205 = vmatprep.subr.mxu0 0.0
      %1206 = vmatpush1.xpose.msra.mxu0 0.0
      %1207 = vmatprep.subr.mxu0 0.0
      %1208 = vmatpush1.xpose.msra.mxu0 0.0
      %1209 = vmatprep.subr.mxu0 0.0
      %1210 = vmatpush1.xpose.msra.mxu0 0.0
      %1211 = vmatprep.subr.mxu0 0.0
      %1212 = vmatpush1.xpose.msra.mxu0 0.0
      %1213 = vmatprep.subr.mxu0 0.0
      %1214 = vmatpush1.xpose.msra.mxu0 0.0
      %1215 = vmatprep.subr.mxu0 0.0
      %1216 = vmatpush1.xpose.msra.mxu0 0.0
      %1217 = vmatprep.mubr.f32.mxu0 0.0
      %1218 = vmatmul.mubr.f32.gmra.mrb[0].mxu0 %v1142
      %v1219 = vpop.f32.mrb[0].mxu0
      %v1220 = vadd.f32 0.0, %v1219
      %v1221 = vpop.f32.mrb[0].mxu0
      %1222 = vmatprep.mubr.f32.mxu0 0.0
      %1223 = vmatmul.mubr.f32.gmra.mrb[0].mxu0 %v1145
      %v1224 = vpop.f32.mrb[0].mxu0
      %v1225 = vadd.f32 0.0, %v1224
      %v1226 = vpop.f32.mrb[0].mxu0
      %1227 = vdwg.mxu0
      %v1229 = vsel %vm1053, %v821, 0
      %v1232 = vsel %vm1053, %v826, 0
      %v1235 = vsel %vm1053, %v928, 0
      %v1238 = vsel %vm1053, %v933, 0
      %1240 = vmatprep.subr.mxu0 0.0
      %1241 = vmatpush1.xpose.msra.mxu0 %v1235
      %1242 = vmatprep.subr.mxu0 0.0
      %1243 = vmatpush1.xpose.msra.mxu0 %v1238
      %1244 = vmatprep.subr.mxu0 0.0
      %1245 = vmatpush1.xpose.msra.mxu0 0.0
      %1246 = vmatprep.subr.mxu0 0.0
      %1247 = vmatpush1.xpose.msra.mxu0 0.0
      %1248 = vmatprep.subr.mxu0 0.0
      %1249 = vmatpush1.xpose.msra.mxu0 0.0
      %1250 = vmatprep.subr.mxu0 0.0
      %1251 = vmatpush1.xpose.msra.mxu0 0.0
      %1252 = vmatprep.subr.mxu0 0.0
      %1253 = vmatpush1.xpose.msra.mxu0 0.0
      %1254 = vmatprep.subr.mxu0 0.0
      %1255 = vmatpush1.xpose.msra.mxu0 0.0
      %1256 = vmatprep.subr.mxu0 0.0
      %1257 = vmatpush1.xpose.msra.mxu0 0.0
      %1258 = vmatprep.subr.mxu0 0.0
      %1259 = vmatpush1.xpose.msra.mxu0 0.0
      %1260 = vmatprep.subr.mxu0 0.0
      %1261 = vmatpush1.xpose.msra.mxu0 0.0
      %1262 = vmatprep.subr.mxu0 0.0
      %1263 = vmatpush1.xpose.msra.mxu0 0.0
      %1264 = vmatprep.subr.mxu0 0.0
      %1265 = vmatpush1.xpose.msra.mxu0 0.0
      %1266 = vmatprep.subr.mxu0 0.0
      %1267 = vmatpush1.xpose.msra.mxu0 0.0
      %1268 = vmatprep.subr.mxu0 0.0
      %1269 = vmatpush1.xpose.msra.mxu0 0.0
      %1270 = vmatprep.subr.mxu0 0.0
      %1271 = vmatpush1.xpose.msra.mxu0 0.0
      %1272 = vmatprep.subr.mxu0 0.0
      %1273 = vmatpush1.xpose.msra.mxu0 0.0
      %1274 = vmatprep.subr.mxu0 0.0
      %1275 = vmatpush1.xpose.msra.mxu0 0.0
      %1276 = vmatprep.subr.mxu0 0.0
      %1277 = vmatpush1.xpose.msra.mxu0 0.0
      %1278 = vmatprep.subr.mxu0 0.0
      %1279 = vmatpush1.xpose.msra.mxu0 0.0
      %1280 = vmatprep.subr.mxu0 0.0
      %1281 = vmatpush1.xpose.msra.mxu0 0.0
      %1282 = vmatprep.subr.mxu0 0.0
      %1283 = vmatpush1.xpose.msra.mxu0 0.0
      %1284 = vmatprep.subr.mxu0 0.0
      %1285 = vmatpush1.xpose.msra.mxu0 0.0
      %1286 = vmatprep.subr.mxu0 0.0
      %1287 = vmatpush1.xpose.msra.mxu0 0.0
      %1288 = vmatprep.subr.mxu0 0.0
      %1289 = vmatpush1.xpose.msra.mxu0 0.0
      %1290 = vmatprep.subr.mxu0 0.0
      %1291 = vmatpush1.xpose.msra.mxu0 0.0
      %1292 = vmatprep.subr.mxu0 0.0
      %1293 = vmatpush1.xpose.msra.mxu0 0.0
      %1294 = vmatprep.subr.mxu0 0.0
      %1295 = vmatpush1.xpose.msra.mxu0 0.0
      %1296 = vmatprep.subr.mxu0 0.0
      %1297 = vmatpush1.xpose.msra.mxu0 0.0
      %1298 = vmatprep.subr.mxu0 0.0
      %1299 = vmatpush1.xpose.msra.mxu0 0.0
      %1300 = vmatprep.subr.mxu0 0.0
      %1301 = vmatpush1.xpose.msra.mxu0 0.0
      %1302 = vmatprep.subr.mxu0 0.0
      %1303 = vmatpush1.xpose.msra.mxu0 0.0
      %1304 = vmatprep.mubr.f32.mxu0 0.0
      %1305 = vmatmul.mubr.f32.gmra.mrb[0].mxu0 %v1229
      %v1306 = vpop.f32.mrb[0].mxu0
      %v1307 = vadd.f32 0.0, %v1306
      %v1308 = vpop.f32.mrb[0].mxu0
      %1309 = vmatprep.mubr.f32.mxu0 0.0
      %1310 = vmatmul.mubr.f32.gmra.mrb[0].mxu0 %v1232
      %v1311 = vpop.f32.mrb[0].mxu0
      %v1312 = vadd.f32 0.0, %v1311
      %v1313 = vpop.f32.mrb[0].mxu0
      %1314 = vdwg.mxu0
      %v1316 = vsel %vm1053, %v831, 0
      %v1319 = vsel %vm1053, %v836, 0
      %v1322 = vsel %vm1053, %v938, 0
      %v1325 = vsel %vm1053, %v943, 0
      %1327 = vmatprep.subr.mxu0 0.0
      %1328 = vmatpush1.xpose.msra.mxu0 %v1322
      %1329 = vmatprep.subr.mxu0 0.0
      %1330 = vmatpush1.xpose.msra.mxu0 %v1325
      %1331 = vmatprep.subr.mxu0 0.0
      %1332 = vmatpush1.xpose.msra.mxu0 0.0
      %1333 = vmatprep.subr.mxu0 0.0
      %1334 = vmatpush1.xpose.msra.mxu0 0.0
      %1335 = vmatprep.subr.mxu0 0.0
      %1336 = vmatpush1.xpose.msra.mxu0 0.0
      %1337 = vmatprep.subr.mxu0 0.0
      %1338 = vmatpush1.xpose.msra.mxu0 0.0
      %1339 = vmatprep.subr.mxu0 0.0
      %1340 = vmatpush1.xpose.msra.mxu0 0.0
      %1341 = vmatprep.subr.mxu0 0.0
      %1342 = vmatpush1.xpose.msra.mxu0 0.0
      %1343 = vmatprep.subr.mxu0 0.0
      %1344 = vmatpush1.xpose.msra.mxu0 0.0
      %1345 = vmatprep.subr.mxu0 0.0
      %1346 = vmatpush1.xpose.msra.mxu0 0.0
      %1347 = vmatprep.subr.mxu0 0.0
      %1348 = vmatpush1.xpose.msra.mxu0 0.0
      %1349 = vmatprep.subr.mxu0 0.0
      %1350 = vmatpush1.xpose.msra.mxu0 0.0
      %1351 = vmatprep.subr.mxu0 0.0
      %1352 = vmatpush1.xpose.msra.mxu0 0.0
      %1353 = vmatprep.subr.mxu0 0.0
      %1354 = vmatpush1.xpose.msra.mxu0 0.0
      %1355 = vmatprep.subr.mxu0 0.0
      %1356 = vmatpush1.xpose.msra.mxu0 0.0
      %1357 = vmatprep.subr.mxu0 0.0
      %1358 = vmatpush1.xpose.msra.mxu0 0.0
      %1359 = vmatprep.subr.mxu0 0.0
      %1360 = vmatpush1.xpose.msra.mxu0 0.0
      %1361 = vmatprep.subr.mxu0 0.0
      %1362 = vmatpush1.xpose.msra.mxu0 0.0
      %1363 = vmatprep.subr.mxu0 0.0
      %1364 = vmatpush1.xpose.msra.mxu0 0.0
      %1365 = vmatprep.subr.mxu0 0.0
      %1366 = vmatpush1.xpose.msra.mxu0 0.0
      %1367 = vmatprep.subr.mxu0 0.0
      %1368 = vmatpush1.xpose.msra.mxu0 0.0
      %1369 = vmatprep.subr.mxu0 0.0
      %1370 = vmatpush1.xpose.msra.mxu0 0.0
      %1371 = vmatprep.subr.mxu0 0.0
      %1372 = vmatpush1.xpose.msra.mxu0 0.0
      %1373 = vmatprep.subr.mxu0 0.0
      %1374 = vmatpush1.xpose.msra.mxu0 0.0
      %1375 = vmatprep.subr.mxu0 0.0
      %1376 = vmatpush1.xpose.msra.mxu0 0.0
      %1377 = vmatprep.subr.mxu0 0.0
      %1378 = vmatpush1.xpose.msra.mxu0 0.0
      %1379 = vmatprep.subr.mxu0 0.0
      %1380 = vmatpush1.xpose.msra.mxu0 0.0
      %1381 = vmatprep.subr.mxu0 0.0
      %1382 = vmatpush1.xpose.msra.mxu0 0.0
      %1383 = vmatprep.subr.mxu0 0.0
      %1384 = vmatpush1.xpose.msra.mxu0 0.0
      %1385 = vmatprep.subr.mxu0 0.0
      %1386 = vmatpush1.xpose.msra.mxu0 0.0
      %1387 = vmatprep.subr.mxu0 0.0
      %1388 = vmatpush1.xpose.msra.mxu0 0.0
      %1389 = vmatprep.subr.mxu0 0.0
      %1390 = vmatpush1.xpose.msra.mxu0 0.0
      %1391 = vmatprep.mubr.f32.mxu0 0.0
      %1392 = vmatmul.mubr.f32.gmra.mrb[0].mxu0 %v1316
      %v1393 = vpop.f32.mrb[0].mxu0
      %v1394 = vadd.f32 0.0, %v1393
      %v1395 = vpop.f32.mrb[0].mxu0
      %1396 = vmatprep.mubr.f32.mxu0 0.0
      %1397 = vmatmul.mubr.f32.gmra.mrb[0].mxu0 %v1319
      %v1398 = vpop.f32.mrb[0].mxu0
      %v1399 = vadd.f32 0.0, %v1398
      %v1400 = vpop.f32.mrb[0].mxu0
      %1401 = vdwg.mxu0
      %v1402 = vmul.f32 %v1133, 0.35355338
      %v1403 = vmul.f32 %v1138, 0.35355338
      %v1404 = vmul.f32 %v1220, 0.35355338
      %v1405 = vmul.f32 %v1225, 0.35355338
      %v1406 = vmul.f32 %v1307, 0.35355338
      %v1407 = vmul.f32 %v1312, 0.35355338
      %v1408 = vmul.f32 %v1394, 0.35355338
      %v1409 = vmul.f32 %v1399, 0.35355338
      %v1410 = vsel %vm559, %v1402, -inf
      %1411 = vmax.xlane.f32.xlu0 %v1410
      %v1412 = vpop.xlane.xlu0 %1411
      %v1413 = vsel %vm559, %v1403, -inf
      %1414 = vmax.xlane.f32.xlu0 %v1413
      %v1415 = vpop.xlane.xlu0 %1414
      %v1416 = vsel %vm559, %v1404, -inf
      %1417 = vmax.xlane.f32.xlu0 %v1416
      %v1418 = vpop.xlane.xlu0 %1417
      %v1419 = vsel %vm559, %v1405, -inf
      %1420 = vmax.xlane.f32.xlu0 %v1419
      %v1421 = vpop.xlane.xlu0 %1420
      %v1422 = vsel %vm559, %v1406, -inf
      %1423 = vmax.xlane.f32.xlu0 %v1422
      %v1424 = vpop.xlane.xlu0 %1423
      %v1425 = vsel %vm559, %v1407, -inf
      %1426 = vmax.xlane.f32.xlu0 %v1425
      %v1427 = vpop.xlane.xlu0 %1426
      %v1428 = vsel %vm559, %v1408, -inf
      %1429 = vmax.xlane.f32.xlu0 %v1428
      %v1430 = vpop.xlane.xlu0 %1429
      %v1431 = vsel %vm559, %v1409, -inf
      %1432 = vmax.xlane.f32.xlu0 %v1431
      %v1433 = vpop.xlane.xlu0 %1432
      %v1434 = vsub.f32 %v1402, %v1412
      %v1435 = vsub.f32 %v1403, %v1415
      %v1436 = vsub.f32 %v1404, %v1418
      %v1437 = vsub.f32 %v1405, %v1421
      %v1438 = vsub.f32 %v1406, %v1424
      %v1439 = vsub.f32 %v1407, %v1427
      %v1440 = vsub.f32 %v1408, %v1430
      %v1441 = vsub.f32 %v1409, %v1433
      %v1442 = vmul.f32 %v1434, 1.442695
      %v1443 = vpow.pop %v1442
      %v1444 = vmul.f32 %v1435, 1.442695
      %v1445 = vpow.pop %v1444
      %v1446 = vmul.f32 %v1436, 1.442695
      %v1447 = vpow.pop %v1446
      %v1448 = vmul.f32 %v1437, 1.442695
      %v1449 = vpow.pop %v1448
      %v1450 = vmul.f32 %v1438, 1.442695
      %v1451 = vpow.pop %v1450
      %v1452 = vmul.f32 %v1439, 1.442695
      %v1453 = vpow.pop %v1452
      %v1454 = vmul.f32 %v1440, 1.442695
      %v1455 = vpow.pop %v1454
      %v1456 = vmul.f32 %v1441, 1.442695
      %v1457 = vpow.pop %v1456
      %v1458 = vsel %vm559, %v1443, 0.0
      %1459 = vadd.xlane.f32.xlu0 %v1458
      %v1460 = vpop.xlane.xlu0 %1459
      %v1461 = vsel %vm559, %v1445, 0.0
      %1462 = vadd.xlane.f32.xlu0 %v1461
      %v1463 = vpop.xlane.xlu0 %1462
      %v1464 = vsel %vm559, %v1447, 0.0
      %1465 = vadd.xlane.f32.xlu0 %v1464
      %v1466 = vpop.xlane.xlu0 %1465
      %v1467 = vsel %vm559, %v1449, 0.0
      %1468 = vadd.xlane.f32.xlu0 %v1467
      %v1469 = vpop.xlane.xlu0 %1468
      %v1470 = vsel %vm559, %v1451, 0.0
      %1471 = vadd.xlane.f32.xlu0 %v1470
      %v1472 = vpop.xlane.xlu0 %1471
      %v1473 = vsel %vm559, %v1453, 0.0
      %1474 = vadd.xlane.f32.xlu0 %v1473
      %v1475 = vpop.xlane.xlu0 %1474
      %v1476 = vsel %vm559, %v1455, 0.0
      %1477 = vadd.xlane.f32.xlu0 %v1476
      %v1478 = vpop.xlane.xlu0 %1477
      %v1479 = vsel %vm559, %v1457, 0.0
      %1480 = vadd.xlane.f32.xlu0 %v1479
      %v1481 = vpop.xlane.xlu0 %1480
      %v1482 = vrcp.pop %v1460
      %v1483 = vmul.f32 %v1443, %v1482
      %v1484 = vrcp.pop %v1463
      %v1485 = vmul.f32 %v1445, %v1484
      %v1486 = vrcp.pop %v1466
      %v1487 = vmul.f32 %v1447, %v1486
      %v1488 = vrcp.pop %v1469
      %v1489 = vmul.f32 %v1449, %v1488
      %v1490 = vrcp.pop %v1472
      %v1491 = vmul.f32 %v1451, %v1490
      %v1492 = vrcp.pop %v1475
      %v1493 = vmul.f32 %v1453, %v1492
      %v1494 = vrcp.pop %v1478
      %v1495 = vmul.f32 %v1455, %v1494
      %v1496 = vrcp.pop %v1481
      %v1497 = vmul.f32 %v1457, %v1496
      %v1499 = vsel %vm559, %v1483, 0
      %v1502 = vsel %vm559, %v1485, 0
      %1504 = vmatprep.subr.mxu0 0.0
      %1505 = vmatpush1.msra.mxu0 %v1015
      %1506 = vmatprep.subr.mxu0 0.0
      %1507 = vmatpush1.msra.mxu0 %v1020
      %1508 = vmatprep.subr.mxu0 0.0
      %1509 = vmatpush1.msra.mxu0 0.0
      %1510 = vmatprep.subr.mxu0 0.0
      %1511 = vmatpush1.msra.mxu0 0.0
      %1512 = vmatprep.subr.mxu0 0.0
      %1513 = vmatpush1.msra.mxu0 0.0
      %1514 = vmatprep.subr.mxu0 0.0
      %1515 = vmatpush1.msra.mxu0 0.0
      %1516 = vmatprep.subr.mxu0 0.0
      %1517 = vmatpush1.msra.mxu0 0.0
      %1518 = vmatprep.subr.mxu0 0.0
      %1519 = vmatpush1.msra.mxu0 0.0
      %1520 = vmatprep.subr.mxu0 0.0
      %1521 = vmatpush1.msra.mxu0 0.0
      %1522 = vmatprep.subr.mxu0 0.0
      %1523 = vmatpush1.msra.mxu0 0.0
      %1524 = vmatprep.subr.mxu0 0.0
      %1525 = vmatpush1.msra.mxu0 0.0
      %1526 = vmatprep.subr.mxu0 0.0
      %1527 = vmatpush1.msra.mxu0 0.0
      %1528 = vmatprep.subr.mxu0 0.0
      %1529 = vmatpush1.msra.mxu0 0.0
      %1530 = vmatprep.subr.mxu0 0.0
      %1531 = vmatpush1.msra.mxu0 0.0
      %1532 = vmatprep.subr.mxu0 0.0
      %1533 = vmatpush1.msra.mxu0 0.0
      %1534 = vmatprep.subr.mxu0 0.0
      %1535 = vmatpush1.msra.mxu0 0.0
      %1536 = vmatprep.subr.mxu0 0.0
      %1537 = vmatpush1.msra.mxu0 0.0
      %1538 = vmatprep.subr.mxu0 0.0
      %1539 = vmatpush1.msra.mxu0 0.0
      %1540 = vmatprep.subr.mxu0 0.0
      %1541 = vmatpush1.msra.mxu0 0.0
      %1542 = vmatprep.subr.mxu0 0.0
      %1543 = vmatpush1.msra.mxu0 0.0
      %1544 = vmatprep.subr.mxu0 0.0
      %1545 = vmatpush1.msra.mxu0 0.0
      %1546 = vmatprep.subr.mxu0 0.0
      %1547 = vmatpush1.msra.mxu0 0.0
      %1548 = vmatprep.subr.mxu0 0.0
      %1549 = vmatpush1.msra.mxu0 0.0
      %1550 = vmatprep.subr.mxu0 0.0
      %1551 = vmatpush1.msra.mxu0 0.0
      %1552 = vmatprep.subr.mxu0 0.0
      %1553 = vmatpush1.msra.mxu0 0.0
      %1554 = vmatprep.subr.mxu0 0.0
      %1555 = vmatpush1.msra.mxu0 0.0
      %1556 = vmatprep.subr.mxu0 0.0
      %1557 = vmatpush1.msra.mxu0 0.0
      %1558 = vmatprep.subr.mxu0 0.0
      %1559 = vmatpush1.msra.mxu0 0.0
      %1560 = vmatprep.subr.mxu0 0.0
      %1561 = vmatpush1.msra.mxu0 0.0
      %1562 = vmatprep.subr.mxu0 0.0
      %1563 = vmatpush1.msra.mxu0 0.0
      %1564 = vmatprep.subr.mxu0 0.0
      %1565 = vmatpush1.msra.mxu0 0.0
      %1566 = vmatprep.subr.mxu0 0.0
      %1567 = vmatpush1.msra.mxu0 0.0
      %1568 = vmatprep.mubr.f32.mxu0 0.0
      %1569 = vmatmul.mubr.f32.gmra.mrb[0].mxu0 %v1499
      %v1570 = vpop.f32.mrb[0].mxu0
      %v1571 = vadd.f32 0.0, %v1570
      %v1572 = vpop.f32.mrb[0].mxu0
      %1573 = vmatprep.mubr.f32.mxu0 0.0
      %1574 = vmatmul.mubr.f32.gmra.mrb[0].mxu0 %v1502
      %v1575 = vpop.f32.mrb[0].mxu0
      %v1576 = vadd.f32 0.0, %v1575
      %v1577 = vpop.f32.mrb[0].mxu0
      %1578 = vdwg.mxu0
      %v1580 = vsel %vm559, %v1487, 0
      %v1583 = vsel %vm559, %v1489, 0
      %1585 = vmatprep.subr.mxu0 0.0
      %1586 = vmatpush1.msra.mxu0 %v1025
      %1587 = vmatprep.subr.mxu0 0.0
      %1588 = vmatpush1.msra.mxu0 %v1030
      %1589 = vmatprep.subr.mxu0 0.0
      %1590 = vmatpush1.msra.mxu0 0.0
      %1591 = vmatprep.subr.mxu0 0.0
      %1592 = vmatpush1.msra.mxu0 0.0
      %1593 = vmatprep.subr.mxu0 0.0
      %1594 = vmatpush1.msra.mxu0 0.0
      %1595 = vmatprep.subr.mxu0 0.0
      %1596 = vmatpush1.msra.mxu0 0.0
      %1597 = vmatprep.subr.mxu0 0.0
      %1598 = vmatpush1.msra.mxu0 0.0
      %1599 = vmatprep.subr.mxu0 0.0
      %1600 = vmatpush1.msra.mxu0 0.0
      %1601 = vmatprep.subr.mxu0 0.0
      %1602 = vmatpush1.msra.mxu0 0.0
      %1603 = vmatprep.subr.mxu0 0.0
      %1604 = vmatpush1.msra.mxu0 0.0
      %1605 = vmatprep.subr.mxu0 0.0
      %1606 = vmatpush1.msra.mxu0 0.0
      %1607 = vmatprep.subr.mxu0 0.0
      %1608 = vmatpush1.msra.mxu0 0.0
      %1609 = vmatprep.subr.mxu0 0.0
      %1610 = vmatpush1.msra.mxu0 0.0
      %1611 = vmatprep.subr.mxu0 0.0
      %1612 = vmatpush1.msra.mxu0 0.0
      %1613 = vmatprep.subr.mxu0 0.0
      %1614 = vmatpush1.msra.mxu0 0.0
      %1615 = vmatprep.subr.mxu0 0.0
      %1616 = vmatpush1.msra.mxu0 0.0
      %1617 = vmatprep.subr.mxu0 0.0
      %1618 = vmatpush1.msra.mxu0 0.0
      %1619 = vmatprep.subr.mxu0 0.0
      %1620 = vmatpush1.msra.mxu0 0.0
      %1621 = vmatprep.subr.mxu0 0.0
      %1622 = vmatpush1.msra.mxu0 0.0
      %1623 = vmatprep.subr.mxu0 0.0
      %1624 = vmatpush1.msra.mxu0 0.0
      %1625 = vmatprep.subr.mxu0 0.0
      %1626 = vmatpush1.msra.mxu0 0.0
      %1627 = vmatprep.subr.mxu0 0.0
      %1628 = vmatpush1.msra.mxu0 0.0
      %1629 = vmatprep.subr.mxu0 0.0
      %1630 = vmatpush1.msra.mxu0 0.0
      %1631 = vmatprep.subr.mxu0 0.0
      %1632 = vmatpush1.msra.mxu0 0.0
      %1633 = vmatprep.subr.mxu0 0.0
      %1634 = vmatpush1.msra.mxu0 0.0
      %1635 = vmatprep.subr.mxu0 0.0
      %1636 = vmatpush1.msra.mxu0 0.0
      %1637 = vmatprep.subr.mxu0 0.0
      %1638 = vmatpush1.msra.mxu0 0.0
      %1639 = vmatprep.subr.mxu0 0.0
      %1640 = vmatpush1.msra.mxu0 0.0
      %1641 = vmatprep.subr.mxu0 0.0
      %1642 = vmatpush1.msra.mxu0 0.0
      %1643 = vmatprep.subr.mxu0 0.0
      %1644 = vmatpush1.msra.mxu0 0.0
      %1645 = vmatprep.subr.mxu0 0.0
      %1646 = vmatpush1.msra.mxu0 0.0
      %1647 = vmatprep.subr.mxu0 0.0
      %1648 = vmatpush1.msra.mxu0 0.0
      %1649 = vmatprep.mubr.f32.mxu0 0.0
      %1650 = vmatmul.mubr.f32.gmra.mrb[0].mxu0 %v1580
      %v1651 = vpop.f32.mrb[0].mxu0
      %v1652 = vadd.f32 0.0, %v1651
      %v1653 = vpop.f32.mrb[0].mxu0
      %1654 = vmatprep.mubr.f32.mxu0 0.0
      %1655 = vmatmul.mubr.f32.gmra.mrb[0].mxu0 %v1583
      %v1656 = vpop.f32.mrb[0].mxu0
      %v1657 = vadd.f32 0.0, %v1656
      %v1658 = vpop.f32.mrb[0].mxu0
      %1659 = vdwg.mxu0
      %v1661 = vsel %vm559, %v1491, 0
      %v1664 = vsel %vm559, %v1493, 0
      %1666 = vmatprep.subr.mxu0 0.0
      %1667 = vmatpush1.msra.mxu0 %v1035
      %1668 = vmatprep.subr.mxu0 0.0
      %1669 = vmatpush1.msra.mxu0 %v1040
      %1670 = vmatprep.subr.mxu0 0.0
      %1671 = vmatpush1.msra.mxu0 0.0
      %1672 = vmatprep.subr.mxu0 0.0
      %1673 = vmatpush1.msra.mxu0 0.0
      %1674 = vmatprep.subr.mxu0 0.0
      %1675 = vmatpush1.msra.mxu0 0.0
      %1676 = vmatprep.subr.mxu0 0.0
      %1677 = vmatpush1.msra.mxu0 0.0
      %1678 = vmatprep.subr.mxu0 0.0
      %1679 = vmatpush1.msra.mxu0 0.0
      %1680 = vmatprep.subr.mxu0 0.0
      %1681 = vmatpush1.msra.mxu0 0.0
      %1682 = vmatprep.subr.mxu0 0.0
      %1683 = vmatpush1.msra.mxu0 0.0
      %1684 = vmatprep.subr.mxu0 0.0
      %1685 = vmatpush1.msra.mxu0 0.0
      %1686 = vmatprep.subr.mxu0 0.0
      %1687 = vmatpush1.msra.mxu0 0.0
      %1688 = vmatprep.subr.mxu0 0.0
      %1689 = vmatpush1.msra.mxu0 0.0
      %1690 = vmatprep.subr.mxu0 0.0
      %1691 = vmatpush1.msra.mxu0 0.0
      %1692 = vmatprep.subr.mxu0 0.0
      %1693 = vmatpush1.msra.mxu0 0.0
      %1694 = vmatprep.subr.mxu0 0.0
      %1695 = vmatpush1.msra.mxu0 0.0
      %1696 = vmatprep.subr.mxu0 0.0
      %1697 = vmatpush1.msra.mxu0 0.0
      %1698 = vmatprep.subr.mxu0 0.0
      %1699 = vmatpush1.msra.mxu0 0.0
      %1700 = vmatprep.subr.mxu0 0.0
      %1701 = vmatpush1.msra.mxu0 0.0
      %1702 = vmatprep.subr.mxu0 0.0
      %1703 = vmatpush1.msra.mxu0 0.0
      %1704 = vmatprep.subr.mxu0 0.0
      %1705 = vmatpush1.msra.mxu0 0.0
      %1706 = vmatprep.subr.mxu0 0.0
      %1707 = vmatpush1.msra.mxu0 0.0
      %1708 = vmatprep.subr.mxu0 0.0
      %1709 = vmatpush1.msra.mxu0 0.0
      %1710 = vmatprep.subr.mxu0 0.0
      %1711 = vmatpush1.msra.mxu0 0.0
      %1712 = vmatprep.subr.mxu0 0.0
      %1713 = vmatpush1.msra.mxu0 0.0
      %1714 = vmatprep.subr.mxu0 0.0
      %1715 = vmatpush1.msra.mxu0 0.0
      %1716 = vmatprep.subr.mxu0 0.0
      %1717 = vmatpush1.msra.mxu0 0.0
      %1718 = vmatprep.subr.mxu0 0.0
      %1719 = vmatpush1.msra.mxu0 0.0
      %1720 = vmatprep.subr.mxu0 0.0
      %1721 = vmatpush1.msra.mxu0 0.0
      %1722 = vmatprep.subr.mxu0 0.0
      %1723 = vmatpush1.msra.mxu0 0.0
      %1724 = vmatprep.subr.mxu0 0.0
      %1725 = vmatpush1.msra.mxu0 0.0
      %1726 = vmatprep.subr.mxu0 0.0
      %1727 = vmatpush1.msra.mxu0 0.0
      %1728 = vmatprep.subr.mxu0 0.0
      %1729 = vmatpush1.msra.mxu0 0.0
      %1730 = vmatprep.mubr.f32.mxu0 0.0
      %1731 = vmatmul.mubr.f32.gmra.mrb[0].mxu0 %v1661
      %v1732 = vpop.f32.mrb[0].mxu0
      %v1733 = vadd.f32 0.0, %v1732
      %v1734 = vpop.f32.mrb[0].mxu0
      %1735 = vmatprep.mubr.f32.mxu0 0.0
      %1736 = vmatmul.mubr.f32.gmra.mrb[0].mxu0 %v1664
      %v1737 = vpop.f32.mrb[0].mxu0
      %v1738 = vadd.f32 0.0, %v1737
      %v1739 = vpop.f32.mrb[0].mxu0
      %1740 = vdwg.mxu0
      %v1742 = vsel %vm559, %v1495, 0
      %v1745 = vsel %vm559, %v1497, 0
      %1747 = vmatprep.subr.mxu0 0.0
      %1748 = vmatpush1.msra.mxu0 %v1045
      %1749 = vmatprep.subr.mxu0 0.0
      %1750 = vmatpush1.msra.mxu0 %v1050
      %1751 = vmatprep.subr.mxu0 0.0
      %1752 = vmatpush1.msra.mxu0 0.0
      %1753 = vmatprep.subr.mxu0 0.0
      %1754 = vmatpush1.msra.mxu0 0.0
      %1755 = vmatprep.subr.mxu0 0.0
      %1756 = vmatpush1.msra.mxu0 0.0
      %1757 = vmatprep.subr.mxu0 0.0
      %1758 = vmatpush1.msra.mxu0 0.0
      %1759 = vmatprep.subr.mxu0 0.0
      %1760 = vmatpush1.msra.mxu0 0.0
      %1761 = vmatprep.subr.mxu0 0.0
      %1762 = vmatpush1.msra.mxu0 0.0
      %1763 = vmatprep.subr.mxu0 0.0
      %1764 = vmatpush1.msra.mxu0 0.0
      %1765 = vmatprep.subr.mxu0 0.0
      %1766 = vmatpush1.msra.mxu0 0.0
      %1767 = vmatprep.subr.mxu0 0.0
      %1768 = vmatpush1.msra.mxu0 0.0
      %1769 = vmatprep.subr.mxu0 0.0
      %1770 = vmatpush1.msra.mxu0 0.0
      %1771 = vmatprep.subr.mxu0 0.0
      %1772 = vmatpush1.msra.mxu0 0.0
      %1773 = vmatprep.subr.mxu0 0.0
      %1774 = vmatpush1.msra.mxu0 0.0
      %1775 = vmatprep.subr.mxu0 0.0
      %1776 = vmatpush1.msra.mxu0 0.0
      %1777 = vmatprep.subr.mxu0 0.0
      %1778 = vmatpush1.msra.mxu0 0.0
      %1779 = vmatprep.subr.mxu0 0.0
      %1780 = vmatpush1.msra.mxu0 0.0
      %1781 = vmatprep.subr.mxu0 0.0
      %1782 = vmatpush1.msra.mxu0 0.0
      %1783 = vmatprep.subr.mxu0 0.0
      %1784 = vmatpush1.msra.mxu0 0.0
      %1785 = vmatprep.subr.mxu0 0.0
      %1786 = vmatpush1.msra.mxu0 0.0
      %1787 = vmatprep.subr.mxu0 0.0
      %1788 = vmatpush1.msra.mxu0 0.0
      %1789 = vmatprep.subr.mxu0 0.0
      %1790 = vmatpush1.msra.mxu0 0.0
      %1791 = vmatprep.subr.mxu0 0.0
      %1792 = vmatpush1.msra.mxu0 0.0
      %1793 = vmatprep.subr.mxu0 0.0
      %1794 = vmatpush1.msra.mxu0 0.0
      %1795 = vmatprep.subr.mxu0 0.0
      %1796 = vmatpush1.msra.mxu0 0.0
      %1797 = vmatprep.subr.mxu0 0.0
      %1798 = vmatpush1.msra.mxu0 0.0
      %1799 = vmatprep.subr.mxu0 0.0
      %1800 = vmatpush1.msra.mxu0 0.0
      %1801 = vmatprep.subr.mxu0 0.0
      %1802 = vmatpush1.msra.mxu0 0.0
      %1803 = vmatprep.subr.mxu0 0.0
      %1804 = vmatpush1.msra.mxu0 0.0
      %1805 = vmatprep.subr.mxu0 0.0
      %1806 = vmatpush1.msra.mxu0 0.0
      %1807 = vmatprep.subr.mxu0 0.0
      %1808 = vmatpush1.msra.mxu0 0.0
      %1809 = vmatprep.subr.mxu0 0.0
      %1810 = vmatpush1.msra.mxu0 0.0
      %1811 = vmatprep.mubr.f32.mxu0 0.0
      %1812 = vmatmul.mubr.f32.gmra.mrb[0].mxu0 %v1742
      %v1813 = vpop.f32.mrb[0].mxu0
      %v1814 = vadd.f32 0.0, %v1813
      %v1815 = vpop.f32.mrb[0].mxu0
      %1816 = vmatprep.mubr.f32.mxu0 0.0
      %1817 = vmatmul.mubr.f32.gmra.mrb[0].mxu0 %v1745
      %v1818 = vpop.f32.mrb[0].mxu0
      %v1819 = vadd.f32 0.0, %v1818
      %v1820 = vpop.f32.mrb[0].mxu0
      %1821 = vdwg.mxu0
      %v1822 = vld [vmem:[%s6] sm:$0xff]
      %v1824 = vsel %vm1053, %v1571, 0
      %v1827 = vsel %vm1053, %v1576, 0
      %v1830 = vsel %vm1053, %v1652, 0
      %v1833 = vsel %vm1053, %v1657, 0
      %v1836 = vsel %vm1053, %v1733, 0
      %v1839 = vsel %vm1053, %v1738, 0
      %v1842 = vsel %vm1053, %v1814, 0
      %v1845 = vsel %vm1053, %v1819, 0
      %1847 = vmatprep.subr.mxu0 0.0
      %1848 = vmatpush1.msra.mxu0 %v1822
      %1849 = vmatprep.subr.mxu0 0.0
      %1850 = vmatpush1.msra.mxu0 0.0
      %1851 = vmatprep.subr.mxu0 0.0
      %1852 = vmatpush1.msra.mxu0 0.0
      %1853 = vmatprep.subr.mxu0 0.0
      %1854 = vmatpush1.msra.mxu0 0.0
      %1855 = vmatprep.subr.mxu0 0.0
      %1856 = vmatpush1.msra.mxu0 0.0
      %1857 = vmatprep.subr.mxu0 0.0
      %1858 = vmatpush1.msra.mxu0 0.0
      %1859 = vmatprep.subr.mxu0 0.0
      %1860 = vmatpush1.msra.mxu0 0.0
      %1861 = vmatprep.subr.mxu0 0.0
      %1862 = vmatpush1.msra.mxu0 0.0
      %1863 = vmatprep.subr.mxu0 0.0
      %1864 = vmatpush1.msra.mxu0 0.0
      %1865 = vmatprep.subr.mxu0 0.0
      %1866 = vmatpush1.msra.mxu0 0.0
      %1867 = vmatprep.subr.mxu0 0.0
      %1868 = vmatpush1.msra.mxu0 0.0
      %1869 = vmatprep.subr.mxu0 0.0
      %1870 = vmatpush1.msra.mxu0 0.0
      %1871 = vmatprep.subr.mxu0 0.0
      %1872 = vmatpush1.msra.mxu0 0.0
      %1873 = vmatprep.subr.mxu0 0.0
      %1874 = vmatpush1.msra.mxu0 0.0
      %1875 = vmatprep.subr.mxu0 0.0
      %1876 = vmatpush1.msra.mxu0 0.0
      %1877 = vmatprep.subr.mxu0 0.0
      %1878 = vmatpush1.msra.mxu0 0.0
      %1879 = vmatprep.subr.mxu0 0.0
      %1880 = vmatpush1.msra.mxu0 0.0
      %1881 = vmatprep.subr.mxu0 0.0
      %1882 = vmatpush1.msra.mxu0 0.0
      %1883 = vmatprep.subr.mxu0 0.0
      %1884 = vmatpush1.msra.mxu0 0.0
      %1885 = vmatprep.subr.mxu0 0.0
      %1886 = vmatpush1.msra.mxu0 0.0
      %1887 = vmatprep.subr.mxu0 0.0
      %1888 = vmatpush1.msra.mxu0 0.0
      %1889 = vmatprep.subr.mxu0 0.0
      %1890 = vmatpush1.msra.mxu0 0.0
      %1891 = vmatprep.subr.mxu0 0.0
      %1892 = vmatpush1.msra.mxu0 0.0
      %1893 = vmatprep.subr.mxu0 0.0
      %1894 = vmatpush1.msra.mxu0 0.0
      %1895 = vmatprep.subr.mxu0 0.0
      %1896 = vmatpush1.msra.mxu0 0.0
      %1897 = vmatprep.subr.mxu0 0.0
      %1898 = vmatpush1.msra.mxu0 0.0
      %1899 = vmatprep.subr.mxu0 0.0
      %1900 = vmatpush1.msra.mxu0 0.0
      %1901 = vmatprep.subr.mxu0 0.0
      %1902 = vmatpush1.msra.mxu0 0.0
      %1903 = vmatprep.subr.mxu0 0.0
      %1904 = vmatpush1.msra.mxu0 0.0
      %1905 = vmatprep.subr.mxu0 0.0
      %1906 = vmatpush1.msra.mxu0 0.0
      %1907 = vmatprep.subr.mxu0 0.0
      %1908 = vmatpush1.msra.mxu0 0.0
      %1909 = vmatprep.subr.mxu0 0.0
      %1910 = vmatpush1.msra.mxu0 0.0
      %1911 = vmatprep.mubr.f32.mxu0 0.0
      %1912 = vmatmul.mubr.f32.gmra.mrb[0].mxu0 %v1824
      %v1913 = vpop.f32.mrb[0].mxu0
      %v1914 = vadd.f32 0.0, %v1913
      %v1915 = vpop.f32.mrb[0].mxu0
      %1916 = vmatprep.mubr.f32.mxu0 0.0
      %1917 = vmatmul.mubr.f32.gmra.mrb[0].mxu0 %v1827
      %v1918 = vpop.f32.mrb[0].mxu0
      %v1919 = vadd.f32 0.0, %v1918
      %v1920 = vpop.f32.mrb[0].mxu0
      %1921 = vmatprep.mubr.f32.mxu0 0.0
      %1922 = vmatmul.mubr.f32.gmra.mrb[0].mxu0 %v1830
      %v1923 = vpop.f32.mrb[0].mxu0
      %v1924 = vadd.f32 0.0, %v1923
      %v1925 = vpop.f32.mrb[0].mxu0
      %1926 = vmatprep.mubr.f32.mxu0 0.0
      %1927 = vmatmul.mubr.f32.gmra.mrb[0].mxu0 %v1833
      %v1928 = vpop.f32.mrb[0].mxu0
      %v1929 = vadd.f32 0.0, %v1928
      %v1930 = vpop.f32.mrb[0].mxu0
      %1931 = vmatprep.mubr.f32.mxu0 0.0
      %1932 = vmatmul.mubr.f32.gmra.mrb[0].mxu0 %v1836
      %v1933 = vpop.f32.mrb[0].mxu0
      %v1934 = vadd.f32 0.0, %v1933
      %v1935 = vpop.f32.mrb[0].mxu0
      %1936 = vmatprep.mubr.f32.mxu0 0.0
      %1937 = vmatmul.mubr.f32.gmra.mrb[0].mxu0 %v1839
      %v1938 = vpop.f32.mrb[0].mxu0
      %v1939 = vadd.f32 0.0, %v1938
      %v1940 = vpop.f32.mrb[0].mxu0
      %1941 = vmatprep.mubr.f32.mxu0 0.0
      %1942 = vmatmul.mubr.f32.gmra.mrb[0].mxu0 %v1842
      %v1943 = vpop.f32.mrb[0].mxu0
      %v1944 = vadd.f32 0.0, %v1943
      %v1945 = vpop.f32.mrb[0].mxu0
      %1946 = vmatprep.mubr.f32.mxu0 0.0
      %1947 = vmatmul.mubr.f32.gmra.mrb[0].mxu0 %v1845
      %v1948 = vpop.f32.mrb[0].mxu0
      %v1949 = vadd.f32 0.0, %v1948
      %v1950 = vpop.f32.mrb[0].mxu0
      %1951 = vdwg.mxu0
      %v1952 = vadd.f32 %v700, %v1914
      %v1953 = vadd.f32 %v701, %v1919
      %v1954 = vadd.f32 %v702, %v1924
      %v1955 = vadd.f32 %v703, %v1929
      %v1956 = vadd.f32 %v704, %v1934
      %v1957 = vadd.f32 %v705, %v1939
      %v1958 = vadd.f32 %v706, %v1944
      %v1959 = vadd.f32 %v707, %v1949
      %s1960 = scalar_lea.vmem %s3, 16
      %v1961 = vld [vmem:[%s1960] sm:$0xff]
      %v1962 = vld [vmem:[%s1960 + $0x8] sm:$0xff]
      %1963 = vmatprep.subr.mxu0 0.0
      %1964 = vmatpush1.msra.mxu0 %v1961
      %1965 = vmatprep.subr.mxu0 0.0
      %1966 = vmatpush1.msra.mxu0 %v1962
      %1967 = vmatprep.subr.mxu0 0.0
      %1968 = vmatpush1.msra.mxu0 0.0
      %1969 = vmatprep.subr.mxu0 0.0
      %1970 = vmatpush1.msra.mxu0 0.0
      %1971 = vmatprep.subr.mxu0 0.0
      %1972 = vmatpush1.msra.mxu0 0.0
      %1973 = vmatprep.subr.mxu0 0.0
      %1974 = vmatpush1.msra.mxu0 0.0
      %1975 = vmatprep.subr.mxu0 0.0
      %1976 = vmatpush1.msra.mxu0 0.0
      %1977 = vmatprep.subr.mxu0 0.0
      %1978 = vmatpush1.msra.mxu0 0.0
      %1979 = vmatprep.subr.mxu0 0.0
      %1980 = vmatpush1.msra.mxu0 0.0
      %1981 = vmatprep.subr.mxu0 0.0
      %1982 = vmatpush1.msra.mxu0 0.0
      %1983 = vmatprep.subr.mxu0 0.0
      %1984 = vmatpush1.msra.mxu0 0.0
      %1985 = vmatprep.subr.mxu0 0.0
      %1986 = vmatpush1.msra.mxu0 0.0
      %1987 = vmatprep.subr.mxu0 0.0
      %1988 = vmatpush1.msra.mxu0 0.0
      %1989 = vmatprep.subr.mxu0 0.0
      %1990 = vmatpush1.msra.mxu0 0.0
      %1991 = vmatprep.subr.mxu0 0.0
      %1992 = vmatpush1.msra.mxu0 0.0
      %1993 = vmatprep.subr.mxu0 0.0
      %1994 = vmatpush1.msra.mxu0 0.0
      %1995 = vmatprep.subr.mxu0 0.0
      %1996 = vmatpush1.msra.mxu0 0.0
      %1997 = vmatprep.subr.mxu0 0.0
      %1998 = vmatpush1.msra.mxu0 0.0
      %1999 = vmatprep.subr.mxu0 0.0
      %2000 = vmatpush1.msra.mxu0 0.0
      %2001 = vmatprep.subr.mxu0 0.0
      %2002 = vmatpush1.msra.mxu0 0.0
      %2003 = vmatprep.subr.mxu0 0.0
      %2004 = vmatpush1.msra.mxu0 0.0
      %2005 = vmatprep.subr.mxu0 0.0
      %2006 = vmatpush1.msra.mxu0 0.0
      %2007 = vmatprep.subr.mxu0 0.0
      %2008 = vmatpush1.msra.mxu0 0.0
      %2009 = vmatprep.subr.mxu0 0.0
      %2010 = vmatpush1.msra.mxu0 0.0
      %2011 = vmatprep.subr.mxu0 0.0
      %2012 = vmatpush1.msra.mxu0 0.0
      %2013 = vmatprep.subr.mxu0 0.0
      %2014 = vmatpush1.msra.mxu0 0.0
      %2015 = vmatprep.subr.mxu0 0.0
      %2016 = vmatpush1.msra.mxu0 0.0
      %2017 = vmatprep.subr.mxu0 0.0
      %2018 = vmatpush1.msra.mxu0 0.0
      %2019 = vmatprep.subr.mxu0 0.0
      %2020 = vmatpush1.msra.mxu0 0.0
      %2021 = vmatprep.subr.mxu0 0.0
      %2022 = vmatpush1.msra.mxu0 0.0
      %2023 = vmatprep.subr.mxu0 0.0
      %2024 = vmatpush1.msra.mxu0 0.0
      %2025 = vmatprep.subr.mxu0 0.0
      %2026 = vmatpush1.msra.mxu0 0.0
      %2027 = vmatprep.mubr.f32.mxu0 0.0
      %2028 = vmatmul.mubr.f32.gmra.mrb[0].mxu0 %v711
      %v2029 = vpop.f32.mrb[0].mxu0
      %v2030 = vadd.f32 0.0, %v2029
      %v2031 = vpop.f32.mrb[0].mxu0
      %2032 = vmatprep.mubr.f32.mxu0 0.0
      %2033 = vmatmul.mubr.f32.gmra.mrb[0].mxu0 %v714
      %v2034 = vpop.f32.mrb[0].mxu0
      %v2035 = vadd.f32 0.0, %v2034
      %v2036 = vpop.f32.mrb[0].mxu0
      %2037 = vmatprep.mubr.f32.mxu0 0.0
      %2038 = vmatmul.mubr.f32.gmra.mrb[0].mxu0 %v717
      %v2039 = vpop.f32.mrb[0].mxu0
      %v2040 = vadd.f32 0.0, %v2039
      %v2041 = vpop.f32.mrb[0].mxu0
      %2042 = vmatprep.mubr.f32.mxu0 0.0
      %2043 = vmatmul.mubr.f32.gmra.mrb[0].mxu0 %v720
      %v2044 = vpop.f32.mrb[0].mxu0
      %v2045 = vadd.f32 0.0, %v2044
      %v2046 = vpop.f32.mrb[0].mxu0
      %2047 = vmatprep.mubr.f32.mxu0 0.0
      %2048 = vmatmul.mubr.f32.gmra.mrb[0].mxu0 %v723
      %v2049 = vpop.f32.mrb[0].mxu0
      %v2050 = vadd.f32 0.0, %v2049
      %v2051 = vpop.f32.mrb[0].mxu0
      %2052 = vmatprep.mubr.f32.mxu0 0.0
      %2053 = vmatmul.mubr.f32.gmra.mrb[0].mxu0 %v726
      %v2054 = vpop.f32.mrb[0].mxu0
      %v2055 = vadd.f32 0.0, %v2054
      %v2056 = vpop.f32.mrb[0].mxu0
      %2057 = vmatprep.mubr.f32.mxu0 0.0
      %2058 = vmatmul.mubr.f32.gmra.mrb[0].mxu0 %v729
      %v2059 = vpop.f32.mrb[0].mxu0
      %v2060 = vadd.f32 0.0, %v2059
      %v2061 = vpop.f32.mrb[0].mxu0
      %2062 = vmatprep.mubr.f32.mxu0 0.0
      %2063 = vmatmul.mubr.f32.gmra.mrb[0].mxu0 %v732
      %v2064 = vpop.f32.mrb[0].mxu0
      %v2065 = vadd.f32 0.0, %v2064
      %v2066 = vpop.f32.mrb[0].mxu0
      %2067 = vdwg.mxu0
      %s2068 = scalar_lea.vmem %s4, 16
      %v2069 = vld [vmem:[%s2068] sm:$0xff]
      %v2070 = vld [vmem:[%s2068 + $0x8] sm:$0xff]
      %2071 = vmatprep.subr.mxu0 0.0
      %2072 = vmatpush1.msra.mxu0 %v2069
      %2073 = vmatprep.subr.mxu0 0.0
      %2074 = vmatpush1.msra.mxu0 %v2070
      %2075 = vmatprep.subr.mxu0 0.0
      %2076 = vmatpush1.msra.mxu0 0.0
      %2077 = vmatprep.subr.mxu0 0.0
      %2078 = vmatpush1.msra.mxu0 0.0
      %2079 = vmatprep.subr.mxu0 0.0
      %2080 = vmatpush1.msra.mxu0 0.0
      %2081 = vmatprep.subr.mxu0 0.0
      %2082 = vmatpush1.msra.mxu0 0.0
      %2083 = vmatprep.subr.mxu0 0.0
      %2084 = vmatpush1.msra.mxu0 0.0
      %2085 = vmatprep.subr.mxu0 0.0
      %2086 = vmatpush1.msra.mxu0 0.0
      %2087 = vmatprep.subr.mxu0 0.0
      %2088 = vmatpush1.msra.mxu0 0.0
      %2089 = vmatprep.subr.mxu0 0.0
      %2090 = vmatpush1.msra.mxu0 0.0
      %2091 = vmatprep.subr.mxu0 0.0
      %2092 = vmatpush1.msra.mxu0 0.0
      %2093 = vmatprep.subr.mxu0 0.0
      %2094 = vmatpush1.msra.mxu0 0.0
      %2095 = vmatprep.subr.mxu0 0.0
      %2096 = vmatpush1.msra.mxu0 0.0
      %2097 = vmatprep.subr.mxu0 0.0
      %2098 = vmatpush1.msra.mxu0 0.0
      %2099 = vmatprep.subr.mxu0 0.0
      %2100 = vmatpush1.msra.mxu0 0.0
      %2101 = vmatprep.subr.mxu0 0.0
      %2102 = vmatpush1.msra.mxu0 0.0
      %2103 = vmatprep.subr.mxu0 0.0
      %2104 = vmatpush1.msra.mxu0 0.0
      %2105 = vmatprep.subr.mxu0 0.0
      %2106 = vmatpush1.msra.mxu0 0.0
      %2107 = vmatprep.subr.mxu0 0.0
      %2108 = vmatpush1.msra.mxu0 0.0
      %2109 = vmatprep.subr.mxu0 0.0
      %2110 = vmatpush1.msra.mxu0 0.0
      %2111 = vmatprep.subr.mxu0 0.0
      %2112 = vmatpush1.msra.mxu0 0.0
      %2113 = vmatprep.subr.mxu0 0.0
      %2114 = vmatpush1.msra.mxu0 0.0
      %2115 = vmatprep.subr.mxu0 0.0
      %2116 = vmatpush1.msra.mxu0 0.0
      %2117 = vmatprep.subr.mxu0 0.0
      %2118 = vmatpush1.msra.mxu0 0.0
      %2119 = vmatprep.subr.mxu0 0.0
      %2120 = vmatpush1.msra.mxu0 0.0
      %2121 = vmatprep.subr.mxu0 0.0
      %2122 = vmatpush1.msra.mxu0 0.0
      %2123 = vmatprep.subr.mxu0 0.0
      %2124 = vmatpush1.msra.mxu0 0.0
      %2125 = vmatprep.subr.mxu0 0.0
      %2126 = vmatpush1.msra.mxu0 0.0
      %2127 = vmatprep.subr.mxu0 0.0
      %2128 = vmatpush1.msra.mxu0 0.0
      %2129 = vmatprep.subr.mxu0 0.0
      %2130 = vmatpush1.msra.mxu0 0.0
      %2131 = vmatprep.subr.mxu0 0.0
      %2132 = vmatpush1.msra.mxu0 0.0
      %2133 = vmatprep.subr.mxu0 0.0
      %2134 = vmatpush1.msra.mxu0 0.0
      %2135 = vmatprep.mubr.f32.mxu0 0.0
      %2136 = vmatmul.mubr.f32.gmra.mrb[0].mxu0 %v711
      %v2137 = vpop.f32.mrb[0].mxu0
      %v2138 = vadd.f32 0.0, %v2137
      %v2139 = vpop.f32.mrb[0].mxu0
      %2140 = vmatprep.mubr.f32.mxu0 0.0
      %2141 = vmatmul.mubr.f32.gmra.mrb[0].mxu0 %v714
      %v2142 = vpop.f32.mrb[0].mxu0
      %v2143 = vadd.f32 0.0, %v2142
      %v2144 = vpop.f32.mrb[0].mxu0
      %2145 = vmatprep.mubr.f32.mxu0 0.0
      %2146 = vmatmul.mubr.f32.gmra.mrb[0].mxu0 %v717
      %v2147 = vpop.f32.mrb[0].mxu0
      %v2148 = vadd.f32 0.0, %v2147
      %v2149 = vpop.f32.mrb[0].mxu0
      %2150 = vmatprep.mubr.f32.mxu0 0.0
      %2151 = vmatmul.mubr.f32.gmra.mrb[0].mxu0 %v720
      %v2152 = vpop.f32.mrb[0].mxu0
      %v2153 = vadd.f32 0.0, %v2152
      %v2154 = vpop.f32.mrb[0].mxu0
      %2155 = vmatprep.mubr.f32.mxu0 0.0
      %2156 = vmatmul.mubr.f32.gmra.mrb[0].mxu0 %v723
      %v2157 = vpop.f32.mrb[0].mxu0
      %v2158 = vadd.f32 0.0, %v2157
      %v2159 = vpop.f32.mrb[0].mxu0
      %2160 = vmatprep.mubr.f32.mxu0 0.0
      %2161 = vmatmul.mubr.f32.gmra.mrb[0].mxu0 %v726
      %v2162 = vpop.f32.mrb[0].mxu0
      %v2163 = vadd.f32 0.0, %v2162
      %v2164 = vpop.f32.mrb[0].mxu0
      %2165 = vmatprep.mubr.f32.mxu0 0.0
      %2166 = vmatmul.mubr.f32.gmra.mrb[0].mxu0 %v729
      %v2167 = vpop.f32.mrb[0].mxu0
      %v2168 = vadd.f32 0.0, %v2167
      %v2169 = vpop.f32.mrb[0].mxu0
      %2170 = vmatprep.mubr.f32.mxu0 0.0
      %2171 = vmatmul.mubr.f32.gmra.mrb[0].mxu0 %v732
      %v2172 = vpop.f32.mrb[0].mxu0
      %v2173 = vadd.f32 0.0, %v2172
      %v2174 = vpop.f32.mrb[0].mxu0
      %2175 = vdwg.mxu0
      %s2176 = scalar_lea.vmem %s5, 16
      %v2177 = vld [vmem:[%s2176] sm:$0xff]
      %v2178 = vld [vmem:[%s2176 + $0x8] sm:$0xff]
      %2179 = vmatprep.subr.mxu0 0.0
      %2180 = vmatpush1.msra.mxu0 %v2177
      %2181 = vmatprep.subr.mxu0 0.0
      %2182 = vmatpush1.msra.mxu0 %v2178
      %2183 = vmatprep.subr.mxu0 0.0
      %2184 = vmatpush1.msra.mxu0 0.0
      %2185 = vmatprep.subr.mxu0 0.0
      %2186 = vmatpush1.msra.mxu0 0.0
      %2187 = vmatprep.subr.mxu0 0.0
      %2188 = vmatpush1.msra.mxu0 0.0
      %2189 = vmatprep.subr.mxu0 0.0
      %2190 = vmatpush1.msra.mxu0 0.0
      %2191 = vmatprep.subr.mxu0 0.0
      %2192 = vmatpush1.msra.mxu0 0.0
      %2193 = vmatprep.subr.mxu0 0.0
      %2194 = vmatpush1.msra.mxu0 0.0
      %2195 = vmatprep.subr.mxu0 0.0
      %2196 = vmatpush1.msra.mxu0 0.0
      %2197 = vmatprep.subr.mxu0 0.0
      %2198 = vmatpush1.msra.mxu0 0.0
      %2199 = vmatprep.subr.mxu0 0.0
      %2200 = vmatpush1.msra.mxu0 0.0
      %2201 = vmatprep.subr.mxu0 0.0
      %2202 = vmatpush1.msra.mxu0 0.0
      %2203 = vmatprep.subr.mxu0 0.0
      %2204 = vmatpush1.msra.mxu0 0.0
      %2205 = vmatprep.subr.mxu0 0.0
      %2206 = vmatpush1.msra.mxu0 0.0
      %2207 = vmatprep.subr.mxu0 0.0
      %2208 = vmatpush1.msra.mxu0 0.0
      %2209 = vmatprep.subr.mxu0 0.0
      %2210 = vmatpush1.msra.mxu0 0.0
      %2211 = vmatprep.subr.mxu0 0.0
      %2212 = vmatpush1.msra.mxu0 0.0
      %2213 = vmatprep.subr.mxu0 0.0
      %2214 = vmatpush1.msra.mxu0 0.0
      %2215 = vmatprep.subr.mxu0 0.0
      %2216 = vmatpush1.msra.mxu0 0.0
      %2217 = vmatprep.subr.mxu0 0.0
      %2218 = vmatpush1.msra.mxu0 0.0
      %2219 = vmatprep.subr.mxu0 0.0
      %2220 = vmatpush1.msra.mxu0 0.0
      %2221 = vmatprep.subr.mxu0 0.0
      %2222 = vmatpush1.msra.mxu0 0.0
      %2223 = vmatprep.subr.mxu0 0.0
      %2224 = vmatpush1.msra.mxu0 0.0
      %2225 = vmatprep.subr.mxu0 0.0
      %2226 = vmatpush1.msra.mxu0 0.0
      %2227 = vmatprep.subr.mxu0 0.0
      %2228 = vmatpush1.msra.mxu0 0.0
      %2229 = vmatprep.subr.mxu0 0.0
      %2230 = vmatpush1.msra.mxu0 0.0
      %2231 = vmatprep.subr.mxu0 0.0
      %2232 = vmatpush1.msra.mxu0 0.0
      %2233 = vmatprep.subr.mxu0 0.0
      %2234 = vmatpush1.msra.mxu0 0.0
      %2235 = vmatprep.subr.mxu0 0.0
      %2236 = vmatpush1.msra.mxu0 0.0
      %2237 = vmatprep.subr.mxu0 0.0
      %2238 = vmatpush1.msra.mxu0 0.0
      %2239 = vmatprep.subr.mxu0 0.0
      %2240 = vmatpush1.msra.mxu0 0.0
      %2241 = vmatprep.subr.mxu0 0.0
      %2242 = vmatpush1.msra.mxu0 0.0
      %2243 = vmatprep.mubr.f32.mxu0 0.0
      %2244 = vmatmul.mubr.f32.gmra.mrb[0].mxu0 %v711
      %v2245 = vpop.f32.mrb[0].mxu0
      %v2246 = vadd.f32 0.0, %v2245
      %v2247 = vpop.f32.mrb[0].mxu0
      %2248 = vmatprep.mubr.f32.mxu0 0.0
      %2249 = vmatmul.mubr.f32.gmra.mrb[0].mxu0 %v714
      %v2250 = vpop.f32.mrb[0].mxu0
      %v2251 = vadd.f32 0.0, %v2250
      %v2252 = vpop.f32.mrb[0].mxu0
      %2253 = vmatprep.mubr.f32.mxu0 0.0
      %2254 = vmatmul.mubr.f32.gmra.mrb[0].mxu0 %v717
      %v2255 = vpop.f32.mrb[0].mxu0
      %v2256 = vadd.f32 0.0, %v2255
      %v2257 = vpop.f32.mrb[0].mxu0
      %2258 = vmatprep.mubr.f32.mxu0 0.0
      %2259 = vmatmul.mubr.f32.gmra.mrb[0].mxu0 %v720
      %v2260 = vpop.f32.mrb[0].mxu0
      %v2261 = vadd.f32 0.0, %v2260
      %v2262 = vpop.f32.mrb[0].mxu0
      %2263 = vmatprep.mubr.f32.mxu0 0.0
      %2264 = vmatmul.mubr.f32.gmra.mrb[0].mxu0 %v723
      %v2265 = vpop.f32.mrb[0].mxu0
      %v2266 = vadd.f32 0.0, %v2265
      %v2267 = vpop.f32.mrb[0].mxu0
      %2268 = vmatprep.mubr.f32.mxu0 0.0
      %2269 = vmatmul.mubr.f32.gmra.mrb[0].mxu0 %v726
      %v2270 = vpop.f32.mrb[0].mxu0
      %v2271 = vadd.f32 0.0, %v2270
      %v2272 = vpop.f32.mrb[0].mxu0
      %2273 = vmatprep.mubr.f32.mxu0 0.0
      %2274 = vmatmul.mubr.f32.gmra.mrb[0].mxu0 %v729
      %v2275 = vpop.f32.mrb[0].mxu0
      %v2276 = vadd.f32 0.0, %v2275
      %v2277 = vpop.f32.mrb[0].mxu0
      %2278 = vmatprep.mubr.f32.mxu0 0.0
      %2279 = vmatmul.mubr.f32.gmra.mrb[0].mxu0 %v732
      %v2280 = vpop.f32.mrb[0].mxu0
      %v2281 = vadd.f32 0.0, %v2280
      %v2282 = vpop.f32.mrb[0].mxu0
      %2283 = vdwg.mxu0
      %v2285 = vsel %vm1053, %v2030, 0
      %v2288 = vsel %vm1053, %v2035, 0
      %v2291 = vsel %vm1053, %v2138, 0
      %v2294 = vsel %vm1053, %v2143, 0
      %2296 = vmatprep.subr.mxu0 0.0
      %2297 = vmatpush1.xpose.msra.mxu0 %v2291
      %2298 = vmatprep.subr.mxu0 0.0
      %2299 = vmatpush1.xpose.msra.mxu0 %v2294
      %2300 = vmatprep.subr.mxu0 0.0
      %2301 = vmatpush1.xpose.msra.mxu0 0.0
      %2302 = vmatprep.subr.mxu0 0.0
      %2303 = vmatpush1.xpose.msra.mxu0 0.0
      %2304 = vmatprep.subr.mxu0 0.0
      %2305 = vmatpush1.xpose.msra.mxu0 0.0
      %2306 = vmatprep.subr.mxu0 0.0
      %2307 = vmatpush1.xpose.msra.mxu0 0.0
      %2308 = vmatprep.subr.mxu0 0.0
      %2309 = vmatpush1.xpose.msra.mxu0 0.0
      %2310 = vmatprep.subr.mxu0 0.0
      %2311 = vmatpush1.xpose.msra.mxu0 0.0
      %2312 = vmatprep.subr.mxu0 0.0
      %2313 = vmatpush1.xpose.msra.mxu0 0.0
      %2314 = vmatprep.subr.mxu0 0.0
      %2315 = vmatpush1.xpose.msra.mxu0 0.0
      %2316 = vmatprep.subr.mxu0 0.0
      %2317 = vmatpush1.xpose.msra.mxu0 0.0
      %2318 = vmatprep.subr.mxu0 0.0
      %2319 = vmatpush1.xpose.msra.mxu0 0.0
      %2320 = vmatprep.subr.mxu0 0.0
      %2321 = vmatpush1.xpose.msra.mxu0 0.0
      %2322 = vmatprep.subr.mxu0 0.0
      %2323 = vmatpush1.xpose.msra.mxu0 0.0
      %2324 = vmatprep.subr.mxu0 0.0
      %2325 = vmatpush1.xpose.msra.mxu0 0.0
      %2326 = vmatprep.subr.mxu0 0.0
      %2327 = vmatpush1.xpose.msra.mxu0 0.0
      %2328 = vmatprep.subr.mxu0 0.0
      %2329 = vmatpush1.xpose.msra.mxu0 0.0
      %2330 = vmatprep.subr.mxu0 0.0
      %2331 = vmatpush1.xpose.msra.mxu0 0.0
      %2332 = vmatprep.subr.mxu0 0.0
      %2333 = vmatpush1.xpose.msra.mxu0 0.0
      %2334 = vmatprep.subr.mxu0 0.0
      %2335 = vmatpush1.xpose.msra.mxu0 0.0
      %2336 = vmatprep.subr.mxu0 0.0
      %2337 = vmatpush1.xpose.msra.mxu0 0.0
      %2338 = vmatprep.subr.mxu0 0.0
      %2339 = vmatpush1.xpose.msra.mxu0 0.0
      %2340 = vmatprep.subr.mxu0 0.0
      %2341 = vmatpush1.xpose.msra.mxu0 0.0
      %2342 = vmatprep.subr.mxu0 0.0
      %2343 = vmatpush1.xpose.msra.mxu0 0.0
      %2344 = vmatprep.subr.mxu0 0.0
      %2345 = vmatpush1.xpose.msra.mxu0 0.0
      %2346 = vmatprep.subr.mxu0 0.0
      %2347 = vmatpush1.xpose.msra.mxu0 0.0
      %2348 = vmatprep.subr.mxu0 0.0
      %2349 = vmatpush1.xpose.msra.mxu0 0.0
      %2350 = vmatprep.subr.mxu0 0.0
      %2351 = vmatpush1.xpose.msra.mxu0 0.0
      %2352 = vmatprep.subr.mxu0 0.0
      %2353 = vmatpush1.xpose.msra.mxu0 0.0
      %2354 = vmatprep.subr.mxu0 0.0
      %2355 = vmatpush1.xpose.msra.mxu0 0.0
      %2356 = vmatprep.subr.mxu0 0.0
      %2357 = vmatpush1.xpose.msra.mxu0 0.0
      %2358 = vmatprep.subr.mxu0 0.0
      %2359 = vmatpush1.xpose.msra.mxu0 0.0
      %2360 = vmatprep.mubr.f32.mxu0 0.0
      %2361 = vmatmul.mubr.f32.gmra.mrb[0].mxu0 %v2285
      %v2362 = vpop.f32.mrb[0].mxu0
      %v2363 = vadd.f32 0.0, %v2362
      %v2364 = vpop.f32.mrb[0].mxu0
      %2365 = vmatprep.mubr.f32.mxu0 0.0
      %2366 = vmatmul.mubr.f32.gmra.mrb[0].mxu0 %v2288
      %v2367 = vpop.f32.mrb[0].mxu0
      %v2368 = vadd.f32 0.0, %v2367
      %v2369 = vpop.f32.mrb[0].mxu0
      %2370 = vdwg.mxu0
      %v2372 = vsel %vm1053, %v2040, 0
      %v2375 = vsel %vm1053, %v2045, 0
      %v2378 = vsel %vm1053, %v2148, 0
      %v2381 = vsel %vm1053, %v2153, 0
      %2383 = vmatprep.subr.mxu0 0.0
      %2384 = vmatpush1.xpose.msra.mxu0 %v2378
      %2385 = vmatprep.subr.mxu0 0.0
      %2386 = vmatpush1.xpose.msra.mxu0 %v2381
      %2387 = vmatprep.subr.mxu0 0.0
      %2388 = vmatpush1.xpose.msra.mxu0 0.0
      %2389 = vmatprep.subr.mxu0 0.0
      %2390 = vmatpush1.xpose.msra.mxu0 0.0
      %2391 = vmatprep.subr.mxu0 0.0
      %2392 = vmatpush1.xpose.msra.mxu0 0.0
      %2393 = vmatprep.subr.mxu0 0.0
      %2394 = vmatpush1.xpose.msra.mxu0 0.0
      %2395 = vmatprep.subr.mxu0 0.0
      %2396 = vmatpush1.xpose.msra.mxu0 0.0
      %2397 = vmatprep.subr.mxu0 0.0
      %2398 = vmatpush1.xpose.msra.mxu0 0.0
      %2399 = vmatprep.subr.mxu0 0.0
      %2400 = vmatpush1.xpose.msra.mxu0 0.0
      %2401 = vmatprep.subr.mxu0 0.0
      %2402 = vmatpush1.xpose.msra.mxu0 0.0
      %2403 = vmatprep.subr.mxu0 0.0
      %2404 = vmatpush1.xpose.msra.mxu0 0.0
      %2405 = vmatprep.subr.mxu0 0.0
      %2406 = vmatpush1.xpose.msra.mxu0 0.0
      %2407 = vmatprep.subr.mxu0 0.0
      %2408 = vmatpush1.xpose.msra.mxu0 0.0
      %2409 = vmatprep.subr.mxu0 0.0
      %2410 = vmatpush1.xpose.msra.mxu0 0.0
      %2411 = vmatprep.subr.mxu0 0.0
      %2412 = vmatpush1.xpose.msra.mxu0 0.0
      %2413 = vmatprep.subr.mxu0 0.0
      %2414 = vmatpush1.xpose.msra.mxu0 0.0
      %2415 = vmatprep.subr.mxu0 0.0
      %2416 = vmatpush1.xpose.msra.mxu0 0.0
      %2417 = vmatprep.subr.mxu0 0.0
      %2418 = vmatpush1.xpose.msra.mxu0 0.0
      %2419 = vmatprep.subr.mxu0 0.0
      %2420 = vmatpush1.xpose.msra.mxu0 0.0
      %2421 = vmatprep.subr.mxu0 0.0
      %2422 = vmatpush1.xpose.msra.mxu0 0.0
      %2423 = vmatprep.subr.mxu0 0.0
      %2424 = vmatpush1.xpose.msra.mxu0 0.0
      %2425 = vmatprep.subr.mxu0 0.0
      %2426 = vmatpush1.xpose.msra.mxu0 0.0
      %2427 = vmatprep.subr.mxu0 0.0
      %2428 = vmatpush1.xpose.msra.mxu0 0.0
      %2429 = vmatprep.subr.mxu0 0.0
      %2430 = vmatpush1.xpose.msra.mxu0 0.0
      %2431 = vmatprep.subr.mxu0 0.0
      %2432 = vmatpush1.xpose.msra.mxu0 0.0
      %2433 = vmatprep.subr.mxu0 0.0
      %2434 = vmatpush1.xpose.msra.mxu0 0.0
      %2435 = vmatprep.subr.mxu0 0.0
      %2436 = vmatpush1.xpose.msra.mxu0 0.0
      %2437 = vmatprep.subr.mxu0 0.0
      %2438 = vmatpush1.xpose.msra.mxu0 0.0
      %2439 = vmatprep.subr.mxu0 0.0
      %2440 = vmatpush1.xpose.msra.mxu0 0.0
      %2441 = vmatprep.subr.mxu0 0.0
      %2442 = vmatpush1.xpose.msra.mxu0 0.0
      %2443 = vmatprep.subr.mxu0 0.0
      %2444 = vmatpush1.xpose.msra.mxu0 0.0
      %2445 = vmatprep.subr.mxu0 0.0
      %2446 = vmatpush1.xpose.msra.mxu0 0.0
      %2447 = vmatprep.mubr.f32.mxu0 0.0
      %2448 = vmatmul.mubr.f32.gmra.mrb[0].mxu0 %v2372
      %v2449 = vpop.f32.mrb[0].mxu0
      %v2450 = vadd.f32 0.0, %v2449
      %v2451 = vpop.f32.mrb[0].mxu0
      %2452 = vmatprep.mubr.f32.mxu0 0.0
      %2453 = vmatmul.mubr.f32.gmra.mrb[0].mxu0 %v2375
      %v2454 = vpop.f32.mrb[0].mxu0
      %v2455 = vadd.f32 0.0, %v2454
      %v2456 = vpop.f32.mrb[0].mxu0
      %2457 = vdwg.mxu0
      %v2459 = vsel %vm1053, %v2050, 0
      %v2462 = vsel %vm1053, %v2055, 0
      %v2465 = vsel %vm1053, %v2158, 0
      %v2468 = vsel %vm1053, %v2163, 0
      %2470 = vmatprep.subr.mxu0 0.0
      %2471 = vmatpush1.xpose.msra.mxu0 %v2465
      %2472 = vmatprep.subr.mxu0 0.0
      %2473 = vmatpush1.xpose.msra.mxu0 %v2468
      %2474 = vmatprep.subr.mxu0 0.0
      %2475 = vmatpush1.xpose.msra.mxu0 0.0
      %2476 = vmatprep.subr.mxu0 0.0
      %2477 = vmatpush1.xpose.msra.mxu0 0.0
      %2478 = vmatprep.subr.mxu0 0.0
      %2479 = vmatpush1.xpose.msra.mxu0 0.0
      %2480 = vmatprep.subr.mxu0 0.0
      %2481 = vmatpush1.xpose.msra.mxu0 0.0
      %2482 = vmatprep.subr.mxu0 0.0
      %2483 = vmatpush1.xpose.msra.mxu0 0.0
      %2484 = vmatprep.subr.mxu0 0.0
      %2485 = vmatpush1.xpose.msra.mxu0 0.0
      %2486 = vmatprep.subr.mxu0 0.0
      %2487 = vmatpush1.xpose.msra.mxu0 0.0
      %2488 = vmatprep.subr.mxu0 0.0
      %2489 = vmatpush1.xpose.msra.mxu0 0.0
      %2490 = vmatprep.subr.mxu0 0.0
      %2491 = vmatpush1.xpose.msra.mxu0 0.0
      %2492 = vmatprep.subr.mxu0 0.0
      %2493 = vmatpush1.xpose.msra.mxu0 0.0
      %2494 = vmatprep.subr.mxu0 0.0
      %2495 = vmatpush1.xpose.msra.mxu0 0.0
      %2496 = vmatprep.subr.mxu0 0.0
      %2497 = vmatpush1.xpose.msra.mxu0 0.0
      %2498 = vmatprep.subr.mxu0 0.0
      %2499 = vmatpush1.xpose.msra.mxu0 0.0
      %2500 = vmatprep.subr.mxu0 0.0
      %2501 = vmatpush1.xpose.msra.mxu0 0.0
      %2502 = vmatprep.subr.mxu0 0.0
      %2503 = vmatpush1.xpose.msra.mxu0 0.0
      %2504 = vmatprep.subr.mxu0 0.0
      %2505 = vmatpush1.xpose.msra.mxu0 0.0
      %2506 = vmatprep.subr.mxu0 0.0
      %2507 = vmatpush1.xpose.msra.mxu0 0.0
      %2508 = vmatprep.subr.mxu0 0.0
      %2509 = vmatpush1.xpose.msra.mxu0 0.0
      %2510 = vmatprep.subr.mxu0 0.0
      %2511 = vmatpush1.xpose.msra.mxu0 0.0
      %2512 = vmatprep.subr.mxu0 0.0
      %2513 = vmatpush1.xpose.msra.mxu0 0.0
      %2514 = vmatprep.subr.mxu0 0.0
      %2515 = vmatpush1.xpose.msra.mxu0 0.0
      %2516 = vmatprep.subr.mxu0 0.0
      %2517 = vmatpush1.xpose.msra.mxu0 0.0
      %2518 = vmatprep.subr.mxu0 0.0
      %2519 = vmatpush1.xpose.msra.mxu0 0.0
      %2520 = vmatprep.subr.mxu0 0.0
      %2521 = vmatpush1.xpose.msra.mxu0 0.0
      %2522 = vmatprep.subr.mxu0 0.0
      %2523 = vmatpush1.xpose.msra.mxu0 0.0
      %2524 = vmatprep.subr.mxu0 0.0
      %2525 = vmatpush1.xpose.msra.mxu0 0.0
      %2526 = vmatprep.subr.mxu0 0.0
      %2527 = vmatpush1.xpose.msra.mxu0 0.0
      %2528 = vmatprep.subr.mxu0 0.0
      %2529 = vmatpush1.xpose.msra.mxu0 0.0
      %2530 = vmatprep.subr.mxu0 0.0
      %2531 = vmatpush1.xpose.msra.mxu0 0.0
      %2532 = vmatprep.subr.mxu0 0.0
      %2533 = vmatpush1.xpose.msra.mxu0 0.0
      %2534 = vmatprep.mubr.f32.mxu0 0.0
      %2535 = vmatmul.mubr.f32.gmra.mrb[0].mxu0 %v2459
      %v2536 = vpop.f32.mrb[0].mxu0
      %v2537 = vadd.f32 0.0, %v2536
      %v2538 = vpop.f32.mrb[0].mxu0
      %2539 = vmatprep.mubr.f32.mxu0 0.0
      %2540 = vmatmul.mubr.f32.gmra.mrb[0].mxu0 %v2462
      %v2541 = vpop.f32.mrb[0].mxu0
      %v2542 = vadd.f32 0.0, %v2541
      %v2543 = vpop.f32.mrb[0].mxu0
      %2544 = vdwg.mxu0
      %v2546 = vsel %vm1053, %v2060, 0
      %v2549 = vsel %vm1053, %v2065, 0
      %v2552 = vsel %vm1053, %v2168, 0
      %v2555 = vsel %vm1053, %v2173, 0
      %2557 = vmatprep.subr.mxu0 0.0
      %2558 = vmatpush1.xpose.msra.mxu0 %v2552
      %2559 = vmatprep.subr.mxu0 0.0
      %2560 = vmatpush1.xpose.msra.mxu0 %v2555
      %2561 = vmatprep.subr.mxu0 0.0
      %2562 = vmatpush1.xpose.msra.mxu0 0.0
      %2563 = vmatprep.subr.mxu0 0.0
      %2564 = vmatpush1.xpose.msra.mxu0 0.0
      %2565 = vmatprep.subr.mxu0 0.0
      %2566 = vmatpush1.xpose.msra.mxu0 0.0
      %2567 = vmatprep.subr.mxu0 0.0
      %2568 = vmatpush1.xpose.msra.mxu0 0.0
      %2569 = vmatprep.subr.mxu0 0.0
      %2570 = vmatpush1.xpose.msra.mxu0 0.0
      %2571 = vmatprep.subr.mxu0 0.0
      %2572 = vmatpush1.xpose.msra.mxu0 0.0
      %2573 = vmatprep.subr.mxu0 0.0
      %2574 = vmatpush1.xpose.msra.mxu0 0.0
      %2575 = vmatprep.subr.mxu0 0.0
      %2576 = vmatpush1.xpose.msra.mxu0 0.0
      %2577 = vmatprep.subr.mxu0 0.0
      %2578 = vmatpush1.xpose.msra.mxu0 0.0
      %2579 = vmatprep.subr.mxu0 0.0
      %2580 = vmatpush1.xpose.msra.mxu0 0.0
      %2581 = vmatprep.subr.mxu0 0.0
      %2582 = vmatpush1.xpose.msra.mxu0 0.0
      %2583 = vmatprep.subr.mxu0 0.0
      %2584 = vmatpush1.xpose.msra.mxu0 0.0
      %2585 = vmatprep.subr.mxu0 0.0
      %2586 = vmatpush1.xpose.msra.mxu0 0.0
      %2587 = vmatprep.subr.mxu0 0.0
      %2588 = vmatpush1.xpose.msra.mxu0 0.0
      %2589 = vmatprep.subr.mxu0 0.0
      %2590 = vmatpush1.xpose.msra.mxu0 0.0
      %2591 = vmatprep.subr.mxu0 0.0
      %2592 = vmatpush1.xpose.msra.mxu0 0.0
      %2593 = vmatprep.subr.mxu0 0.0
      %2594 = vmatpush1.xpose.msra.mxu0 0.0
      %2595 = vmatprep.subr.mxu0 0.0
      %2596 = vmatpush1.xpose.msra.mxu0 0.0
      %2597 = vmatprep.subr.mxu0 0.0
      %2598 = vmatpush1.xpose.msra.mxu0 0.0
      %2599 = vmatprep.subr.mxu0 0.0
      %2600 = vmatpush1.xpose.msra.mxu0 0.0
      %2601 = vmatprep.subr.mxu0 0.0
      %2602 = vmatpush1.xpose.msra.mxu0 0.0
      %2603 = vmatprep.subr.mxu0 0.0
      %2604 = vmatpush1.xpose.msra.mxu0 0.0
      %2605 = vmatprep.subr.mxu0 0.0
      %2606 = vmatpush1.xpose.msra.mxu0 0.0
      %2607 = vmatprep.subr.mxu0 0.0
      %2608 = vmatpush1.xpose.msra.mxu0 0.0
      %2609 = vmatprep.subr.mxu0 0.0
      %2610 = vmatpush1.xpose.msra.mxu0 0.0
      %2611 = vmatprep.subr.mxu0 0.0
      %2612 = vmatpush1.xpose.msra.mxu0 0.0
      %2613 = vmatprep.subr.mxu0 0.0
      %2614 = vmatpush1.xpose.msra.mxu0 0.0
      %2615 = vmatprep.subr.mxu0 0.0
      %2616 = vmatpush1.xpose.msra.mxu0 0.0
      %2617 = vmatprep.subr.mxu0 0.0
      %2618 = vmatpush1.xpose.msra.mxu0 0.0
      %2619 = vmatprep.subr.mxu0 0.0
      %2620 = vmatpush1.xpose.msra.mxu0 0.0
      %2621 = vmatprep.mubr.f32.mxu0 0.0
      %2622 = vmatmul.mubr.f32.gmra.mrb[0].mxu0 %v2546
      %v2623 = vpop.f32.mrb[0].mxu0
      %v2624 = vadd.f32 0.0, %v2623
      %v2625 = vpop.f32.mrb[0].mxu0
      %2626 = vmatprep.mubr.f32.mxu0 0.0
      %2627 = vmatmul.mubr.f32.gmra.mrb[0].mxu0 %v2549
      %v2628 = vpop.f32.mrb[0].mxu0
      %v2629 = vadd.f32 0.0, %v2628
      %v2630 = vpop.f32.mrb[0].mxu0
      %2631 = vdwg.mxu0
      %v2632 = vmul.f32 %v2363, 0.35355338
      %v2633 = vmul.f32 %v2368, 0.35355338
      %v2634 = vmul.f32 %v2450, 0.35355338
      %v2635 = vmul.f32 %v2455, 0.35355338
      %v2636 = vmul.f32 %v2537, 0.35355338
      %v2637 = vmul.f32 %v2542, 0.35355338
      %v2638 = vmul.f32 %v2624, 0.35355338
      %v2639 = vmul.f32 %v2629, 0.35355338
      %v2640 = vsel %vm559, %v2632, -inf
      %2641 = vmax.xlane.f32.xlu0 %v2640
      %v2642 = vpop.xlane.xlu0 %2641
      %v2643 = vsel %vm559, %v2633, -inf
      %2644 = vmax.xlane.f32.xlu0 %v2643
      %v2645 = vpop.xlane.xlu0 %2644
      %v2646 = vsel %vm559, %v2634, -inf
      %2647 = vmax.xlane.f32.xlu0 %v2646
      %v2648 = vpop.xlane.xlu0 %2647
      %v2649 = vsel %vm559, %v2635, -inf
      %2650 = vmax.xlane.f32.xlu0 %v2649
      %v2651 = vpop.xlane.xlu0 %2650
      %v2652 = vsel %vm559, %v2636, -inf
      %2653 = vmax.xlane.f32.xlu0 %v2652
      %v2654 = vpop.xlane.xlu0 %2653
      %v2655 = vsel %vm559, %v2637, -inf
      %2656 = vmax.xlane.f32.xlu0 %v2655
      %v2657 = vpop.xlane.xlu0 %2656
      %v2658 = vsel %vm559, %v2638, -inf
      %2659 = vmax.xlane.f32.xlu0 %v2658
      %v2660 = vpop.xlane.xlu0 %2659
      %v2661 = vsel %vm559, %v2639, -inf
      %2662 = vmax.xlane.f32.xlu0 %v2661
      %v2663 = vpop.xlane.xlu0 %2662
      %v2664 = vsub.f32 %v2632, %v2642
      %v2665 = vsub.f32 %v2633, %v2645
      %v2666 = vsub.f32 %v2634, %v2648
      %v2667 = vsub.f32 %v2635, %v2651
      %v2668 = vsub.f32 %v2636, %v2654
      %v2669 = vsub.f32 %v2637, %v2657
      %v2670 = vsub.f32 %v2638, %v2660
      %v2671 = vsub.f32 %v2639, %v2663
      %v2672 = vmul.f32 %v2664, 1.442695
      %v2673 = vpow.pop %v2672
      %v2674 = vmul.f32 %v2665, 1.442695
      %v2675 = vpow.pop %v2674
      %v2676 = vmul.f32 %v2666, 1.442695
      %v2677 = vpow.pop %v2676
      %v2678 = vmul.f32 %v2667, 1.442695
      %v2679 = vpow.pop %v2678
      %v2680 = vmul.f32 %v2668, 1.442695
      %v2681 = vpow.pop %v2680
      %v2682 = vmul.f32 %v2669, 1.442695
      %v2683 = vpow.pop %v2682
      %v2684 = vmul.f32 %v2670, 1.442695
      %v2685 = vpow.pop %v2684
      %v2686 = vmul.f32 %v2671, 1.442695
      %v2687 = vpow.pop %v2686
      %v2688 = vsel %vm559, %v2673, 0.0
      %2689 = vadd.xlane.f32.xlu0 %v2688
      %v2690 = vpop.xlane.xlu0 %2689
      %v2691 = vsel %vm559, %v2675, 0.0
      %2692 = vadd.xlane.f32.xlu0 %v2691
      %v2693 = vpop.xlane.xlu0 %2692
      %v2694 = vsel %vm559, %v2677, 0.0
      %2695 = vadd.xlane.f32.xlu0 %v2694
      %v2696 = vpop.xlane.xlu0 %2695
      %v2697 = vsel %vm559, %v2679, 0.0
      %2698 = vadd.xlane.f32.xlu0 %v2697
      %v2699 = vpop.xlane.xlu0 %2698
      %v2700 = vsel %vm559, %v2681, 0.0
      %2701 = vadd.xlane.f32.xlu0 %v2700
      %v2702 = vpop.xlane.xlu0 %2701
      %v2703 = vsel %vm559, %v2683, 0.0
      %2704 = vadd.xlane.f32.xlu0 %v2703
      %v2705 = vpop.xlane.xlu0 %2704
      %v2706 = vsel %vm559, %v2685, 0.0
      %2707 = vadd.xlane.f32.xlu0 %v2706
      %v2708 = vpop.xlane.xlu0 %2707
      %v2709 = vsel %vm559, %v2687, 0.0
      %2710 = vadd.xlane.f32.xlu0 %v2709
      %v2711 = vpop.xlane.xlu0 %2710
      %v2712 = vrcp.pop %v2690
      %v2713 = vmul.f32 %v2673, %v2712
      %v2714 = vrcp.pop %v2693
      %v2715 = vmul.f32 %v2675, %v2714
      %v2716 = vrcp.pop %v2696
      %v2717 = vmul.f32 %v2677, %v2716
      %v2718 = vrcp.pop %v2699
      %v2719 = vmul.f32 %v2679, %v2718
      %v2720 = vrcp.pop %v2702
      %v2721 = vmul.f32 %v2681, %v2720
      %v2722 = vrcp.pop %v2705
      %v2723 = vmul.f32 %v2683, %v2722
      %v2724 = vrcp.pop %v2708
      %v2725 = vmul.f32 %v2685, %v2724
      %v2726 = vrcp.pop %v2711
      %v2727 = vmul.f32 %v2687, %v2726
      %v2729 = vsel %vm559, %v2713, 0
      %v2732 = vsel %vm559, %v2715, 0
      %2734 = vmatprep.subr.mxu0 0.0
      %2735 = vmatpush1.msra.mxu0 %v2246
      %2736 = vmatprep.subr.mxu0 0.0
      %2737 = vmatpush1.msra.mxu0 %v2251
      %2738 = vmatprep.subr.mxu0 0.0
      %2739 = vmatpush1.msra.mxu0 0.0
      %2740 = vmatprep.subr.mxu0 0.0
      %2741 = vmatpush1.msra.mxu0 0.0
      %2742 = vmatprep.subr.mxu0 0.0
      %2743 = vmatpush1.msra.mxu0 0.0
      %2744 = vmatprep.subr.mxu0 0.0
      %2745 = vmatpush1.msra.mxu0 0.0
      %2746 = vmatprep.subr.mxu0 0.0
      %2747 = vmatpush1.msra.mxu0 0.0
      %2748 = vmatprep.subr.mxu0 0.0
      %2749 = vmatpush1.msra.mxu0 0.0
      %2750 = vmatprep.subr.mxu0 0.0
      %2751 = vmatpush1.msra.mxu0 0.0
      %2752 = vmatprep.subr.mxu0 0.0
      %2753 = vmatpush1.msra.mxu0 0.0
      %2754 = vmatprep.subr.mxu0 0.0
      %2755 = vmatpush1.msra.mxu0 0.0
      %2756 = vmatprep.subr.mxu0 0.0
      %2757 = vmatpush1.msra.mxu0 0.0
      %2758 = vmatprep.subr.mxu0 0.0
      %2759 = vmatpush1.msra.mxu0 0.0
      %2760 = vmatprep.subr.mxu0 0.0
      %2761 = vmatpush1.msra.mxu0 0.0
      %2762 = vmatprep.subr.mxu0 0.0
      %2763 = vmatpush1.msra.mxu0 0.0
      %2764 = vmatprep.subr.mxu0 0.0
      %2765 = vmatpush1.msra.mxu0 0.0
      %2766 = vmatprep.subr.mxu0 0.0
      %2767 = vmatpush1.msra.mxu0 0.0
      %2768 = vmatprep.subr.mxu0 0.0
      %2769 = vmatpush1.msra.mxu0 0.0
      %2770 = vmatprep.subr.mxu0 0.0
      %2771 = vmatpush1.msra.mxu0 0.0
      %2772 = vmatprep.subr.mxu0 0.0
      %2773 = vmatpush1.msra.mxu0 0.0
      %2774 = vmatprep.subr.mxu0 0.0
      %2775 = vmatpush1.msra.mxu0 0.0
      %2776 = vmatprep.subr.mxu0 0.0
      %2777 = vmatpush1.msra.mxu0 0.0
      %2778 = vmatprep.subr.mxu0 0.0
      %2779 = vmatpush1.msra.mxu0 0.0
      %2780 = vmatprep.subr.mxu0 0.0
      %2781 = vmatpush1.msra.mxu0 0.0
      %2782 = vmatprep.subr.mxu0 0.0
      %2783 = vmatpush1.msra.mxu0 0.0
      %2784 = vmatprep.subr.mxu0 0.0
      %2785 = vmatpush1.msra.mxu0 0.0
      %2786 = vmatprep.subr.mxu0 0.0
      %2787 = vmatpush1.msra.mxu0 0.0
      %2788 = vmatprep.subr.mxu0 0.0
      %2789 = vmatpush1.msra.mxu0 0.0
      %2790 = vmatprep.subr.mxu0 0.0
      %2791 = vmatpush1.msra.mxu0 0.0
      %2792 = vmatprep.subr.mxu0 0.0
      %2793 = vmatpush1.msra.mxu0 0.0
      %2794 = vmatprep.subr.mxu0 0.0
      %2795 = vmatpush1.msra.mxu0 0.0
      %2796 = vmatprep.subr.mxu0 0.0
      %2797 = vmatpush1.msra.mxu0 0.0
      %2798 = vmatprep.mubr.f32.mxu0 0.0
      %2799 = vmatmul.mubr.f32.gmra.mrb[0].mxu0 %v2729
      %v2800 = vpop.f32.mrb[0].mxu0
      %v2801 = vadd.f32 0.0, %v2800
      %v2802 = vpop.f32.mrb[0].mxu0
      %2803 = vmatprep.mubr.f32.mxu0 0.0
      %2804 = vmatmul.mubr.f32.gmra.mrb[0].mxu0 %v2732
      %v2805 = vpop.f32.mrb[0].mxu0
      %v2806 = vadd.f32 0.0, %v2805
      %v2807 = vpop.f32.mrb[0].mxu0
      %2808 = vdwg.mxu0
      %v2810 = vsel %vm559, %v2717, 0
      %v2813 = vsel %vm559, %v2719, 0
      %2815 = vmatprep.subr.mxu0 0.0
      %2816 = vmatpush1.msra.mxu0 %v2256
      %2817 = vmatprep.subr.mxu0 0.0
      %2818 = vmatpush1.msra.mxu0 %v2261
      %2819 = vmatprep.subr.mxu0 0.0
      %2820 = vmatpush1.msra.mxu0 0.0
      %2821 = vmatprep.subr.mxu0 0.0
      %2822 = vmatpush1.msra.mxu0 0.0
      %2823 = vmatprep.subr.mxu0 0.0
      %2824 = vmatpush1.msra.mxu0 0.0
      %2825 = vmatprep.subr.mxu0 0.0
      %2826 = vmatpush1.msra.mxu0 0.0
      %2827 = vmatprep.subr.mxu0 0.0
      %2828 = vmatpush1.msra.mxu0 0.0
      %2829 = vmatprep.subr.mxu0 0.0
      %2830 = vmatpush1.msra.mxu0 0.0
      %2831 = vmatprep.subr.mxu0 0.0
      %2832 = vmatpush1.msra.mxu0 0.0
      %2833 = vmatprep.subr.mxu0 0.0
      %2834 = vmatpush1.msra.mxu0 0.0
      %2835 = vmatprep.subr.mxu0 0.0
      %2836 = vmatpush1.msra.mxu0 0.0
      %2837 = vmatprep.subr.mxu0 0.0
      %2838 = vmatpush1.msra.mxu0 0.0
      %2839 = vmatprep.subr.mxu0 0.0
      %2840 = vmatpush1.msra.mxu0 0.0
      %2841 = vmatprep.subr.mxu0 0.0
      %2842 = vmatpush1.msra.mxu0 0.0
      %2843 = vmatprep.subr.mxu0 0.0
      %2844 = vmatpush1.msra.mxu0 0.0
      %2845 = vmatprep.subr.mxu0 0.0
      %2846 = vmatpush1.msra.mxu0 0.0
      %2847 = vmatprep.subr.mxu0 0.0
      %2848 = vmatpush1.msra.mxu0 0.0
      %2849 = vmatprep.subr.mxu0 0.0
      %2850 = vmatpush1.msra.mxu0 0.0
      %2851 = vmatprep.subr.mxu0 0.0
      %2852 = vmatpush1.msra.mxu0 0.0
      %2853 = vmatprep.subr.mxu0 0.0
      %2854 = vmatpush1.msra.mxu0 0.0
      %2855 = vmatprep.subr.mxu0 0.0
      %2856 = vmatpush1.msra.mxu0 0.0
      %2857 = vmatprep.subr.mxu0 0.0
      %2858 = vmatpush1.msra.mxu0 0.0
      %2859 = vmatprep.subr.mxu0 0.0
      %2860 = vmatpush1.msra.mxu0 0.0
      %2861 = vmatprep.subr.mxu0 0.0
      %2862 = vmatpush1.msra.mxu0 0.0
      %2863 = vmatprep.subr.mxu0 0.0
      %2864 = vmatpush1.msra.mxu0 0.0
      %2865 = vmatprep.subr.mxu0 0.0
      %2866 = vmatpush1.msra.mxu0 0.0
      %2867 = vmatprep.subr.mxu0 0.0
      %2868 = vmatpush1.msra.mxu0 0.0
      %2869 = vmatprep.subr.mxu0 0.0
      %2870 = vmatpush1.msra.mxu0 0.0
      %2871 = vmatprep.subr.mxu0 0.0
      %2872 = vmatpush1.msra.mxu0 0.0
      %2873 = vmatprep.subr.mxu0 0.0
      %2874 = vmatpush1.msra.mxu0 0.0
      %2875 = vmatprep.subr.mxu0 0.0
      %2876 = vmatpush1.msra.mxu0 0.0
      %2877 = vmatprep.subr.mxu0 0.0
      %2878 = vmatpush1.msra.mxu0 0.0
      %2879 = vmatprep.mubr.f32.mxu0 0.0
      %2880 = vmatmul.mubr.f32.gmra.mrb[0].mxu0 %v2810
      %v2881 = vpop.f32.mrb[0].mxu0
      %v2882 = vadd.f32 0.0, %v2881
      %v2883 = vpop.f32.mrb[0].mxu0
      %2884 = vmatprep.mubr.f32.mxu0 0.0
      %2885 = vmatmul.mubr.f32.gmra.mrb[0].mxu0 %v2813
      %v2886 = vpop.f32.mrb[0].mxu0
      %v2887 = vadd.f32 0.0, %v2886
      %v2888 = vpop.f32.mrb[0].mxu0
      %2889 = vdwg.mxu0
      %v2891 = vsel %vm559, %v2721, 0
      %v2894 = vsel %vm559, %v2723, 0
      %2896 = vmatprep.subr.mxu0 0.0
      %2897 = vmatpush1.msra.mxu0 %v2266
      %2898 = vmatprep.subr.mxu0 0.0
      %2899 = vmatpush1.msra.mxu0 %v2271
      %2900 = vmatprep.subr.mxu0 0.0
      %2901 = vmatpush1.msra.mxu0 0.0
      %2902 = vmatprep.subr.mxu0 0.0
      %2903 = vmatpush1.msra.mxu0 0.0
      %2904 = vmatprep.subr.mxu0 0.0
      %2905 = vmatpush1.msra.mxu0 0.0
      %2906 = vmatprep.subr.mxu0 0.0
      %2907 = vmatpush1.msra.mxu0 0.0
      %2908 = vmatprep.subr.mxu0 0.0
      %2909 = vmatpush1.msra.mxu0 0.0
      %2910 = vmatprep.subr.mxu0 0.0
      %2911 = vmatpush1.msra.mxu0 0.0
      %2912 = vmatprep.subr.mxu0 0.0
      %2913 = vmatpush1.msra.mxu0 0.0
      %2914 = vmatprep.subr.mxu0 0.0
      %2915 = vmatpush1.msra.mxu0 0.0
      %2916 = vmatprep.subr.mxu0 0.0
      %2917 = vmatpush1.msra.mxu0 0.0
      %2918 = vmatprep.subr.mxu0 0.0
      %2919 = vmatpush1.msra.mxu0 0.0
      %2920 = vmatprep.subr.mxu0 0.0
      %2921 = vmatpush1.msra.mxu0 0.0
      %2922 = vmatprep.subr.mxu0 0.0
      %2923 = vmatpush1.msra.mxu0 0.0
      %2924 = vmatprep.subr.mxu0 0.0
      %2925 = vmatpush1.msra.mxu0 0.0
      %2926 = vmatprep.subr.mxu0 0.0
      %2927 = vmatpush1.msra.mxu0 0.0
      %2928 = vmatprep.subr.mxu0 0.0
      %2929 = vmatpush1.msra.mxu0 0.0
      %2930 = vmatprep.subr.mxu0 0.0
      %2931 = vmatpush1.msra.mxu0 0.0
      %2932 = vmatprep.subr.mxu0 0.0
      %2933 = vmatpush1.msra.mxu0 0.0
      %2934 = vmatprep.subr.mxu0 0.0
      %2935 = vmatpush1.msra.mxu0 0.0
      %2936 = vmatprep.subr.mxu0 0.0
      %2937 = vmatpush1.msra.mxu0 0.0
      %2938 = vmatprep.subr.mxu0 0.0
      %2939 = vmatpush1.msra.mxu0 0.0
      %2940 = vmatprep.subr.mxu0 0.0
      %2941 = vmatpush1.msra.mxu0 0.0
      %2942 = vmatprep.subr.mxu0 0.0
      %2943 = vmatpush1.msra.mxu0 0.0
      %2944 = vmatprep.subr.mxu0 0.0
      %2945 = vmatpush1.msra.mxu0 0.0
      %2946 = vmatprep.subr.mxu0 0.0
      %2947 = vmatpush1.msra.mxu0 0.0
      %2948 = vmatprep.subr.mxu0 0.0
      %2949 = vmatpush1.msra.mxu0 0.0
      %2950 = vmatprep.subr.mxu0 0.0
      %2951 = vmatpush1.msra.mxu0 0.0
      %2952 = vmatprep.subr.mxu0 0.0
      %2953 = vmatpush1.msra.mxu0 0.0
      %2954 = vmatprep.subr.mxu0 0.0
      %2955 = vmatpush1.msra.mxu0 0.0
      %2956 = vmatprep.subr.mxu0 0.0
      %2957 = vmatpush1.msra.mxu0 0.0
      %2958 = vmatprep.subr.mxu0 0.0
      %2959 = vmatpush1.msra.mxu0 0.0
      %2960 = vmatprep.mubr.f32.mxu0 0.0
      %2961 = vmatmul.mubr.f32.gmra.mrb[0].mxu0 %v2891
      %v2962 = vpop.f32.mrb[0].mxu0
      %v2963 = vadd.f32 0.0, %v2962
      %v2964 = vpop.f32.mrb[0].mxu0
      %2965 = vmatprep.mubr.f32.mxu0 0.0
      %2966 = vmatmul.mubr.f32.gmra.mrb[0].mxu0 %v2894
      %v2967 = vpop.f32.mrb[0].mxu0
      %v2968 = vadd.f32 0.0, %v2967
      %v2969 = vpop.f32.mrb[0].mxu0
      %2970 = vdwg.mxu0
      %v2972 = vsel %vm559, %v2725, 0
      %v2975 = vsel %vm559, %v2727, 0
      %2977 = vmatprep.subr.mxu0 0.0
      %2978 = vmatpush1.msra.mxu0 %v2276
      %2979 = vmatprep.subr.mxu0 0.0
      %2980 = vmatpush1.msra.mxu0 %v2281
      %2981 = vmatprep.subr.mxu0 0.0
      %2982 = vmatpush1.msra.mxu0 0.0
      %2983 = vmatprep.subr.mxu0 0.0
      %2984 = vmatpush1.msra.mxu0 0.0
      %2985 = vmatprep.subr.mxu0 0.0
      %2986 = vmatpush1.msra.mxu0 0.0
      %2987 = vmatprep.subr.mxu0 0.0
      %2988 = vmatpush1.msra.mxu0 0.0
      %2989 = vmatprep.subr.mxu0 0.0
      %2990 = vmatpush1.msra.mxu0 0.0
      %2991 = vmatprep.subr.mxu0 0.0
      %2992 = vmatpush1.msra.mxu0 0.0
      %2993 = vmatprep.subr.mxu0 0.0
      %2994 = vmatpush1.msra.mxu0 0.0
      %2995 = vmatprep.subr.mxu0 0.0
      %2996 = vmatpush1.msra.mxu0 0.0
      %2997 = vmatprep.subr.mxu0 0.0
      %2998 = vmatpush1.msra.mxu0 0.0
      %2999 = vmatprep.subr.mxu0 0.0
      %3000 = vmatpush1.msra.mxu0 0.0
      %3001 = vmatprep.subr.mxu0 0.0
      %3002 = vmatpush1.msra.mxu0 0.0
      %3003 = vmatprep.subr.mxu0 0.0
      %3004 = vmatpush1.msra.mxu0 0.0
      %3005 = vmatprep.subr.mxu0 0.0
      %3006 = vmatpush1.msra.mxu0 0.0
      %3007 = vmatprep.subr.mxu0 0.0
      %3008 = vmatpush1.msra.mxu0 0.0
      %3009 = vmatprep.subr.mxu0 0.0
      %3010 = vmatpush1.msra.mxu0 0.0
      %3011 = vmatprep.subr.mxu0 0.0
      %3012 = vmatpush1.msra.mxu0 0.0
      %3013 = vmatprep.subr.mxu0 0.0
      %3014 = vmatpush1.msra.mxu0 0.0
      %3015 = vmatprep.subr.mxu0 0.0
      %3016 = vmatpush1.msra.mxu0 0.0
      %3017 = vmatprep.subr.mxu0 0.0
      %3018 = vmatpush1.msra.mxu0 0.0
      %3019 = vmatprep.subr.mxu0 0.0
      %3020 = vmatpush1.msra.mxu0 0.0
      %3021 = vmatprep.subr.mxu0 0.0
      %3022 = vmatpush1.msra.mxu0 0.0
      %3023 = vmatprep.subr.mxu0 0.0
      %3024 = vmatpush1.msra.mxu0 0.0
      %3025 = vmatprep.subr.mxu0 0.0
      %3026 = vmatpush1.msra.mxu0 0.0
      %3027 = vmatprep.subr.mxu0 0.0
      %3028 = vmatpush1.msra.mxu0 0.0
      %3029 = vmatprep.subr.mxu0 0.0
      %3030 = vmatpush1.msra.mxu0 0.0
      %3031 = vmatprep.subr.mxu0 0.0
      %3032 = vmatpush1.msra.mxu0 0.0
      %3033 = vmatprep.subr.mxu0 0.0
      %3034 = vmatpush1.msra.mxu0 0.0
      %3035 = vmatprep.subr.mxu0 0.0
      %3036 = vmatpush1.msra.mxu0 0.0
      %3037 = vmatprep.subr.mxu0 0.0
      %3038 = vmatpush1.msra.mxu0 0.0
      %3039 = vmatprep.subr.mxu0 0.0
      %3040 = vmatpush1.msra.mxu0 0.0
      %3041 = vmatprep.mubr.f32.mxu0 0.0
      %3042 = vmatmul.mubr.f32.gmra.mrb[0].mxu0 %v2972
      %v3043 = vpop.f32.mrb[0].mxu0
      %v3044 = vadd.f32 0.0, %v3043
      %v3045 = vpop.f32.mrb[0].mxu0
      %3046 = vmatprep.mubr.f32.mxu0 0.0
      %3047 = vmatmul.mubr.f32.gmra.mrb[0].mxu0 %v2975
      %v3048 = vpop.f32.mrb[0].mxu0
      %v3049 = vadd.f32 0.0, %v3048
      %v3050 = vpop.f32.mrb[0].mxu0
      %3051 = vdwg.mxu0
      %s3052 = scalar_lea.vmem %s6, 8
      %v3053 = vld [vmem:[%s3052] sm:$0xff]
      %v3055 = vsel %vm1053, %v2801, 0
      %v3058 = vsel %vm1053, %v2806, 0
      %v3061 = vsel %vm1053, %v2882, 0
      %v3064 = vsel %vm1053, %v2887, 0
      %v3067 = vsel %vm1053, %v2963, 0
      %v3070 = vsel %vm1053, %v2968, 0
      %v3073 = vsel %vm1053, %v3044, 0
      %v3076 = vsel %vm1053, %v3049, 0
      %3078 = vmatprep.subr.mxu0 0.0
      %3079 = vmatpush1.msra.mxu0 %v3053
      %3080 = vmatprep.subr.mxu0 0.0
      %3081 = vmatpush1.msra.mxu0 0.0
      %3082 = vmatprep.subr.mxu0 0.0
      %3083 = vmatpush1.msra.mxu0 0.0
      %3084 = vmatprep.subr.mxu0 0.0
      %3085 = vmatpush1.msra.mxu0 0.0
      %3086 = vmatprep.subr.mxu0 0.0
      %3087 = vmatpush1.msra.mxu0 0.0
      %3088 = vmatprep.subr.mxu0 0.0
      %3089 = vmatpush1.msra.mxu0 0.0
      %3090 = vmatprep.subr.mxu0 0.0
      %3091 = vmatpush1.msra.mxu0 0.0
      %3092 = vmatprep.subr.mxu0 0.0
      %3093 = vmatpush1.msra.mxu0 0.0
      %3094 = vmatprep.subr.mxu0 0.0
      %3095 = vmatpush1.msra.mxu0 0.0
      %3096 = vmatprep.subr.mxu0 0.0
      %3097 = vmatpush1.msra.mxu0 0.0
      %3098 = vmatprep.subr.mxu0 0.0
      %3099 = vmatpush1.msra.mxu0 0.0
      %3100 = vmatprep.subr.mxu0 0.0
      %3101 = vmatpush1.msra.mxu0 0.0
      %3102 = vmatprep.subr.mxu0 0.0
      %3103 = vmatpush1.msra.mxu0 0.0
      %3104 = vmatprep.subr.mxu0 0.0
      %3105 = vmatpush1.msra.mxu0 0.0
      %3106 = vmatprep.subr.mxu0 0.0
      %3107 = vmatpush1.msra.mxu0 0.0
      %3108 = vmatprep.subr.mxu0 0.0
      %3109 = vmatpush1.msra.mxu0 0.0
      %3110 = vmatprep.subr.mxu0 0.0
      %3111 = vmatpush1.msra.mxu0 0.0
      %3112 = vmatprep.subr.mxu0 0.0
      %3113 = vmatpush1.msra.mxu0 0.0
      %3114 = vmatprep.subr.mxu0 0.0
      %3115 = vmatpush1.msra.mxu0 0.0
      %3116 = vmatprep.subr.mxu0 0.0
      %3117 = vmatpush1.msra.mxu0 0.0
      %3118 = vmatprep.subr.mxu0 0.0
      %3119 = vmatpush1.msra.mxu0 0.0
      %3120 = vmatprep.subr.mxu0 0.0
      %3121 = vmatpush1.msra.mxu0 0.0
      %3122 = vmatprep.subr.mxu0 0.0
      %3123 = vmatpush1.msra.mxu0 0.0
      %3124 = vmatprep.subr.mxu0 0.0
      %3125 = vmatpush1.msra.mxu0 0.0
      %3126 = vmatprep.subr.mxu0 0.0
      %3127 = vmatpush1.msra.mxu0 0.0
      %3128 = vmatprep.subr.mxu0 0.0
      %3129 = vmatpush1.msra.mxu0 0.0
      %3130 = vmatprep.subr.mxu0 0.0
      %3131 = vmatpush1.msra.mxu0 0.0
      %3132 = vmatprep.subr.mxu0 0.0
      %3133 = vmatpush1.msra.mxu0 0.0
      %3134 = vmatprep.subr.mxu0 0.0
      %3135 = vmatpush1.msra.mxu0 0.0
      %3136 = vmatprep.subr.mxu0 0.0
      %3137 = vmatpush1.msra.mxu0 0.0
      %3138 = vmatprep.subr.mxu0 0.0
      %3139 = vmatpush1.msra.mxu0 0.0
      %3140 = vmatprep.subr.mxu0 0.0
      %3141 = vmatpush1.msra.mxu0 0.0
      %3142 = vmatprep.mubr.f32.mxu0 0.0
      %3143 = vmatmul.mubr.f32.gmra.mrb[0].mxu0 %v3055
      %v3144 = vpop.f32.mrb[0].mxu0
      %v3145 = vadd.f32 0.0, %v3144
      %v3146 = vpop.f32.mrb[0].mxu0
      %3147 = vmatprep.mubr.f32.mxu0 0.0
      %3148 = vmatmul.mubr.f32.gmra.mrb[0].mxu0 %v3058
      %v3149 = vpop.f32.mrb[0].mxu0
      %v3150 = vadd.f32 0.0, %v3149
      %v3151 = vpop.f32.mrb[0].mxu0
      %3152 = vmatprep.mubr.f32.mxu0 0.0
      %3153 = vmatmul.mubr.f32.gmra.mrb[0].mxu0 %v3061
      %v3154 = vpop.f32.mrb[0].mxu0
      %v3155 = vadd.f32 0.0, %v3154
      %v3156 = vpop.f32.mrb[0].mxu0
      %3157 = vmatprep.mubr.f32.mxu0 0.0
      %3158 = vmatmul.mubr.f32.gmra.mrb[0].mxu0 %v3064
      %v3159 = vpop.f32.mrb[0].mxu0
      %v3160 = vadd.f32 0.0, %v3159
      %v3161 = vpop.f32.mrb[0].mxu0
      %3162 = vmatprep.mubr.f32.mxu0 0.0
      %3163 = vmatmul.mubr.f32.gmra.mrb[0].mxu0 %v3067
      %v3164 = vpop.f32.mrb[0].mxu0
      %v3165 = vadd.f32 0.0, %v3164
      %v3166 = vpop.f32.mrb[0].mxu0
      %3167 = vmatprep.mubr.f32.mxu0 0.0
      %3168 = vmatmul.mubr.f32.gmra.mrb[0].mxu0 %v3070
      %v3169 = vpop.f32.mrb[0].mxu0
      %v3170 = vadd.f32 0.0, %v3169
      %v3171 = vpop.f32.mrb[0].mxu0
      %3172 = vmatprep.mubr.f32.mxu0 0.0
      %3173 = vmatmul.mubr.f32.gmra.mrb[0].mxu0 %v3073
      %v3174 = vpop.f32.mrb[0].mxu0
      %v3175 = vadd.f32 0.0, %v3174
      %v3176 = vpop.f32.mrb[0].mxu0
      %3177 = vmatprep.mubr.f32.mxu0 0.0
      %3178 = vmatmul.mubr.f32.gmra.mrb[0].mxu0 %v3076
      %v3179 = vpop.f32.mrb[0].mxu0
      %v3180 = vadd.f32 0.0, %v3179
      %v3181 = vpop.f32.mrb[0].mxu0
      %3182 = vdwg.mxu0
      %v3183 = vadd.f32 %v1952, %v3145
      %v3184 = vadd.f32 %v1953, %v3150
      %v3185 = vadd.f32 %v1954, %v3155
      %v3186 = vadd.f32 %v1955, %v3160
      %v3187 = vadd.f32 %v1956, %v3165
      %v3188 = vadd.f32 %v1957, %v3170
      %v3189 = vadd.f32 %v1958, %v3175
      %v3190 = vadd.f32 %v1959, %v3180
      %s3191 = scalar_lea.vmem %s3, 32
      %v3192 = vld [vmem:[%s3191] sm:$0xff]
      %v3193 = vld [vmem:[%s3191 + $0x8] sm:$0xff]
      %3194 = vmatprep.subr.mxu0 0.0
      %3195 = vmatpush1.msra.mxu0 %v3192
      %3196 = vmatprep.subr.mxu0 0.0
      %3197 = vmatpush1.msra.mxu0 %v3193
      %3198 = vmatprep.subr.mxu0 0.0
      %3199 = vmatpush1.msra.mxu0 0.0
      %3200 = vmatprep.subr.mxu0 0.0
      %3201 = vmatpush1.msra.mxu0 0.0
      %3202 = vmatprep.subr.mxu0 0.0
      %3203 = vmatpush1.msra.mxu0 0.0
      %3204 = vmatprep.subr.mxu0 0.0
      %3205 = vmatpush1.msra.mxu0 0.0
      %3206 = vmatprep.subr.mxu0 0.0
      %3207 = vmatpush1.msra.mxu0 0.0
      %3208 = vmatprep.subr.mxu0 0.0
      %3209 = vmatpush1.msra.mxu0 0.0
      %3210 = vmatprep.subr.mxu0 0.0
      %3211 = vmatpush1.msra.mxu0 0.0
      %3212 = vmatprep.subr.mxu0 0.0
      %3213 = vmatpush1.msra.mxu0 0.0
      %3214 = vmatprep.subr.mxu0 0.0
      %3215 = vmatpush1.msra.mxu0 0.0
      %3216 = vmatprep.subr.mxu0 0.0
      %3217 = vmatpush1.msra.mxu0 0.0
      %3218 = vmatprep.subr.mxu0 0.0
      %3219 = vmatpush1.msra.mxu0 0.0
      %3220 = vmatprep.subr.mxu0 0.0
      %3221 = vmatpush1.msra.mxu0 0.0
      %3222 = vmatprep.subr.mxu0 0.0
      %3223 = vmatpush1.msra.mxu0 0.0
      %3224 = vmatprep.subr.mxu0 0.0
      %3225 = vmatpush1.msra.mxu0 0.0
      %3226 = vmatprep.subr.mxu0 0.0
      %3227 = vmatpush1.msra.mxu0 0.0
      %3228 = vmatprep.subr.mxu0 0.0
      %3229 = vmatpush1.msra.mxu0 0.0
      %3230 = vmatprep.subr.mxu0 0.0
      %3231 = vmatpush1.msra.mxu0 0.0
      %3232 = vmatprep.subr.mxu0 0.0
      %3233 = vmatpush1.msra.mxu0 0.0
      %3234 = vmatprep.subr.mxu0 0.0
      %3235 = vmatpush1.msra.mxu0 0.0
      %3236 = vmatprep.subr.mxu0 0.0
      %3237 = vmatpush1.msra.mxu0 0.0
      %3238 = vmatprep.subr.mxu0 0.0
      %3239 = vmatpush1.msra.mxu0 0.0
      %3240 = vmatprep.subr.mxu0 0.0
      %3241 = vmatpush1.msra.mxu0 0.0
      %3242 = vmatprep.subr.mxu0 0.0
      %3243 = vmatpush1.msra.mxu0 0.0
      %3244 = vmatprep.subr.mxu0 0.0
      %3245 = vmatpush1.msra.mxu0 0.0
      %3246 = vmatprep.subr.mxu0 0.0
      %3247 = vmatpush1.msra.mxu0 0.0
      %3248 = vmatprep.subr.mxu0 0.0
      %3249 = vmatpush1.msra.mxu0 0.0
      %3250 = vmatprep.subr.mxu0 0.0
      %3251 = vmatpush1.msra.mxu0 0.0
      %3252 = vmatprep.subr.mxu0 0.0
      %3253 = vmatpush1.msra.mxu0 0.0
      %3254 = vmatprep.subr.mxu0 0.0
      %3255 = vmatpush1.msra.mxu0 0.0
      %3256 = vmatprep.subr.mxu0 0.0
      %3257 = vmatpush1.msra.mxu0 0.0
      %3258 = vmatprep.mubr.f32.mxu0 0.0
      %3259 = vmatmul.mubr.f32.gmra.mrb[0].mxu0 %v711
      %v3260 = vpop.f32.mrb[0].mxu0
      %v3261 = vadd.f32 0.0, %v3260
      %v3262 = vpop.f32.mrb[0].mxu0
      %3263 = vmatprep.mubr.f32.mxu0 0.0
      %3264 = vmatmul.mubr.f32.gmra.mrb[0].mxu0 %v714
      %v3265 = vpop.f32.mrb[0].mxu0
      %v3266 = vadd.f32 0.0, %v3265
      %v3267 = vpop.f32.mrb[0].mxu0
      %3268 = vmatprep.mubr.f32.mxu0 0.0
      %3269 = vmatmul.mubr.f32.gmra.mrb[0].mxu0 %v717
      %v3270 = vpop.f32.mrb[0].mxu0
      %v3271 = vadd.f32 0.0, %v3270
      %v3272 = vpop.f32.mrb[0].mxu0
      %3273 = vmatprep.mubr.f32.mxu0 0.0
      %3274 = vmatmul.mubr.f32.gmra.mrb[0].mxu0 %v720
      %v3275 = vpop.f32.mrb[0].mxu0
      %v3276 = vadd.f32 0.0, %v3275
      %v3277 = vpop.f32.mrb[0].mxu0
      %3278 = vmatprep.mubr.f32.mxu0 0.0
      %3279 = vmatmul.mubr.f32.gmra.mrb[0].mxu0 %v723
      %v3280 = vpop.f32.mrb[0].mxu0
      %v3281 = vadd.f32 0.0, %v3280
      %v3282 = vpop.f32.mrb[0].mxu0
      %3283 = vmatprep.mubr.f32.mxu0 0.0
      %3284 = vmatmul.mubr.f32.gmra.mrb[0].mxu0 %v726
      %v3285 = vpop.f32.mrb[0].mxu0
      %v3286 = vadd.f32 0.0, %v3285
      %v3287 = vpop.f32.mrb[0].mxu0
      %3288 = vmatprep.mubr.f32.mxu0 0.0
      %3289 = vmatmul.mubr.f32.gmra.mrb[0].mxu0 %v729
      %v3290 = vpop.f32.mrb[0].mxu0
      %v3291 = vadd.f32 0.0, %v3290
      %v3292 = vpop.f32.mrb[0].mxu0
      %3293 = vmatprep.mubr.f32.mxu0 0.0
      %3294 = vmatmul.mubr.f32.gmra.mrb[0].mxu0 %v732
      %v3295 = vpop.f32.mrb[0].mxu0
      %v3296 = vadd.f32 0.0, %v3295
      %v3297 = vpop.f32.mrb[0].mxu0
      %3298 = vdwg.mxu0
      %s3299 = scalar_lea.vmem %s4, 32
      %v3300 = vld [vmem:[%s3299] sm:$0xff]
      %v3301 = vld [vmem:[%s3299 + $0x8] sm:$0xff]
      %3302 = vmatprep.subr.mxu0 0.0
      %3303 = vmatpush1.msra.mxu0 %v3300
      %3304 = vmatprep.subr.mxu0 0.0
      %3305 = vmatpush1.msra.mxu0 %v3301
      %3306 = vmatprep.subr.mxu0 0.0
      %3307 = vmatpush1.msra.mxu0 0.0
      %3308 = vmatprep.subr.mxu0 0.0
      %3309 = vmatpush1.msra.mxu0 0.0
      %3310 = vmatprep.subr.mxu0 0.0
      %3311 = vmatpush1.msra.mxu0 0.0
      %3312 = vmatprep.subr.mxu0 0.0
      %3313 = vmatpush1.msra.mxu0 0.0
      %3314 = vmatprep.subr.mxu0 0.0
      %3315 = vmatpush1.msra.mxu0 0.0
      %3316 = vmatprep.subr.mxu0 0.0
      %3317 = vmatpush1.msra.mxu0 0.0
      %3318 = vmatprep.subr.mxu0 0.0
      %3319 = vmatpush1.msra.mxu0 0.0
      %3320 = vmatprep.subr.mxu0 0.0
      %3321 = vmatpush1.msra.mxu0 0.0
      %3322 = vmatprep.subr.mxu0 0.0
      %3323 = vmatpush1.msra.mxu0 0.0
      %3324 = vmatprep.subr.mxu0 0.0
      %3325 = vmatpush1.msra.mxu0 0.0
      %3326 = vmatprep.subr.mxu0 0.0
      %3327 = vmatpush1.msra.mxu0 0.0
      %3328 = vmatprep.subr.mxu0 0.0
      %3329 = vmatpush1.msra.mxu0 0.0
      %3330 = vmatprep.subr.mxu0 0.0
      %3331 = vmatpush1.msra.mxu0 0.0
      %3332 = vmatprep.subr.mxu0 0.0
      %3333 = vmatpush1.msra.mxu0 0.0
      %3334 = vmatprep.subr.mxu0 0.0
      %3335 = vmatpush1.msra.mxu0 0.0
      %3336 = vmatprep.subr.mxu0 0.0
      %3337 = vmatpush1.msra.mxu0 0.0
      %3338 = vmatprep.subr.mxu0 0.0
      %3339 = vmatpush1.msra.mxu0 0.0
      %3340 = vmatprep.subr.mxu0 0.0
      %3341 = vmatpush1.msra.mxu0 0.0
      %3342 = vmatprep.subr.mxu0 0.0
      %3343 = vmatpush1.msra.mxu0 0.0
      %3344 = vmatprep.subr.mxu0 0.0
      %3345 = vmatpush1.msra.mxu0 0.0
      %3346 = vmatprep.subr.mxu0 0.0
      %3347 = vmatpush1.msra.mxu0 0.0
      %3348 = vmatprep.subr.mxu0 0.0
      %3349 = vmatpush1.msra.mxu0 0.0
      %3350 = vmatprep.subr.mxu0 0.0
      %3351 = vmatpush1.msra.mxu0 0.0
      %3352 = vmatprep.subr.mxu0 0.0
      %3353 = vmatpush1.msra.mxu0 0.0
      %3354 = vmatprep.subr.mxu0 0.0
      %3355 = vmatpush1.msra.mxu0 0.0
      %3356 = vmatprep.subr.mxu0 0.0
      %3357 = vmatpush1.msra.mxu0 0.0
      %3358 = vmatprep.subr.mxu0 0.0
      %3359 = vmatpush1.msra.mxu0 0.0
      %3360 = vmatprep.subr.mxu0 0.0
      %3361 = vmatpush1.msra.mxu0 0.0
      %3362 = vmatprep.subr.mxu0 0.0
      %3363 = vmatpush1.msra.mxu0 0.0
      %3364 = vmatprep.subr.mxu0 0.0
      %3365 = vmatpush1.msra.mxu0 0.0
      %3366 = vmatprep.mubr.f32.mxu0 0.0
      %3367 = vmatmul.mubr.f32.gmra.mrb[0].mxu0 %v711
      %v3368 = vpop.f32.mrb[0].mxu0
      %v3369 = vadd.f32 0.0, %v3368
      %v3370 = vpop.f32.mrb[0].mxu0
      %3371 = vmatprep.mubr.f32.mxu0 0.0
      %3372 = vmatmul.mubr.f32.gmra.mrb[0].mxu0 %v714
      %v3373 = vpop.f32.mrb[0].mxu0
      %v3374 = vadd.f32 0.0, %v3373
      %v3375 = vpop.f32.mrb[0].mxu0
      %3376 = vmatprep.mubr.f32.mxu0 0.0
      %3377 = vmatmul.mubr.f32.gmra.mrb[0].mxu0 %v717
      %v3378 = vpop.f32.mrb[0].mxu0
      %v3379 = vadd.f32 0.0, %v3378
      %v3380 = vpop.f32.mrb[0].mxu0
      %3381 = vmatprep.mubr.f32.mxu0 0.0
      %3382 = vmatmul.mubr.f32.gmra.mrb[0].mxu0 %v720
      %v3383 = vpop.f32.mrb[0].mxu0
      %v3384 = vadd.f32 0.0, %v3383
      %v3385 = vpop.f32.mrb[0].mxu0
      %3386 = vmatprep.mubr.f32.mxu0 0.0
      %3387 = vmatmul.mubr.f32.gmra.mrb[0].mxu0 %v723
      %v3388 = vpop.f32.mrb[0].mxu0
      %v3389 = vadd.f32 0.0, %v3388
      %v3390 = vpop.f32.mrb[0].mxu0
      %3391 = vmatprep.mubr.f32.mxu0 0.0
      %3392 = vmatmul.mubr.f32.gmra.mrb[0].mxu0 %v726
      %v3393 = vpop.f32.mrb[0].mxu0
      %v3394 = vadd.f32 0.0, %v3393
      %v3395 = vpop.f32.mrb[0].mxu0
      %3396 = vmatprep.mubr.f32.mxu0 0.0
      %3397 = vmatmul.mubr.f32.gmra.mrb[0].mxu0 %v729
      %v3398 = vpop.f32.mrb[0].mxu0
      %v3399 = vadd.f32 0.0, %v3398
      %v3400 = vpop.f32.mrb[0].mxu0
      %3401 = vmatprep.mubr.f32.mxu0 0.0
      %3402 = vmatmul.mubr.f32.gmra.mrb[0].mxu0 %v732
      %v3403 = vpop.f32.mrb[0].mxu0
      %v3404 = vadd.f32 0.0, %v3403
      %v3405 = vpop.f32.mrb[0].mxu0
      %3406 = vdwg.mxu0
      %s3407 = scalar_lea.vmem %s5, 32
      %v3408 = vld [vmem:[%s3407] sm:$0xff]
      %v3409 = vld [vmem:[%s3407 + $0x8] sm:$0xff]
      %3410 = vmatprep.subr.mxu0 0.0
      %3411 = vmatpush1.msra.mxu0 %v3408
      %3412 = vmatprep.subr.mxu0 0.0
      %3413 = vmatpush1.msra.mxu0 %v3409
      %3414 = vmatprep.subr.mxu0 0.0
      %3415 = vmatpush1.msra.mxu0 0.0
      %3416 = vmatprep.subr.mxu0 0.0
      %3417 = vmatpush1.msra.mxu0 0.0
      %3418 = vmatprep.subr.mxu0 0.0
      %3419 = vmatpush1.msra.mxu0 0.0
      %3420 = vmatprep.subr.mxu0 0.0
      %3421 = vmatpush1.msra.mxu0 0.0
      %3422 = vmatprep.subr.mxu0 0.0
      %3423 = vmatpush1.msra.mxu0 0.0
      %3424 = vmatprep.subr.mxu0 0.0
      %3425 = vmatpush1.msra.mxu0 0.0
      %3426 = vmatprep.subr.mxu0 0.0
      %3427 = vmatpush1.msra.mxu0 0.0
      %3428 = vmatprep.subr.mxu0 0.0
      %3429 = vmatpush1.msra.mxu0 0.0
      %3430 = vmatprep.subr.mxu0 0.0
      %3431 = vmatpush1.msra.mxu0 0.0
      %3432 = vmatprep.subr.mxu0 0.0
      %3433 = vmatpush1.msra.mxu0 0.0
      %3434 = vmatprep.subr.mxu0 0.0
      %3435 = vmatpush1.msra.mxu0 0.0
      %3436 = vmatprep.subr.mxu0 0.0
      %3437 = vmatpush1.msra.mxu0 0.0
      %3438 = vmatprep.subr.mxu0 0.0
      %3439 = vmatpush1.msra.mxu0 0.0
      %3440 = vmatprep.subr.mxu0 0.0
      %3441 = vmatpush1.msra.mxu0 0.0
      %3442 = vmatprep.subr.mxu0 0.0
      %3443 = vmatpush1.msra.mxu0 0.0
      %3444 = vmatprep.subr.mxu0 0.0
      %3445 = vmatpush1.msra.mxu0 0.0
      %3446 = vmatprep.subr.mxu0 0.0
      %3447 = vmatpush1.msra.mxu0 0.0
      %3448 = vmatprep.subr.mxu0 0.0
      %3449 = vmatpush1.msra.mxu0 0.0
      %3450 = vmatprep.subr.mxu0 0.0
      %3451 = vmatpush1.msra.mxu0 0.0
      %3452 = vmatprep.subr.mxu0 0.0
      %3453 = vmatpush1.msra.mxu0 0.0
      %3454 = vmatprep.subr.mxu0 0.0
      %3455 = vmatpush1.msra.mxu0 0.0
      %3456 = vmatprep.subr.mxu0 0.0
      %3457 = vmatpush1.msra.mxu0 0.0
      %3458 = vmatprep.subr.mxu0 0.0
      %3459 = vmatpush1.msra.mxu0 0.0
      %3460 = vmatprep.subr.mxu0 0.0
      %3461 = vmatpush1.msra.mxu0 0.0
      %3462 = vmatprep.subr.mxu0 0.0
      %3463 = vmatpush1.msra.mxu0 0.0
      %3464 = vmatprep.subr.mxu0 0.0
      %3465 = vmatpush1.msra.mxu0 0.0
      %3466 = vmatprep.subr.mxu0 0.0
      %3467 = vmatpush1.msra.mxu0 0.0
      %3468 = vmatprep.subr.mxu0 0.0
      %3469 = vmatpush1.msra.mxu0 0.0
      %3470 = vmatprep.subr.mxu0 0.0
      %3471 = vmatpush1.msra.mxu0 0.0
      %3472 = vmatprep.subr.mxu0 0.0
      %3473 = vmatpush1.msra.mxu0 0.0
      %3474 = vmatprep.mubr.f32.mxu0 0.0
      %3475 = vmatmul.mubr.f32.gmra.mrb[0].mxu0 %v711
      %v3476 = vpop.f32.mrb[0].mxu0
      %v3477 = vadd.f32 0.0, %v3476
      %v3478 = vpop.f32.mrb[0].mxu0
      %3479 = vmatprep.mubr.f32.mxu0 0.0
      %3480 = vmatmul.mubr.f32.gmra.mrb[0].mxu0 %v714
      %v3481 = vpop.f32.mrb[0].mxu0
      %v3482 = vadd.f32 0.0, %v3481
      %v3483 = vpop.f32.mrb[0].mxu0
      %3484 = vmatprep.mubr.f32.mxu0 0.0
      %3485 = vmatmul.mubr.f32.gmra.mrb[0].mxu0 %v717
      %v3486 = vpop.f32.mrb[0].mxu0
      %v3487 = vadd.f32 0.0, %v3486
      %v3488 = vpop.f32.mrb[0].mxu0
      %3489 = vmatprep.mubr.f32.mxu0 0.0
      %3490 = vmatmul.mubr.f32.gmra.mrb[0].mxu0 %v720
      %v3491 = vpop.f32.mrb[0].mxu0
      %v3492 = vadd.f32 0.0, %v3491
      %v3493 = vpop.f32.mrb[0].mxu0
      %3494 = vmatprep.mubr.f32.mxu0 0.0
      %3495 = vmatmul.mubr.f32.gmra.mrb[0].mxu0 %v723
      %v3496 = vpop.f32.mrb[0].mxu0
      %v3497 = vadd.f32 0.0, %v3496
      %v3498 = vpop.f32.mrb[0].mxu0
      %3499 = vmatprep.mubr.f32.mxu0 0.0
      %3500 = vmatmul.mubr.f32.gmra.mrb[0].mxu0 %v726
      %v3501 = vpop.f32.mrb[0].mxu0
      %v3502 = vadd.f32 0.0, %v3501
      %v3503 = vpop.f32.mrb[0].mxu0
      %3504 = vmatprep.mubr.f32.mxu0 0.0
      %3505 = vmatmul.mubr.f32.gmra.mrb[0].mxu0 %v729
      %v3506 = vpop.f32.mrb[0].mxu0
      %v3507 = vadd.f32 0.0, %v3506
      %v3508 = vpop.f32.mrb[0].mxu0
      %3509 = vmatprep.mubr.f32.mxu0 0.0
      %3510 = vmatmul.mubr.f32.gmra.mrb[0].mxu0 %v732
      %v3511 = vpop.f32.mrb[0].mxu0
      %v3512 = vadd.f32 0.0, %v3511
      %v3513 = vpop.f32.mrb[0].mxu0
      %3514 = vdwg.mxu0
      %v3516 = vsel %vm1053, %v3261, 0
      %v3519 = vsel %vm1053, %v3266, 0
      %v3522 = vsel %vm1053, %v3369, 0
      %v3525 = vsel %vm1053, %v3374, 0
      %3527 = vmatprep.subr.mxu0 0.0
      %3528 = vmatpush1.xpose.msra.mxu0 %v3522
      %3529 = vmatprep.subr.mxu0 0.0
      %3530 = vmatpush1.xpose.msra.mxu0 %v3525
      %3531 = vmatprep.subr.mxu0 0.0
      %3532 = vmatpush1.xpose.msra.mxu0 0.0
      %3533 = vmatprep.subr.mxu0 0.0
      %3534 = vmatpush1.xpose.msra.mxu0 0.0
      %3535 = vmatprep.subr.mxu0 0.0
      %3536 = vmatpush1.xpose.msra.mxu0 0.0
      %3537 = vmatprep.subr.mxu0 0.0
      %3538 = vmatpush1.xpose.msra.mxu0 0.0
      %3539 = vmatprep.subr.mxu0 0.0
      %3540 = vmatpush1.xpose.msra.mxu0 0.0
      %3541 = vmatprep.subr.mxu0 0.0
      %3542 = vmatpush1.xpose.msra.mxu0 0.0
      %3543 = vmatprep.subr.mxu0 0.0
      %3544 = vmatpush1.xpose.msra.mxu0 0.0
      %3545 = vmatprep.subr.mxu0 0.0
      %3546 = vmatpush1.xpose.msra.mxu0 0.0
      %3547 = vmatprep.subr.mxu0 0.0
      %3548 = vmatpush1.xpose.msra.mxu0 0.0
      %3549 = vmatprep.subr.mxu0 0.0
      %3550 = vmatpush1.xpose.msra.mxu0 0.0
      %3551 = vmatprep.subr.mxu0 0.0
      %3552 = vmatpush1.xpose.msra.mxu0 0.0
      %3553 = vmatprep.subr.mxu0 0.0
      %3554 = vmatpush1.xpose.msra.mxu0 0.0
      %3555 = vmatprep.subr.mxu0 0.0
      %3556 = vmatpush1.xpose.msra.mxu0 0.0
      %3557 = vmatprep.subr.mxu0 0.0
      %3558 = vmatpush1.xpose.msra.mxu0 0.0
      %3559 = vmatprep.subr.mxu0 0.0
      %3560 = vmatpush1.xpose.msra.mxu0 0.0
      %3561 = vmatprep.subr.mxu0 0.0
      %3562 = vmatpush1.xpose.msra.mxu0 0.0
      %3563 = vmatprep.subr.mxu0 0.0
      %3564 = vmatpush1.xpose.msra.mxu0 0.0
      %3565 = vmatprep.subr.mxu0 0.0
      %3566 = vmatpush1.xpose.msra.mxu0 0.0
      %3567 = vmatprep.subr.mxu0 0.0
      %3568 = vmatpush1.xpose.msra.mxu0 0.0
      %3569 = vmatprep.subr.mxu0 0.0
      %3570 = vmatpush1.xpose.msra.mxu0 0.0
      %3571 = vmatprep.subr.mxu0 0.0
      %3572 = vmatpush1.xpose.msra.mxu0 0.0
      %3573 = vmatprep.subr.mxu0 0.0
      %3574 = vmatpush1.xpose.msra.mxu0 0.0
      %3575 = vmatprep.subr.mxu0 0.0
      %3576 = vmatpush1.xpose.msra.mxu0 0.0
      %3577 = vmatprep.subr.mxu0 0.0
      %3578 = vmatpush1.xpose.msra.mxu0 0.0
      %3579 = vmatprep.subr.mxu0 0.0
      %3580 = vmatpush1.xpose.msra.mxu0 0.0
      %3581 = vmatprep.subr.mxu0 0.0
      %3582 = vmatpush1.xpose.msra.mxu0 0.0
      %3583 = vmatprep.subr.mxu0 0.0
      %3584 = vmatpush1.xpose.msra.mxu0 0.0
      %3585 = vmatprep.subr.mxu0 0.0
      %3586 = vmatpush1.xpose.msra.mxu0 0.0
      %3587 = vmatprep.subr.mxu0 0.0
      %3588 = vmatpush1.xpose.msra.mxu0 0.0
      %3589 = vmatprep.subr.mxu0 0.0
      %3590 = vmatpush1.xpose.msra.mxu0 0.0
      %3591 = vmatprep.mubr.f32.mxu0 0.0
      %3592 = vmatmul.mubr.f32.gmra.mrb[0].mxu0 %v3516
      %v3593 = vpop.f32.mrb[0].mxu0
      %v3594 = vadd.f32 0.0, %v3593
      %v3595 = vpop.f32.mrb[0].mxu0
      %3596 = vmatprep.mubr.f32.mxu0 0.0
      %3597 = vmatmul.mubr.f32.gmra.mrb[0].mxu0 %v3519
      %v3598 = vpop.f32.mrb[0].mxu0
      %v3599 = vadd.f32 0.0, %v3598
      %v3600 = vpop.f32.mrb[0].mxu0
      %3601 = vdwg.mxu0
      %v3603 = vsel %vm1053, %v3271, 0
      %v3606 = vsel %vm1053, %v3276, 0
      %v3609 = vsel %vm1053, %v3379, 0
      %v3612 = vsel %vm1053, %v3384, 0
      %3614 = vmatprep.subr.mxu0 0.0
      %3615 = vmatpush1.xpose.msra.mxu0 %v3609
      %3616 = vmatprep.subr.mxu0 0.0
      %3617 = vmatpush1.xpose.msra.mxu0 %v3612
      %3618 = vmatprep.subr.mxu0 0.0
      %3619 = vmatpush1.xpose.msra.mxu0 0.0
      %3620 = vmatprep.subr.mxu0 0.0
      %3621 = vmatpush1.xpose.msra.mxu0 0.0
      %3622 = vmatprep.subr.mxu0 0.0
      %3623 = vmatpush1.xpose.msra.mxu0 0.0
      %3624 = vmatprep.subr.mxu0 0.0
      %3625 = vmatpush1.xpose.msra.mxu0 0.0
      %3626 = vmatprep.subr.mxu0 0.0
      %3627 = vmatpush1.xpose.msra.mxu0 0.0
      %3628 = vmatprep.subr.mxu0 0.0
      %3629 = vmatpush1.xpose.msra.mxu0 0.0
      %3630 = vmatprep.subr.mxu0 0.0
      %3631 = vmatpush1.xpose.msra.mxu0 0.0
      %3632 = vmatprep.subr.mxu0 0.0
      %3633 = vmatpush1.xpose.msra.mxu0 0.0
      %3634 = vmatprep.subr.mxu0 0.0
      %3635 = vmatpush1.xpose.msra.mxu0 0.0
      %3636 = vmatprep.subr.mxu0 0.0
      %3637 = vmatpush1.xpose.msra.mxu0 0.0
      %3638 = vmatprep.subr.mxu0 0.0
      %3639 = vmatpush1.xpose.msra.mxu0 0.0
      %3640 = vmatprep.subr.mxu0 0.0
      %3641 = vmatpush1.xpose.msra.mxu0 0.0
      %3642 = vmatprep.subr.mxu0 0.0
      %3643 = vmatpush1.xpose.msra.mxu0 0.0
      %3644 = vmatprep.subr.mxu0 0.0
      %3645 = vmatpush1.xpose.msra.mxu0 0.0
      %3646 = vmatprep.subr.mxu0 0.0
      %3647 = vmatpush1.xpose.msra.mxu0 0.0
      %3648 = vmatprep.subr.mxu0 0.0
      %3649 = vmatpush1.xpose.msra.mxu0 0.0
      %3650 = vmatprep.subr.mxu0 0.0
      %3651 = vmatpush1.xpose.msra.mxu0 0.0
      %3652 = vmatprep.subr.mxu0 0.0
      %3653 = vmatpush1.xpose.msra.mxu0 0.0
      %3654 = vmatprep.subr.mxu0 0.0
      %3655 = vmatpush1.xpose.msra.mxu0 0.0
      %3656 = vmatprep.subr.mxu0 0.0
      %3657 = vmatpush1.xpose.msra.mxu0 0.0
      %3658 = vmatprep.subr.mxu0 0.0
      %3659 = vmatpush1.xpose.msra.mxu0 0.0
      %3660 = vmatprep.subr.mxu0 0.0
      %3661 = vmatpush1.xpose.msra.mxu0 0.0
      %3662 = vmatprep.subr.mxu0 0.0
      %3663 = vmatpush1.xpose.msra.mxu0 0.0
      %3664 = vmatprep.subr.mxu0 0.0
      %3665 = vmatpush1.xpose.msra.mxu0 0.0
      %3666 = vmatprep.subr.mxu0 0.0
      %3667 = vmatpush1.xpose.msra.mxu0 0.0
      %3668 = vmatprep.subr.mxu0 0.0
      %3669 = vmatpush1.xpose.msra.mxu0 0.0
      %3670 = vmatprep.subr.mxu0 0.0
      %3671 = vmatpush1.xpose.msra.mxu0 0.0
      %3672 = vmatprep.subr.mxu0 0.0
      %3673 = vmatpush1.xpose.msra.mxu0 0.0
      %3674 = vmatprep.subr.mxu0 0.0
      %3675 = vmatpush1.xpose.msra.mxu0 0.0
      %3676 = vmatprep.subr.mxu0 0.0
      %3677 = vmatpush1.xpose.msra.mxu0 0.0
      %3678 = vmatprep.mubr.f32.mxu0 0.0
      %3679 = vmatmul.mubr.f32.gmra.mrb[0].mxu0 %v3603
      %v3680 = vpop.f32.mrb[0].mxu0
      %v3681 = vadd.f32 0.0, %v3680
      %v3682 = vpop.f32.mrb[0].mxu0
      %3683 = vmatprep.mubr.f32.mxu0 0.0
      %3684 = vmatmul.mubr.f32.gmra.mrb[0].mxu0 %v3606
      %v3685 = vpop.f32.mrb[0].mxu0
      %v3686 = vadd.f32 0.0, %v3685
      %v3687 = vpop.f32.mrb[0].mxu0
      %3688 = vdwg.mxu0
      %v3690 = vsel %vm1053, %v3281, 0
      %v3693 = vsel %vm1053, %v3286, 0
      %v3696 = vsel %vm1053, %v3389, 0
      %v3699 = vsel %vm1053, %v3394, 0
      %3701 = vmatprep.subr.mxu0 0.0
      %3702 = vmatpush1.xpose.msra.mxu0 %v3696
      %3703 = vmatprep.subr.mxu0 0.0
      %3704 = vmatpush1.xpose.msra.mxu0 %v3699
      %3705 = vmatprep.subr.mxu0 0.0
      %3706 = vmatpush1.xpose.msra.mxu0 0.0
      %3707 = vmatprep.subr.mxu0 0.0
      %3708 = vmatpush1.xpose.msra.mxu0 0.0
      %3709 = vmatprep.subr.mxu0 0.0
      %3710 = vmatpush1.xpose.msra.mxu0 0.0
      %3711 = vmatprep.subr.mxu0 0.0
      %3712 = vmatpush1.xpose.msra.mxu0 0.0
      %3713 = vmatprep.subr.mxu0 0.0
      %3714 = vmatpush1.xpose.msra.mxu0 0.0
      %3715 = vmatprep.subr.mxu0 0.0
      %3716 = vmatpush1.xpose.msra.mxu0 0.0
      %3717 = vmatprep.subr.mxu0 0.0
      %3718 = vmatpush1.xpose.msra.mxu0 0.0
      %3719 = vmatprep.subr.mxu0 0.0
      %3720 = vmatpush1.xpose.msra.mxu0 0.0
      %3721 = vmatprep.subr.mxu0 0.0
      %3722 = vmatpush1.xpose.msra.mxu0 0.0
      %3723 = vmatprep.subr.mxu0 0.0
      %3724 = vmatpush1.xpose.msra.mxu0 0.0
      %3725 = vmatprep.subr.mxu0 0.0
      %3726 = vmatpush1.xpose.msra.mxu0 0.0
      %3727 = vmatprep.subr.mxu0 0.0
      %3728 = vmatpush1.xpose.msra.mxu0 0.0
      %3729 = vmatprep.subr.mxu0 0.0
      %3730 = vmatpush1.xpose.msra.mxu0 0.0
      %3731 = vmatprep.subr.mxu0 0.0
      %3732 = vmatpush1.xpose.msra.mxu0 0.0
      %3733 = vmatprep.subr.mxu0 0.0
      %3734 = vmatpush1.xpose.msra.mxu0 0.0
      %3735 = vmatprep.subr.mxu0 0.0
      %3736 = vmatpush1.xpose.msra.mxu0 0.0
      %3737 = vmatprep.subr.mxu0 0.0
      %3738 = vmatpush1.xpose.msra.mxu0 0.0
      %3739 = vmatprep.subr.mxu0 0.0
      %3740 = vmatpush1.xpose.msra.mxu0 0.0
      %3741 = vmatprep.subr.mxu0 0.0
      %3742 = vmatpush1.xpose.msra.mxu0 0.0
      %3743 = vmatprep.subr.mxu0 0.0
      %3744 = vmatpush1.xpose.msra.mxu0 0.0
      %3745 = vmatprep.subr.mxu0 0.0
      %3746 = vmatpush1.xpose.msra.mxu0 0.0
      %3747 = vmatprep.subr.mxu0 0.0
      %3748 = vmatpush1.xpose.msra.mxu0 0.0
      %3749 = vmatprep.subr.mxu0 0.0
      %3750 = vmatpush1.xpose.msra.mxu0 0.0
      %3751 = vmatprep.subr.mxu0 0.0
      %3752 = vmatpush1.xpose.msra.mxu0 0.0
      %3753 = vmatprep.subr.mxu0 0.0
      %3754 = vmatpush1.xpose.msra.mxu0 0.0
      %3755 = vmatprep.subr.mxu0 0.0
      %3756 = vmatpush1.xpose.msra.mxu0 0.0
      %3757 = vmatprep.subr.mxu0 0.0
      %3758 = vmatpush1.xpose.msra.mxu0 0.0
      %3759 = vmatprep.subr.mxu0 0.0
      %3760 = vmatpush1.xpose.msra.mxu0 0.0
      %3761 = vmatprep.subr.mxu0 0.0
      %3762 = vmatpush1.xpose.msra.mxu0 0.0
      %3763 = vmatprep.subr.mxu0 0.0
      %3764 = vmatpush1.xpose.msra.mxu0 0.0
      %3765 = vmatprep.mubr.f32.mxu0 0.0
      %3766 = vmatmul.mubr.f32.gmra.mrb[0].mxu0 %v3690
      %v3767 = vpop.f32.mrb[0].mxu0
      %v3768 = vadd.f32 0.0, %v3767
      %v3769 = vpop.f32.mrb[0].mxu0
      %3770 = vmatprep.mubr.f32.mxu0 0.0
      %3771 = vmatmul.mubr.f32.gmra.mrb[0].mxu0 %v3693
      %v3772 = vpop.f32.mrb[0].mxu0
      %v3773 = vadd.f32 0.0, %v3772
      %v3774 = vpop.f32.mrb[0].mxu0
      %3775 = vdwg.mxu0
      %v3777 = vsel %vm1053, %v3291, 0
      %v3780 = vsel %vm1053, %v3296, 0
      %v3783 = vsel %vm1053, %v3399, 0
      %v3786 = vsel %vm1053, %v3404, 0
      %3788 = vmatprep.subr.mxu0 0.0
      %3789 = vmatpush1.xpose.msra.mxu0 %v3783
      %3790 = vmatprep.subr.mxu0 0.0
      %3791 = vmatpush1.xpose.msra.mxu0 %v3786
      %3792 = vmatprep.subr.mxu0 0.0
      %3793 = vmatpush1.xpose.msra.mxu0 0.0
      %3794 = vmatprep.subr.mxu0 0.0
      %3795 = vmatpush1.xpose.msra.mxu0 0.0
      %3796 = vmatprep.subr.mxu0 0.0
      %3797 = vmatpush1.xpose.msra.mxu0 0.0
      %3798 = vmatprep.subr.mxu0 0.0
      %3799 = vmatpush1.xpose.msra.mxu0 0.0
      %3800 = vmatprep.subr.mxu0 0.0
      %3801 = vmatpush1.xpose.msra.mxu0 0.0
      %3802 = vmatprep.subr.mxu0 0.0
      %3803 = vmatpush1.xpose.msra.mxu0 0.0
      %3804 = vmatprep.subr.mxu0 0.0
      %3805 = vmatpush1.xpose.msra.mxu0 0.0
      %3806 = vmatprep.subr.mxu0 0.0
      %3807 = vmatpush1.xpose.msra.mxu0 0.0
      %3808 = vmatprep.subr.mxu0 0.0
      %3809 = vmatpush1.xpose.msra.mxu0 0.0
      %3810 = vmatprep.subr.mxu0 0.0
      %3811 = vmatpush1.xpose.msra.mxu0 0.0
      %3812 = vmatprep.subr.mxu0 0.0
      %3813 = vmatpush1.xpose.msra.mxu0 0.0
      %3814 = vmatprep.subr.mxu0 0.0
      %3815 = vmatpush1.xpose.msra.mxu0 0.0
      %3816 = vmatprep.subr.mxu0 0.0
      %3817 = vmatpush1.xpose.msra.mxu0 0.0
      %3818 = vmatprep.subr.mxu0 0.0
      %3819 = vmatpush1.xpose.msra.mxu0 0.0
      %3820 = vmatprep.subr.mxu0 0.0
      %3821 = vmatpush1.xpose.msra.mxu0 0.0
      %3822 = vmatprep.subr.mxu0 0.0
      %3823 = vmatpush1.xpose.msra.mxu0 0.0
      %3824 = vmatprep.subr.mxu0 0.0
      %3825 = vmatpush1.xpose.msra.mxu0 0.0
      %3826 = vmatprep.subr.mxu0 0.0
      %3827 = vmatpush1.xpose.msra.mxu0 0.0
      %3828 = vmatprep.subr.mxu0 0.0
      %3829 = vmatpush1.xpose.msra.mxu0 0.0
      %3830 = vmatprep.subr.mxu0 0.0
      %3831 = vmatpush1.xpose.msra.mxu0 0.0
      %3832 = vmatprep.subr.mxu0 0.0
      %3833 = vmatpush1.xpose.msra.mxu0 0.0
      %3834 = vmatprep.subr.mxu0 0.0
      %3835 = vmatpush1.xpose.msra.mxu0 0.0
      %3836 = vmatprep.subr.mxu0 0.0
      %3837 = vmatpush1.xpose.msra.mxu0 0.0
      %3838 = vmatprep.subr.mxu0 0.0
      %3839 = vmatpush1.xpose.msra.mxu0 0.0
      %3840 = vmatprep.subr.mxu0 0.0
      %3841 = vmatpush1.xpose.msra.mxu0 0.0
      %3842 = vmatprep.subr.mxu0 0.0
      %3843 = vmatpush1.xpose.msra.mxu0 0.0
      %3844 = vmatprep.subr.mxu0 0.0
      %3845 = vmatpush1.xpose.msra.mxu0 0.0
      %3846 = vmatprep.subr.mxu0 0.0
      %3847 = vmatpush1.xpose.msra.mxu0 0.0
      %3848 = vmatprep.subr.mxu0 0.0
      %3849 = vmatpush1.xpose.msra.mxu0 0.0
      %3850 = vmatprep.subr.mxu0 0.0
      %3851 = vmatpush1.xpose.msra.mxu0 0.0
      %3852 = vmatprep.mubr.f32.mxu0 0.0
      %3853 = vmatmul.mubr.f32.gmra.mrb[0].mxu0 %v3777
      %v3854 = vpop.f32.mrb[0].mxu0
      %v3855 = vadd.f32 0.0, %v3854
      %v3856 = vpop.f32.mrb[0].mxu0
      %3857 = vmatprep.mubr.f32.mxu0 0.0
      %3858 = vmatmul.mubr.f32.gmra.mrb[0].mxu0 %v3780
      %v3859 = vpop.f32.mrb[0].mxu0
      %v3860 = vadd.f32 0.0, %v3859
      %v3861 = vpop.f32.mrb[0].mxu0
      %3862 = vdwg.mxu0
      %v3863 = vmul.f32 %v3594, 0.35355338
      %v3864 = vmul.f32 %v3599, 0.35355338
      %v3865 = vmul.f32 %v3681, 0.35355338
      %v3866 = vmul.f32 %v3686, 0.35355338
      %v3867 = vmul.f32 %v3768, 0.35355338
      %v3868 = vmul.f32 %v3773, 0.35355338
      %v3869 = vmul.f32 %v3855, 0.35355338
      %v3870 = vmul.f32 %v3860, 0.35355338
      %v3871 = vsel %vm559, %v3863, -inf
      %3872 = vmax.xlane.f32.xlu0 %v3871
      %v3873 = vpop.xlane.xlu0 %3872
      %v3874 = vsel %vm559, %v3864, -inf
      %3875 = vmax.xlane.f32.xlu0 %v3874
      %v3876 = vpop.xlane.xlu0 %3875
      %v3877 = vsel %vm559, %v3865, -inf
      %3878 = vmax.xlane.f32.xlu0 %v3877
      %v3879 = vpop.xlane.xlu0 %3878
      %v3880 = vsel %vm559, %v3866, -inf
      %3881 = vmax.xlane.f32.xlu0 %v3880
      %v3882 = vpop.xlane.xlu0 %3881
      %v3883 = vsel %vm559, %v3867, -inf
      %3884 = vmax.xlane.f32.xlu0 %v3883
      %v3885 = vpop.xlane.xlu0 %3884
      %v3886 = vsel %vm559, %v3868, -inf
      %3887 = vmax.xlane.f32.xlu0 %v3886
      %v3888 = vpop.xlane.xlu0 %3887
      %v3889 = vsel %vm559, %v3869, -inf
      %3890 = vmax.xlane.f32.xlu0 %v3889
      %v3891 = vpop.xlane.xlu0 %3890
      %v3892 = vsel %vm559, %v3870, -inf
      %3893 = vmax.xlane.f32.xlu0 %v3892
      %v3894 = vpop.xlane.xlu0 %3893
      %v3895 = vsub.f32 %v3863, %v3873
      %v3896 = vsub.f32 %v3864, %v3876
      %v3897 = vsub.f32 %v3865, %v3879
      %v3898 = vsub.f32 %v3866, %v3882
      %v3899 = vsub.f32 %v3867, %v3885
      %v3900 = vsub.f32 %v3868, %v3888
      %v3901 = vsub.f32 %v3869, %v3891
      %v3902 = vsub.f32 %v3870, %v3894
      %v3903 = vmul.f32 %v3895, 1.442695
      %v3904 = vpow.pop %v3903
      %v3905 = vmul.f32 %v3896, 1.442695
      %v3906 = vpow.pop %v3905
      %v3907 = vmul.f32 %v3897, 1.442695
      %v3908 = vpow.pop %v3907
      %v3909 = vmul.f32 %v3898, 1.442695
      %v3910 = vpow.pop %v3909
      %v3911 = vmul.f32 %v3899, 1.442695
      %v3912 = vpow.pop %v3911
      %v3913 = vmul.f32 %v3900, 1.442695
      %v3914 = vpow.pop %v3913
      %v3915 = vmul.f32 %v3901, 1.442695
      %v3916 = vpow.pop %v3915
      %v3917 = vmul.f32 %v3902, 1.442695
      %v3918 = vpow.pop %v3917
      %v3919 = vsel %vm559, %v3904, 0.0
      %3920 = vadd.xlane.f32.xlu0 %v3919
      %v3921 = vpop.xlane.xlu0 %3920
      %v3922 = vsel %vm559, %v3906, 0.0
      %3923 = vadd.xlane.f32.xlu0 %v3922
      %v3924 = vpop.xlane.xlu0 %3923
      %v3925 = vsel %vm559, %v3908, 0.0
      %3926 = vadd.xlane.f32.xlu0 %v3925
      %v3927 = vpop.xlane.xlu0 %3926
      %v3928 = vsel %vm559, %v3910, 0.0
      %3929 = vadd.xlane.f32.xlu0 %v3928
      %v3930 = vpop.xlane.xlu0 %3929
      %v3931 = vsel %vm559, %v3912, 0.0
      %3932 = vadd.xlane.f32.xlu0 %v3931
      %v3933 = vpop.xlane.xlu0 %3932
      %v3934 = vsel %vm559, %v3914, 0.0
      %3935 = vadd.xlane.f32.xlu0 %v3934
      %v3936 = vpop.xlane.xlu0 %3935
      %v3937 = vsel %vm559, %v3916, 0.0
      %3938 = vadd.xlane.f32.xlu0 %v3937
      %v3939 = vpop.xlane.xlu0 %3938
      %v3940 = vsel %vm559, %v3918, 0.0
      %3941 = vadd.xlane.f32.xlu0 %v3940
      %v3942 = vpop.xlane.xlu0 %3941
      %v3943 = vrcp.pop %v3921
      %v3944 = vmul.f32 %v3904, %v3943
      %v3945 = vrcp.pop %v3924
      %v3946 = vmul.f32 %v3906, %v3945
      %v3947 = vrcp.pop %v3927
      %v3948 = vmul.f32 %v3908, %v3947
      %v3949 = vrcp.pop %v3930
      %v3950 = vmul.f32 %v3910, %v3949
      %v3951 = vrcp.pop %v3933
      %v3952 = vmul.f32 %v3912, %v3951
      %v3953 = vrcp.pop %v3936
      %v3954 = vmul.f32 %v3914, %v3953
      %v3955 = vrcp.pop %v3939
      %v3956 = vmul.f32 %v3916, %v3955
      %v3957 = vrcp.pop %v3942
      %v3958 = vmul.f32 %v3918, %v3957
      %v3960 = vsel %vm559, %v3944, 0
      %v3963 = vsel %vm559, %v3946, 0
      %3965 = vmatprep.subr.mxu0 0.0
      %3966 = vmatpush1.msra.mxu0 %v3477
      %3967 = vmatprep.subr.mxu0 0.0
      %3968 = vmatpush1.msra.mxu0 %v3482
      %3969 = vmatprep.subr.mxu0 0.0
      %3970 = vmatpush1.msra.mxu0 0.0
      %3971 = vmatprep.subr.mxu0 0.0
      %3972 = vmatpush1.msra.mxu0 0.0
      %3973 = vmatprep.subr.mxu0 0.0
      %3974 = vmatpush1.msra.mxu0 0.0
      %3975 = vmatprep.subr.mxu0 0.0
      %3976 = vmatpush1.msra.mxu0 0.0
      %3977 = vmatprep.subr.mxu0 0.0
      %3978 = vmatpush1.msra.mxu0 0.0
      %3979 = vmatprep.subr.mxu0 0.0
      %3980 = vmatpush1.msra.mxu0 0.0
      %3981 = vmatprep.subr.mxu0 0.0
      %3982 = vmatpush1.msra.mxu0 0.0
      %3983 = vmatprep.subr.mxu0 0.0
      %3984 = vmatpush1.msra.mxu0 0.0
      %3985 = vmatprep.subr.mxu0 0.0
      %3986 = vmatpush1.msra.mxu0 0.0
      %3987 = vmatprep.subr.mxu0 0.0
      %3988 = vmatpush1.msra.mxu0 0.0
      %3989 = vmatprep.subr.mxu0 0.0
      %3990 = vmatpush1.msra.mxu0 0.0
      %3991 = vmatprep.subr.mxu0 0.0
      %3992 = vmatpush1.msra.mxu0 0.0
      %3993 = vmatprep.subr.mxu0 0.0
      %3994 = vmatpush1.msra.mxu0 0.0
      %3995 = vmatprep.subr.mxu0 0.0
      %3996 = vmatpush1.msra.mxu0 0.0
      %3997 = vmatprep.subr.mxu0 0.0
      %3998 = vmatpush1.msra.mxu0 0.0
      %3999 = vmatprep.subr.mxu0 0.0
      %4000 = vmatpush1.msra.mxu0 0.0
      %4001 = vmatprep.subr.mxu0 0.0
      %4002 = vmatpush1.msra.mxu0 0.0
      %4003 = vmatprep.subr.mxu0 0.0
      %4004 = vmatpush1.msra.mxu0 0.0
      %4005 = vmatprep.subr.mxu0 0.0
      %4006 = vmatpush1.msra.mxu0 0.0
      %4007 = vmatprep.subr.mxu0 0.0
      %4008 = vmatpush1.msra.mxu0 0.0
      %4009 = vmatprep.subr.mxu0 0.0
      %4010 = vmatpush1.msra.mxu0 0.0
      %4011 = vmatprep.subr.mxu0 0.0
      %4012 = vmatpush1.msra.mxu0 0.0
      %4013 = vmatprep.subr.mxu0 0.0
      %4014 = vmatpush1.msra.mxu0 0.0
      %4015 = vmatprep.subr.mxu0 0.0
      %4016 = vmatpush1.msra.mxu0 0.0
      %4017 = vmatprep.subr.mxu0 0.0
      %4018 = vmatpush1.msra.mxu0 0.0
      %4019 = vmatprep.subr.mxu0 0.0
      %4020 = vmatpush1.msra.mxu0 0.0
      %4021 = vmatprep.subr.mxu0 0.0
      %4022 = vmatpush1.msra.mxu0 0.0
      %4023 = vmatprep.subr.mxu0 0.0
      %4024 = vmatpush1.msra.mxu0 0.0
      %4025 = vmatprep.subr.mxu0 0.0
      %4026 = vmatpush1.msra.mxu0 0.0
      %4027 = vmatprep.subr.mxu0 0.0
      %4028 = vmatpush1.msra.mxu0 0.0
      %4029 = vmatprep.mubr.f32.mxu0 0.0
      %4030 = vmatmul.mubr.f32.gmra.mrb[0].mxu0 %v3960
      %v4031 = vpop.f32.mrb[0].mxu0
      %v4032 = vadd.f32 0.0, %v4031
      %v4033 = vpop.f32.mrb[0].mxu0
      %4034 = vmatprep.mubr.f32.mxu0 0.0
      %4035 = vmatmul.mubr.f32.gmra.mrb[0].mxu0 %v3963
      %v4036 = vpop.f32.mrb[0].mxu0
      %v4037 = vadd.f32 0.0, %v4036
      %v4038 = vpop.f32.mrb[0].mxu0
      %4039 = vdwg.mxu0
      %v4041 = vsel %vm559, %v3948, 0
      %v4044 = vsel %vm559, %v3950, 0
      %4046 = vmatprep.subr.mxu0 0.0
      %4047 = vmatpush1.msra.mxu0 %v3487
      %4048 = vmatprep.subr.mxu0 0.0
      %4049 = vmatpush1.msra.mxu0 %v3492
      %4050 = vmatprep.subr.mxu0 0.0
      %4051 = vmatpush1.msra.mxu0 0.0
      %4052 = vmatprep.subr.mxu0 0.0
      %4053 = vmatpush1.msra.mxu0 0.0
      %4054 = vmatprep.subr.mxu0 0.0
      %4055 = vmatpush1.msra.mxu0 0.0
      %4056 = vmatprep.subr.mxu0 0.0
      %4057 = vmatpush1.msra.mxu0 0.0
      %4058 = vmatprep.subr.mxu0 0.0
      %4059 = vmatpush1.msra.mxu0 0.0
      %4060 = vmatprep.subr.mxu0 0.0
      %4061 = vmatpush1.msra.mxu0 0.0
      %4062 = vmatprep.subr.mxu0 0.0
      %4063 = vmatpush1.msra.mxu0 0.0
      %4064 = vmatprep.subr.mxu0 0.0
      %4065 = vmatpush1.msra.mxu0 0.0
      %4066 = vmatprep.subr.mxu0 0.0
      %4067 = vmatpush1.msra.mxu0 0.0
      %4068 = vmatprep.subr.mxu0 0.0
      %4069 = vmatpush1.msra.mxu0 0.0
      %4070 = vmatprep.subr.mxu0 0.0
      %4071 = vmatpush1.msra.mxu0 0.0
      %4072 = vmatprep.subr.mxu0 0.0
      %4073 = vmatpush1.msra.mxu0 0.0
      %4074 = vmatprep.subr.mxu0 0.0
      %4075 = vmatpush1.msra.mxu0 0.0
      %4076 = vmatprep.subr.mxu0 0.0
      %4077 = vmatpush1.msra.mxu0 0.0
      %4078 = vmatprep.subr.mxu0 0.0
      %4079 = vmatpush1.msra.mxu0 0.0
      %4080 = vmatprep.subr.mxu0 0.0
      %4081 = vmatpush1.msra.mxu0 0.0
      %4082 = vmatprep.subr.mxu0 0.0
      %4083 = vmatpush1.msra.mxu0 0.0
      %4084 = vmatprep.subr.mxu0 0.0
      %4085 = vmatpush1.msra.mxu0 0.0
      %4086 = vmatprep.subr.mxu0 0.0
      %4087 = vmatpush1.msra.mxu0 0.0
      %4088 = vmatprep.subr.mxu0 0.0
      %4089 = vmatpush1.msra.mxu0 0.0
      %4090 = vmatprep.subr.mxu0 0.0
      %4091 = vmatpush1.msra.mxu0 0.0
      %4092 = vmatprep.subr.mxu0 0.0
      %4093 = vmatpush1.msra.mxu0 0.0
      %4094 = vmatprep.subr.mxu0 0.0
      %4095 = vmatpush1.msra.mxu0 0.0
      %4096 = vmatprep.subr.mxu0 0.0
      %4097 = vmatpush1.msra.mxu0 0.0
      %4098 = vmatprep.subr.mxu0 0.0
      %4099 = vmatpush1.msra.mxu0 0.0
      %4100 = vmatprep.subr.mxu0 0.0
      %4101 = vmatpush1.msra.mxu0 0.0
      %4102 = vmatprep.subr.mxu0 0.0
      %4103 = vmatpush1.msra.mxu0 0.0
      %4104 = vmatprep.subr.mxu0 0.0
      %4105 = vmatpush1.msra.mxu0 0.0
      %4106 = vmatprep.subr.mxu0 0.0
      %4107 = vmatpush1.msra.mxu0 0.0
      %4108 = vmatprep.subr.mxu0 0.0
      %4109 = vmatpush1.msra.mxu0 0.0
      %4110 = vmatprep.mubr.f32.mxu0 0.0
      %4111 = vmatmul.mubr.f32.gmra.mrb[0].mxu0 %v4041
      %v4112 = vpop.f32.mrb[0].mxu0
      %v4113 = vadd.f32 0.0, %v4112
      %v4114 = vpop.f32.mrb[0].mxu0
      %4115 = vmatprep.mubr.f32.mxu0 0.0
      %4116 = vmatmul.mubr.f32.gmra.mrb[0].mxu0 %v4044
      %v4117 = vpop.f32.mrb[0].mxu0
      %v4118 = vadd.f32 0.0, %v4117
      %v4119 = vpop.f32.mrb[0].mxu0
      %4120 = vdwg.mxu0
      %v4122 = vsel %vm559, %v3952, 0
      %v4125 = vsel %vm559, %v3954, 0
      %4127 = vmatprep.subr.mxu0 0.0
      %4128 = vmatpush1.msra.mxu0 %v3497
      %4129 = vmatprep.subr.mxu0 0.0
      %4130 = vmatpush1.msra.mxu0 %v3502
      %4131 = vmatprep.subr.mxu0 0.0
      %4132 = vmatpush1.msra.mxu0 0.0
      %4133 = vmatprep.subr.mxu0 0.0
      %4134 = vmatpush1.msra.mxu0 0.0
      %4135 = vmatprep.subr.mxu0 0.0
      %4136 = vmatpush1.msra.mxu0 0.0
      %4137 = vmatprep.subr.mxu0 0.0
      %4138 = vmatpush1.msra.mxu0 0.0
      %4139 = vmatprep.subr.mxu0 0.0
      %4140 = vmatpush1.msra.mxu0 0.0
      %4141 = vmatprep.subr.mxu0 0.0
      %4142 = vmatpush1.msra.mxu0 0.0
      %4143 = vmatprep.subr.mxu0 0.0
      %4144 = vmatpush1.msra.mxu0 0.0
      %4145 = vmatprep.subr.mxu0 0.0
      %4146 = vmatpush1.msra.mxu0 0.0
      %4147 = vmatprep.subr.mxu0 0.0
      %4148 = vmatpush1.msra.mxu0 0.0
      %4149 = vmatprep.subr.mxu0 0.0
      %4150 = vmatpush1.msra.mxu0 0.0
      %4151 = vmatprep.subr.mxu0 0.0
      %4152 = vmatpush1.msra.mxu0 0.0
      %4153 = vmatprep.subr.mxu0 0.0
      %4154 = vmatpush1.msra.mxu0 0.0
      %4155 = vmatprep.subr.mxu0 0.0
      %4156 = vmatpush1.msra.mxu0 0.0
      %4157 = vmatprep.subr.mxu0 0.0
      %4158 = vmatpush1.msra.mxu0 0.0
      %4159 = vmatprep.subr.mxu0 0.0
      %4160 = vmatpush1.msra.mxu0 0.0
      %4161 = vmatprep.subr.mxu0 0.0
      %4162 = vmatpush1.msra.mxu0 0.0
      %4163 = vmatprep.subr.mxu0 0.0
      %4164 = vmatpush1.msra.mxu0 0.0
      %4165 = vmatprep.subr.mxu0 0.0
      %4166 = vmatpush1.msra.mxu0 0.0
      %4167 = vmatprep.subr.mxu0 0.0
      %4168 = vmatpush1.msra.mxu0 0.0
      %4169 = vmatprep.subr.mxu0 0.0
      %4170 = vmatpush1.msra.mxu0 0.0
      %4171 = vmatprep.subr.mxu0 0.0
      %4172 = vmatpush1.msra.mxu0 0.0
      %4173 = vmatprep.subr.mxu0 0.0
      %4174 = vmatpush1.msra.mxu0 0.0
      %4175 = vmatprep.subr.mxu0 0.0
      %4176 = vmatpush1.msra.mxu0 0.0
      %4177 = vmatprep.subr.mxu0 0.0
      %4178 = vmatpush1.msra.mxu0 0.0
      %4179 = vmatprep.subr.mxu0 0.0
      %4180 = vmatpush1.msra.mxu0 0.0
      %4181 = vmatprep.subr.mxu0 0.0
      %4182 = vmatpush1.msra.mxu0 0.0
      %4183 = vmatprep.subr.mxu0 0.0
      %4184 = vmatpush1.msra.mxu0 0.0
      %4185 = vmatprep.subr.mxu0 0.0
      %4186 = vmatpush1.msra.mxu0 0.0
      %4187 = vmatprep.subr.mxu0 0.0
      %4188 = vmatpush1.msra.mxu0 0.0
      %4189 = vmatprep.subr.mxu0 0.0
      %4190 = vmatpush1.msra.mxu0 0.0
      %4191 = vmatprep.mubr.f32.mxu0 0.0
      %4192 = vmatmul.mubr.f32.gmra.mrb[0].mxu0 %v4122
      %v4193 = vpop.f32.mrb[0].mxu0
      %v4194 = vadd.f32 0.0, %v4193
      %v4195 = vpop.f32.mrb[0].mxu0
      %4196 = vmatprep.mubr.f32.mxu0 0.0
      %4197 = vmatmul.mubr.f32.gmra.mrb[0].mxu0 %v4125
      %v4198 = vpop.f32.mrb[0].mxu0
      %v4199 = vadd.f32 0.0, %v4198
      %v4200 = vpop.f32.mrb[0].mxu0
      %4201 = vdwg.mxu0
      %v4203 = vsel %vm559, %v3956, 0
      %v4206 = vsel %vm559, %v3958, 0
      %4208 = vmatprep.subr.mxu0 0.0
      %4209 = vmatpush1.msra.mxu0 %v3507
      %4210 = vmatprep.subr.mxu0 0.0
      %4211 = vmatpush1.msra.mxu0 %v3512
      %4212 = vmatprep.subr.mxu0 0.0
      %4213 = vmatpush1.msra.mxu0 0.0
      %4214 = vmatprep.subr.mxu0 0.0
      %4215 = vmatpush1.msra.mxu0 0.0
      %4216 = vmatprep.subr.mxu0 0.0
      %4217 = vmatpush1.msra.mxu0 0.0
      %4218 = vmatprep.subr.mxu0 0.0
      %4219 = vmatpush1.msra.mxu0 0.0
      %4220 = vmatprep.subr.mxu0 0.0
      %4221 = vmatpush1.msra.mxu0 0.0
      %4222 = vmatprep.subr.mxu0 0.0
      %4223 = vmatpush1.msra.mxu0 0.0
      %4224 = vmatprep.subr.mxu0 0.0
      %4225 = vmatpush1.msra.mxu0 0.0
      %4226 = vmatprep.subr.mxu0 0.0
      %4227 = vmatpush1.msra.mxu0 0.0
      %4228 = vmatprep.subr.mxu0 0.0
      %4229 = vmatpush1.msra.mxu0 0.0
      %4230 = vmatprep.subr.mxu0 0.0
      %4231 = vmatpush1.msra.mxu0 0.0
      %4232 = vmatprep.subr.mxu0 0.0
      %4233 = vmatpush1.msra.mxu0 0.0
      %4234 = vmatprep.subr.mxu0 0.0
      %4235 = vmatpush1.msra.mxu0 0.0
      %4236 = vmatprep.subr.mxu0 0.0
      %4237 = vmatpush1.msra.mxu0 0.0
      %4238 = vmatprep.subr.mxu0 0.0
      %4239 = vmatpush1.msra.mxu0 0.0
      %4240 = vmatprep.subr.mxu0 0.0
      %4241 = vmatpush1.msra.mxu0 0.0
      %4242 = vmatprep.subr.mxu0 0.0
      %4243 = vmatpush1.msra.mxu0 0.0
      %4244 = vmatprep.subr.mxu0 0.0
      %4245 = vmatpush1.msra.mxu0 0.0
      %4246 = vmatprep.subr.mxu0 0.0
      %4247 = vmatpush1.msra.mxu0 0.0
      %4248 = vmatprep.subr.mxu0 0.0
      %4249 = vmatpush1.msra.mxu0 0.0
      %4250 = vmatprep.subr.mxu0 0.0
      %4251 = vmatpush1.msra.mxu0 0.0
      %4252 = vmatprep.subr.mxu0 0.0
      %4253 = vmatpush1.msra.mxu0 0.0
      %4254 = vmatprep.subr.mxu0 0.0
      %4255 = vmatpush1.msra.mxu0 0.0
      %4256 = vmatprep.subr.mxu0 0.0
      %4257 = vmatpush1.msra.mxu0 0.0
      %4258 = vmatprep.subr.mxu0 0.0
      %4259 = vmatpush1.msra.mxu0 0.0
      %4260 = vmatprep.subr.mxu0 0.0
      %4261 = vmatpush1.msra.mxu0 0.0
      %4262 = vmatprep.subr.mxu0 0.0
      %4263 = vmatpush1.msra.mxu0 0.0
      %4264 = vmatprep.subr.mxu0 0.0
      %4265 = vmatpush1.msra.mxu0 0.0
      %4266 = vmatprep.subr.mxu0 0.0
      %4267 = vmatpush1.msra.mxu0 0.0
      %4268 = vmatprep.subr.mxu0 0.0
      %4269 = vmatpush1.msra.mxu0 0.0
      %4270 = vmatprep.subr.mxu0 0.0
      %4271 = vmatpush1.msra.mxu0 0.0
      %4272 = vmatprep.mubr.f32.mxu0 0.0
      %4273 = vmatmul.mubr.f32.gmra.mrb[0].mxu0 %v4203
      %v4274 = vpop.f32.mrb[0].mxu0
      %v4275 = vadd.f32 0.0, %v4274
      %v4276 = vpop.f32.mrb[0].mxu0
      %4277 = vmatprep.mubr.f32.mxu0 0.0
      %4278 = vmatmul.mubr.f32.gmra.mrb[0].mxu0 %v4206
      %v4279 = vpop.f32.mrb[0].mxu0
      %v4280 = vadd.f32 0.0, %v4279
      %v4281 = vpop.f32.mrb[0].mxu0
      %4282 = vdwg.mxu0
      %s4283 = scalar_lea.vmem %s6, 16
      %v4284 = vld [vmem:[%s4283] sm:$0xff]
      %v4286 = vsel %vm1053, %v4032, 0
      %v4289 = vsel %vm1053, %v4037, 0
      %v4292 = vsel %vm1053, %v4113, 0
      %v4295 = vsel %vm1053, %v4118, 0
      %v4298 = vsel %vm1053, %v4194, 0
      %v4301 = vsel %vm1053, %v4199, 0
      %v4304 = vsel %vm1053, %v4275, 0
      %v4307 = vsel %vm1053, %v4280, 0
      %4309 = vmatprep.subr.mxu0 0.0
      %4310 = vmatpush1.msra.mxu0 %v4284
      %4311 = vmatprep.subr.mxu0 0.0
      %4312 = vmatpush1.msra.mxu0 0.0
      %4313 = vmatprep.subr.mxu0 0.0
      %4314 = vmatpush1.msra.mxu0 0.0
      %4315 = vmatprep.subr.mxu0 0.0
      %4316 = vmatpush1.msra.mxu0 0.0
      %4317 = vmatprep.subr.mxu0 0.0
      %4318 = vmatpush1.msra.mxu0 0.0
      %4319 = vmatprep.subr.mxu0 0.0
      %4320 = vmatpush1.msra.mxu0 0.0
      %4321 = vmatprep.subr.mxu0 0.0
      %4322 = vmatpush1.msra.mxu0 0.0
      %4323 = vmatprep.subr.mxu0 0.0
      %4324 = vmatpush1.msra.mxu0 0.0
      %4325 = vmatprep.subr.mxu0 0.0
      %4326 = vmatpush1.msra.mxu0 0.0
      %4327 = vmatprep.subr.mxu0 0.0
      %4328 = vmatpush1.msra.mxu0 0.0
      %4329 = vmatprep.subr.mxu0 0.0
      %4330 = vmatpush1.msra.mxu0 0.0
      %4331 = vmatprep.subr.mxu0 0.0
      %4332 = vmatpush1.msra.mxu0 0.0
      %4333 = vmatprep.subr.mxu0 0.0
      %4334 = vmatpush1.msra.mxu0 0.0
      %4335 = vmatprep.subr.mxu0 0.0
      %4336 = vmatpush1.msra.mxu0 0.0
      %4337 = vmatprep.subr.mxu0 0.0
      %4338 = vmatpush1.msra.mxu0 0.0
      %4339 = vmatprep.subr.mxu0 0.0
      %4340 = vmatpush1.msra.mxu0 0.0
      %4341 = vmatprep.subr.mxu0 0.0
      %4342 = vmatpush1.msra.mxu0 0.0
      %4343 = vmatprep.subr.mxu0 0.0
      %4344 = vmatpush1.msra.mxu0 0.0
      %4345 = vmatprep.subr.mxu0 0.0
      %4346 = vmatpush1.msra.mxu0 0.0
      %4347 = vmatprep.subr.mxu0 0.0
      %4348 = vmatpush1.msra.mxu0 0.0
      %4349 = vmatprep.subr.mxu0 0.0
      %4350 = vmatpush1.msra.mxu0 0.0
      %4351 = vmatprep.subr.mxu0 0.0
      %4352 = vmatpush1.msra.mxu0 0.0
      %4353 = vmatprep.subr.mxu0 0.0
      %4354 = vmatpush1.msra.mxu0 0.0
      %4355 = vmatprep.subr.mxu0 0.0
      %4356 = vmatpush1.msra.mxu0 0.0
      %4357 = vmatprep.subr.mxu0 0.0
      %4358 = vmatpush1.msra.mxu0 0.0
      %4359 = vmatprep.subr.mxu0 0.0
      %4360 = vmatpush1.msra.mxu0 0.0
      %4361 = vmatprep.subr.mxu0 0.0
      %4362 = vmatpush1.msra.mxu0 0.0
      %4363 = vmatprep.subr.mxu0 0.0
      %4364 = vmatpush1.msra.mxu0 0.0
      %4365 = vmatprep.subr.mxu0 0.0
      %4366 = vmatpush1.msra.mxu0 0.0
      %4367 = vmatprep.subr.mxu0 0.0
      %4368 = vmatpush1.msra.mxu0 0.0
      %4369 = vmatprep.subr.mxu0 0.0
      %4370 = vmatpush1.msra.mxu0 0.0
      %4371 = vmatprep.subr.mxu0 0.0
      %4372 = vmatpush1.msra.mxu0 0.0
      %4373 = vmatprep.mubr.f32.mxu0 0.0
      %4374 = vmatmul.mubr.f32.gmra.mrb[0].mxu0 %v4286
      %v4375 = vpop.f32.mrb[0].mxu0
      %v4376 = vadd.f32 0.0, %v4375
      %v4377 = vpop.f32.mrb[0].mxu0
      %4378 = vmatprep.mubr.f32.mxu0 0.0
      %4379 = vmatmul.mubr.f32.gmra.mrb[0].mxu0 %v4289
      %v4380 = vpop.f32.mrb[0].mxu0
      %v4381 = vadd.f32 0.0, %v4380
      %v4382 = vpop.f32.mrb[0].mxu0
      %4383 = vmatprep.mubr.f32.mxu0 0.0
      %4384 = vmatmul.mubr.f32.gmra.mrb[0].mxu0 %v4292
      %v4385 = vpop.f32.mrb[0].mxu0
      %v4386 = vadd.f32 0.0, %v4385
      %v4387 = vpop.f32.mrb[0].mxu0
      %4388 = vmatprep.mubr.f32.mxu0 0.0
      %4389 = vmatmul.mubr.f32.gmra.mrb[0].mxu0 %v4295
      %v4390 = vpop.f32.mrb[0].mxu0
      %v4391 = vadd.f32 0.0, %v4390
      %v4392 = vpop.f32.mrb[0].mxu0
      %4393 = vmatprep.mubr.f32.mxu0 0.0
      %4394 = vmatmul.mubr.f32.gmra.mrb[0].mxu0 %v4298
      %v4395 = vpop.f32.mrb[0].mxu0
      %v4396 = vadd.f32 0.0, %v4395
      %v4397 = vpop.f32.mrb[0].mxu0
      %4398 = vmatprep.mubr.f32.mxu0 0.0
      %4399 = vmatmul.mubr.f32.gmra.mrb[0].mxu0 %v4301
      %v4400 = vpop.f32.mrb[0].mxu0
      %v4401 = vadd.f32 0.0, %v4400
      %v4402 = vpop.f32.mrb[0].mxu0
      %4403 = vmatprep.mubr.f32.mxu0 0.0
      %4404 = vmatmul.mubr.f32.gmra.mrb[0].mxu0 %v4304
      %v4405 = vpop.f32.mrb[0].mxu0
      %v4406 = vadd.f32 0.0, %v4405
      %v4407 = vpop.f32.mrb[0].mxu0
      %4408 = vmatprep.mubr.f32.mxu0 0.0
      %4409 = vmatmul.mubr.f32.gmra.mrb[0].mxu0 %v4307
      %v4410 = vpop.f32.mrb[0].mxu0
      %v4411 = vadd.f32 0.0, %v4410
      %v4412 = vpop.f32.mrb[0].mxu0
      %4413 = vdwg.mxu0
      %v4414 = vadd.f32 %v3183, %v4376
      %v4415 = vadd.f32 %v3184, %v4381
      %v4416 = vadd.f32 %v3185, %v4386
      %v4417 = vadd.f32 %v3186, %v4391
      %v4418 = vadd.f32 %v3187, %v4396
      %v4419 = vadd.f32 %v3188, %v4401
      %v4420 = vadd.f32 %v3189, %v4406
      %v4421 = vadd.f32 %v3190, %v4411
      %s4422 = scalar_lea.vmem %s3, 48
      %v4423 = vld [vmem:[%s4422] sm:$0xff]
      %v4424 = vld [vmem:[%s4422 + $0x8] sm:$0xff]
      %4425 = vmatprep.subr.mxu0 0.0
      %4426 = vmatpush1.msra.mxu0 %v4423
      %4427 = vmatprep.subr.mxu0 0.0
      %4428 = vmatpush1.msra.mxu0 %v4424
      %4429 = vmatprep.subr.mxu0 0.0
      %4430 = vmatpush1.msra.mxu0 0.0
      %4431 = vmatprep.subr.mxu0 0.0
      %4432 = vmatpush1.msra.mxu0 0.0
      %4433 = vmatprep.subr.mxu0 0.0
      %4434 = vmatpush1.msra.mxu0 0.0
      %4435 = vmatprep.subr.mxu0 0.0
      %4436 = vmatpush1.msra.mxu0 0.0
      %4437 = vmatprep.subr.mxu0 0.0
      %4438 = vmatpush1.msra.mxu0 0.0
      %4439 = vmatprep.subr.mxu0 0.0
      %4440 = vmatpush1.msra.mxu0 0.0
      %4441 = vmatprep.subr.mxu0 0.0
      %4442 = vmatpush1.msra.mxu0 0.0
      %4443 = vmatprep.subr.mxu0 0.0
      %4444 = vmatpush1.msra.mxu0 0.0
      %4445 = vmatprep.subr.mxu0 0.0
      %4446 = vmatpush1.msra.mxu0 0.0
      %4447 = vmatprep.subr.mxu0 0.0
      %4448 = vmatpush1.msra.mxu0 0.0
      %4449 = vmatprep.subr.mxu0 0.0
      %4450 = vmatpush1.msra.mxu0 0.0
      %4451 = vmatprep.subr.mxu0 0.0
      %4452 = vmatpush1.msra.mxu0 0.0
      %4453 = vmatprep.subr.mxu0 0.0
      %4454 = vmatpush1.msra.mxu0 0.0
      %4455 = vmatprep.subr.mxu0 0.0
      %4456 = vmatpush1.msra.mxu0 0.0
      %4457 = vmatprep.subr.mxu0 0.0
      %4458 = vmatpush1.msra.mxu0 0.0
      %4459 = vmatprep.subr.mxu0 0.0
      %4460 = vmatpush1.msra.mxu0 0.0
      %4461 = vmatprep.subr.mxu0 0.0
      %4462 = vmatpush1.msra.mxu0 0.0
      %4463 = vmatprep.subr.mxu0 0.0
      %4464 = vmatpush1.msra.mxu0 0.0
      %4465 = vmatprep.subr.mxu0 0.0
      %4466 = vmatpush1.msra.mxu0 0.0
      %4467 = vmatprep.subr.mxu0 0.0
      %4468 = vmatpush1.msra.mxu0 0.0
      %4469 = vmatprep.subr.mxu0 0.0
      %4470 = vmatpush1.msra.mxu0 0.0
      %4471 = vmatprep.subr.mxu0 0.0
      %4472 = vmatpush1.msra.mxu0 0.0
      %4473 = vmatprep.subr.mxu0 0.0
      %4474 = vmatpush1.msra.mxu0 0.0
      %4475 = vmatprep.subr.mxu0 0.0
      %4476 = vmatpush1.msra.mxu0 0.0
      %4477 = vmatprep.subr.mxu0 0.0
      %4478 = vmatpush1.msra.mxu0 0.0
      %4479 = vmatprep.subr.mxu0 0.0
      %4480 = vmatpush1.msra.mxu0 0.0
      %4481 = vmatprep.subr.mxu0 0.0
      %4482 = vmatpush1.msra.mxu0 0.0
      %4483 = vmatprep.subr.mxu0 0.0
      %4484 = vmatpush1.msra.mxu0 0.0
      %4485 = vmatprep.subr.mxu0 0.0
      %4486 = vmatpush1.msra.mxu0 0.0
      %4487 = vmatprep.subr.mxu0 0.0
      %4488 = vmatpush1.msra.mxu0 0.0
      %4489 = vmatprep.mubr.f32.mxu0 0.0
      %4490 = vmatmul.mubr.f32.gmra.mrb[0].mxu0 %v711
      %v4491 = vpop.f32.mrb[0].mxu0
      %v4492 = vadd.f32 0.0, %v4491
      %v4493 = vpop.f32.mrb[0].mxu0
      %4494 = vmatprep.mubr.f32.mxu0 0.0
      %4495 = vmatmul.mubr.f32.gmra.mrb[0].mxu0 %v714
      %v4496 = vpop.f32.mrb[0].mxu0
      %v4497 = vadd.f32 0.0, %v4496
      %v4498 = vpop.f32.mrb[0].mxu0
      %4499 = vmatprep.mubr.f32.mxu0 0.0
      %4500 = vmatmul.mubr.f32.gmra.mrb[0].mxu0 %v717
      %v4501 = vpop.f32.mrb[0].mxu0
      %v4502 = vadd.f32 0.0, %v4501
      %v4503 = vpop.f32.mrb[0].mxu0
      %4504 = vmatprep.mubr.f32.mxu0 0.0
      %4505 = vmatmul.mubr.f32.gmra.mrb[0].mxu0 %v720
      %v4506 = vpop.f32.mrb[0].mxu0
      %v4507 = vadd.f32 0.0, %v4506
      %v4508 = vpop.f32.mrb[0].mxu0
      %4509 = vmatprep.mubr.f32.mxu0 0.0
      %4510 = vmatmul.mubr.f32.gmra.mrb[0].mxu0 %v723
      %v4511 = vpop.f32.mrb[0].mxu0
      %v4512 = vadd.f32 0.0, %v4511
      %v4513 = vpop.f32.mrb[0].mxu0
      %4514 = vmatprep.mubr.f32.mxu0 0.0
      %4515 = vmatmul.mubr.f32.gmra.mrb[0].mxu0 %v726
      %v4516 = vpop.f32.mrb[0].mxu0
      %v4517 = vadd.f32 0.0, %v4516
      %v4518 = vpop.f32.mrb[0].mxu0
      %4519 = vmatprep.mubr.f32.mxu0 0.0
      %4520 = vmatmul.mubr.f32.gmra.mrb[0].mxu0 %v729
      %v4521 = vpop.f32.mrb[0].mxu0
      %v4522 = vadd.f32 0.0, %v4521
      %v4523 = vpop.f32.mrb[0].mxu0
      %4524 = vmatprep.mubr.f32.mxu0 0.0
      %4525 = vmatmul.mubr.f32.gmra.mrb[0].mxu0 %v732
      %v4526 = vpop.f32.mrb[0].mxu0
      %v4527 = vadd.f32 0.0, %v4526
      %v4528 = vpop.f32.mrb[0].mxu0
      %4529 = vdwg.mxu0
      %s4530 = scalar_lea.vmem %s4, 48
      %v4531 = vld [vmem:[%s4530] sm:$0xff]
      %v4532 = vld [vmem:[%s4530 + $0x8] sm:$0xff]
      %4533 = vmatprep.subr.mxu0 0.0
      %4534 = vmatpush1.msra.mxu0 %v4531
      %4535 = vmatprep.subr.mxu0 0.0
      %4536 = vmatpush1.msra.mxu0 %v4532
      %4537 = vmatprep.subr.mxu0 0.0
      %4538 = vmatpush1.msra.mxu0 0.0
      %4539 = vmatprep.subr.mxu0 0.0
      %4540 = vmatpush1.msra.mxu0 0.0
      %4541 = vmatprep.subr.mxu0 0.0
      %4542 = vmatpush1.msra.mxu0 0.0
      %4543 = vmatprep.subr.mxu0 0.0
      %4544 = vmatpush1.msra.mxu0 0.0
      %4545 = vmatprep.subr.mxu0 0.0
      %4546 = vmatpush1.msra.mxu0 0.0
      %4547 = vmatprep.subr.mxu0 0.0
      %4548 = vmatpush1.msra.mxu0 0.0
      %4549 = vmatprep.subr.mxu0 0.0
      %4550 = vmatpush1.msra.mxu0 0.0
      %4551 = vmatprep.subr.mxu0 0.0
      %4552 = vmatpush1.msra.mxu0 0.0
      %4553 = vmatprep.subr.mxu0 0.0
      %4554 = vmatpush1.msra.mxu0 0.0
      %4555 = vmatprep.subr.mxu0 0.0
      %4556 = vmatpush1.msra.mxu0 0.0
      %4557 = vmatprep.subr.mxu0 0.0
      %4558 = vmatpush1.msra.mxu0 0.0
      %4559 = vmatprep.subr.mxu0 0.0
      %4560 = vmatpush1.msra.mxu0 0.0
      %4561 = vmatprep.subr.mxu0 0.0
      %4562 = vmatpush1.msra.mxu0 0.0
      %4563 = vmatprep.subr.mxu0 0.0
      %4564 = vmatpush1.msra.mxu0 0.0
      %4565 = vmatprep.subr.mxu0 0.0
      %4566 = vmatpush1.msra.mxu0 0.0
      %4567 = vmatprep.subr.mxu0 0.0
      %4568 = vmatpush1.msra.mxu0 0.0
      %4569 = vmatprep.subr.mxu0 0.0
      %4570 = vmatpush1.msra.mxu0 0.0
      %4571 = vmatprep.subr.mxu0 0.0
      %4572 = vmatpush1.msra.mxu0 0.0
      %4573 = vmatprep.subr.mxu0 0.0
      %4574 = vmatpush1.msra.mxu0 0.0
      %4575 = vmatprep.subr.mxu0 0.0
      %4576 = vmatpush1.msra.mxu0 0.0
      %4577 = vmatprep.subr.mxu0 0.0
      %4578 = vmatpush1.msra.mxu0 0.0
      %4579 = vmatprep.subr.mxu0 0.0
      %4580 = vmatpush1.msra.mxu0 0.0
      %4581 = vmatprep.subr.mxu0 0.0
      %4582 = vmatpush1.msra.mxu0 0.0
      %4583 = vmatprep.subr.mxu0 0.0
      %4584 = vmatpush1.msra.mxu0 0.0
      %4585 = vmatprep.subr.mxu0 0.0
      %4586 = vmatpush1.msra.mxu0 0.0
      %4587 = vmatprep.subr.mxu0 0.0
      %4588 = vmatpush1.msra.mxu0 0.0
      %4589 = vmatprep.subr.mxu0 0.0
      %4590 = vmatpush1.msra.mxu0 0.0
      %4591 = vmatprep.subr.mxu0 0.0
      %4592 = vmatpush1.msra.mxu0 0.0
      %4593 = vmatprep.subr.mxu0 0.0
      %4594 = vmatpush1.msra.mxu0 0.0
      %4595 = vmatprep.subr.mxu0 0.0
      %4596 = vmatpush1.msra.mxu0 0.0
      %4597 = vmatprep.mubr.f32.mxu0 0.0
      %4598 = vmatmul.mubr.f32.gmra.mrb[0].mxu0 %v711
      %v4599 = vpop.f32.mrb[0].mxu0
      %v4600 = vadd.f32 0.0, %v4599
      %v4601 = vpop.f32.mrb[0].mxu0
      %4602 = vmatprep.mubr.f32.mxu0 0.0
      %4603 = vmatmul.mubr.f32.gmra.mrb[0].mxu0 %v714
      %v4604 = vpop.f32.mrb[0].mxu0
      %v4605 = vadd.f32 0.0, %v4604
      %v4606 = vpop.f32.mrb[0].mxu0
      %4607 = vmatprep.mubr.f32.mxu0 0.0
      %4608 = vmatmul.mubr.f32.gmra.mrb[0].mxu0 %v717
      %v4609 = vpop.f32.mrb[0].mxu0
      %v4610 = vadd.f32 0.0, %v4609
      %v4611 = vpop.f32.mrb[0].mxu0
      %4612 = vmatprep.mubr.f32.mxu0 0.0
      %4613 = vmatmul.mubr.f32.gmra.mrb[0].mxu0 %v720
      %v4614 = vpop.f32.mrb[0].mxu0
      %v4615 = vadd.f32 0.0, %v4614
      %v4616 = vpop.f32.mrb[0].mxu0
      %4617 = vmatprep.mubr.f32.mxu0 0.0
      %4618 = vmatmul.mubr.f32.gmra.mrb[0].mxu0 %v723
      %v4619 = vpop.f32.mrb[0].mxu0
      %v4620 = vadd.f32 0.0, %v4619
      %v4621 = vpop.f32.mrb[0].mxu0
      %4622 = vmatprep.mubr.f32.mxu0 0.0
      %4623 = vmatmul.mubr.f32.gmra.mrb[0].mxu0 %v726
      %v4624 = vpop.f32.mrb[0].mxu0
      %v4625 = vadd.f32 0.0, %v4624
      %v4626 = vpop.f32.mrb[0].mxu0
      %4627 = vmatprep.mubr.f32.mxu0 0.0
      %4628 = vmatmul.mubr.f32.gmra.mrb[0].mxu0 %v729
      %v4629 = vpop.f32.mrb[0].mxu0
      %v4630 = vadd.f32 0.0, %v4629
      %v4631 = vpop.f32.mrb[0].mxu0
      %4632 = vmatprep.mubr.f32.mxu0 0.0
      %4633 = vmatmul.mubr.f32.gmra.mrb[0].mxu0 %v732
      %v4634 = vpop.f32.mrb[0].mxu0
      %v4635 = vadd.f32 0.0, %v4634
      %v4636 = vpop.f32.mrb[0].mxu0
      %4637 = vdwg.mxu0
      %s4638 = scalar_lea.vmem %s5, 48
      %v4639 = vld [vmem:[%s4638] sm:$0xff]
      %v4640 = vld [vmem:[%s4638 + $0x8] sm:$0xff]
      %4641 = vmatprep.subr.mxu0 0.0
      %4642 = vmatpush1.msra.mxu0 %v4639
      %4643 = vmatprep.subr.mxu0 0.0
      %4644 = vmatpush1.msra.mxu0 %v4640
      %4645 = vmatprep.subr.mxu0 0.0
      %4646 = vmatpush1.msra.mxu0 0.0
      %4647 = vmatprep.subr.mxu0 0.0
      %4648 = vmatpush1.msra.mxu0 0.0
      %4649 = vmatprep.subr.mxu0 0.0
      %4650 = vmatpush1.msra.mxu0 0.0
      %4651 = vmatprep.subr.mxu0 0.0
      %4652 = vmatpush1.msra.mxu0 0.0
      %4653 = vmatprep.subr.mxu0 0.0
      %4654 = vmatpush1.msra.mxu0 0.0
      %4655 = vmatprep.subr.mxu0 0.0
      %4656 = vmatpush1.msra.mxu0 0.0
      %4657 = vmatprep.subr.mxu0 0.0
      %4658 = vmatpush1.msra.mxu0 0.0
      %4659 = vmatprep.subr.mxu0 0.0
      %4660 = vmatpush1.msra.mxu0 0.0
      %4661 = vmatprep.subr.mxu0 0.0
      %4662 = vmatpush1.msra.mxu0 0.0
      %4663 = vmatprep.subr.mxu0 0.0
      %4664 = vmatpush1.msra.mxu0 0.0
      %4665 = vmatprep.subr.mxu0 0.0
      %4666 = vmatpush1.msra.mxu0 0.0
      %4667 = vmatprep.subr.mxu0 0.0
      %4668 = vmatpush1.msra.mxu0 0.0
      %4669 = vmatprep.subr.mxu0 0.0
      %4670 = vmatpush1.msra.mxu0 0.0
      %4671 = vmatprep.subr.mxu0 0.0
      %4672 = vmatpush1.msra.mxu0 0.0
      %4673 = vmatprep.subr.mxu0 0.0
      %4674 = vmatpush1.msra.mxu0 0.0
      %4675 = vmatprep.subr.mxu0 0.0
      %4676 = vmatpush1.msra.mxu0 0.0
      %4677 = vmatprep.subr.mxu0 0.0
      %4678 = vmatpush1.msra.mxu0 0.0
      %4679 = vmatprep.subr.mxu0 0.0
      %4680 = vmatpush1.msra.mxu0 0.0
      %4681 = vmatprep.subr.mxu0 0.0
      %4682 = vmatpush1.msra.mxu0 0.0
      %4683 = vmatprep.subr.mxu0 0.0
      %4684 = vmatpush1.msra.mxu0 0.0
      %4685 = vmatprep.subr.mxu0 0.0
      %4686 = vmatpush1.msra.mxu0 0.0
      %4687 = vmatprep.subr.mxu0 0.0
      %4688 = vmatpush1.msra.mxu0 0.0
      %4689 = vmatprep.subr.mxu0 0.0
      %4690 = vmatpush1.msra.mxu0 0.0
      %4691 = vmatprep.subr.mxu0 0.0
      %4692 = vmatpush1.msra.mxu0 0.0
      %4693 = vmatprep.subr.mxu0 0.0
      %4694 = vmatpush1.msra.mxu0 0.0
      %4695 = vmatprep.subr.mxu0 0.0
      %4696 = vmatpush1.msra.mxu0 0.0
      %4697 = vmatprep.subr.mxu0 0.0
      %4698 = vmatpush1.msra.mxu0 0.0
      %4699 = vmatprep.subr.mxu0 0.0
      %4700 = vmatpush1.msra.mxu0 0.0
      %4701 = vmatprep.subr.mxu0 0.0
      %4702 = vmatpush1.msra.mxu0 0.0
      %4703 = vmatprep.subr.mxu0 0.0
      %4704 = vmatpush1.msra.mxu0 0.0
      %4705 = vmatprep.mubr.f32.mxu0 0.0
      %4706 = vmatmul.mubr.f32.gmra.mrb[0].mxu0 %v711
      %v4707 = vpop.f32.mrb[0].mxu0
      %v4708 = vadd.f32 0.0, %v4707
      %v4709 = vpop.f32.mrb[0].mxu0
      %4710 = vmatprep.mubr.f32.mxu0 0.0
      %4711 = vmatmul.mubr.f32.gmra.mrb[0].mxu0 %v714
      %v4712 = vpop.f32.mrb[0].mxu0
      %v4713 = vadd.f32 0.0, %v4712
      %v4714 = vpop.f32.mrb[0].mxu0
      %4715 = vmatprep.mubr.f32.mxu0 0.0
      %4716 = vmatmul.mubr.f32.gmra.mrb[0].mxu0 %v717
      %v4717 = vpop.f32.mrb[0].mxu0
      %v4718 = vadd.f32 0.0, %v4717
      %v4719 = vpop.f32.mrb[0].mxu0
      %4720 = vmatprep.mubr.f32.mxu0 0.0
      %4721 = vmatmul.mubr.f32.gmra.mrb[0].mxu0 %v720
      %v4722 = vpop.f32.mrb[0].mxu0
      %v4723 = vadd.f32 0.0, %v4722
      %v4724 = vpop.f32.mrb[0].mxu0
      %4725 = vmatprep.mubr.f32.mxu0 0.0
      %4726 = vmatmul.mubr.f32.gmra.mrb[0].mxu0 %v723
      %v4727 = vpop.f32.mrb[0].mxu0
      %v4728 = vadd.f32 0.0, %v4727
      %v4729 = vpop.f32.mrb[0].mxu0
      %4730 = vmatprep.mubr.f32.mxu0 0.0
      %4731 = vmatmul.mubr.f32.gmra.mrb[0].mxu0 %v726
      %v4732 = vpop.f32.mrb[0].mxu0
      %v4733 = vadd.f32 0.0, %v4732
      %v4734 = vpop.f32.mrb[0].mxu0
      %4735 = vmatprep.mubr.f32.mxu0 0.0
      %4736 = vmatmul.mubr.f32.gmra.mrb[0].mxu0 %v729
      %v4737 = vpop.f32.mrb[0].mxu0
      %v4738 = vadd.f32 0.0, %v4737
      %v4739 = vpop.f32.mrb[0].mxu0
      %4740 = vmatprep.mubr.f32.mxu0 0.0
      %4741 = vmatmul.mubr.f32.gmra.mrb[0].mxu0 %v732
      %v4742 = vpop.f32.mrb[0].mxu0
      %v4743 = vadd.f32 0.0, %v4742
      %v4744 = vpop.f32.mrb[0].mxu0
      %4745 = vdwg.mxu0
      %v4747 = vsel %vm1053, %v4492, 0
      %v4750 = vsel %vm1053, %v4497, 0
      %v4753 = vsel %vm1053, %v4600, 0
      %v4756 = vsel %vm1053, %v4605, 0
      %4758 = vmatprep.subr.mxu0 0.0
      %4759 = vmatpush1.xpose.msra.mxu0 %v4753
      %4760 = vmatprep.subr.mxu0 0.0
      %4761 = vmatpush1.xpose.msra.mxu0 %v4756
      %4762 = vmatprep.subr.mxu0 0.0
      %4763 = vmatpush1.xpose.msra.mxu0 0.0
      %4764 = vmatprep.subr.mxu0 0.0
      %4765 = vmatpush1.xpose.msra.mxu0 0.0
      %4766 = vmatprep.subr.mxu0 0.0
      %4767 = vmatpush1.xpose.msra.mxu0 0.0
      %4768 = vmatprep.subr.mxu0 0.0
      %4769 = vmatpush1.xpose.msra.mxu0 0.0
      %4770 = vmatprep.subr.mxu0 0.0
      %4771 = vmatpush1.xpose.msra.mxu0 0.0
      %4772 = vmatprep.subr.mxu0 0.0
      %4773 = vmatpush1.xpose.msra.mxu0 0.0
      %4774 = vmatprep.subr.mxu0 0.0
      %4775 = vmatpush1.xpose.msra.mxu0 0.0
      %4776 = vmatprep.subr.mxu0 0.0
      %4777 = vmatpush1.xpose.msra.mxu0 0.0
      %4778 = vmatprep.subr.mxu0 0.0
      %4779 = vmatpush1.xpose.msra.mxu0 0.0
      %4780 = vmatprep.subr.mxu0 0.0
      %4781 = vmatpush1.xpose.msra.mxu0 0.0
      %4782 = vmatprep.subr.mxu0 0.0
      %4783 = vmatpush1.xpose.msra.mxu0 0.0
      %4784 = vmatprep.subr.mxu0 0.0
      %4785 = vmatpush1.xpose.msra.mxu0 0.0
      %4786 = vmatprep.subr.mxu0 0.0
      %4787 = vmatpush1.xpose.msra.mxu0 0.0
      %4788 = vmatprep.subr.mxu0 0.0
      %4789 = vmatpush1.xpose.msra.mxu0 0.0
      %4790 = vmatprep.subr.mxu0 0.0
      %4791 = vmatpush1.xpose.msra.mxu0 0.0
      %4792 = vmatprep.subr.mxu0 0.0
      %4793 = vmatpush1.xpose.msra.mxu0 0.0
      %4794 = vmatprep.subr.mxu0 0.0
      %4795 = vmatpush1.xpose.msra.mxu0 0.0
      %4796 = vmatprep.subr.mxu0 0.0
      %4797 = vmatpush1.xpose.msra.mxu0 0.0
      %4798 = vmatprep.subr.mxu0 0.0
      %4799 = vmatpush1.xpose.msra.mxu0 0.0
      %4800 = vmatprep.subr.mxu0 0.0
      %4801 = vmatpush1.xpose.msra.mxu0 0.0
      %4802 = vmatprep.subr.mxu0 0.0
      %4803 = vmatpush1.xpose.msra.mxu0 0.0
      %4804 = vmatprep.subr.mxu0 0.0
      %4805 = vmatpush1.xpose.msra.mxu0 0.0
      %4806 = vmatprep.subr.mxu0 0.0
      %4807 = vmatpush1.xpose.msra.mxu0 0.0
      %4808 = vmatprep.subr.mxu0 0.0
      %4809 = vmatpush1.xpose.msra.mxu0 0.0
      %4810 = vmatprep.subr.mxu0 0.0
      %4811 = vmatpush1.xpose.msra.mxu0 0.0
      %4812 = vmatprep.subr.mxu0 0.0
      %4813 = vmatpush1.xpose.msra.mxu0 0.0
      %4814 = vmatprep.subr.mxu0 0.0
      %4815 = vmatpush1.xpose.msra.mxu0 0.0
      %4816 = vmatprep.subr.mxu0 0.0
      %4817 = vmatpush1.xpose.msra.mxu0 0.0
      %4818 = vmatprep.subr.mxu0 0.0
      %4819 = vmatpush1.xpose.msra.mxu0 0.0
      %4820 = vmatprep.subr.mxu0 0.0
      %4821 = vmatpush1.xpose.msra.mxu0 0.0
      %4822 = vmatprep.mubr.f32.mxu0 0.0
      %4823 = vmatmul.mubr.f32.gmra.mrb[0].mxu0 %v4747
      %v4824 = vpop.f32.mrb[0].mxu0
      %v4825 = vadd.f32 0.0, %v4824
      %v4826 = vpop.f32.mrb[0].mxu0
      %4827 = vmatprep.mubr.f32.mxu0 0.0
      %4828 = vmatmul.mubr.f32.gmra.mrb[0].mxu0 %v4750
      %v4829 = vpop.f32.mrb[0].mxu0
      %v4830 = vadd.f32 0.0, %v4829
      %v4831 = vpop.f32.mrb[0].mxu0
      %4832 = vdwg.mxu0
      %v4834 = vsel %vm1053, %v4502, 0
      %v4837 = vsel %vm1053, %v4507, 0
      %v4840 = vsel %vm1053, %v4610, 0
      %v4843 = vsel %vm1053, %v4615, 0
      %4845 = vmatprep.subr.mxu0 0.0
      %4846 = vmatpush1.xpose.msra.mxu0 %v4840
      %4847 = vmatprep.subr.mxu0 0.0
      %4848 = vmatpush1.xpose.msra.mxu0 %v4843
      %4849 = vmatprep.subr.mxu0 0.0
      %4850 = vmatpush1.xpose.msra.mxu0 0.0
      %4851 = vmatprep.subr.mxu0 0.0
      %4852 = vmatpush1.xpose.msra.mxu0 0.0
      %4853 = vmatprep.subr.mxu0 0.0
      %4854 = vmatpush1.xpose.msra.mxu0 0.0
      %4855 = vmatprep.subr.mxu0 0.0
      %4856 = vmatpush1.xpose.msra.mxu0 0.0
      %4857 = vmatprep.subr.mxu0 0.0
      %4858 = vmatpush1.xpose.msra.mxu0 0.0
      %4859 = vmatprep.subr.mxu0 0.0
      %4860 = vmatpush1.xpose.msra.mxu0 0.0
      %4861 = vmatprep.subr.mxu0 0.0
      %4862 = vmatpush1.xpose.msra.mxu0 0.0
      %4863 = vmatprep.subr.mxu0 0.0
      %4864 = vmatpush1.xpose.msra.mxu0 0.0
      %4865 = vmatprep.subr.mxu0 0.0
      %4866 = vmatpush1.xpose.msra.mxu0 0.0
      %4867 = vmatprep.subr.mxu0 0.0
      %4868 = vmatpush1.xpose.msra.mxu0 0.0
      %4869 = vmatprep.subr.mxu0 0.0
      %4870 = vmatpush1.xpose.msra.mxu0 0.0
      %4871 = vmatprep.subr.mxu0 0.0
      %4872 = vmatpush1.xpose.msra.mxu0 0.0
      %4873 = vmatprep.subr.mxu0 0.0
      %4874 = vmatpush1.xpose.msra.mxu0 0.0
      %4875 = vmatprep.subr.mxu0 0.0
      %4876 = vmatpush1.xpose.msra.mxu0 0.0
      %4877 = vmatprep.subr.mxu0 0.0
      %4878 = vmatpush1.xpose.msra.mxu0 0.0
      %4879 = vmatprep.subr.mxu0 0.0
      %4880 = vmatpush1.xpose.msra.mxu0 0.0
      %4881 = vmatprep.subr.mxu0 0.0
      %4882 = vmatpush1.xpose.msra.mxu0 0.0
      %4883 = vmatprep.subr.mxu0 0.0
      %4884 = vmatpush1.xpose.msra.mxu0 0.0
      %4885 = vmatprep.subr.mxu0 0.0
      %4886 = vmatpush1.xpose.msra.mxu0 0.0
      %4887 = vmatprep.subr.mxu0 0.0
      %4888 = vmatpush1.xpose.msra.mxu0 0.0
      %4889 = vmatprep.subr.mxu0 0.0
      %4890 = vmatpush1.xpose.msra.mxu0 0.0
      %4891 = vmatprep.subr.mxu0 0.0
      %4892 = vmatpush1.xpose.msra.mxu0 0.0
      %4893 = vmatprep.subr.mxu0 0.0
      %4894 = vmatpush1.xpose.msra.mxu0 0.0
      %4895 = vmatprep.subr.mxu0 0.0
      %4896 = vmatpush1.xpose.msra.mxu0 0.0
      %4897 = vmatprep.subr.mxu0 0.0
      %4898 = vmatpush1.xpose.msra.mxu0 0.0
      %4899 = vmatprep.subr.mxu0 0.0
      %4900 = vmatpush1.xpose.msra.mxu0 0.0
      %4901 = vmatprep.subr.mxu0 0.0
      %4902 = vmatpush1.xpose.msra.mxu0 0.0
      %4903 = vmatprep.subr.mxu0 0.0
      %4904 = vmatpush1.xpose.msra.mxu0 0.0
      %4905 = vmatprep.subr.mxu0 0.0
      %4906 = vmatpush1.xpose.msra.mxu0 0.0
      %4907 = vmatprep.subr.mxu0 0.0
      %4908 = vmatpush1.xpose.msra.mxu0 0.0
      %4909 = vmatprep.mubr.f32.mxu0 0.0
      %4910 = vmatmul.mubr.f32.gmra.mrb[0].mxu0 %v4834
      %v4911 = vpop.f32.mrb[0].mxu0
      %v4912 = vadd.f32 0.0, %v4911
      %v4913 = vpop.f32.mrb[0].mxu0
      %4914 = vmatprep.mubr.f32.mxu0 0.0
      %4915 = vmatmul.mubr.f32.gmra.mrb[0].mxu0 %v4837
      %v4916 = vpop.f32.mrb[0].mxu0
      %v4917 = vadd.f32 0.0, %v4916
      %v4918 = vpop.f32.mrb[0].mxu0
      %4919 = vdwg.mxu0
      %v4921 = vsel %vm1053, %v4512, 0
      %v4924 = vsel %vm1053, %v4517, 0
      %v4927 = vsel %vm1053, %v4620, 0
      %v4930 = vsel %vm1053, %v4625, 0
      %4932 = vmatprep.subr.mxu0 0.0
      %4933 = vmatpush1.xpose.msra.mxu0 %v4927
      %4934 = vmatprep.subr.mxu0 0.0
      %4935 = vmatpush1.xpose.msra.mxu0 %v4930
      %4936 = vmatprep.subr.mxu0 0.0
      %4937 = vmatpush1.xpose.msra.mxu0 0.0
      %4938 = vmatprep.subr.mxu0 0.0
      %4939 = vmatpush1.xpose.msra.mxu0 0.0
      %4940 = vmatprep.subr.mxu0 0.0
      %4941 = vmatpush1.xpose.msra.mxu0 0.0
      %4942 = vmatprep.subr.mxu0 0.0
      %4943 = vmatpush1.xpose.msra.mxu0 0.0
      %4944 = vmatprep.subr.mxu0 0.0
      %4945 = vmatpush1.xpose.msra.mxu0 0.0
      %4946 = vmatprep.subr.mxu0 0.0
      %4947 = vmatpush1.xpose.msra.mxu0 0.0
      %4948 = vmatprep.subr.mxu0 0.0
      %4949 = vmatpush1.xpose.msra.mxu0 0.0
      %4950 = vmatprep.subr.mxu0 0.0
      %4951 = vmatpush1.xpose.msra.mxu0 0.0
      %4952 = vmatprep.subr.mxu0 0.0
      %4953 = vmatpush1.xpose.msra.mxu0 0.0
      %4954 = vmatprep.subr.mxu0 0.0
      %4955 = vmatpush1.xpose.msra.mxu0 0.0
      %4956 = vmatprep.subr.mxu0 0.0
      %4957 = vmatpush1.xpose.msra.mxu0 0.0
      %4958 = vmatprep.subr.mxu0 0.0
      %4959 = vmatpush1.xpose.msra.mxu0 0.0
      %4960 = vmatprep.subr.mxu0 0.0
      %4961 = vmatpush1.xpose.msra.mxu0 0.0
      %4962 = vmatprep.subr.mxu0 0.0
      %4963 = vmatpush1.xpose.msra.mxu0 0.0
      %4964 = vmatprep.subr.mxu0 0.0
      %4965 = vmatpush1.xpose.msra.mxu0 0.0
      %4966 = vmatprep.subr.mxu0 0.0
      %4967 = vmatpush1.xpose.msra.mxu0 0.0
      %4968 = vmatprep.subr.mxu0 0.0
      %4969 = vmatpush1.xpose.msra.mxu0 0.0
      %4970 = vmatprep.subr.mxu0 0.0
      %4971 = vmatpush1.xpose.msra.mxu0 0.0
      %4972 = vmatprep.subr.mxu0 0.0
      %4973 = vmatpush1.xpose.msra.mxu0 0.0
      %4974 = vmatprep.subr.mxu0 0.0
      %4975 = vmatpush1.xpose.msra.mxu0 0.0
      %4976 = vmatprep.subr.mxu0 0.0
      %4977 = vmatpush1.xpose.msra.mxu0 0.0
      %4978 = vmatprep.subr.mxu0 0.0
      %4979 = vmatpush1.xpose.msra.mxu0 0.0
      %4980 = vmatprep.subr.mxu0 0.0
      %4981 = vmatpush1.xpose.msra.mxu0 0.0
      %4982 = vmatprep.subr.mxu0 0.0
      %4983 = vmatpush1.xpose.msra.mxu0 0.0
      %4984 = vmatprep.subr.mxu0 0.0
      %4985 = vmatpush1.xpose.msra.mxu0 0.0
      %4986 = vmatprep.subr.mxu0 0.0
      %4987 = vmatpush1.xpose.msra.mxu0 0.0
      %4988 = vmatprep.subr.mxu0 0.0
      %4989 = vmatpush1.xpose.msra.mxu0 0.0
      %4990 = vmatprep.subr.mxu0 0.0
      %4991 = vmatpush1.xpose.msra.mxu0 0.0
      %4992 = vmatprep.subr.mxu0 0.0
      %4993 = vmatpush1.xpose.msra.mxu0 0.0
      %4994 = vmatprep.subr.mxu0 0.0
      %4995 = vmatpush1.xpose.msra.mxu0 0.0
      %4996 = vmatprep.mubr.f32.mxu0 0.0
      %4997 = vmatmul.mubr.f32.gmra.mrb[0].mxu0 %v4921
      %v4998 = vpop.f32.mrb[0].mxu0
      %v4999 = vadd.f32 0.0, %v4998
      %v5000 = vpop.f32.mrb[0].mxu0
      %5001 = vmatprep.mubr.f32.mxu0 0.0
      %5002 = vmatmul.mubr.f32.gmra.mrb[0].mxu0 %v4924
      %v5003 = vpop.f32.mrb[0].mxu0
      %v5004 = vadd.f32 0.0, %v5003
      %v5005 = vpop.f32.mrb[0].mxu0
      %5006 = vdwg.mxu0
      %v5008 = vsel %vm1053, %v4522, 0
      %v5011 = vsel %vm1053, %v4527, 0
      %v5014 = vsel %vm1053, %v4630, 0
      %v5017 = vsel %vm1053, %v4635, 0
      %5019 = vmatprep.subr.mxu0 0.0
      %5020 = vmatpush1.xpose.msra.mxu0 %v5014
      %5021 = vmatprep.subr.mxu0 0.0
      %5022 = vmatpush1.xpose.msra.mxu0 %v5017
      %5023 = vmatprep.subr.mxu0 0.0
      %5024 = vmatpush1.xpose.msra.mxu0 0.0
      %5025 = vmatprep.subr.mxu0 0.0
      %5026 = vmatpush1.xpose.msra.mxu0 0.0
      %5027 = vmatprep.subr.mxu0 0.0
      %5028 = vmatpush1.xpose.msra.mxu0 0.0
      %5029 = vmatprep.subr.mxu0 0.0
      %5030 = vmatpush1.xpose.msra.mxu0 0.0
      %5031 = vmatprep.subr.mxu0 0.0
      %5032 = vmatpush1.xpose.msra.mxu0 0.0
      %5033 = vmatprep.subr.mxu0 0.0
      %5034 = vmatpush1.xpose.msra.mxu0 0.0
      %5035 = vmatprep.subr.mxu0 0.0
      %5036 = vmatpush1.xpose.msra.mxu0 0.0
      %5037 = vmatprep.subr.mxu0 0.0
      %5038 = vmatpush1.xpose.msra.mxu0 0.0
      %5039 = vmatprep.subr.mxu0 0.0
      %5040 = vmatpush1.xpose.msra.mxu0 0.0
      %5041 = vmatprep.subr.mxu0 0.0
      %5042 = vmatpush1.xpose.msra.mxu0 0.0
      %5043 = vmatprep.subr.mxu0 0.0
      %5044 = vmatpush1.xpose.msra.mxu0 0.0
      %5045 = vmatprep.subr.mxu0 0.0
      %5046 = vmatpush1.xpose.msra.mxu0 0.0
      %5047 = vmatprep.subr.mxu0 0.0
      %5048 = vmatpush1.xpose.msra.mxu0 0.0
      %5049 = vmatprep.subr.mxu0 0.0
      %5050 = vmatpush1.xpose.msra.mxu0 0.0
      %5051 = vmatprep.subr.mxu0 0.0
      %5052 = vmatpush1.xpose.msra.mxu0 0.0
      %5053 = vmatprep.subr.mxu0 0.0
      %5054 = vmatpush1.xpose.msra.mxu0 0.0
      %5055 = vmatprep.subr.mxu0 0.0
      %5056 = vmatpush1.xpose.msra.mxu0 0.0
      %5057 = vmatprep.subr.mxu0 0.0
      %5058 = vmatpush1.xpose.msra.mxu0 0.0
      %5059 = vmatprep.subr.mxu0 0.0
      %5060 = vmatpush1.xpose.msra.mxu0 0.0
      %5061 = vmatprep.subr.mxu0 0.0
      %5062 = vmatpush1.xpose.msra.mxu0 0.0
      %5063 = vmatprep.subr.mxu0 0.0
      %5064 = vmatpush1.xpose.msra.mxu0 0.0
      %5065 = vmatprep.subr.mxu0 0.0
      %5066 = vmatpush1.xpose.msra.mxu0 0.0
      %5067 = vmatprep.subr.mxu0 0.0
      %5068 = vmatpush1.xpose.msra.mxu0 0.0
      %5069 = vmatprep.subr.mxu0 0.0
      %5070 = vmatpush1.xpose.msra.mxu0 0.0
      %5071 = vmatprep.subr.mxu0 0.0
      %5072 = vmatpush1.xpose.msra.mxu0 0.0
      %5073 = vmatprep.subr.mxu0 0.0
      %5074 = vmatpush1.xpose.msra.mxu0 0.0
      %5075 = vmatprep.subr.mxu0 0.0
      %5076 = vmatpush1.xpose.msra.mxu0 0.0
      %5077 = vmatprep.subr.mxu0 0.0
      %5078 = vmatpush1.xpose.msra.mxu0 0.0
      %5079 = vmatprep.subr.mxu0 0.0
      %5080 = vmatpush1.xpose.msra.mxu0 0.0
      %5081 = vmatprep.subr.mxu0 0.0
      %5082 = vmatpush1.xpose.msra.mxu0 0.0
      %5083 = vmatprep.mubr.f32.mxu0 0.0
      %5084 = vmatmul.mubr.f32.gmra.mrb[0].mxu0 %v5008
      %v5085 = vpop.f32.mrb[0].mxu0
      %v5086 = vadd.f32 0.0, %v5085
      %v5087 = vpop.f32.mrb[0].mxu0
      %5088 = vmatprep.mubr.f32.mxu0 0.0
      %5089 = vmatmul.mubr.f32.gmra.mrb[0].mxu0 %v5011
      %v5090 = vpop.f32.mrb[0].mxu0
      %v5091 = vadd.f32 0.0, %v5090
      %v5092 = vpop.f32.mrb[0].mxu0
      %5093 = vdwg.mxu0
      %v5094 = vmul.f32 %v4825, 0.35355338
      %v5095 = vmul.f32 %v4830, 0.35355338
      %v5096 = vmul.f32 %v4912, 0.35355338
      %v5097 = vmul.f32 %v4917, 0.35355338
      %v5098 = vmul.f32 %v4999, 0.35355338
      %v5099 = vmul.f32 %v5004, 0.35355338
      %v5100 = vmul.f32 %v5086, 0.35355338
      %v5101 = vmul.f32 %v5091, 0.35355338
      %v5102 = vsel %vm559, %v5094, -inf
      %5103 = vmax.xlane.f32.xlu0 %v5102
      %v5104 = vpop.xlane.xlu0 %5103
      %v5105 = vsel %vm559, %v5095, -inf
      %5106 = vmax.xlane.f32.xlu0 %v5105
      %v5107 = vpop.xlane.xlu0 %5106
      %v5108 = vsel %vm559, %v5096, -inf
      %5109 = vmax.xlane.f32.xlu0 %v5108
      %v5110 = vpop.xlane.xlu0 %5109
      %v5111 = vsel %vm559, %v5097, -inf
      %5112 = vmax.xlane.f32.xlu0 %v5111
      %v5113 = vpop.xlane.xlu0 %5112
      %v5114 = vsel %vm559, %v5098, -inf
      %5115 = vmax.xlane.f32.xlu0 %v5114
      %v5116 = vpop.xlane.xlu0 %5115
      %v5117 = vsel %vm559, %v5099, -inf
      %5118 = vmax.xlane.f32.xlu0 %v5117
      %v5119 = vpop.xlane.xlu0 %5118
      %v5120 = vsel %vm559, %v5100, -inf
      %5121 = vmax.xlane.f32.xlu0 %v5120
      %v5122 = vpop.xlane.xlu0 %5121
      %v5123 = vsel %vm559, %v5101, -inf
      %5124 = vmax.xlane.f32.xlu0 %v5123
      %v5125 = vpop.xlane.xlu0 %5124
      %v5126 = vsub.f32 %v5094, %v5104
      %v5127 = vsub.f32 %v5095, %v5107
      %v5128 = vsub.f32 %v5096, %v5110
      %v5129 = vsub.f32 %v5097, %v5113
      %v5130 = vsub.f32 %v5098, %v5116
      %v5131 = vsub.f32 %v5099, %v5119
      %v5132 = vsub.f32 %v5100, %v5122
      %v5133 = vsub.f32 %v5101, %v5125
      %v5134 = vmul.f32 %v5126, 1.442695
      %v5135 = vpow.pop %v5134
      %v5136 = vmul.f32 %v5127, 1.442695
      %v5137 = vpow.pop %v5136
      %v5138 = vmul.f32 %v5128, 1.442695
      %v5139 = vpow.pop %v5138
      %v5140 = vmul.f32 %v5129, 1.442695
      %v5141 = vpow.pop %v5140
      %v5142 = vmul.f32 %v5130, 1.442695
      %v5143 = vpow.pop %v5142
      %v5144 = vmul.f32 %v5131, 1.442695
      %v5145 = vpow.pop %v5144
      %v5146 = vmul.f32 %v5132, 1.442695
      %v5147 = vpow.pop %v5146
      %v5148 = vmul.f32 %v5133, 1.442695
      %v5149 = vpow.pop %v5148
      %v5150 = vsel %vm559, %v5135, 0.0
      %5151 = vadd.xlane.f32.xlu0 %v5150
      %v5152 = vpop.xlane.xlu0 %5151
      %v5153 = vsel %vm559, %v5137, 0.0
      %5154 = vadd.xlane.f32.xlu0 %v5153
      %v5155 = vpop.xlane.xlu0 %5154
      %v5156 = vsel %vm559, %v5139, 0.0
      %5157 = vadd.xlane.f32.xlu0 %v5156
      %v5158 = vpop.xlane.xlu0 %5157
      %v5159 = vsel %vm559, %v5141, 0.0
      %5160 = vadd.xlane.f32.xlu0 %v5159
      %v5161 = vpop.xlane.xlu0 %5160
      %v5162 = vsel %vm559, %v5143, 0.0
      %5163 = vadd.xlane.f32.xlu0 %v5162
      %v5164 = vpop.xlane.xlu0 %5163
      %v5165 = vsel %vm559, %v5145, 0.0
      %5166 = vadd.xlane.f32.xlu0 %v5165
      %v5167 = vpop.xlane.xlu0 %5166
      %v5168 = vsel %vm559, %v5147, 0.0
      %5169 = vadd.xlane.f32.xlu0 %v5168
      %v5170 = vpop.xlane.xlu0 %5169
      %v5171 = vsel %vm559, %v5149, 0.0
      %5172 = vadd.xlane.f32.xlu0 %v5171
      %v5173 = vpop.xlane.xlu0 %5172
      %v5174 = vrcp.pop %v5152
      %v5175 = vmul.f32 %v5135, %v5174
      %v5176 = vrcp.pop %v5155
      %v5177 = vmul.f32 %v5137, %v5176
      %v5178 = vrcp.pop %v5158
      %v5179 = vmul.f32 %v5139, %v5178
      %v5180 = vrcp.pop %v5161
      %v5181 = vmul.f32 %v5141, %v5180
      %v5182 = vrcp.pop %v5164
      %v5183 = vmul.f32 %v5143, %v5182
      %v5184 = vrcp.pop %v5167
      %v5185 = vmul.f32 %v5145, %v5184
      %v5186 = vrcp.pop %v5170
      %v5187 = vmul.f32 %v5147, %v5186
      %v5188 = vrcp.pop %v5173
      %v5189 = vmul.f32 %v5149, %v5188
      %v5191 = vsel %vm559, %v5175, 0
      %v5194 = vsel %vm559, %v5177, 0
      %5196 = vmatprep.subr.mxu0 0.0
      %5197 = vmatpush1.msra.mxu0 %v4708
      %5198 = vmatprep.subr.mxu0 0.0
      %5199 = vmatpush1.msra.mxu0 %v4713
      %5200 = vmatprep.subr.mxu0 0.0
      %5201 = vmatpush1.msra.mxu0 0.0
      %5202 = vmatprep.subr.mxu0 0.0
      %5203 = vmatpush1.msra.mxu0 0.0
      %5204 = vmatprep.subr.mxu0 0.0
      %5205 = vmatpush1.msra.mxu0 0.0
      %5206 = vmatprep.subr.mxu0 0.0
      %5207 = vmatpush1.msra.mxu0 0.0
      %5208 = vmatprep.subr.mxu0 0.0
      %5209 = vmatpush1.msra.mxu0 0.0
      %5210 = vmatprep.subr.mxu0 0.0
      %5211 = vmatpush1.msra.mxu0 0.0
      %5212 = vmatprep.subr.mxu0 0.0
      %5213 = vmatpush1.msra.mxu0 0.0
      %5214 = vmatprep.subr.mxu0 0.0
      %5215 = vmatpush1.msra.mxu0 0.0
      %5216 = vmatprep.subr.mxu0 0.0
      %5217 = vmatpush1.msra.mxu0 0.0
      %5218 = vmatprep.subr.mxu0 0.0
      %5219 = vmatpush1.msra.mxu0 0.0
      %5220 = vmatprep.subr.mxu0 0.0
      %5221 = vmatpush1.msra.mxu0 0.0
      %5222 = vmatprep.subr.mxu0 0.0
      %5223 = vmatpush1.msra.mxu0 0.0
      %5224 = vmatprep.subr.mxu0 0.0
      %5225 = vmatpush1.msra.mxu0 0.0
      %5226 = vmatprep.subr.mxu0 0.0
      %5227 = vmatpush1.msra.mxu0 0.0
      %5228 = vmatprep.subr.mxu0 0.0
      %5229 = vmatpush1.msra.mxu0 0.0
      %5230 = vmatprep.subr.mxu0 0.0
      %5231 = vmatpush1.msra.mxu0 0.0
      %5232 = vmatprep.subr.mxu0 0.0
      %5233 = vmatpush1.msra.mxu0 0.0
      %5234 = vmatprep.subr.mxu0 0.0
      %5235 = vmatpush1.msra.mxu0 0.0
      %5236 = vmatprep.subr.mxu0 0.0
      %5237 = vmatpush1.msra.mxu0 0.0
      %5238 = vmatprep.subr.mxu0 0.0
      %5239 = vmatpush1.msra.mxu0 0.0
      %5240 = vmatprep.subr.mxu0 0.0
      %5241 = vmatpush1.msra.mxu0 0.0
      %5242 = vmatprep.subr.mxu0 0.0
      %5243 = vmatpush1.msra.mxu0 0.0
      %5244 = vmatprep.subr.mxu0 0.0
      %5245 = vmatpush1.msra.mxu0 0.0
      %5246 = vmatprep.subr.mxu0 0.0
      %5247 = vmatpush1.msra.mxu0 0.0
      %5248 = vmatprep.subr.mxu0 0.0
      %5249 = vmatpush1.msra.mxu0 0.0
      %5250 = vmatprep.subr.mxu0 0.0
      %5251 = vmatpush1.msra.mxu0 0.0
      %5252 = vmatprep.subr.mxu0 0.0
      %5253 = vmatpush1.msra.mxu0 0.0
      %5254 = vmatprep.subr.mxu0 0.0
      %5255 = vmatpush1.msra.mxu0 0.0
      %5256 = vmatprep.subr.mxu0 0.0
      %5257 = vmatpush1.msra.mxu0 0.0
      %5258 = vmatprep.subr.mxu0 0.0
      %5259 = vmatpush1.msra.mxu0 0.0
      %5260 = vmatprep.mubr.f32.mxu0 0.0
      %5261 = vmatmul.mubr.f32.gmra.mrb[0].mxu0 %v5191
      %v5262 = vpop.f32.mrb[0].mxu0
      %v5263 = vadd.f32 0.0, %v5262
      %v5264 = vpop.f32.mrb[0].mxu0
      %5265 = vmatprep.mubr.f32.mxu0 0.0
      %5266 = vmatmul.mubr.f32.gmra.mrb[0].mxu0 %v5194
      %v5267 = vpop.f32.mrb[0].mxu0
      %v5268 = vadd.f32 0.0, %v5267
      %v5269 = vpop.f32.mrb[0].mxu0
      %5270 = vdwg.mxu0
      %v5272 = vsel %vm559, %v5179, 0
      %v5275 = vsel %vm559, %v5181, 0
      %5277 = vmatprep.subr.mxu0 0.0
      %5278 = vmatpush1.msra.mxu0 %v4718
      %5279 = vmatprep.subr.mxu0 0.0
      %5280 = vmatpush1.msra.mxu0 %v4723
      %5281 = vmatprep.subr.mxu0 0.0
      %5282 = vmatpush1.msra.mxu0 0.0
      %5283 = vmatprep.subr.mxu0 0.0
      %5284 = vmatpush1.msra.mxu0 0.0
      %5285 = vmatprep.subr.mxu0 0.0
      %5286 = vmatpush1.msra.mxu0 0.0
      %5287 = vmatprep.subr.mxu0 0.0
      %5288 = vmatpush1.msra.mxu0 0.0
      %5289 = vmatprep.subr.mxu0 0.0
      %5290 = vmatpush1.msra.mxu0 0.0
      %5291 = vmatprep.subr.mxu0 0.0
      %5292 = vmatpush1.msra.mxu0 0.0
      %5293 = vmatprep.subr.mxu0 0.0
      %5294 = vmatpush1.msra.mxu0 0.0
      %5295 = vmatprep.subr.mxu0 0.0
      %5296 = vmatpush1.msra.mxu0 0.0
      %5297 = vmatprep.subr.mxu0 0.0
      %5298 = vmatpush1.msra.mxu0 0.0
      %5299 = vmatprep.subr.mxu0 0.0
      %5300 = vmatpush1.msra.mxu0 0.0
      %5301 = vmatprep.subr.mxu0 0.0
      %5302 = vmatpush1.msra.mxu0 0.0
      %5303 = vmatprep.subr.mxu0 0.0
      %5304 = vmatpush1.msra.mxu0 0.0
      %5305 = vmatprep.subr.mxu0 0.0
      %5306 = vmatpush1.msra.mxu0 0.0
      %5307 = vmatprep.subr.mxu0 0.0
      %5308 = vmatpush1.msra.mxu0 0.0
      %5309 = vmatprep.subr.mxu0 0.0
      %5310 = vmatpush1.msra.mxu0 0.0
      %5311 = vmatprep.subr.mxu0 0.0
      %5312 = vmatpush1.msra.mxu0 0.0
      %5313 = vmatprep.subr.mxu0 0.0
      %5314 = vmatpush1.msra.mxu0 0.0
      %5315 = vmatprep.subr.mxu0 0.0
      %5316 = vmatpush1.msra.mxu0 0.0
      %5317 = vmatprep.subr.mxu0 0.0
      %5318 = vmatpush1.msra.mxu0 0.0
      %5319 = vmatprep.subr.mxu0 0.0
      %5320 = vmatpush1.msra.mxu0 0.0
      %5321 = vmatprep.subr.mxu0 0.0
      %5322 = vmatpush1.msra.mxu0 0.0
      %5323 = vmatprep.subr.mxu0 0.0
      %5324 = vmatpush1.msra.mxu0 0.0
      %5325 = vmatprep.subr.mxu0 0.0
      %5326 = vmatpush1.msra.mxu0 0.0
      %5327 = vmatprep.subr.mxu0 0.0
      %5328 = vmatpush1.msra.mxu0 0.0
      %5329 = vmatprep.subr.mxu0 0.0
      %5330 = vmatpush1.msra.mxu0 0.0
      %5331 = vmatprep.subr.mxu0 0.0
      %5332 = vmatpush1.msra.mxu0 0.0
      %5333 = vmatprep.subr.mxu0 0.0
      %5334 = vmatpush1.msra.mxu0 0.0
      %5335 = vmatprep.subr.mxu0 0.0
      %5336 = vmatpush1.msra.mxu0 0.0
      %5337 = vmatprep.subr.mxu0 0.0
      %5338 = vmatpush1.msra.mxu0 0.0
      %5339 = vmatprep.subr.mxu0 0.0
      %5340 = vmatpush1.msra.mxu0 0.0
      %5341 = vmatprep.mubr.f32.mxu0 0.0
      %5342 = vmatmul.mubr.f32.gmra.mrb[0].mxu0 %v5272
      %v5343 = vpop.f32.mrb[0].mxu0
      %v5344 = vadd.f32 0.0, %v5343
      %v5345 = vpop.f32.mrb[0].mxu0
      %5346 = vmatprep.mubr.f32.mxu0 0.0
      %5347 = vmatmul.mubr.f32.gmra.mrb[0].mxu0 %v5275
      %v5348 = vpop.f32.mrb[0].mxu0
      %v5349 = vadd.f32 0.0, %v5348
      %v5350 = vpop.f32.mrb[0].mxu0
      %5351 = vdwg.mxu0
      %v5353 = vsel %vm559, %v5183, 0
      %v5356 = vsel %vm559, %v5185, 0
      %5358 = vmatprep.subr.mxu0 0.0
      %5359 = vmatpush1.msra.mxu0 %v4728
      %5360 = vmatprep.subr.mxu0 0.0
      %5361 = vmatpush1.msra.mxu0 %v4733
      %5362 = vmatprep.subr.mxu0 0.0
      %5363 = vmatpush1.msra.mxu0 0.0
      %5364 = vmatprep.subr.mxu0 0.0
      %5365 = vmatpush1.msra.mxu0 0.0
      %5366 = vmatprep.subr.mxu0 0.0
      %5367 = vmatpush1.msra.mxu0 0.0
      %5368 = vmatprep.subr.mxu0 0.0
      %5369 = vmatpush1.msra.mxu0 0.0
      %5370 = vmatprep.subr.mxu0 0.0
      %5371 = vmatpush1.msra.mxu0 0.0
      %5372 = vmatprep.subr.mxu0 0.0
      %5373 = vmatpush1.msra.mxu0 0.0
      %5374 = vmatprep.subr.mxu0 0.0
      %5375 = vmatpush1.msra.mxu0 0.0
      %5376 = vmatprep.subr.mxu0 0.0
      %5377 = vmatpush1.msra.mxu0 0.0
      %5378 = vmatprep.subr.mxu0 0.0
      %5379 = vmatpush1.msra.mxu0 0.0
      %5380 = vmatprep.subr.mxu0 0.0
      %5381 = vmatpush1.msra.mxu0 0.0
      %5382 = vmatprep.subr.mxu0 0.0
      %5383 = vmatpush1.msra.mxu0 0.0
      %5384 = vmatprep.subr.mxu0 0.0
      %5385 = vmatpush1.msra.mxu0 0.0
      %5386 = vmatprep.subr.mxu0 0.0
      %5387 = vmatpush1.msra.mxu0 0.0
      %5388 = vmatprep.subr.mxu0 0.0
      %5389 = vmatpush1.msra.mxu0 0.0
      %5390 = vmatprep.subr.mxu0 0.0
      %5391 = vmatpush1.msra.mxu0 0.0
      %5392 = vmatprep.subr.mxu0 0.0
      %5393 = vmatpush1.msra.mxu0 0.0
      %5394 = vmatprep.subr.mxu0 0.0
      %5395 = vmatpush1.msra.mxu0 0.0
      %5396 = vmatprep.subr.mxu0 0.0
      %5397 = vmatpush1.msra.mxu0 0.0
      %5398 = vmatprep.subr.mxu0 0.0
      %5399 = vmatpush1.msra.mxu0 0.0
      %5400 = vmatprep.subr.mxu0 0.0
      %5401 = vmatpush1.msra.mxu0 0.0
      %5402 = vmatprep.subr.mxu0 0.0
      %5403 = vmatpush1.msra.mxu0 0.0
      %5404 = vmatprep.subr.mxu0 0.0
      %5405 = vmatpush1.msra.mxu0 0.0
      %5406 = vmatprep.subr.mxu0 0.0
      %5407 = vmatpush1.msra.mxu0 0.0
      %5408 = vmatprep.subr.mxu0 0.0
      %5409 = vmatpush1.msra.mxu0 0.0
      %5410 = vmatprep.subr.mxu0 0.0
      %5411 = vmatpush1.msra.mxu0 0.0
      %5412 = vmatprep.subr.mxu0 0.0
      %5413 = vmatpush1.msra.mxu0 0.0
      %5414 = vmatprep.subr.mxu0 0.0
      %5415 = vmatpush1.msra.mxu0 0.0
      %5416 = vmatprep.subr.mxu0 0.0
      %5417 = vmatpush1.msra.mxu0 0.0
      %5418 = vmatprep.subr.mxu0 0.0
      %5419 = vmatpush1.msra.mxu0 0.0
      %5420 = vmatprep.subr.mxu0 0.0
      %5421 = vmatpush1.msra.mxu0 0.0
      %5422 = vmatprep.mubr.f32.mxu0 0.0
      %5423 = vmatmul.mubr.f32.gmra.mrb[0].mxu0 %v5353
      %v5424 = vpop.f32.mrb[0].mxu0
      %v5425 = vadd.f32 0.0, %v5424
      %v5426 = vpop.f32.mrb[0].mxu0
      %5427 = vmatprep.mubr.f32.mxu0 0.0
      %5428 = vmatmul.mubr.f32.gmra.mrb[0].mxu0 %v5356
      %v5429 = vpop.f32.mrb[0].mxu0
      %v5430 = vadd.f32 0.0, %v5429
      %v5431 = vpop.f32.mrb[0].mxu0
      %5432 = vdwg.mxu0
      %v5434 = vsel %vm559, %v5187, 0
      %v5437 = vsel %vm559, %v5189, 0
      %5439 = vmatprep.subr.mxu0 0.0
      %5440 = vmatpush1.msra.mxu0 %v4738
      %5441 = vmatprep.subr.mxu0 0.0
      %5442 = vmatpush1.msra.mxu0 %v4743
      %5443 = vmatprep.subr.mxu0 0.0
      %5444 = vmatpush1.msra.mxu0 0.0
      %5445 = vmatprep.subr.mxu0 0.0
      %5446 = vmatpush1.msra.mxu0 0.0
      %5447 = vmatprep.subr.mxu0 0.0
      %5448 = vmatpush1.msra.mxu0 0.0
      %5449 = vmatprep.subr.mxu0 0.0
      %5450 = vmatpush1.msra.mxu0 0.0
      %5451 = vmatprep.subr.mxu0 0.0
      %5452 = vmatpush1.msra.mxu0 0.0
      %5453 = vmatprep.subr.mxu0 0.0
      %5454 = vmatpush1.msra.mxu0 0.0
      %5455 = vmatprep.subr.mxu0 0.0
      %5456 = vmatpush1.msra.mxu0 0.0
      %5457 = vmatprep.subr.mxu0 0.0
      %5458 = vmatpush1.msra.mxu0 0.0
      %5459 = vmatprep.subr.mxu0 0.0
      %5460 = vmatpush1.msra.mxu0 0.0
      %5461 = vmatprep.subr.mxu0 0.0
      %5462 = vmatpush1.msra.mxu0 0.0
      %5463 = vmatprep.subr.mxu0 0.0
      %5464 = vmatpush1.msra.mxu0 0.0
      %5465 = vmatprep.subr.mxu0 0.0
      %5466 = vmatpush1.msra.mxu0 0.0
      %5467 = vmatprep.subr.mxu0 0.0
      %5468 = vmatpush1.msra.mxu0 0.0
      %5469 = vmatprep.subr.mxu0 0.0
      %5470 = vmatpush1.msra.mxu0 0.0
      %5471 = vmatprep.subr.mxu0 0.0
      %5472 = vmatpush1.msra.mxu0 0.0
      %5473 = vmatprep.subr.mxu0 0.0
      %5474 = vmatpush1.msra.mxu0 0.0
      %5475 = vmatprep.subr.mxu0 0.0
      %5476 = vmatpush1.msra.mxu0 0.0
      %5477 = vmatprep.subr.mxu0 0.0
      %5478 = vmatpush1.msra.mxu0 0.0
      %5479 = vmatprep.subr.mxu0 0.0
      %5480 = vmatpush1.msra.mxu0 0.0
      %5481 = vmatprep.subr.mxu0 0.0
      %5482 = vmatpush1.msra.mxu0 0.0
      %5483 = vmatprep.subr.mxu0 0.0
      %5484 = vmatpush1.msra.mxu0 0.0
      %5485 = vmatprep.subr.mxu0 0.0
      %5486 = vmatpush1.msra.mxu0 0.0
      %5487 = vmatprep.subr.mxu0 0.0
      %5488 = vmatpush1.msra.mxu0 0.0
      %5489 = vmatprep.subr.mxu0 0.0
      %5490 = vmatpush1.msra.mxu0 0.0
      %5491 = vmatprep.subr.mxu0 0.0
      %5492 = vmatpush1.msra.mxu0 0.0
      %5493 = vmatprep.subr.mxu0 0.0
      %5494 = vmatpush1.msra.mxu0 0.0
      %5495 = vmatprep.subr.mxu0 0.0
      %5496 = vmatpush1.msra.mxu0 0.0
      %5497 = vmatprep.subr.mxu0 0.0
      %5498 = vmatpush1.msra.mxu0 0.0
      %5499 = vmatprep.subr.mxu0 0.0
      %5500 = vmatpush1.msra.mxu0 0.0
      %5501 = vmatprep.subr.mxu0 0.0
      %5502 = vmatpush1.msra.mxu0 0.0
      %5503 = vmatprep.mubr.f32.mxu0 0.0
      %5504 = vmatmul.mubr.f32.gmra.mrb[0].mxu0 %v5434
      %v5505 = vpop.f32.mrb[0].mxu0
      %v5506 = vadd.f32 0.0, %v5505
      %v5507 = vpop.f32.mrb[0].mxu0
      %5508 = vmatprep.mubr.f32.mxu0 0.0
      %5509 = vmatmul.mubr.f32.gmra.mrb[0].mxu0 %v5437
      %v5510 = vpop.f32.mrb[0].mxu0
      %v5511 = vadd.f32 0.0, %v5510
      %v5512 = vpop.f32.mrb[0].mxu0
      %5513 = vdwg.mxu0
      %s5514 = scalar_lea.vmem %s6, 24
      %v5515 = vld [vmem:[%s5514] sm:$0xff]
      %v5517 = vsel %vm1053, %v5263, 0
      %v5520 = vsel %vm1053, %v5268, 0
      %v5523 = vsel %vm1053, %v5344, 0
      %v5526 = vsel %vm1053, %v5349, 0
      %v5529 = vsel %vm1053, %v5425, 0
      %v5532 = vsel %vm1053, %v5430, 0
      %v5535 = vsel %vm1053, %v5506, 0
      %v5538 = vsel %vm1053, %v5511, 0
      %5540 = vmatprep.subr.mxu0 0.0
      %5541 = vmatpush1.msra.mxu0 %v5515
      %5542 = vmatprep.subr.mxu0 0.0
      %5543 = vmatpush1.msra.mxu0 0.0
      %5544 = vmatprep.subr.mxu0 0.0
      %5545 = vmatpush1.msra.mxu0 0.0
      %5546 = vmatprep.subr.mxu0 0.0
      %5547 = vmatpush1.msra.mxu0 0.0
      %5548 = vmatprep.subr.mxu0 0.0
      %5549 = vmatpush1.msra.mxu0 0.0
      %5550 = vmatprep.subr.mxu0 0.0
      %5551 = vmatpush1.msra.mxu0 0.0
      %5552 = vmatprep.subr.mxu0 0.0
      %5553 = vmatpush1.msra.mxu0 0.0
      %5554 = vmatprep.subr.mxu0 0.0
      %5555 = vmatpush1.msra.mxu0 0.0
      %5556 = vmatprep.subr.mxu0 0.0
      %5557 = vmatpush1.msra.mxu0 0.0
      %5558 = vmatprep.subr.mxu0 0.0
      %5559 = vmatpush1.msra.mxu0 0.0
      %5560 = vmatprep.subr.mxu0 0.0
      %5561 = vmatpush1.msra.mxu0 0.0
      %5562 = vmatprep.subr.mxu0 0.0
      %5563 = vmatpush1.msra.mxu0 0.0
      %5564 = vmatprep.subr.mxu0 0.0
      %5565 = vmatpush1.msra.mxu0 0.0
      %5566 = vmatprep.subr.mxu0 0.0
      %5567 = vmatpush1.msra.mxu0 0.0
      %5568 = vmatprep.subr.mxu0 0.0
      %5569 = vmatpush1.msra.mxu0 0.0
      %5570 = vmatprep.subr.mxu0 0.0
      %5571 = vmatpush1.msra.mxu0 0.0
      %5572 = vmatprep.subr.mxu0 0.0
      %5573 = vmatpush1.msra.mxu0 0.0
      %5574 = vmatprep.subr.mxu0 0.0
      %5575 = vmatpush1.msra.mxu0 0.0
      %5576 = vmatprep.subr.mxu0 0.0
      %5577 = vmatpush1.msra.mxu0 0.0
      %5578 = vmatprep.subr.mxu0 0.0
      %5579 = vmatpush1.msra.mxu0 0.0
      %5580 = vmatprep.subr.mxu0 0.0
      %5581 = vmatpush1.msra.mxu0 0.0
      %5582 = vmatprep.subr.mxu0 0.0
      %5583 = vmatpush1.msra.mxu0 0.0
      %5584 = vmatprep.subr.mxu0 0.0
      %5585 = vmatpush1.msra.mxu0 0.0
      %5586 = vmatprep.subr.mxu0 0.0
      %5587 = vmatpush1.msra.mxu0 0.0
      %5588 = vmatprep.subr.mxu0 0.0
      %5589 = vmatpush1.msra.mxu0 0.0
      %5590 = vmatprep.subr.mxu0 0.0
      %5591 = vmatpush1.msra.mxu0 0.0
      %5592 = vmatprep.subr.mxu0 0.0
      %5593 = vmatpush1.msra.mxu0 0.0
      %5594 = vmatprep.subr.mxu0 0.0
      %5595 = vmatpush1.msra.mxu0 0.0
      %5596 = vmatprep.subr.mxu0 0.0
      %5597 = vmatpush1.msra.mxu0 0.0
      %5598 = vmatprep.subr.mxu0 0.0
      %5599 = vmatpush1.msra.mxu0 0.0
      %5600 = vmatprep.subr.mxu0 0.0
      %5601 = vmatpush1.msra.mxu0 0.0
      %5602 = vmatprep.subr.mxu0 0.0
      %5603 = vmatpush1.msra.mxu0 0.0
      %5604 = vmatprep.mubr.f32.mxu0 0.0
      %5605 = vmatmul.mubr.f32.gmra.mrb[0].mxu0 %v5517
      %v5606 = vpop.f32.mrb[0].mxu0
      %v5607 = vadd.f32 0.0, %v5606
      %v5608 = vpop.f32.mrb[0].mxu0
      %5609 = vmatprep.mubr.f32.mxu0 0.0
      %5610 = vmatmul.mubr.f32.gmra.mrb[0].mxu0 %v5520
      %v5611 = vpop.f32.mrb[0].mxu0
      %v5612 = vadd.f32 0.0, %v5611
      %v5613 = vpop.f32.mrb[0].mxu0
      %5614 = vmatprep.mubr.f32.mxu0 0.0
      %5615 = vmatmul.mubr.f32.gmra.mrb[0].mxu0 %v5523
      %v5616 = vpop.f32.mrb[0].mxu0
      %v5617 = vadd.f32 0.0, %v5616
      %v5618 = vpop.f32.mrb[0].mxu0
      %5619 = vmatprep.mubr.f32.mxu0 0.0
      %5620 = vmatmul.mubr.f32.gmra.mrb[0].mxu0 %v5526
      %v5621 = vpop.f32.mrb[0].mxu0
      %v5622 = vadd.f32 0.0, %v5621
      %v5623 = vpop.f32.mrb[0].mxu0
      %5624 = vmatprep.mubr.f32.mxu0 0.0
      %5625 = vmatmul.mubr.f32.gmra.mrb[0].mxu0 %v5529
      %v5626 = vpop.f32.mrb[0].mxu0
      %v5627 = vadd.f32 0.0, %v5626
      %v5628 = vpop.f32.mrb[0].mxu0
      %5629 = vmatprep.mubr.f32.mxu0 0.0
      %5630 = vmatmul.mubr.f32.gmra.mrb[0].mxu0 %v5532
      %v5631 = vpop.f32.mrb[0].mxu0
      %v5632 = vadd.f32 0.0, %v5631
      %v5633 = vpop.f32.mrb[0].mxu0
      %5634 = vmatprep.mubr.f32.mxu0 0.0
      %5635 = vmatmul.mubr.f32.gmra.mrb[0].mxu0 %v5535
      %v5636 = vpop.f32.mrb[0].mxu0
      %v5637 = vadd.f32 0.0, %v5636
      %v5638 = vpop.f32.mrb[0].mxu0
      %5639 = vmatprep.mubr.f32.mxu0 0.0
      %5640 = vmatmul.mubr.f32.gmra.mrb[0].mxu0 %v5538
      %v5641 = vpop.f32.mrb[0].mxu0
      %v5642 = vadd.f32 0.0, %v5641
      %v5643 = vpop.f32.mrb[0].mxu0
      %5644 = vdwg.mxu0
      %v5645 = vadd.f32 %v4414, %v5607
      %v5646 = vadd.f32 %v4415, %v5612
      %v5647 = vadd.f32 %v4416, %v5617
      %v5648 = vadd.f32 %v4417, %v5622
      %v5649 = vadd.f32 %v4418, %v5627
      %v5650 = vadd.f32 %v4419, %v5632
      %v5651 = vadd.f32 %v4420, %v5637
      %v5652 = vadd.f32 %v4421, %v5642
      %v5653 = vld [vmem:[%s8] sm:$0x1]
      %v5654 = vld [vmem:[%s9] sm:$0x1]
      %v5655 = vsel %vm559, %v5645, 0.0
      %5656 = vadd.xlane.f32.xlu0 %v5655
      %v5657 = vpop.xlane.xlu0 %5656
      %v5658 = vsel %vm559, %v5646, 0.0
      %5659 = vadd.xlane.f32.xlu0 %v5658
      %v5660 = vpop.xlane.xlu0 %5659
      %v5661 = vsel %vm559, %v5647, 0.0
      %5662 = vadd.xlane.f32.xlu0 %v5661
      %v5663 = vpop.xlane.xlu0 %5662
      %v5664 = vsel %vm559, %v5648, 0.0
      %5665 = vadd.xlane.f32.xlu0 %v5664
      %v5666 = vpop.xlane.xlu0 %5665
      %v5667 = vsel %vm559, %v5649, 0.0
      %5668 = vadd.xlane.f32.xlu0 %v5667
      %v5669 = vpop.xlane.xlu0 %5668
      %v5670 = vsel %vm559, %v5650, 0.0
      %5671 = vadd.xlane.f32.xlu0 %v5670
      %v5672 = vpop.xlane.xlu0 %5671
      %v5673 = vsel %vm559, %v5651, 0.0
      %5674 = vadd.xlane.f32.xlu0 %v5673
      %v5675 = vpop.xlane.xlu0 %5674
      %v5676 = vsel %vm559, %v5652, 0.0
      %5677 = vadd.xlane.f32.xlu0 %v5676
      %v5678 = vpop.xlane.xlu0 %5677
      %v5679 = vmul.f32 %v5657, %v584
      %v5680 = vmul.f32 %v5660, %v584
      %v5681 = vmul.f32 %v5663, %v584
      %v5682 = vmul.f32 %v5666, %v584
      %v5683 = vmul.f32 %v5669, %v584
      %v5684 = vmul.f32 %v5672, %v584
      %v5685 = vmul.f32 %v5675, %v584
      %v5686 = vmul.f32 %v5678, %v584
      %v5687 = vsub.f32 %v5645, %v5679
      %v5688 = vsub.f32 %v5646, %v5680
      %v5689 = vsub.f32 %v5647, %v5681
      %v5690 = vsub.f32 %v5648, %v5682
      %v5691 = vsub.f32 %v5649, %v5683
      %v5692 = vsub.f32 %v5650, %v5684
      %v5693 = vsub.f32 %v5651, %v5685
      %v5694 = vsub.f32 %v5652, %v5686
      %v5695 = vmul.f32 %v5687, %v5687
      %v5696 = vmul.f32 %v5688, %v5688
      %v5697 = vmul.f32 %v5689, %v5689
      %v5698 = vmul.f32 %v5690, %v5690
      %v5699 = vmul.f32 %v5691, %v5691
      %v5700 = vmul.f32 %v5692, %v5692
      %v5701 = vmul.f32 %v5693, %v5693
      %v5702 = vmul.f32 %v5694, %v5694
      %v5703 = vsel %vm559, %v5695, 0.0
      %5704 = vadd.xlane.f32.xlu0 %v5703
      %v5705 = vpop.xlane.xlu0 %5704
      %v5706 = vsel %vm559, %v5696, 0.0
      %5707 = vadd.xlane.f32.xlu0 %v5706
      %v5708 = vpop.xlane.xlu0 %5707
      %v5709 = vsel %vm559, %v5697, 0.0
      %5710 = vadd.xlane.f32.xlu0 %v5709
      %v5711 = vpop.xlane.xlu0 %5710
      %v5712 = vsel %vm559, %v5698, 0.0
      %5713 = vadd.xlane.f32.xlu0 %v5712
      %v5714 = vpop.xlane.xlu0 %5713
      %v5715 = vsel %vm559, %v5699, 0.0
      %5716 = vadd.xlane.f32.xlu0 %v5715
      %v5717 = vpop.xlane.xlu0 %5716
      %v5718 = vsel %vm559, %v5700, 0.0
      %5719 = vadd.xlane.f32.xlu0 %v5718
      %v5720 = vpop.xlane.xlu0 %5719
      %v5721 = vsel %vm559, %v5701, 0.0
      %5722 = vadd.xlane.f32.xlu0 %v5721
      %v5723 = vpop.xlane.xlu0 %5722
      %v5724 = vsel %vm559, %v5702, 0.0
      %5725 = vadd.xlane.f32.xlu0 %v5724
      %v5726 = vpop.xlane.xlu0 %5725
      %v5727 = vmul.f32 %v5705, %v584
      %v5728 = vmul.f32 %v5708, %v584
      %v5729 = vmul.f32 %v5711, %v584
      %v5730 = vmul.f32 %v5714, %v584
      %v5731 = vmul.f32 %v5717, %v584
      %v5732 = vmul.f32 %v5720, %v584
      %v5733 = vmul.f32 %v5723, %v584
      %v5734 = vmul.f32 %v5726, %v584
      %v5735 = vadd.f32 %v5727, 1e-05
      %v5736 = vadd.f32 %v5728, 1e-05
      %v5737 = vadd.f32 %v5729, 1e-05
      %v5738 = vadd.f32 %v5730, 1e-05
      %v5739 = vadd.f32 %v5731, 1e-05
      %v5740 = vadd.f32 %v5732, 1e-05
      %v5741 = vadd.f32 %v5733, 1e-05
      %v5742 = vadd.f32 %v5734, 1e-05
      %v5743 = vrsqrt.pop %v5735
      %v5744 = vrsqrt.pop %v5736
      %v5745 = vrsqrt.pop %v5737
      %v5746 = vrsqrt.pop %v5738
      %v5747 = vrsqrt.pop %v5739
      %v5748 = vrsqrt.pop %v5740
      %v5749 = vrsqrt.pop %v5741
      %v5750 = vrsqrt.pop %v5742
      %v5751 = vmul.f32 %v5687, %v5743
      %v5752 = vmul.f32 %v5688, %v5744
      %v5753 = vmul.f32 %v5689, %v5745
      %v5754 = vmul.f32 %v5690, %v5746
      %v5755 = vmul.f32 %v5691, %v5747
      %v5756 = vmul.f32 %v5692, %v5748
      %v5757 = vmul.f32 %v5693, %v5749
      %v5758 = vmul.f32 %v5694, %v5750
      %v5760 = vlaneseq
      %v5761 = vshrl.u32 %v5760, 7
      %v5762 = vsub.s32 0, %v5761
      %v5763 = vrot.slane %v5653, %v5762
      %v5765 = vmul.f32 %v5751, %v5763
      %v5766 = vmul.f32 %v5752, %v5763
      %v5767 = vmul.f32 %v5753, %v5763
      %v5768 = vmul.f32 %v5754, %v5763
      %v5769 = vmul.f32 %v5755, %v5763
      %v5770 = vmul.f32 %v5756, %v5763
      %v5771 = vmul.f32 %v5757, %v5763
      %v5772 = vmul.f32 %v5758, %v5763
      %v5774 = vlaneseq
      %v5775 = vshrl.u32 %v5774, 7
      %v5776 = vsub.s32 0, %v5775
      %v5777 = vrot.slane %v5654, %v5776
      %v5779 = vadd.f32 %v5765, %v5777
      %v5780 = vadd.f32 %v5766, %v5777
      %v5781 = vadd.f32 %v5767, %v5777
      %v5782 = vadd.f32 %v5768, %v5777
      %v5783 = vadd.f32 %v5769, %v5777
      %v5784 = vadd.f32 %v5770, %v5777
      %v5785 = vadd.f32 %v5771, %v5777
      %v5786 = vadd.f32 %v5772, %v5777
      %v5787 = vld [vmem:[%s10] sm:$0xff]
      %v5788 = vld [vmem:[%s10 + $0x8] sm:$0xff]
      %v5789 = vld [vmem:[%s11] sm:$0x1]
      %v5791 = vlaneseq
      %v5792 = vshrl.u32 %v5791, 7
      %v5793 = vsub.s32 0, %v5792
      %v5794 = vrot.slane %v5789, %v5793
      %v5797 = vsel %vm559, %v5779, 0
      %v5800 = vsel %vm559, %v5780, 0
      %v5803 = vsel %vm559, %v5781, 0
      %v5806 = vsel %vm559, %v5782, 0
      %v5809 = vsel %vm559, %v5783, 0
      %v5812 = vsel %vm559, %v5784, 0
      %v5815 = vsel %vm559, %v5785, 0
      %v5818 = vsel %vm559, %v5786, 0
      %5820 = vmatprep.subr.mxu0 0.0
      %5821 = vmatpush1.msra.mxu0 %v5787
      %5822 = vmatprep.subr.mxu0 0.0
      %5823 = vmatpush1.msra.mxu0 %v5788
      %5824 = vmatprep.subr.mxu0 0.0
      %5825 = vmatpush1.msra.mxu0 0.0
      %5826 = vmatprep.subr.mxu0 0.0
      %5827 = vmatpush1.msra.mxu0 0.0
      %5828 = vmatprep.subr.mxu0 0.0
      %5829 = vmatpush1.msra.mxu0 0.0
      %5830 = vmatprep.subr.mxu0 0.0
      %5831 = vmatpush1.msra.mxu0 0.0
      %5832 = vmatprep.subr.mxu0 0.0
      %5833 = vmatpush1.msra.mxu0 0.0
      %5834 = vmatprep.subr.mxu0 0.0
      %5835 = vmatpush1.msra.mxu0 0.0
      %5836 = vmatprep.subr.mxu0 0.0
      %5837 = vmatpush1.msra.mxu0 0.0
      %5838 = vmatprep.subr.mxu0 0.0
      %5839 = vmatpush1.msra.mxu0 0.0
      %5840 = vmatprep.subr.mxu0 0.0
      %5841 = vmatpush1.msra.mxu0 0.0
      %5842 = vmatprep.subr.mxu0 0.0
      %5843 = vmatpush1.msra.mxu0 0.0
      %5844 = vmatprep.subr.mxu0 0.0
      %5845 = vmatpush1.msra.mxu0 0.0
      %5846 = vmatprep.subr.mxu0 0.0
      %5847 = vmatpush1.msra.mxu0 0.0
      %5848 = vmatprep.subr.mxu0 0.0
      %5849 = vmatpush1.msra.mxu0 0.0
      %5850 = vmatprep.subr.mxu0 0.0
      %5851 = vmatpush1.msra.mxu0 0.0
      %5852 = vmatprep.subr.mxu0 0.0
      %5853 = vmatpush1.msra.mxu0 0.0
      %5854 = vmatprep.subr.mxu0 0.0
      %5855 = vmatpush1.msra.mxu0 0.0
      %5856 = vmatprep.subr.mxu0 0.0
      %5857 = vmatpush1.msra.mxu0 0.0
      %5858 = vmatprep.subr.mxu0 0.0
      %5859 = vmatpush1.msra.mxu0 0.0
      %5860 = vmatprep.subr.mxu0 0.0
      %5861 = vmatpush1.msra.mxu0 0.0
      %5862 = vmatprep.subr.mxu0 0.0
      %5863 = vmatpush1.msra.mxu0 0.0
      %5864 = vmatprep.subr.mxu0 0.0
      %5865 = vmatpush1.msra.mxu0 0.0
      %5866 = vmatprep.subr.mxu0 0.0
      %5867 = vmatpush1.msra.mxu0 0.0
      %5868 = vmatprep.subr.mxu0 0.0
      %5869 = vmatpush1.msra.mxu0 0.0
      %5870 = vmatprep.subr.mxu0 0.0
      %5871 = vmatpush1.msra.mxu0 0.0
      %5872 = vmatprep.subr.mxu0 0.0
      %5873 = vmatpush1.msra.mxu0 0.0
      %5874 = vmatprep.subr.mxu0 0.0
      %5875 = vmatpush1.msra.mxu0 0.0
      %5876 = vmatprep.subr.mxu0 0.0
      %5877 = vmatpush1.msra.mxu0 0.0
      %5878 = vmatprep.subr.mxu0 0.0
      %5879 = vmatpush1.msra.mxu0 0.0
      %5880 = vmatprep.subr.mxu0 0.0
      %5881 = vmatpush1.msra.mxu0 0.0
      %5882 = vmatprep.subr.mxu0 0.0
      %5883 = vmatpush1.msra.mxu0 0.0
      %5884 = vmatprep.mubr.f32.mxu0 0.0
      %5885 = vmatmul.mubr.f32.gmra.mrb[0].mxu0 %v5797
      %v5886 = vpop.f32.mrb[0].mxu0
      %v5887 = vadd.f32 %v5794, %v5886
      %v5888 = vpop.f32.mrb[0].mxu0
      %5889 = vmatprep.mubr.f32.mxu0 0.0
      %5890 = vmatmul.mubr.f32.gmra.mrb[0].mxu0 %v5800
      %v5891 = vpop.f32.mrb[0].mxu0
      %v5892 = vadd.f32 %v5794, %v5891
      %v5893 = vpop.f32.mrb[0].mxu0
      %5894 = vmatprep.mubr.f32.mxu0 0.0
      %5895 = vmatmul.mubr.f32.gmra.mrb[0].mxu0 %v5803
      %v5896 = vpop.f32.mrb[0].mxu0
      %v5897 = vadd.f32 %v5794, %v5896
      %v5898 = vpop.f32.mrb[0].mxu0
      %5899 = vmatprep.mubr.f32.mxu0 0.0
      %5900 = vmatmul.mubr.f32.gmra.mrb[0].mxu0 %v5806
      %v5901 = vpop.f32.mrb[0].mxu0
      %v5902 = vadd.f32 %v5794, %v5901
      %v5903 = vpop.f32.mrb[0].mxu0
      %5904 = vmatprep.mubr.f32.mxu0 0.0
      %5905 = vmatmul.mubr.f32.gmra.mrb[0].mxu0 %v5809
      %v5906 = vpop.f32.mrb[0].mxu0
      %v5907 = vadd.f32 %v5794, %v5906
      %v5908 = vpop.f32.mrb[0].mxu0
      %5909 = vmatprep.mubr.f32.mxu0 0.0
      %5910 = vmatmul.mubr.f32.gmra.mrb[0].mxu0 %v5812
      %v5911 = vpop.f32.mrb[0].mxu0
      %v5912 = vadd.f32 %v5794, %v5911
      %v5913 = vpop.f32.mrb[0].mxu0
      %5914 = vmatprep.mubr.f32.mxu0 0.0
      %5915 = vmatmul.mubr.f32.gmra.mrb[0].mxu0 %v5815
      %v5916 = vpop.f32.mrb[0].mxu0
      %v5917 = vadd.f32 %v5794, %v5916
      %v5918 = vpop.f32.mrb[0].mxu0
      %5919 = vmatprep.mubr.f32.mxu0 0.0
      %5920 = vmatmul.mubr.f32.gmra.mrb[0].mxu0 %v5818
      %v5921 = vpop.f32.mrb[0].mxu0
      %v5922 = vadd.f32 %v5794, %v5921
      %v5923 = vpop.f32.mrb[0].mxu0
      %5924 = vdwg.mxu0
      %v5925 = vxor.u32 %v5887, 2147483648
      %v5926 = vxor.u32 %v5892, 2147483648
      %v5927 = vxor.u32 %v5897, 2147483648
      %v5928 = vxor.u32 %v5902, 2147483648
      %v5929 = vxor.u32 %v5907, 2147483648
      %v5930 = vxor.u32 %v5912, 2147483648
      %v5931 = vxor.u32 %v5917, 2147483648
      %v5932 = vxor.u32 %v5922, 2147483648
      %v5933 = vmul.f32 %v5925, 1.442695
      %v5934 = vpow.pop %v5933
      %v5935 = vmul.f32 %v5926, 1.442695
      %v5936 = vpow.pop %v5935
      %v5937 = vmul.f32 %v5927, 1.442695
      %v5938 = vpow.pop %v5937
      %v5939 = vmul.f32 %v5928, 1.442695
      %v5940 = vpow.pop %v5939
      %v5941 = vmul.f32 %v5929, 1.442695
      %v5942 = vpow.pop %v5941
      %v5943 = vmul.f32 %v5930, 1.442695
      %v5944 = vpow.pop %v5943
      %v5945 = vmul.f32 %v5931, 1.442695
      %v5946 = vpow.pop %v5945
      %v5947 = vmul.f32 %v5932, 1.442695
      %v5948 = vpow.pop %v5947
      %v5949 = vadd.f32 %v5934, 1.0
      %v5950 = vadd.f32 %v5936, 1.0
      %v5951 = vadd.f32 %v5938, 1.0
      %v5952 = vadd.f32 %v5940, 1.0
      %v5953 = vadd.f32 %v5942, 1.0
      %v5954 = vadd.f32 %v5944, 1.0
      %v5955 = vadd.f32 %v5946, 1.0
      %v5956 = vadd.f32 %v5948, 1.0
      %v5957 = vrcp.pop %v5949
      %v5958 = vmul.f32 1.0, %v5957
      %v5959 = vrcp.pop %v5950
      %v5960 = vmul.f32 1.0, %v5959
      %v5961 = vrcp.pop %v5951
      %v5962 = vmul.f32 1.0, %v5961
      %v5963 = vrcp.pop %v5952
      %v5964 = vmul.f32 1.0, %v5963
      %v5965 = vrcp.pop %v5953
      %v5966 = vmul.f32 1.0, %v5965
      %v5967 = vrcp.pop %v5954
      %v5968 = vmul.f32 1.0, %v5967
      %v5969 = vrcp.pop %v5955
      %v5970 = vmul.f32 1.0, %v5969
      %v5971 = vrcp.pop %v5956
      %v5972 = vmul.f32 1.0, %v5971
      %v5973 = vmul.f32 %v5887, %v5958
      %v5974 = vmul.f32 %v5892, %v5960
      %v5975 = vmul.f32 %v5897, %v5962
      %v5976 = vmul.f32 %v5902, %v5964
      %v5977 = vmul.f32 %v5907, %v5966
      %v5978 = vmul.f32 %v5912, %v5968
      %v5979 = vmul.f32 %v5917, %v5970
      %v5980 = vmul.f32 %v5922, %v5972
      %v5981 = vld [vmem:[%s12] sm:$0xff]
      %v5982 = vld [vmem:[%s12 + $0x8] sm:$0xff]
      %v5983 = vld [vmem:[%s12 + $0x10] sm:$0xff]
      %v5984 = vld [vmem:[%s12 + $0x18] sm:$0xff]
      %vm5985 = vcmask 261120
      %v5987 = vsel %vm5985, %v5973, 0
      %v5990 = vsel %vm5985, %v5974, 0
      %v5993 = vsel %vm5985, %v5975, 0
      %v5996 = vsel %vm5985, %v5976, 0
      %v5999 = vsel %vm5985, %v5977, 0
      %v6002 = vsel %vm5985, %v5978, 0
      %v6005 = vsel %vm5985, %v5979, 0
      %v6008 = vsel %vm5985, %v5980, 0
      %6010 = vmatprep.subr.mxu0 0.0
      %6011 = vmatpush1.msra.mxu0 %v5981
      %6012 = vmatprep.subr.mxu0 0.0
      %6013 = vmatpush1.msra.mxu0 %v5982
      %6014 = vmatprep.subr.mxu0 0.0
      %6015 = vmatpush1.msra.mxu0 %v5983
      %6016 = vmatprep.subr.mxu0 0.0
      %6017 = vmatpush1.msra.mxu0 %v5984
      %6018 = vmatprep.subr.mxu0 0.0
      %6019 = vmatpush1.msra.mxu0 0.0
      %6020 = vmatprep.subr.mxu0 0.0
      %6021 = vmatpush1.msra.mxu0 0.0
      %6022 = vmatprep.subr.mxu0 0.0
      %6023 = vmatpush1.msra.mxu0 0.0
      %6024 = vmatprep.subr.mxu0 0.0
      %6025 = vmatpush1.msra.mxu0 0.0
      %6026 = vmatprep.subr.mxu0 0.0
      %6027 = vmatpush1.msra.mxu0 0.0
      %6028 = vmatprep.subr.mxu0 0.0
      %6029 = vmatpush1.msra.mxu0 0.0
      %6030 = vmatprep.subr.mxu0 0.0
      %6031 = vmatpush1.msra.mxu0 0.0
      %6032 = vmatprep.subr.mxu0 0.0
      %6033 = vmatpush1.msra.mxu0 0.0
      %6034 = vmatprep.subr.mxu0 0.0
      %6035 = vmatpush1.msra.mxu0 0.0
      %6036 = vmatprep.subr.mxu0 0.0
      %6037 = vmatpush1.msra.mxu0 0.0
      %6038 = vmatprep.subr.mxu0 0.0
      %6039 = vmatpush1.msra.mxu0 0.0
      %6040 = vmatprep.subr.mxu0 0.0
      %6041 = vmatpush1.msra.mxu0 0.0
      %6042 = vmatprep.subr.mxu0 0.0
      %6043 = vmatpush1.msra.mxu0 0.0
      %6044 = vmatprep.subr.mxu0 0.0
      %6045 = vmatpush1.msra.mxu0 0.0
      %6046 = vmatprep.subr.mxu0 0.0
      %6047 = vmatpush1.msra.mxu0 0.0
      %6048 = vmatprep.subr.mxu0 0.0
      %6049 = vmatpush1.msra.mxu0 0.0
      %6050 = vmatprep.subr.mxu0 0.0
      %6051 = vmatpush1.msra.mxu0 0.0
      %6052 = vmatprep.subr.mxu0 0.0
      %6053 = vmatpush1.msra.mxu0 0.0
      %6054 = vmatprep.subr.mxu0 0.0
      %6055 = vmatpush1.msra.mxu0 0.0
      %6056 = vmatprep.subr.mxu0 0.0
      %6057 = vmatpush1.msra.mxu0 0.0
      %6058 = vmatprep.subr.mxu0 0.0
      %6059 = vmatpush1.msra.mxu0 0.0
      %6060 = vmatprep.subr.mxu0 0.0
      %6061 = vmatpush1.msra.mxu0 0.0
      %6062 = vmatprep.subr.mxu0 0.0
      %6063 = vmatpush1.msra.mxu0 0.0
      %6064 = vmatprep.subr.mxu0 0.0
      %6065 = vmatpush1.msra.mxu0 0.0
      %6066 = vmatprep.subr.mxu0 0.0
      %6067 = vmatpush1.msra.mxu0 0.0
      %6068 = vmatprep.subr.mxu0 0.0
      %6069 = vmatpush1.msra.mxu0 0.0
      %6070 = vmatprep.subr.mxu0 0.0
      %6071 = vmatpush1.msra.mxu0 0.0
      %6072 = vmatprep.subr.mxu0 0.0
      %6073 = vmatpush1.msra.mxu0 0.0
      %6074 = vmatprep.mubr.f32.mxu0 0.0
      %6075 = vmatmul.mubr.f32.gmra.mrb[0].mxu0 %v5987
      %v6076 = vpop.f32.mrb[0].mxu0
      %v6077 = vadd.f32 0.0, %v6076
      %v6078 = vpop.f32.mrb[0].mxu0
      %6079 = vmatprep.mubr.f32.mxu0 0.0
      %6080 = vmatmul.mubr.f32.gmra.mrb[0].mxu0 %v5990
      %v6081 = vpop.f32.mrb[0].mxu0
      %v6082 = vadd.f32 0.0, %v6081
      %v6083 = vpop.f32.mrb[0].mxu0
      %6084 = vmatprep.mubr.f32.mxu0 0.0
      %6085 = vmatmul.mubr.f32.gmra.mrb[0].mxu0 %v5993
      %v6086 = vpop.f32.mrb[0].mxu0
      %v6087 = vadd.f32 0.0, %v6086
      %v6088 = vpop.f32.mrb[0].mxu0
      %6089 = vmatprep.mubr.f32.mxu0 0.0
      %6090 = vmatmul.mubr.f32.gmra.mrb[0].mxu0 %v5996
      %v6091 = vpop.f32.mrb[0].mxu0
      %v6092 = vadd.f32 0.0, %v6091
      %v6093 = vpop.f32.mrb[0].mxu0
      %6094 = vmatprep.mubr.f32.mxu0 0.0
      %6095 = vmatmul.mubr.f32.gmra.mrb[0].mxu0 %v5999
      %v6096 = vpop.f32.mrb[0].mxu0
      %v6097 = vadd.f32 0.0, %v6096
      %v6098 = vpop.f32.mrb[0].mxu0
      %6099 = vmatprep.mubr.f32.mxu0 0.0
      %6100 = vmatmul.mubr.f32.gmra.mrb[0].mxu0 %v6002
      %v6101 = vpop.f32.mrb[0].mxu0
      %v6102 = vadd.f32 0.0, %v6101
      %v6103 = vpop.f32.mrb[0].mxu0
      %6104 = vmatprep.mubr.f32.mxu0 0.0
      %6105 = vmatmul.mubr.f32.gmra.mrb[0].mxu0 %v6005
      %v6106 = vpop.f32.mrb[0].mxu0
      %v6107 = vadd.f32 0.0, %v6106
      %v6108 = vpop.f32.mrb[0].mxu0
      %6109 = vmatprep.mubr.f32.mxu0 0.0
      %6110 = vmatmul.mubr.f32.gmra.mrb[0].mxu0 %v6008
      %v6111 = vpop.f32.mrb[0].mxu0
      %v6112 = vadd.f32 0.0, %v6111
      %v6113 = vpop.f32.mrb[0].mxu0
      %6114 = vdwg.mxu0
      %v6115 = vadd.f32 %v5645, %v6077
      %v6116 = vadd.f32 %v5646, %v6082
      %v6117 = vadd.f32 %v5647, %v6087
      %v6118 = vadd.f32 %v5648, %v6092
      %v6119 = vadd.f32 %v5649, %v6097
      %v6120 = vadd.f32 %v5650, %v6102
      %v6121 = vadd.f32 %v5651, %v6107
      %v6122 = vadd.f32 %v5652, %v6112
      %v6123 = vld [vmem:[%s13] sm:$0x1]
      %v6125 = vlaneseq
      %v6126 = vshrl.u32 %v6125, 7
      %v6127 = vsub.s32 0, %v6126
      %v6128 = vrot.slane %v6123, %v6127
      %v6130 = vadd.f32 %v6115, %v6128
      %v6131 = vadd.f32 %v6116, %v6128
      %v6132 = vadd.f32 %v6117, %v6128
      %v6133 = vadd.f32 %v6118, %v6128
      %v6134 = vadd.f32 %v6119, %v6128
      %v6135 = vadd.f32 %v6120, %v6128
      %v6136 = vadd.f32 %v6121, %v6128
      %v6137 = vadd.f32 %v6122, %v6128
      %v6138 = vld [vmem:[%s14] sm:$0xff]
      %v6139 = vld [vmem:[%s14 + $0x8] sm:$0xff]
      %v6141 = vsel %vm559, %v6130, 0
      %v6144 = vsel %vm559, %v6131, 0
      %v6147 = vsel %vm559, %v6132, 0
      %v6150 = vsel %vm559, %v6133, 0
      %v6153 = vsel %vm559, %v6134, 0
      %v6156 = vsel %vm559, %v6135, 0
      %v6159 = vsel %vm559, %v6136, 0
      %v6162 = vsel %vm559, %v6137, 0
      %6164 = vmatprep.subr.mxu0 0.0
      %6165 = vmatpush1.msra.mxu0 %v6138
      %6166 = vmatprep.subr.mxu0 0.0
      %6167 = vmatpush1.msra.mxu0 %v6139
      %6168 = vmatprep.subr.mxu0 0.0
      %6169 = vmatpush1.msra.mxu0 0.0
      %6170 = vmatprep.subr.mxu0 0.0
      %6171 = vmatpush1.msra.mxu0 0.0
      %6172 = vmatprep.subr.mxu0 0.0
      %6173 = vmatpush1.msra.mxu0 0.0
      %6174 = vmatprep.subr.mxu0 0.0
      %6175 = vmatpush1.msra.mxu0 0.0
      %6176 = vmatprep.subr.mxu0 0.0
      %6177 = vmatpush1.msra.mxu0 0.0
      %6178 = vmatprep.subr.mxu0 0.0
      %6179 = vmatpush1.msra.mxu0 0.0
      %6180 = vmatprep.subr.mxu0 0.0
      %6181 = vmatpush1.msra.mxu0 0.0
      %6182 = vmatprep.subr.mxu0 0.0
      %6183 = vmatpush1.msra.mxu0 0.0
      %6184 = vmatprep.subr.mxu0 0.0
      %6185 = vmatpush1.msra.mxu0 0.0
      %6186 = vmatprep.subr.mxu0 0.0
      %6187 = vmatpush1.msra.mxu0 0.0
      %6188 = vmatprep.subr.mxu0 0.0
      %6189 = vmatpush1.msra.mxu0 0.0
      %6190 = vmatprep.subr.mxu0 0.0
      %6191 = vmatpush1.msra.mxu0 0.0
      %6192 = vmatprep.subr.mxu0 0.0
      %6193 = vmatpush1.msra.mxu0 0.0
      %6194 = vmatprep.subr.mxu0 0.0
      %6195 = vmatpush1.msra.mxu0 0.0
      %6196 = vmatprep.subr.mxu0 0.0
      %6197 = vmatpush1.msra.mxu0 0.0
      %6198 = vmatprep.subr.mxu0 0.0
      %6199 = vmatpush1.msra.mxu0 0.0
      %6200 = vmatprep.subr.mxu0 0.0
      %6201 = vmatpush1.msra.mxu0 0.0
      %6202 = vmatprep.subr.mxu0 0.0
      %6203 = vmatpush1.msra.mxu0 0.0
      %6204 = vmatprep.subr.mxu0 0.0
      %6205 = vmatpush1.msra.mxu0 0.0
      %6206 = vmatprep.subr.mxu0 0.0
      %6207 = vmatpush1.msra.mxu0 0.0
      %6208 = vmatprep.subr.mxu0 0.0
      %6209 = vmatpush1.msra.mxu0 0.0
      %6210 = vmatprep.subr.mxu0 0.0
      %6211 = vmatpush1.msra.mxu0 0.0
      %6212 = vmatprep.subr.mxu0 0.0
      %6213 = vmatpush1.msra.mxu0 0.0
      %6214 = vmatprep.subr.mxu0 0.0
      %6215 = vmatpush1.msra.mxu0 0.0
      %6216 = vmatprep.subr.mxu0 0.0
      %6217 = vmatpush1.msra.mxu0 0.0
      %6218 = vmatprep.subr.mxu0 0.0
      %6219 = vmatpush1.msra.mxu0 0.0
      %6220 = vmatprep.subr.mxu0 0.0
      %6221 = vmatpush1.msra.mxu0 0.0
      %6222 = vmatprep.subr.mxu0 0.0
      %6223 = vmatpush1.msra.mxu0 0.0
      %6224 = vmatprep.subr.mxu0 0.0
      %6225 = vmatpush1.msra.mxu0 0.0
      %6226 = vmatprep.subr.mxu0 0.0
      %6227 = vmatpush1.msra.mxu0 0.0
      %6228 = vmatprep.mubr.f32.mxu0 0.0
      %6229 = vmatmul.mubr.f32.gmra.mrb[0].mxu0 %v6141
      %v6230 = vpop.f32.mrb[0].mxu0
      %v6231 = vadd.f32 0.0, %v6230
      %v6232 = vpop.f32.mrb[0].mxu0
      %6233 = vmatprep.mubr.f32.mxu0 0.0
      %6234 = vmatmul.mubr.f32.gmra.mrb[0].mxu0 %v6144
      %v6235 = vpop.f32.mrb[0].mxu0
      %v6236 = vadd.f32 0.0, %v6235
      %v6237 = vpop.f32.mrb[0].mxu0
      %6238 = vmatprep.mubr.f32.mxu0 0.0
      %6239 = vmatmul.mubr.f32.gmra.mrb[0].mxu0 %v6147
      %v6240 = vpop.f32.mrb[0].mxu0
      %v6241 = vadd.f32 0.0, %v6240
      %v6242 = vpop.f32.mrb[0].mxu0
      %6243 = vmatprep.mubr.f32.mxu0 0.0
      %6244 = vmatmul.mubr.f32.gmra.mrb[0].mxu0 %v6150
      %v6245 = vpop.f32.mrb[0].mxu0
      %v6246 = vadd.f32 0.0, %v6245
      %v6247 = vpop.f32.mrb[0].mxu0
      %6248 = vmatprep.mubr.f32.mxu0 0.0
      %6249 = vmatmul.mubr.f32.gmra.mrb[0].mxu0 %v6153
      %v6250 = vpop.f32.mrb[0].mxu0
      %v6251 = vadd.f32 0.0, %v6250
      %v6252 = vpop.f32.mrb[0].mxu0
      %6253 = vmatprep.mubr.f32.mxu0 0.0
      %6254 = vmatmul.mubr.f32.gmra.mrb[0].mxu0 %v6156
      %v6255 = vpop.f32.mrb[0].mxu0
      %v6256 = vadd.f32 0.0, %v6255
      %v6257 = vpop.f32.mrb[0].mxu0
      %6258 = vmatprep.mubr.f32.mxu0 0.0
      %6259 = vmatmul.mubr.f32.gmra.mrb[0].mxu0 %v6159
      %v6260 = vpop.f32.mrb[0].mxu0
      %v6261 = vadd.f32 0.0, %v6260
      %v6262 = vpop.f32.mrb[0].mxu0
      %6263 = vmatprep.mubr.f32.mxu0 0.0
      %6264 = vmatmul.mubr.f32.gmra.mrb[0].mxu0 %v6162
      %v6265 = vpop.f32.mrb[0].mxu0
      %v6266 = vadd.f32 0.0, %v6265
      %v6267 = vpop.f32.mrb[0].mxu0
      %6268 = vdwg.mxu0
      %v6269 = vld [vmem:[%s15] sm:$0x1]
      %v6271 = vlaneseq
      %v6272 = vshrl.u32 %v6271, 7
      %v6273 = vsub.s32 0, %v6272
      %v6274 = vrot.slane %v6269, %v6273
      %v6276 = vmul.f32 %v6231, %v6274
      %v6277 = vmul.f32 %v6236, %v6274
      %v6278 = vmul.f32 %v6241, %v6274
      %v6279 = vmul.f32 %v6246, %v6274
      %v6280 = vmul.f32 %v6251, %v6274
      %v6281 = vmul.f32 %v6256, %v6274
      %v6282 = vmul.f32 %v6261, %v6274
      %v6283 = vmul.f32 %v6266, %v6274
      %v6284 = vld [vmem:[%s16] sm:$0x1]
      %v6286 = vlaneseq
      %v6287 = vshrl.u32 %v6286, 7
      %v6288 = vsub.s32 0, %v6287
      %v6289 = vrot.slane %v6284, %v6288
      %v6291 = vadd.f32 %v6276, %v6289
      %v6292 = vadd.f32 %v6277, %v6289
      %v6293 = vadd.f32 %v6278, %v6289
      %v6294 = vadd.f32 %v6279, %v6289
      %v6295 = vadd.f32 %v6280, %v6289
      %v6296 = vadd.f32 %v6281, %v6289
      %v6297 = vadd.f32 %v6282, %v6289
      %v6298 = vadd.f32 %v6283, %v6289
      %v6299 = vxor.u32 %v6291, 2147483648
      %v6300 = vxor.u32 %v6292, 2147483648
      %v6301 = vxor.u32 %v6293, 2147483648
      %v6302 = vxor.u32 %v6294, 2147483648
      %v6303 = vxor.u32 %v6295, 2147483648
      %v6304 = vxor.u32 %v6296, 2147483648
      %v6305 = vxor.u32 %v6297, 2147483648
      %v6306 = vxor.u32 %v6298, 2147483648
      %v6307 = vmul.f32 %v6299, 1.442695
      %v6308 = vpow.pop %v6307
      %v6309 = vmul.f32 %v6300, 1.442695
      %v6310 = vpow.pop %v6309
      %v6311 = vmul.f32 %v6301, 1.442695
      %v6312 = vpow.pop %v6311
      %v6313 = vmul.f32 %v6302, 1.442695
      %v6314 = vpow.pop %v6313
      %v6315 = vmul.f32 %v6303, 1.442695
      %v6316 = vpow.pop %v6315
      %v6317 = vmul.f32 %v6304, 1.442695
      %v6318 = vpow.pop %v6317
      %v6319 = vmul.f32 %v6305, 1.442695
      %v6320 = vpow.pop %v6319
      %v6321 = vmul.f32 %v6306, 1.442695
      %v6322 = vpow.pop %v6321
      %v6323 = vadd.f32 %v6308, 1.0
      %v6324 = vadd.f32 %v6310, 1.0
      %v6325 = vadd.f32 %v6312, 1.0
      %v6326 = vadd.f32 %v6314, 1.0
      %v6327 = vadd.f32 %v6316, 1.0
      %v6328 = vadd.f32 %v6318, 1.0
      %v6329 = vadd.f32 %v6320, 1.0
      %v6330 = vadd.f32 %v6322, 1.0
      %v6331 = vrcp.pop %v6323
      %v6332 = vmul.f32 1.0, %v6331
      %v6333 = vrcp.pop %v6324
      %v6334 = vmul.f32 1.0, %v6333
      %v6335 = vrcp.pop %v6325
      %v6336 = vmul.f32 1.0, %v6335
      %v6337 = vrcp.pop %v6326
      %v6338 = vmul.f32 1.0, %v6337
      %v6339 = vrcp.pop %v6327
      %v6340 = vmul.f32 1.0, %v6339
      %v6341 = vrcp.pop %v6328
      %v6342 = vmul.f32 1.0, %v6341
      %v6343 = vrcp.pop %v6329
      %v6344 = vmul.f32 1.0, %v6343
      %v6345 = vrcp.pop %v6330
      %v6346 = vmul.f32 1.0, %v6345
      %v6347 = vmul.f32 %v6291, %v6332
      %v6348 = vmul.f32 %v6292, %v6334
      %v6349 = vmul.f32 %v6293, %v6336
      %v6350 = vmul.f32 %v6294, %v6338
      %v6351 = vmul.f32 %v6295, %v6340
      %v6352 = vmul.f32 %v6296, %v6342
      %v6353 = vmul.f32 %v6297, %v6344
      %v6354 = vmul.f32 %v6298, %v6346
      %6355 = vst.msk [vmem:[%s548] sm:$0xff] %vm1053, %v6347
      %6356 = vst.msk [vmem:[%s548 + $0x8] sm:$0xff] %vm1053, %v6348
      %6357 = vst.msk [vmem:[%s548 + $0x10] sm:$0xff] %vm1053, %v6349
      %6358 = vst.msk [vmem:[%s548 + $0x18] sm:$0xff] %vm1053, %v6350
      %6359 = vst.msk [vmem:[%s548 + $0x20] sm:$0xff] %vm1053, %v6351
      %6360 = vst.msk [vmem:[%s548 + $0x28] sm:$0xff] %vm1053, %v6352
      %6361 = vst.msk [vmem:[%s548 + $0x30] sm:$0xff] %vm1053, %v6353
      %6362 = vst.msk [vmem:[%s548 + $0x38] sm:$0xff] %vm1053, %v6354
      %p6363 = scmp.lt.s32.totalorder %s28, 1
      %s6364 = scalar_select %p6363, %s28, 1
      %s6365 = smul.addr %s6364, 8
      %s6366 = smul.addr %s6365, 8
      %s6367 = scalar_lea.vmem %s17, %s6366
      // Predicated region
      $region89: #{customvit_forward.4} parent=87 // pred_check
        %p6368 = pneg %p408
      $region90: #{customvit_forward.4} parent=87 // pred_check_branch
        %6370 = sbr.rel (%p6368) target = $region92
      $region91: #{customvit_forward.4} parent=87 // pred_region
        _
      $region92: #{customvit_forward.4} parent=87 // pred_fallthru
        _
    $region88: #{customvit_forward.4} parent=5 // pred_fallthru
      _
    %p6371 = scmp.le.s32.totalorder 2, %s23
    // Predicated region
    $region93: #{customvit_forward.4} parent=5 // pred_check
      %p6372 = pneg %p6371
    $region94: #{customvit_forward.4} parent=5 // pred_check_branch
      %6374 = sbr.rel (%p6372) target = $region96
    $region95: #{customvit_forward.4} parent=5 // pred_region
      %s6375 = ssub.s32 %s23, 2
      // Predicated region
      $region97: #{customvit_forward.4} parent=95 // pred_check
        %p6376 = pneg %p414
      $region98: #{customvit_forward.4} parent=95 // pred_check_branch
        %6378 = sbr.rel (%p6376) target = $region100
      $region99: #{customvit_forward.4} parent=95 // pred_region
        %p6379 = scmp.lt.s32.totalorder %s29, 1
        %s6380 = scalar_select %p6379, %s29, 1
        %s6381 = smul.addr %s6380, 8
        %s6382 = smul.addr %s6381, 8
        %s6383 = scalar_lea.vmem %s17, %s6382
      $region100: #{customvit_forward.4} parent=95 // pred_fallthru
        _
    $region96: #{customvit_forward.4} parent=5 // pred_fallthru
      _
  $region6: #{customvit_forward.4} parent=0 // loop_footer
    %s27 = sadd.s32 1, %s23
  $region7: #{customvit_forward.4} parent=0 // loop_footer_branch
    %22 = sbr.rel target = $region3
  $region8: #{customvit_forward.4} parent=0 // loop_exit
    _

</llo_original>
